<compile_context>
chip_gen: v7x
topology: tpu7x:2x2x1
jax: 0.10.0
libtpu: 0.0.40
codegen_flags: <defaults>
</compile_context>

<pallas_src>
import functools

import jax
import jax.numpy as jnp
from jax.experimental import pallas as pl
from jax.experimental.pallas import tpu as pltpu


# ------------------------- layer dims (true / padded) -----------------------

def _round_up(v, m):
    return ((v + m - 1) // m) * m


_LAYER_DIMS = [          # (fan_in, fan_out) as in the PyTorch module
    (784, 1024),   # l1
    (1024, 512),   # l2
    (512, 100),    # l3
    (100, 100),    # l4
    (100, 100),    # l5
    (100, 512),    # l6
    (512, 1024),   # l7
    (1024, 784),   # l8
]

_LAYER_DIMS_PAD = [(_round_up(i, 128), _round_up(o, 128)) for (i, o) in _LAYER_DIMS]

_IN_DIM, _IN_DIM_PAD = 784, _round_up(784, 128)          # 784 -> 896
_ENC_OUT, _ENC_OUT_PAD = 100, _round_up(100, 128)        # 100 -> 128
_REC_OUT, _REC_OUT_PAD = 784, _round_up(784, 128)        # 784 -> 896

_TILE_M = 128   # batch-tile rows: multiple of 128 -> full MXU tiles, clean (8,128) vregs


# ------------------------------ Pallas kernel -------------------------------

def _apply_act(y, act):
    # y is always f32 (MXU accumulator dtype): keep post-matmul math in f32
    # so v5e (no bf16 VALU/EUP) takes no conversion penalty.
    if act == "ReLU":
        return jnp.maximum(y, 0.0)
    elif act == "Sigmoid":
        return jax.nn.sigmoid(y)
    elif act == "tanh":
        return jnp.tanh(y)
    elif act == "gelu":
        return jax.nn.gelu(y)
    elif act == "lrelu":
        return jnp.where(y >= 0.0, y, 0.01 * y)
    else:
        raise ValueError(act)


def _fused_mlp_kernel(x_ref, *refs, n_layers, act):
    """refs = (w1, b1, w2, b2, ..., wn, bn, o_ref).

    x_ref / o_ref are (TILE_M, dim) batch tiles; all weights/biases are full
    VMEM-resident blocks (constant index_map across the batch grid).
    """
    o_ref = refs[-1]
    h = x_ref[...]                                    # (TILE_M, 896) bf16
    for i in range(n_layers):
        w_ref = refs[2 * i]                           # (Kp, Np) bf16
        b_ref = refs[2 * i + 1]                       # (1, Np)  f32
        y = jnp.dot(h.astype(w_ref.dtype), w_ref[...],
                    preferred_element_type=jnp.float32)
        y = y + b_ref[...]
        h = _apply_act(y, act)
    o_ref[...] = h.astype(o_ref.dtype)


def _fused_forward(x_pad, layer_params, act, out_pad_dim):
    """One pallas_call running all layers, tiled over the (padded) batch."""
    m_pad, in_pad_dim = x_pad.shape
    n_layers = len(layer_params)
    n_tiles = m_pad // _TILE_M

    flat_inputs = [x_pad]
    in_specs = [pl.BlockSpec((_TILE_M, in_pad_dim), lambda i: (i, 0))]
    for (w, b) in layer_params:
        flat_inputs += [w, b]
        # Constant block index -> fetched once, kept VMEM-resident across tiles.
        in_specs += [pl.BlockSpec(w.shape, lambda i: (0, 0)),
                     pl.BlockSpec(b.shape, lambda i: (0, 0))]

    return pl.pallas_call(
        functools.partial(_fused_mlp_kernel, n_layers=n_layers, act=act),
        out_shape=jax.ShapeDtypeStruct((m_pad, out_pad_dim), jnp.bfloat16),
        grid=(n_tiles,),
        in_specs=in_specs,
        out_specs=pl.BlockSpec((_TILE_M, out_pad_dim), lambda i: (i, 0)),
        compiler_params=pltpu.CompilerParams(
            dimension_semantics=("parallel",),       # independent batch tiles
            vmem_limit_bytes=32 << 20),
    )(*flat_inputs)


# ------------------------------- Model setup --------------------------------

def init_params(key):
    """Deterministic synthetic params (PyTorch-Linear-like uniform init),
    zero-padded to lane-multiple shapes, weights cast to bf16, biases kept
    f32 and pre-reshaped to (1, N_pad)."""
    params = []
    for (fan_in, fan_out), (kp, np_) in zip(_LAYER_DIMS, _LAYER_DIMS_PAD):
        key, kw, kb = jax.random.split(key, 3)
        bound = 1.0 / jnp.sqrt(fan_in)
        w = jax.random.uniform(kw, (fan_in, fan_out), jnp.float32, -bound, bound)
        b = jax.random.uniform(kb, (fan_out,), jnp.float32, -bound, bound)
        # Zero-pad: padded K rows multiply padded (zero) activations; padded N
        # cols produce act(0), which is annihilated by the zero-padded weight
        # rows of the next layer, and the final padded cols/rows are sliced off.
        w_pad = jnp.zeros((kp, np_), jnp.float32).at[:fan_in, :fan_out].set(w)
        b_pad = jnp.zeros((1, np_), jnp.float32).at[0, :fan_out].set(b)
        params.append((w_pad.astype(jnp.bfloat16), b_pad))
    return params


@functools.partial(jax.jit, static_argnames=("recover", "act"))
def nn_encoder_forward(params, x, recover=False, act="ReLU"):
    """Matches NNencoder.forward: x.view(-1, 784) then 4 (or 8) gated linears."""
    h = x.reshape(-1, _IN_DIM)                        # same as torch view(-1, 784)
    rows = h.shape[0]
    m_pad = max(_TILE_M, _round_up(rows, _TILE_M))    # full 128-row batch tiles
    x_pad = jnp.zeros((m_pad, _IN_DIM_PAD), jnp.bfloat16)
    x_pad = x_pad.at[:rows, :_IN_DIM].set(h.astype(jnp.bfloat16))

    n_layers = 8 if recover else 4
    out_dim, out_pad_dim = ((_REC_OUT, _REC_OUT_PAD) if recover
                            else (_ENC_OUT, _ENC_OUT_PAD))

    out_pad = _fused_forward(x_pad, params[:n_layers], act, out_pad_dim)
    return out_pad[:rows, :out_dim].astype(jnp.float32)


# ------------------------------- Reference ----------------------------------

def ref_forward(params, x, recover=False, act="ReLU"):
    """Plain-JAX reference using the same bf16 weights / bf16 LHS / f32 accum."""
    h = x.reshape(-1, _IN_DIM).astype(jnp.bfloat16)
    h = jnp.pad(h, ((0, 0), (0, _IN_DIM_PAD - _IN_DIM)))
    n_layers = 8 if recover else 4
    for i in range(n_layers):
        w, b = params[i]
        y = jnp.dot(h.astype(w.dtype), w, preferred_element_type=jnp.float32) + b
        h = _apply_act(y, act)
    out_dim = _REC_OUT if recover else _ENC_OUT
    return h[:, :out_dim]


# ---------------------------------- Main -------------------------------------

if __name__ == "__main__":
    key = jax.random.PRNGKey(0)
    kp, kx = jax.random.split(key)

    params = init_params(kp)

    batch = 2
    x = jax.random.normal(kx, (batch, 1, 28, 28), jnp.float32)  # NCHW, 784 px

    # Default path (recover=False): output (batch, 100)
    out = jax.block_until_ready(nn_encoder_forward(params, x, recover=False))
    assert out.shape == (batch, 100), out.shape

    # Recover path (recover=True): output (batch, 784)
    out_rec = jax.block_until_ready(nn_encoder_forward(params, x, recover=True))
    assert out_rec.shape == (batch, 784), out_rec.shape

    # Cross-check against a plain-JAX reference of the same bf16-weight math.
    # (Kernel output is rounded through bf16 for HBM traffic, so allow ~1 ulp
    #  of bf16 relative error on top of accumulation-order noise.)
    ref = ref_forward(params, x, recover=False)
    assert jnp.allclose(out, ref, atol=2e-2, rtol=2e-2), (
        float(jnp.max(jnp.abs(out - ref))))
    ref_r = ref_forward(params, x, recover=True)
    assert jnp.allclose(out_rec, ref_r, atol=2e-2, rtol=2e-2), (
        float(jnp.max(jnp.abs(out_rec - ref_r))))

    print("KERNEL_OK")
</pallas_src>

<mosaic_0001>
module attributes {stable_mosaic.version = 11 : i64} {
  func.func @_fused_mlp_kernel(%arg0: i32, %arg1: memref<128x896xbf16, #tpu.memory_space<vmem>>, %arg2: memref<896x1024xbf16, #tpu.memory_space<vmem>>, %arg3: memref<1x1024xf32, #tpu.memory_space<vmem>>, %arg4: memref<1024x512xbf16, #tpu.memory_space<vmem>>, %arg5: memref<1x512xf32, #tpu.memory_space<vmem>>, %arg6: memref<512x128xbf16, #tpu.memory_space<vmem>>, %arg7: memref<1x128xf32, #tpu.memory_space<vmem>>, %arg8: memref<128x128xbf16, #tpu.memory_space<vmem>>, %arg9: memref<1x128xf32, #tpu.memory_space<vmem>>, %arg10: memref<128x128xbf16, #tpu.memory_space<vmem>>) attributes {dimension_semantics = [#tpu.dimension_semantics<parallel>], iteration_bounds = array<i64: 1>, scalar_prefetch = 0 : i64, scratch_operands = 0 : i64, tpu.core_type = #tpu.core_type<tc>, window_params = [{transform_indices = @transform_0, window_bounds = array<i64: 128, 896>}, {pipeline_mode = #tpu.pipeline_mode<synchronous>, transform_indices = @transform_1, window_bounds = array<i64: 896, 1024>}, {pipeline_mode = #tpu.pipeline_mode<synchronous>, transform_indices = @transform_2, window_bounds = array<i64: 1, 1024>}, {pipeline_mode = #tpu.pipeline_mode<synchronous>, transform_indices = @transform_3, window_bounds = array<i64: 1024, 512>}, {pipeline_mode = #tpu.pipeline_mode<synchronous>, transform_indices = @transform_4, window_bounds = array<i64: 1, 512>}, {pipeline_mode = #tpu.pipeline_mode<synchronous>, transform_indices = @transform_5, window_bounds = array<i64: 512, 128>}, {pipeline_mode = #tpu.pipeline_mode<synchronous>, transform_indices = @transform_6, window_bounds = array<i64: 1, 128>}, {pipeline_mode = #tpu.pipeline_mode<synchronous>, transform_indices = @transform_7, window_bounds = array<i64: 128, 128>}, {pipeline_mode = #tpu.pipeline_mode<synchronous>, transform_indices = @transform_8, window_bounds = array<i64: 1, 128>}, {transform_indices = @transform_9, window_bounds = array<i64: 128, 128>}]} {
    %c0 = arith.constant 0 : index
    %c0_0 = arith.constant 0 : index
    %0 = vector.load %arg1[%c0, %c0_0] : memref<128x896xbf16, #tpu.memory_space<vmem>>, vector<128x896xbf16>
    %c0_1 = arith.constant 0 : index
    %c0_2 = arith.constant 0 : index
    %1 = vector.load %arg2[%c0_1, %c0_2] : memref<896x1024xbf16, #tpu.memory_space<vmem>>, vector<896x1024xbf16>
    %cst = arith.constant dense<0.000000e+00> : vector<128x1024xf32>
    %2 = tpu.matmul %0, %1, %cst {dimension_numbers = #tpu.dot_dimension_numbers<[1], [0], [0], [1], [0, 0, 1, 1], [], []>} : vector<128x896xbf16>, vector<896x1024xbf16>, vector<128x1024xf32> -> vector<128x1024xf32>
    %c0_3 = arith.constant 0 : index
    %c0_4 = arith.constant 0 : index
    %3 = vector.load %arg3[%c0_3, %c0_4] : memref<1x1024xf32, #tpu.memory_space<vmem>>, vector<1x1024xf32>
    %4 = vector.broadcast %3 : vector<1x1024xf32> to vector<128x1024xf32>
    %5 = arith.addf %2, %4 : vector<128x1024xf32>
    %cst_5 = arith.constant 0.000000e+00 : f32
    %6 = vector.broadcast %cst_5 : f32 to vector<128x1024xf32>
    %7 = arith.maximumf %5, %6 : vector<128x1024xf32>
    %8 = arith.truncf %7 : vector<128x1024xf32> to vector<128x1024xbf16>
    %c0_6 = arith.constant 0 : index
    %c0_7 = arith.constant 0 : index
    %9 = vector.load %arg4[%c0_6, %c0_7] : memref<1024x512xbf16, #tpu.memory_space<vmem>>, vector<1024x512xbf16>
    %cst_8 = arith.constant dense<0.000000e+00> : vector<128x512xf32>
    %10 = tpu.matmul %8, %9, %cst_8 {dimension_numbers = #tpu.dot_dimension_numbers<[1], [0], [0], [1], [0, 0, 1, 1], [], []>} : vector<128x1024xbf16>, vector<1024x512xbf16>, vector<128x512xf32> -> vector<128x512xf32>
    %c0_9 = arith.constant 0 : index
    %c0_10 = arith.constant 0 : index
    %11 = vector.load %arg5[%c0_9, %c0_10] : memref<1x512xf32, #tpu.memory_space<vmem>>, vector<1x512xf32>
    %12 = vector.broadcast %11 : vector<1x512xf32> to vector<128x512xf32>
    %13 = arith.addf %10, %12 : vector<128x512xf32>
    %cst_11 = arith.constant 0.000000e+00 : f32
    %14 = vector.broadcast %cst_11 : f32 to vector<128x512xf32>
    %15 = arith.maximumf %13, %14 : vector<128x512xf32>
    %16 = arith.truncf %15 : vector<128x512xf32> to vector<128x512xbf16>
    %c0_12 = arith.constant 0 : index
    %c0_13 = arith.constant 0 : index
    %17 = vector.load %arg6[%c0_12, %c0_13] : memref<512x128xbf16, #tpu.memory_space<vmem>>, vector<512x128xbf16>
    %cst_14 = arith.constant dense<0.000000e+00> : vector<128x128xf32>
    %18 = tpu.matmul %16, %17, %cst_14 {dimension_numbers = #tpu.dot_dimension_numbers<[1], [0], [0], [1], [0, 0, 1, 1], [], []>} : vector<128x512xbf16>, vector<512x128xbf16>, vector<128x128xf32> -> vector<128x128xf32>
    %c0_15 = arith.constant 0 : index
    %c0_16 = arith.constant 0 : index
    %19 = vector.load %arg7[%c0_15, %c0_16] : memref<1x128xf32, #tpu.memory_space<vmem>>, vector<1x128xf32>
    %20 = vector.broadcast %19 : vector<1x128xf32> to vector<128x128xf32>
    %21 = arith.addf %18, %20 : vector<128x128xf32>
    %cst_17 = arith.constant 0.000000e+00 : f32
    %22 = vector.broadcast %cst_17 : f32 to vector<128x128xf32>
    %23 = arith.maximumf %21, %22 : vector<128x128xf32>
    %24 = arith.truncf %23 : vector<128x128xf32> to vector<128x128xbf16>
    %c0_18 = arith.constant 0 : index
    %c0_19 = arith.constant 0 : index
    %25 = vector.load %arg8[%c0_18, %c0_19] : memref<128x128xbf16, #tpu.memory_space<vmem>>, vector<128x128xbf16>
    %cst_20 = arith.constant dense<0.000000e+00> : vector<128x128xf32>
    %26 = tpu.matmul %24, %25, %cst_20 {dimension_numbers = #tpu.dot_dimension_numbers<[1], [0], [0], [1], [0, 0, 1, 1], [], []>} : vector<128x128xbf16>, vector<128x128xbf16>, vector<128x128xf32> -> vector<128x128xf32>
    %c0_21 = arith.constant 0 : index
    %c0_22 = arith.constant 0 : index
    %27 = vector.load %arg9[%c0_21, %c0_22] : memref<1x128xf32, #tpu.memory_space<vmem>>, vector<1x128xf32>
    %28 = vector.broadcast %27 : vector<1x128xf32> to vector<128x128xf32>
    %29 = arith.addf %26, %28 : vector<128x128xf32>
    %cst_23 = arith.constant 0.000000e+00 : f32
    %30 = vector.broadcast %cst_23 : f32 to vector<128x128xf32>
    %31 = arith.maximumf %29, %30 : vector<128x128xf32>
    %32 = arith.truncf %31 : vector<128x128xf32> to vector<128x128xbf16>
    %c0_24 = arith.constant 0 : index
    %c0_25 = arith.constant 0 : index
    %33 = vector.load %arg10[%c0_24, %c0_25] : memref<128x128xbf16, #tpu.memory_space<vmem>>, vector<128x128xbf16>
    tpu.vector_store %arg10[%c0_24, %c0_25], %32 {strides = array<i32>} : memref<128x128xbf16, #tpu.memory_space<vmem>>, vector<128x128xbf16>,
    return
  }
  func.func @transform_0(%arg0: i32) -> (i32, i32) {
    %c0_i32 = arith.constant 0 : i32
    %c0_i32_0 = arith.constant 0 : i32
    return %arg0, %c0_i32 : i32, i32
  }
  func.func @transform_1(%arg0: i32) -> (i32, i32) {
    %c0_i32 = arith.constant 0 : i32
    %c0_i32_0 = arith.constant 0 : i32
    %c0_i32_1 = arith.constant 0 : i32
    return %c0_i32, %c0_i32_0 : i32, i32
  }
  func.func @transform_2(%arg0: i32) -> (i32, i32) {
    %c0_i32 = arith.constant 0 : i32
    %c0_i32_0 = arith.constant 0 : i32
    %c0_i32_1 = arith.constant 0 : i32
    return %c0_i32, %c0_i32_0 : i32, i32
  }
  func.func @transform_3(%arg0: i32) -> (i32, i32) {
    %c0_i32 = arith.constant 0 : i32
    %c0_i32_0 = arith.constant 0 : i32
    %c0_i32_1 = arith.constant 0 : i32
    return %c0_i32, %c0_i32_0 : i32, i32
  }
  func.func @transform_4(%arg0: i32) -> (i32, i32) {
    %c0_i32 = arith.constant 0 : i32
    %c0_i32_0 = arith.constant 0 : i32
    %c0_i32_1 = arith.constant 0 : i32
    return %c0_i32, %c0_i32_0 : i32, i32
  }
  func.func @transform_5(%arg0: i32) -> (i32, i32) {
    %c0_i32 = arith.constant 0 : i32
    %c0_i32_0 = arith.constant 0 : i32
    %c0_i32_1 = arith.constant 0 : i32
    return %c0_i32, %c0_i32_0 : i32, i32
  }
  func.func @transform_6(%arg0: i32) -> (i32, i32) {
    %c0_i32 = arith.constant 0 : i32
    %c0_i32_0 = arith.constant 0 : i32
    %c0_i32_1 = arith.constant 0 : i32
    return %c0_i32, %c0_i32_0 : i32, i32
  }
  func.func @transform_7(%arg0: i32) -> (i32, i32) {
    %c0_i32 = arith.constant 0 : i32
    %c0_i32_0 = arith.constant 0 : i32
    %c0_i32_1 = arith.constant 0 : i32
    return %c0_i32, %c0_i32_0 : i32, i32
  }
  func.func @transform_8(%arg0: i32) -> (i32, i32) {
    %c0_i32 = arith.constant 0 : i32
    %c0_i32_0 = arith.constant 0 : i32
    %c0_i32_1 = arith.constant 0 : i32
    return %c0_i32, %c0_i32_0 : i32, i32
  }
  func.func @transform_9(%arg0: i32) -> (i32, i32) {
    %c0_i32 = arith.constant 0 : i32
    %c0_i32_0 = arith.constant 0 : i32
    return %arg0, %c0_i32 : i32, i32
  }
}

</mosaic_0001>

<llo_original>
// kernel: nn_encoder_forward.1
$region0: #{nn_encoder_forward.1}
  #allocation0 [shape = 'u32[]', space=smem, size = 0x4, offset = 0x4, fixed_abs, tag = 'smem constant byte address 0x4 - core index']
  #allocation1 [shape = 'u32[144,128]{1,0:T(1,128)}', space=vmem, size = 0x12000, scoped, tag = 'internal scratch']
  %s0 = inlined_call_operand.vmem [shape: bf16[128,896], index: 0, kind: input, shape index: {}]
  %s1 = inlined_call_operand.hbm [shape: bf16[896,1024], index: 1, kind: input, shape index: {}]
  %s2 = inlined_call_operand.hbm [shape: f32[1,1024], index: 2, kind: input, shape index: {}]
  %s3 = inlined_call_operand.hbm [shape: bf16[1024,512], index: 3, kind: input, shape index: {}]
  %s4 = inlined_call_operand.hbm [shape: f32[1,512], index: 4, kind: input, shape index: {}]
  %s5 = inlined_call_operand.hbm [shape: bf16[512,128], index: 5, kind: input, shape index: {}]
  %s6 = inlined_call_operand.hbm [shape: f32[1,128], index: 6, kind: input, shape index: {}]
  %s7 = inlined_call_operand.hbm [shape: bf16[128,128], index: 7, kind: input, shape index: {}]
  %s8 = inlined_call_operand.hbm [shape: f32[1,128], index: 8, kind: input, shape index: {}]
  %s9 = inlined_call_operand.vmem [shape: bf16[128,128], index: 9, kind: output, shape index: {}]
  %s10 = sld [smem:[#allocation0]]
  $region78: #{nn_encoder_forward.1} parent=0
    _
  %s12 = ssub.s32 1, %s10
  %s13 = scalar_select 0, %s12, %s10
  $region1: #{nn_encoder_forward.1} parent=0
    #allocation2 [shape = 'u8[1835008]{0}', space=vmem, size = 0x1c0000, scoped, tag = 'input window, operand 1, single buffered']
    #allocation3 [shape = 's32[1]{0}', space=sflag, size = 0x4, scoped, tag = 'scoped memory for nn_encoder_forward.1']
    #allocation4 [shape = 'u8[4096]{0}', space=vmem, size = 0x1000, scoped, tag = 'input window, operand 2, single buffered']
    #allocation5 [shape = 's32[1]{0}', space=sflag, size = 0x4, scoped, tag = 'scoped memory for nn_encoder_forward.1']
    #allocation6 [shape = 'u8[1048576]{0}', space=vmem, size = 0x100000, scoped, tag = 'input window, operand 3, single buffered']
    #allocation7 [shape = 'u8[2048]{0}', space=vmem, size = 0x800, scoped, tag = 'input window, operand 4, single buffered']
    #allocation8 [shape = 's32[1]{0}', space=sflag, size = 0x4, scoped, tag = 'scoped memory for nn_encoder_forward.1']
    #allocation9 [shape = 'u8[131072]{0}', space=vmem, size = 0x20000, scoped, tag = 'input window, operand 5, single buffered']
    #allocation10 [shape = 'u8[512]{0}', space=vmem, size = 0x400, scoped, tag = 'input window, operand 6, single buffered']
    #allocation11 [shape = 's32[1]{0}', space=sflag, size = 0x4, scoped, tag = 'scoped memory for nn_encoder_forward.1']
    #allocation12 [shape = 'u8[32768]{0}', space=vmem, size = 0x8000, scoped, tag = 'input window, operand 7, single buffered']
    #allocation13 [shape = 'u8[512]{0}', space=vmem, size = 0x400, scoped, tag = 'input window, operand 8, single buffered']
    #allocation14 [shape = 's32[1]{0}', space=sflag, size = 0x4, scoped, tag = 'scoped memory for nn_encoder_forward.1']
    %14 = vsyncpa [#allocation3], 0
    %15 = vsyncpa [#allocation5], 0
    %16 = vsyncpa [#allocation8], 0
    %17 = vsyncpa [#allocation11], 0
    %18 = vsyncpa [#allocation14], 0
    // Predicated region
    $region2: #{nn_encoder_forward.1} parent=1 // pred_check
      _
    $region3: #{nn_encoder_forward.1} parent=1 // pred_check_branch
      %20 = sbr.rel (0) target = $region5
    $region4: #{nn_encoder_forward.1} parent=1 // pred_region
      _
    $region5: #{nn_encoder_forward.1} parent=1 // pred_fallthru
      _
    // Predicated region
    $region6: #{nn_encoder_forward.1} parent=1 // pred_check
      _
    $region7: #{nn_encoder_forward.1} parent=1 // pred_check_branch
      %22 = sbr.rel (0) target = $region9
    $region8: #{nn_encoder_forward.1} parent=1 // pred_region
      %s24 = ssub.s32 57344, 57344
      %25 = vsyncadd [#allocation3], %s24
      %s26 = sshll.u32 [#allocation2], 4
      %s27 = int_to_ptr.vmem [resolvable:$true] %s26
      %32 = dma.hbm_to_vmem [thread:$0]  %s1, 57344, %s27, [#allocation3], 512, 512, 32
    $region9: #{nn_encoder_forward.1} parent=1 // pred_fallthru
      _
    // Predicated region
    $region10: #{nn_encoder_forward.1} parent=1 // pred_check
      _
    $region11: #{nn_encoder_forward.1} parent=1 // pred_check_branch
      %34 = sbr.rel (0) target = $region13
    $region12: #{nn_encoder_forward.1} parent=1 // pred_region
      %s36 = ssub.s32 128, 128
      %37 = vsyncadd [#allocation5], %s36
      %s39 = sshll.u32 [#allocation4], 4
      %s40 = int_to_ptr.vmem [resolvable:$true] %s39
      %42 = dma.hbm_to_vmem [thread:$0]  %s2, 128, %s40, [#allocation5]
    $region13: #{nn_encoder_forward.1} parent=1 // pred_fallthru
      _
    // Predicated region
    $region14: #{nn_encoder_forward.1} parent=1 // pred_check
      _
    $region15: #{nn_encoder_forward.1} parent=1 // pred_check_branch
      %44 = sbr.rel (0) target = $region17
    $region16: #{nn_encoder_forward.1} parent=1 // pred_region
      %s46 = ssub.s32 32768, 32768
      %47 = vsyncadd [#allocation5], %s46
      %s48 = sshll.u32 [#allocation6], 4
      %s49 = int_to_ptr.vmem [resolvable:$true] %s48
      %54 = dma.hbm_to_vmem [thread:$0]  %s3, 32768, %s49, [#allocation5], 256, 256, 16
    $region17: #{nn_encoder_forward.1} parent=1 // pred_fallthru
      _
    // Predicated region
    $region18: #{nn_encoder_forward.1} parent=1 // pred_check
      _
    $region19: #{nn_encoder_forward.1} parent=1 // pred_check_branch
      %56 = sbr.rel (0) target = $region21
    $region20: #{nn_encoder_forward.1} parent=1 // pred_region
      %s58 = ssub.s32 64, 64
      %59 = vsyncadd [#allocation8], %s58
      %s61 = sshll.u32 [#allocation7], 4
      %s62 = int_to_ptr.vmem [resolvable:$true] %s61
      %64 = dma.hbm_to_vmem [thread:$0]  %s4, 64, %s62, [#allocation8]
    $region21: #{nn_encoder_forward.1} parent=1 // pred_fallthru
      _
    // Predicated region
    $region22: #{nn_encoder_forward.1} parent=1 // pred_check
      _
    $region23: #{nn_encoder_forward.1} parent=1 // pred_check_branch
      %66 = sbr.rel (0) target = $region25
    $region24: #{nn_encoder_forward.1} parent=1 // pred_region
      %s68 = ssub.s32 4096, 4096
      %69 = vsyncadd [#allocation8], %s68
      %s70 = sshll.u32 [#allocation9], 4
      %s71 = int_to_ptr.vmem [resolvable:$true] %s70
      %76 = dma.hbm_to_vmem [thread:$0]  %s5, 4096, %s71, [#allocation8], 64, 64, 4
    $region25: #{nn_encoder_forward.1} parent=1 // pred_fallthru
      _
    // Predicated region
    $region26: #{nn_encoder_forward.1} parent=1 // pred_check
      _
    $region27: #{nn_encoder_forward.1} parent=1 // pred_check_branch
      %78 = sbr.rel (0) target = $region29
    $region28: #{nn_encoder_forward.1} parent=1 // pred_region
      %s80 = ssub.s32 16, 16
      %81 = vsyncadd [#allocation11], %s80
      %s83 = sshll.u32 [#allocation10], 4
      %s84 = int_to_ptr.vmem [resolvable:$true] %s83
      %86 = dma.hbm_to_vmem [thread:$0]  %s6, 16, %s84, [#allocation11]
    $region29: #{nn_encoder_forward.1} parent=1 // pred_fallthru
      _
    // Predicated region
    $region30: #{nn_encoder_forward.1} parent=1 // pred_check
      _
    $region31: #{nn_encoder_forward.1} parent=1 // pred_check_branch
      %88 = sbr.rel (0) target = $region33
    $region32: #{nn_encoder_forward.1} parent=1 // pred_region
      %s90 = ssub.s32 1024, 1024
      %91 = vsyncadd [#allocation11], %s90
      %s92 = sshll.u32 [#allocation12], 4
      %s93 = int_to_ptr.vmem [resolvable:$true] %s92
      %98 = dma.hbm_to_vmem [thread:$0]  %s7, 1024, %s93, [#allocation11], 64, 64, 4
    $region33: #{nn_encoder_forward.1} parent=1 // pred_fallthru
      _
    // Predicated region
    $region34: #{nn_encoder_forward.1} parent=1 // pred_check
      _
    $region35: #{nn_encoder_forward.1} parent=1 // pred_check_branch
      %100 = sbr.rel (0) target = $region37
    $region36: #{nn_encoder_forward.1} parent=1 // pred_region
      %s102 = ssub.s32 16, 16
      %103 = vsyncadd [#allocation14], %s102
      %s105 = sshll.u32 [#allocation13], 4
      %s106 = int_to_ptr.vmem [resolvable:$true] %s105
      %108 = dma.hbm_to_vmem [thread:$0]  %s8, 16, %s106, [#allocation14]
    $region37: #{nn_encoder_forward.1} parent=1 // pred_fallthru
      _
    // Predicated region
    $region38: #{nn_encoder_forward.1} parent=1 // pred_check
      _
    $region39: #{nn_encoder_forward.1} parent=1 // pred_check_branch
      %110 = sbr.rel (0) target = $region41
    $region40: #{nn_encoder_forward.1} parent=1 // pred_region
      %111 = dma.done [#allocation3], 57344
    $region41: #{nn_encoder_forward.1} parent=1 // pred_fallthru
      _
    // Predicated region
    $region42: #{nn_encoder_forward.1} parent=1 // pred_check
      _
    $region43: #{nn_encoder_forward.1} parent=1 // pred_check_branch
      %113 = sbr.rel (0) target = $region45
    $region44: #{nn_encoder_forward.1} parent=1 // pred_region
      %114 = dma.done [#allocation5], 128
    $region45: #{nn_encoder_forward.1} parent=1 // pred_fallthru
      _
    // Predicated region
    $region46: #{nn_encoder_forward.1} parent=1 // pred_check
      _
    $region47: #{nn_encoder_forward.1} parent=1 // pred_check_branch
      %116 = sbr.rel (0) target = $region49
    $region48: #{nn_encoder_forward.1} parent=1 // pred_region
      %117 = dma.done [#allocation5], 32768
    $region49: #{nn_encoder_forward.1} parent=1 // pred_fallthru
      _
    // Predicated region
    $region50: #{nn_encoder_forward.1} parent=1 // pred_check
      _
    $region51: #{nn_encoder_forward.1} parent=1 // pred_check_branch
      %119 = sbr.rel (0) target = $region53
    $region52: #{nn_encoder_forward.1} parent=1 // pred_region
      %120 = dma.done [#allocation8], 64
    $region53: #{nn_encoder_forward.1} parent=1 // pred_fallthru
      _
    // Predicated region
    $region54: #{nn_encoder_forward.1} parent=1 // pred_check
      _
    $region55: #{nn_encoder_forward.1} parent=1 // pred_check_branch
      %122 = sbr.rel (0) target = $region57
    $region56: #{nn_encoder_forward.1} parent=1 // pred_region
      %123 = dma.done [#allocation8], 4096
    $region57: #{nn_encoder_forward.1} parent=1 // pred_fallthru
      _
    // Predicated region
    $region58: #{nn_encoder_forward.1} parent=1 // pred_check
      _
    $region59: #{nn_encoder_forward.1} parent=1 // pred_check_branch
      %125 = sbr.rel (0) target = $region61
    $region60: #{nn_encoder_forward.1} parent=1 // pred_region
      %126 = dma.done [#allocation11], 16
    $region61: #{nn_encoder_forward.1} parent=1 // pred_fallthru
      _
    // Predicated region
    $region62: #{nn_encoder_forward.1} parent=1 // pred_check
      _
    $region63: #{nn_encoder_forward.1} parent=1 // pred_check_branch
      %128 = sbr.rel (0) target = $region65
    $region64: #{nn_encoder_forward.1} parent=1 // pred_region
      %129 = dma.done [#allocation11], 1024
    $region65: #{nn_encoder_forward.1} parent=1 // pred_fallthru
      _
    // Predicated region
    $region66: #{nn_encoder_forward.1} parent=1 // pred_check
      _
    $region67: #{nn_encoder_forward.1} parent=1 // pred_check_branch
      %131 = sbr.rel (0) target = $region69
    $region68: #{nn_encoder_forward.1} parent=1 // pred_region
      %132 = dma.done [#allocation14], 16
    $region69: #{nn_encoder_forward.1} parent=1 // pred_fallthru
      _
    %v134 = vld [vmem:[%s0] sm:$0xff]
    %v135 = vld [vmem:[%s0 + $0x8] sm:$0xff]
    %v136 = vld [vmem:[%s0 + $0x10] sm:$0xff]
    %v137 = vld [vmem:[%s0 + $0x18] sm:$0xf]
    %v138 = vld [vmem:[%s0 + $0x1c] sm:$0xff]
    %v139 = vld [vmem:[%s0 + $0x24] sm:$0xff]
    %v140 = vld [vmem:[%s0 + $0x2c] sm:$0xff]
    %v141 = vld [vmem:[%s0 + $0x34] sm:$0xf]
    %v142 = vld [vmem:[%s0 + $0x38] sm:$0xff]
    %v143 = vld [vmem:[%s0 + $0x40] sm:$0xff]
    %v144 = vld [vmem:[%s0 + $0x48] sm:$0xff]
    %v145 = vld [vmem:[%s0 + $0x50] sm:$0xf]
    %v146 = vld [vmem:[%s0 + $0x54] sm:$0xff]
    %v147 = vld [vmem:[%s0 + $0x5c] sm:$0xff]
    %v148 = vld [vmem:[%s0 + $0x64] sm:$0xff]
    %v149 = vld [vmem:[%s0 + $0x6c] sm:$0xf]
    %v150 = vld [vmem:[%s0 + $0x70] sm:$0xff]
    %v151 = vld [vmem:[%s0 + $0x78] sm:$0xff]
    %v152 = vld [vmem:[%s0 + $0x80] sm:$0xff]
    %v153 = vld [vmem:[%s0 + $0x88] sm:$0xf]
    %v154 = vld [vmem:[%s0 + $0x8c] sm:$0xff]
    %v155 = vld [vmem:[%s0 + $0x94] sm:$0xff]
    %v156 = vld [vmem:[%s0 + $0x9c] sm:$0xff]
    %v157 = vld [vmem:[%s0 + $0xa4] sm:$0xf]
    %v158 = vld [vmem:[%s0 + $0xa8] sm:$0xff]
    %v159 = vld [vmem:[%s0 + $0xb0] sm:$0xff]
    %v160 = vld [vmem:[%s0 + $0xb8] sm:$0xff]
    %v161 = vld [vmem:[%s0 + $0xc0] sm:$0xf]
    %v162 = vld [vmem:[%s0 + $0xc4] sm:$0xff]
    %v163 = vld [vmem:[%s0 + $0xcc] sm:$0xff]
    %v164 = vld [vmem:[%s0 + $0xd4] sm:$0xff]
    %v165 = vld [vmem:[%s0 + $0xdc] sm:$0xf]
    %v166 = vld [vmem:[%s0 + $0xe0] sm:$0xff]
    %v167 = vld [vmem:[%s0 + $0xe8] sm:$0xff]
    %v168 = vld [vmem:[%s0 + $0xf0] sm:$0xff]
    %v169 = vld [vmem:[%s0 + $0xf8] sm:$0xf]
    %v170 = vld [vmem:[%s0 + $0xfc] sm:$0xff]
    %v171 = vld [vmem:[%s0 + $0x104] sm:$0xff]
    %v172 = vld [vmem:[%s0 + $0x10c] sm:$0xff]
    %v173 = vld [vmem:[%s0 + $0x114] sm:$0xf]
    %v174 = vld [vmem:[%s0 + $0x118] sm:$0xff]
    %v175 = vld [vmem:[%s0 + $0x120] sm:$0xff]
    %v176 = vld [vmem:[%s0 + $0x128] sm:$0xff]
    %v177 = vld [vmem:[%s0 + $0x130] sm:$0xf]
    %v178 = vld [vmem:[%s0 + $0x134] sm:$0xff]
    %v179 = vld [vmem:[%s0 + $0x13c] sm:$0xff]
    %v180 = vld [vmem:[%s0 + $0x144] sm:$0xff]
    %v181 = vld [vmem:[%s0 + $0x14c] sm:$0xf]
    %v182 = vld [vmem:[%s0 + $0x150] sm:$0xff]
    %v183 = vld [vmem:[%s0 + $0x158] sm:$0xff]
    %v184 = vld [vmem:[%s0 + $0x160] sm:$0xff]
    %v185 = vld [vmem:[%s0 + $0x168] sm:$0xf]
    %v186 = vld [vmem:[%s0 + $0x16c] sm:$0xff]
    %v187 = vld [vmem:[%s0 + $0x174] sm:$0xff]
    %v188 = vld [vmem:[%s0 + $0x17c] sm:$0xff]
    %v189 = vld [vmem:[%s0 + $0x184] sm:$0xf]
    %v190 = vld [vmem:[%s0 + $0x188] sm:$0xff]
    %v191 = vld [vmem:[%s0 + $0x190] sm:$0xff]
    %v192 = vld [vmem:[%s0 + $0x198] sm:$0xff]
    %v193 = vld [vmem:[%s0 + $0x1a0] sm:$0xf]
    %v194 = vld [vmem:[%s0 + $0x1a4] sm:$0xff]
    %v195 = vld [vmem:[%s0 + $0x1ac] sm:$0xff]
    %v196 = vld [vmem:[%s0 + $0x1b4] sm:$0xff]
    %v197 = vld [vmem:[%s0 + $0x1bc] sm:$0xf]
    %v198 = vld [vmem:[#allocation2] sm:$0xff]
    %v199 = vld [vmem:[#allocation2 + $0x8] sm:$0xff]
    %v200 = vld [vmem:[#allocation2 + $0x10] sm:$0xff]
    %v201 = vld [vmem:[#allocation2 + $0x18] sm:$0xff]
    %v202 = vld [vmem:[#allocation2 + $0x20] sm:$0xff]
    %v203 = vld [vmem:[#allocation2 + $0x28] sm:$0xff]
    %v204 = vld [vmem:[#allocation2 + $0x30] sm:$0xff]
    %v205 = vld [vmem:[#allocation2 + $0x38] sm:$0xff]
    %v206 = vld [vmem:[#allocation2 + $0x40] sm:$0xff]
    %v207 = vld [vmem:[#allocation2 + $0x48] sm:$0xff]
    %v208 = vld [vmem:[#allocation2 + $0x50] sm:$0xff]
    %v209 = vld [vmem:[#allocation2 + $0x58] sm:$0xff]
    %v210 = vld [vmem:[#allocation2 + $0x60] sm:$0xff]
    %v211 = vld [vmem:[#allocation2 + $0x68] sm:$0xff]
    %v212 = vld [vmem:[#allocation2 + $0x70] sm:$0xff]
    %v213 = vld [vmem:[#allocation2 + $0x78] sm:$0xff]
    %v214 = vld [vmem:[#allocation2 + $0x80] sm:$0xff]
    %v215 = vld [vmem:[#allocation2 + $0x88] sm:$0xff]
    %v216 = vld [vmem:[#allocation2 + $0x90] sm:$0xff]
    %v217 = vld [vmem:[#allocation2 + $0x98] sm:$0xff]
    %v218 = vld [vmem:[#allocation2 + $0xa0] sm:$0xff]
    %v219 = vld [vmem:[#allocation2 + $0xa8] sm:$0xff]
    %v220 = vld [vmem:[#allocation2 + $0xb0] sm:$0xff]
    %v221 = vld [vmem:[#allocation2 + $0xb8] sm:$0xff]
    %v222 = vld [vmem:[#allocation2 + $0xc0] sm:$0xff]
    %v223 = vld [vmem:[#allocation2 + $0xc8] sm:$0xff]
    %v224 = vld [vmem:[#allocation2 + $0xd0] sm:$0xff]
    %v225 = vld [vmem:[#allocation2 + $0xd8] sm:$0xff]
    %v226 = vld [vmem:[#allocation2 + $0xe0] sm:$0xff]
    %v227 = vld [vmem:[#allocation2 + $0xe8] sm:$0xff]
    %v228 = vld [vmem:[#allocation2 + $0xf0] sm:$0xff]
    %v229 = vld [vmem:[#allocation2 + $0xf8] sm:$0xff]
    %v230 = vld [vmem:[#allocation2 + $0x100] sm:$0xff]
    %v231 = vld [vmem:[#allocation2 + $0x108] sm:$0xff]
    %v232 = vld [vmem:[#allocation2 + $0x110] sm:$0xff]
    %v233 = vld [vmem:[#allocation2 + $0x118] sm:$0xff]
    %v234 = vld [vmem:[#allocation2 + $0x120] sm:$0xff]
    %v235 = vld [vmem:[#allocation2 + $0x128] sm:$0xff]
    %v236 = vld [vmem:[#allocation2 + $0x130] sm:$0xff]
    %v237 = vld [vmem:[#allocation2 + $0x138] sm:$0xff]
    %v238 = vld [vmem:[#allocation2 + $0x140] sm:$0xff]
    %v239 = vld [vmem:[#allocation2 + $0x148] sm:$0xff]
    %v240 = vld [vmem:[#allocation2 + $0x150] sm:$0xff]
    %v241 = vld [vmem:[#allocation2 + $0x158] sm:$0xff]
    %v242 = vld [vmem:[#allocation2 + $0x160] sm:$0xff]
    %v243 = vld [vmem:[#allocation2 + $0x168] sm:$0xff]
    %v244 = vld [vmem:[#allocation2 + $0x170] sm:$0xff]
    %v245 = vld [vmem:[#allocation2 + $0x178] sm:$0xff]
    %v246 = vld [vmem:[#allocation2 + $0x180] sm:$0xff]
    %v247 = vld [vmem:[#allocation2 + $0x188] sm:$0xff]
    %v248 = vld [vmem:[#allocation2 + $0x190] sm:$0xff]
    %v249 = vld [vmem:[#allocation2 + $0x198] sm:$0xff]
    %v250 = vld [vmem:[#allocation2 + $0x1a0] sm:$0xff]
    %v251 = vld [vmem:[#allocation2 + $0x1a8] sm:$0xff]
    %v252 = vld [vmem:[#allocation2 + $0x1b0] sm:$0xff]
    %v253 = vld [vmem:[#allocation2 + $0x1b8] sm:$0xff]
    %v254 = vld [vmem:[#allocation2 + $0x1c0] sm:$0xff]
    %v255 = vld [vmem:[#allocation2 + $0x1c8] sm:$0xff]
    %v256 = vld [vmem:[#allocation2 + $0x1d0] sm:$0xff]
    %v257 = vld [vmem:[#allocation2 + $0x1d8] sm:$0xff]
    %v258 = vld [vmem:[#allocation2 + $0x1e0] sm:$0xff]
    %v259 = vld [vmem:[#allocation2 + $0x1e8] sm:$0xff]
    %v260 = vld [vmem:[#allocation2 + $0x1f0] sm:$0xff]
    %v261 = vld [vmem:[#allocation2 + $0x1f8] sm:$0xff]
    %v262 = vld [vmem:[#allocation2 + $0x200] sm:$0xff]
    %v263 = vld [vmem:[#allocation2 + $0x208] sm:$0xff]
    %v264 = vld [vmem:[#allocation2 + $0x210] sm:$0xff]
    %v265 = vld [vmem:[#allocation2 + $0x218] sm:$0xff]
    %v266 = vld [vmem:[#allocation2 + $0x220] sm:$0xff]
    %v267 = vld [vmem:[#allocation2 + $0x228] sm:$0xff]
    %v268 = vld [vmem:[#allocation2 + $0x230] sm:$0xff]
    %v269 = vld [vmem:[#allocation2 + $0x238] sm:$0xff]
    %v270 = vld [vmem:[#allocation2 + $0x240] sm:$0xff]
    %v271 = vld [vmem:[#allocation2 + $0x248] sm:$0xff]
    %v272 = vld [vmem:[#allocation2 + $0x250] sm:$0xff]
    %v273 = vld [vmem:[#allocation2 + $0x258] sm:$0xff]
    %v274 = vld [vmem:[#allocation2 + $0x260] sm:$0xff]
    %v275 = vld [vmem:[#allocation2 + $0x268] sm:$0xff]
    %v276 = vld [vmem:[#allocation2 + $0x270] sm:$0xff]
    %v277 = vld [vmem:[#allocation2 + $0x278] sm:$0xff]
    %v278 = vld [vmem:[#allocation2 + $0x280] sm:$0xff]
    %v279 = vld [vmem:[#allocation2 + $0x288] sm:$0xff]
    %v280 = vld [vmem:[#allocation2 + $0x290] sm:$0xff]
    %v281 = vld [vmem:[#allocation2 + $0x298] sm:$0xff]
    %v282 = vld [vmem:[#allocation2 + $0x2a0] sm:$0xff]
    %v283 = vld [vmem:[#allocation2 + $0x2a8] sm:$0xff]
    %v284 = vld [vmem:[#allocation2 + $0x2b0] sm:$0xff]
    %v285 = vld [vmem:[#allocation2 + $0x2b8] sm:$0xff]
    %v286 = vld [vmem:[#allocation2 + $0x2c0] sm:$0xff]
    %v287 = vld [vmem:[#allocation2 + $0x2c8] sm:$0xff]
    %v288 = vld [vmem:[#allocation2 + $0x2d0] sm:$0xff]
    %v289 = vld [vmem:[#allocation2 + $0x2d8] sm:$0xff]
    %v290 = vld [vmem:[#allocation2 + $0x2e0] sm:$0xff]
    %v291 = vld [vmem:[#allocation2 + $0x2e8] sm:$0xff]
    %v292 = vld [vmem:[#allocation2 + $0x2f0] sm:$0xff]
    %v293 = vld [vmem:[#allocation2 + $0x2f8] sm:$0xff]
    %v294 = vld [vmem:[#allocation2 + $0x300] sm:$0xff]
    %v295 = vld [vmem:[#allocation2 + $0x308] sm:$0xff]
    %v296 = vld [vmem:[#allocation2 + $0x310] sm:$0xff]
    %v297 = vld [vmem:[#allocation2 + $0x318] sm:$0xff]
    %v298 = vld [vmem:[#allocation2 + $0x320] sm:$0xff]
    %v299 = vld [vmem:[#allocation2 + $0x328] sm:$0xff]
    %v300 = vld [vmem:[#allocation2 + $0x330] sm:$0xff]
    %v301 = vld [vmem:[#allocation2 + $0x338] sm:$0xff]
    %v302 = vld [vmem:[#allocation2 + $0x340] sm:$0xff]
    %v303 = vld [vmem:[#allocation2 + $0x348] sm:$0xff]
    %v304 = vld [vmem:[#allocation2 + $0x350] sm:$0xff]
    %v305 = vld [vmem:[#allocation2 + $0x358] sm:$0xff]
    %v306 = vld [vmem:[#allocation2 + $0x360] sm:$0xff]
    %v307 = vld [vmem:[#allocation2 + $0x368] sm:$0xff]
    %v308 = vld [vmem:[#allocation2 + $0x370] sm:$0xff]
    %v309 = vld [vmem:[#allocation2 + $0x378] sm:$0xff]
    %v310 = vld [vmem:[#allocation2 + $0x380] sm:$0xff]
    %v311 = vld [vmem:[#allocation2 + $0x388] sm:$0xff]
    %v312 = vld [vmem:[#allocation2 + $0x390] sm:$0xff]
    %v313 = vld [vmem:[#allocation2 + $0x398] sm:$0xff]
    %v314 = vld [vmem:[#allocation2 + $0x3a0] sm:$0xff]
    %v315 = vld [vmem:[#allocation2 + $0x3a8] sm:$0xff]
    %v316 = vld [vmem:[#allocation2 + $0x3b0] sm:$0xff]
    %v317 = vld [vmem:[#allocation2 + $0x3b8] sm:$0xff]
    %v318 = vld [vmem:[#allocation2 + $0x3c0] sm:$0xff]
    %v319 = vld [vmem:[#allocation2 + $0x3c8] sm:$0xff]
    %v320 = vld [vmem:[#allocation2 + $0x3d0] sm:$0xff]
    %v321 = vld [vmem:[#allocation2 + $0x3d8] sm:$0xff]
    %v322 = vld [vmem:[#allocation2 + $0x3e0] sm:$0xff]
    %v323 = vld [vmem:[#allocation2 + $0x3e8] sm:$0xff]
    %v324 = vld [vmem:[#allocation2 + $0x3f0] sm:$0xff]
    %v325 = vld [vmem:[#allocation2 + $0x3f8] sm:$0xff]
    %v326 = vld [vmem:[#allocation2 + $0x400] sm:$0xff]
    %v327 = vld [vmem:[#allocation2 + $0x408] sm:$0xff]
    %v328 = vld [vmem:[#allocation2 + $0x410] sm:$0xff]
    %v329 = vld [vmem:[#allocation2 + $0x418] sm:$0xff]
    %v330 = vld [vmem:[#allocation2 + $0x420] sm:$0xff]
    %v331 = vld [vmem:[#allocation2 + $0x428] sm:$0xff]
    %v332 = vld [vmem:[#allocation2 + $0x430] sm:$0xff]
    %v333 = vld [vmem:[#allocation2 + $0x438] sm:$0xff]
    %v334 = vld [vmem:[#allocation2 + $0x440] sm:$0xff]
    %v335 = vld [vmem:[#allocation2 + $0x448] sm:$0xff]
    %v336 = vld [vmem:[#allocation2 + $0x450] sm:$0xff]
    %v337 = vld [vmem:[#allocation2 + $0x458] sm:$0xff]
    %v338 = vld [vmem:[#allocation2 + $0x460] sm:$0xff]
    %v339 = vld [vmem:[#allocation2 + $0x468] sm:$0xff]
    %v340 = vld [vmem:[#allocation2 + $0x470] sm:$0xff]
    %v341 = vld [vmem:[#allocation2 + $0x478] sm:$0xff]
    %v342 = vld [vmem:[#allocation2 + $0x480] sm:$0xff]
    %v343 = vld [vmem:[#allocation2 + $0x488] sm:$0xff]
    %v344 = vld [vmem:[#allocation2 + $0x490] sm:$0xff]
    %v345 = vld [vmem:[#allocation2 + $0x498] sm:$0xff]
    %v346 = vld [vmem:[#allocation2 + $0x4a0] sm:$0xff]
    %v347 = vld [vmem:[#allocation2 + $0x4a8] sm:$0xff]
    %v348 = vld [vmem:[#allocation2 + $0x4b0] sm:$0xff]
    %v349 = vld [vmem:[#allocation2 + $0x4b8] sm:$0xff]
    %v350 = vld [vmem:[#allocation2 + $0x4c0] sm:$0xff]
    %v351 = vld [vmem:[#allocation2 + $0x4c8] sm:$0xff]
    %v352 = vld [vmem:[#allocation2 + $0x4d0] sm:$0xff]
    %v353 = vld [vmem:[#allocation2 + $0x4d8] sm:$0xff]
    %v354 = vld [vmem:[#allocation2 + $0x4e0] sm:$0xff]
    %v355 = vld [vmem:[#allocation2 + $0x4e8] sm:$0xff]
    %v356 = vld [vmem:[#allocation2 + $0x4f0] sm:$0xff]
    %v357 = vld [vmem:[#allocation2 + $0x4f8] sm:$0xff]
    %v358 = vld [vmem:[#allocation2 + $0x500] sm:$0xff]
    %v359 = vld [vmem:[#allocation2 + $0x508] sm:$0xff]
    %v360 = vld [vmem:[#allocation2 + $0x510] sm:$0xff]
    %v361 = vld [vmem:[#allocation2 + $0x518] sm:$0xff]
    %v362 = vld [vmem:[#allocation2 + $0x520] sm:$0xff]
    %v363 = vld [vmem:[#allocation2 + $0x528] sm:$0xff]
    %v364 = vld [vmem:[#allocation2 + $0x530] sm:$0xff]
    %v365 = vld [vmem:[#allocation2 + $0x538] sm:$0xff]
    %v366 = vld [vmem:[#allocation2 + $0x540] sm:$0xff]
    %v367 = vld [vmem:[#allocation2 + $0x548] sm:$0xff]
    %v368 = vld [vmem:[#allocation2 + $0x550] sm:$0xff]
    %v369 = vld [vmem:[#allocation2 + $0x558] sm:$0xff]
    %v370 = vld [vmem:[#allocation2 + $0x560] sm:$0xff]
    %v371 = vld [vmem:[#allocation2 + $0x568] sm:$0xff]
    %v372 = vld [vmem:[#allocation2 + $0x570] sm:$0xff]
    %v373 = vld [vmem:[#allocation2 + $0x578] sm:$0xff]
    %v374 = vld [vmem:[#allocation2 + $0x580] sm:$0xff]
    %v375 = vld [vmem:[#allocation2 + $0x588] sm:$0xff]
    %v376 = vld [vmem:[#allocation2 + $0x590] sm:$0xff]
    %v377 = vld [vmem:[#allocation2 + $0x598] sm:$0xff]
    %v378 = vld [vmem:[#allocation2 + $0x5a0] sm:$0xff]
    %v379 = vld [vmem:[#allocation2 + $0x5a8] sm:$0xff]
    %v380 = vld [vmem:[#allocation2 + $0x5b0] sm:$0xff]
    %v381 = vld [vmem:[#allocation2 + $0x5b8] sm:$0xff]
    %v382 = vld [vmem:[#allocation2 + $0x5c0] sm:$0xff]
    %v383 = vld [vmem:[#allocation2 + $0x5c8] sm:$0xff]
    %v384 = vld [vmem:[#allocation2 + $0x5d0] sm:$0xff]
    %v385 = vld [vmem:[#allocation2 + $0x5d8] sm:$0xff]
    %v386 = vld [vmem:[#allocation2 + $0x5e0] sm:$0xff]
    %v387 = vld [vmem:[#allocation2 + $0x5e8] sm:$0xff]
    %v388 = vld [vmem:[#allocation2 + $0x5f0] sm:$0xff]
    %v389 = vld [vmem:[#allocation2 + $0x5f8] sm:$0xff]
    %v390 = vld [vmem:[#allocation2 + $0x600] sm:$0xff]
    %v391 = vld [vmem:[#allocation2 + $0x608] sm:$0xff]
    %v392 = vld [vmem:[#allocation2 + $0x610] sm:$0xff]
    %v393 = vld [vmem:[#allocation2 + $0x618] sm:$0xff]
    %v394 = vld [vmem:[#allocation2 + $0x620] sm:$0xff]
    %v395 = vld [vmem:[#allocation2 + $0x628] sm:$0xff]
    %v396 = vld [vmem:[#allocation2 + $0x630] sm:$0xff]
    %v397 = vld [vmem:[#allocation2 + $0x638] sm:$0xff]
    %v398 = vld [vmem:[#allocation2 + $0x640] sm:$0xff]
    %v399 = vld [vmem:[#allocation2 + $0x648] sm:$0xff]
    %v400 = vld [vmem:[#allocation2 + $0x650] sm:$0xff]
    %v401 = vld [vmem:[#allocation2 + $0x658] sm:$0xff]
    %v402 = vld [vmem:[#allocation2 + $0x660] sm:$0xff]
    %v403 = vld [vmem:[#allocation2 + $0x668] sm:$0xff]
    %v404 = vld [vmem:[#allocation2 + $0x670] sm:$0xff]
    %v405 = vld [vmem:[#allocation2 + $0x678] sm:$0xff]
    %v406 = vld [vmem:[#allocation2 + $0x680] sm:$0xff]
    %v407 = vld [vmem:[#allocation2 + $0x688] sm:$0xff]
    %v408 = vld [vmem:[#allocation2 + $0x690] sm:$0xff]
    %v409 = vld [vmem:[#allocation2 + $0x698] sm:$0xff]
    %v410 = vld [vmem:[#allocation2 + $0x6a0] sm:$0xff]
    %v411 = vld [vmem:[#allocation2 + $0x6a8] sm:$0xff]
    %v412 = vld [vmem:[#allocation2 + $0x6b0] sm:$0xff]
    %v413 = vld [vmem:[#allocation2 + $0x6b8] sm:$0xff]
    %v414 = vld [vmem:[#allocation2 + $0x6c0] sm:$0xff]
    %v415 = vld [vmem:[#allocation2 + $0x6c8] sm:$0xff]
    %v416 = vld [vmem:[#allocation2 + $0x6d0] sm:$0xff]
    %v417 = vld [vmem:[#allocation2 + $0x6d8] sm:$0xff]
    %v418 = vld [vmem:[#allocation2 + $0x6e0] sm:$0xff]
    %v419 = vld [vmem:[#allocation2 + $0x6e8] sm:$0xff]
    %v420 = vld [vmem:[#allocation2 + $0x6f0] sm:$0xff]
    %v421 = vld [vmem:[#allocation2 + $0x6f8] sm:$0xff]
    %v422 = vld [vmem:[#allocation2 + $0x700] sm:$0xff]
    %v423 = vld [vmem:[#allocation2 + $0x708] sm:$0xff]
    %v424 = vld [vmem:[#allocation2 + $0x710] sm:$0xff]
    %v425 = vld [vmem:[#allocation2 + $0x718] sm:$0xff]
    %v426 = vld [vmem:[#allocation2 + $0x720] sm:$0xff]
    %v427 = vld [vmem:[#allocation2 + $0x728] sm:$0xff]
    %v428 = vld [vmem:[#allocation2 + $0x730] sm:$0xff]
    %v429 = vld [vmem:[#allocation2 + $0x738] sm:$0xff]
    %v430 = vld [vmem:[#allocation2 + $0x740] sm:$0xff]
    %v431 = vld [vmem:[#allocation2 + $0x748] sm:$0xff]
    %v432 = vld [vmem:[#allocation2 + $0x750] sm:$0xff]
    %v433 = vld [vmem:[#allocation2 + $0x758] sm:$0xff]
    %v434 = vld [vmem:[#allocation2 + $0x760] sm:$0xff]
    %v435 = vld [vmem:[#allocation2 + $0x768] sm:$0xff]
    %v436 = vld [vmem:[#allocation2 + $0x770] sm:$0xff]
    %v437 = vld [vmem:[#allocation2 + $0x778] sm:$0xff]
    %v438 = vld [vmem:[#allocation2 + $0x780] sm:$0xff]
    %v439 = vld [vmem:[#allocation2 + $0x788] sm:$0xff]
    %v440 = vld [vmem:[#allocation2 + $0x790] sm:$0xff]
    %v441 = vld [vmem:[#allocation2 + $0x798] sm:$0xff]
    %v442 = vld [vmem:[#allocation2 + $0x7a0] sm:$0xff]
    %v443 = vld [vmem:[#allocation2 + $0x7a8] sm:$0xff]
    %v444 = vld [vmem:[#allocation2 + $0x7b0] sm:$0xff]
    %v445 = vld [vmem:[#allocation2 + $0x7b8] sm:$0xff]
    %v446 = vld [vmem:[#allocation2 + $0x7c0] sm:$0xff]
    %v447 = vld [vmem:[#allocation2 + $0x7c8] sm:$0xff]
    %v448 = vld [vmem:[#allocation2 + $0x7d0] sm:$0xff]
    %v449 = vld [vmem:[#allocation2 + $0x7d8] sm:$0xff]
    %v450 = vld [vmem:[#allocation2 + $0x7e0] sm:$0xff]
    %v451 = vld [vmem:[#allocation2 + $0x7e8] sm:$0xff]
    %v452 = vld [vmem:[#allocation2 + $0x7f0] sm:$0xff]
    %v453 = vld [vmem:[#allocation2 + $0x7f8] sm:$0xff]
    %v454 = vld [vmem:[#allocation2 + $0x800] sm:$0xff]
    %v455 = vld [vmem:[#allocation2 + $0x808] sm:$0xff]
    %v456 = vld [vmem:[#allocation2 + $0x810] sm:$0xff]
    %v457 = vld [vmem:[#allocation2 + $0x818] sm:$0xff]
    %v458 = vld [vmem:[#allocation2 + $0x820] sm:$0xff]
    %v459 = vld [vmem:[#allocation2 + $0x828] sm:$0xff]
    %v460 = vld [vmem:[#allocation2 + $0x830] sm:$0xff]
    %v461 = vld [vmem:[#allocation2 + $0x838] sm:$0xff]
    %v462 = vld [vmem:[#allocation2 + $0x840] sm:$0xff]
    %v463 = vld [vmem:[#allocation2 + $0x848] sm:$0xff]
    %v464 = vld [vmem:[#allocation2 + $0x850] sm:$0xff]
    %v465 = vld [vmem:[#allocation2 + $0x858] sm:$0xff]
    %v466 = vld [vmem:[#allocation2 + $0x860] sm:$0xff]
    %v467 = vld [vmem:[#allocation2 + $0x868] sm:$0xff]
    %v468 = vld [vmem:[#allocation2 + $0x870] sm:$0xff]
    %v469 = vld [vmem:[#allocation2 + $0x878] sm:$0xff]
    %v470 = vld [vmem:[#allocation2 + $0x880] sm:$0xff]
    %v471 = vld [vmem:[#allocation2 + $0x888] sm:$0xff]
    %v472 = vld [vmem:[#allocation2 + $0x890] sm:$0xff]
    %v473 = vld [vmem:[#allocation2 + $0x898] sm:$0xff]
    %v474 = vld [vmem:[#allocation2 + $0x8a0] sm:$0xff]
    %v475 = vld [vmem:[#allocation2 + $0x8a8] sm:$0xff]
    %v476 = vld [vmem:[#allocation2 + $0x8b0] sm:$0xff]
    %v477 = vld [vmem:[#allocation2 + $0x8b8] sm:$0xff]
    %v478 = vld [vmem:[#allocation2 + $0x8c0] sm:$0xff]
    %v479 = vld [vmem:[#allocation2 + $0x8c8] sm:$0xff]
    %v480 = vld [vmem:[#allocation2 + $0x8d0] sm:$0xff]
    %v481 = vld [vmem:[#allocation2 + $0x8d8] sm:$0xff]
    %v482 = vld [vmem:[#allocation2 + $0x8e0] sm:$0xff]
    %v483 = vld [vmem:[#allocation2 + $0x8e8] sm:$0xff]
    %v484 = vld [vmem:[#allocation2 + $0x8f0] sm:$0xff]
    %v485 = vld [vmem:[#allocation2 + $0x8f8] sm:$0xff]
    %v486 = vld [vmem:[#allocation2 + $0x900] sm:$0xff]
    %v487 = vld [vmem:[#allocation2 + $0x908] sm:$0xff]
    %v488 = vld [vmem:[#allocation2 + $0x910] sm:$0xff]
    %v489 = vld [vmem:[#allocation2 + $0x918] sm:$0xff]
    %v490 = vld [vmem:[#allocation2 + $0x920] sm:$0xff]
    %v491 = vld [vmem:[#allocation2 + $0x928] sm:$0xff]
    %v492 = vld [vmem:[#allocation2 + $0x930] sm:$0xff]
    %v493 = vld [vmem:[#allocation2 + $0x938] sm:$0xff]
    %v494 = vld [vmem:[#allocation2 + $0x940] sm:$0xff]
    %v495 = vld [vmem:[#allocation2 + $0x948] sm:$0xff]
    %v496 = vld [vmem:[#allocation2 + $0x950] sm:$0xff]
    %v497 = vld [vmem:[#allocation2 + $0x958] sm:$0xff]
    %v498 = vld [vmem:[#allocation2 + $0x960] sm:$0xff]
    %v499 = vld [vmem:[#allocation2 + $0x968] sm:$0xff]
    %v500 = vld [vmem:[#allocation2 + $0x970] sm:$0xff]
    %v501 = vld [vmem:[#allocation2 + $0x978] sm:$0xff]
    %v502 = vld [vmem:[#allocation2 + $0x980] sm:$0xff]
    %v503 = vld [vmem:[#allocation2 + $0x988] sm:$0xff]
    %v504 = vld [vmem:[#allocation2 + $0x990] sm:$0xff]
    %v505 = vld [vmem:[#allocation2 + $0x998] sm:$0xff]
    %v506 = vld [vmem:[#allocation2 + $0x9a0] sm:$0xff]
    %v507 = vld [vmem:[#allocation2 + $0x9a8] sm:$0xff]
    %v508 = vld [vmem:[#allocation2 + $0x9b0] sm:$0xff]
    %v509 = vld [vmem:[#allocation2 + $0x9b8] sm:$0xff]
    %v510 = vld [vmem:[#allocation2 + $0x9c0] sm:$0xff]
    %v511 = vld [vmem:[#allocation2 + $0x9c8] sm:$0xff]
    %v512 = vld [vmem:[#allocation2 + $0x9d0] sm:$0xff]
    %v513 = vld [vmem:[#allocation2 + $0x9d8] sm:$0xff]
    %v514 = vld [vmem:[#allocation2 + $0x9e0] sm:$0xff]
    %v515 = vld [vmem:[#allocation2 + $0x9e8] sm:$0xff]
    %v516 = vld [vmem:[#allocation2 + $0x9f0] sm:$0xff]
    %v517 = vld [vmem:[#allocation2 + $0x9f8] sm:$0xff]
    %v518 = vld [vmem:[#allocation2 + $0xa00] sm:$0xff]
    %v519 = vld [vmem:[#allocation2 + $0xa08] sm:$0xff]
    %v520 = vld [vmem:[#allocation2 + $0xa10] sm:$0xff]
    %v521 = vld [vmem:[#allocation2 + $0xa18] sm:$0xff]
    %v522 = vld [vmem:[#allocation2 + $0xa20] sm:$0xff]
    %v523 = vld [vmem:[#allocation2 + $0xa28] sm:$0xff]
    %v524 = vld [vmem:[#allocation2 + $0xa30] sm:$0xff]
    %v525 = vld [vmem:[#allocation2 + $0xa38] sm:$0xff]
    %v526 = vld [vmem:[#allocation2 + $0xa40] sm:$0xff]
    %v527 = vld [vmem:[#allocation2 + $0xa48] sm:$0xff]
    %v528 = vld [vmem:[#allocation2 + $0xa50] sm:$0xff]
    %v529 = vld [vmem:[#allocation2 + $0xa58] sm:$0xff]
    %v530 = vld [vmem:[#allocation2 + $0xa60] sm:$0xff]
    %v531 = vld [vmem:[#allocation2 + $0xa68] sm:$0xff]
    %v532 = vld [vmem:[#allocation2 + $0xa70] sm:$0xff]
    %v533 = vld [vmem:[#allocation2 + $0xa78] sm:$0xff]
    %v534 = vld [vmem:[#allocation2 + $0xa80] sm:$0xff]
    %v535 = vld [vmem:[#allocation2 + $0xa88] sm:$0xff]
    %v536 = vld [vmem:[#allocation2 + $0xa90] sm:$0xff]
    %v537 = vld [vmem:[#allocation2 + $0xa98] sm:$0xff]
    %v538 = vld [vmem:[#allocation2 + $0xaa0] sm:$0xff]
    %v539 = vld [vmem:[#allocation2 + $0xaa8] sm:$0xff]
    %v540 = vld [vmem:[#allocation2 + $0xab0] sm:$0xff]
    %v541 = vld [vmem:[#allocation2 + $0xab8] sm:$0xff]
    %v542 = vld [vmem:[#allocation2 + $0xac0] sm:$0xff]
    %v543 = vld [vmem:[#allocation2 + $0xac8] sm:$0xff]
    %v544 = vld [vmem:[#allocation2 + $0xad0] sm:$0xff]
    %v545 = vld [vmem:[#allocation2 + $0xad8] sm:$0xff]
    %v546 = vld [vmem:[#allocation2 + $0xae0] sm:$0xff]
    %v547 = vld [vmem:[#allocation2 + $0xae8] sm:$0xff]
    %v548 = vld [vmem:[#allocation2 + $0xaf0] sm:$0xff]
    %v549 = vld [vmem:[#allocation2 + $0xaf8] sm:$0xff]
    %v550 = vld [vmem:[#allocation2 + $0xb00] sm:$0xff]
    %v551 = vld [vmem:[#allocation2 + $0xb08] sm:$0xff]
    %v552 = vld [vmem:[#allocation2 + $0xb10] sm:$0xff]
    %v553 = vld [vmem:[#allocation2 + $0xb18] sm:$0xff]
    %v554 = vld [vmem:[#allocation2 + $0xb20] sm:$0xff]
    %v555 = vld [vmem:[#allocation2 + $0xb28] sm:$0xff]
    %v556 = vld [vmem:[#allocation2 + $0xb30] sm:$0xff]
    %v557 = vld [vmem:[#allocation2 + $0xb38] sm:$0xff]
    %v558 = vld [vmem:[#allocation2 + $0xb40] sm:$0xff]
    %v559 = vld [vmem:[#allocation2 + $0xb48] sm:$0xff]
    %v560 = vld [vmem:[#allocation2 + $0xb50] sm:$0xff]
    %v561 = vld [vmem:[#allocation2 + $0xb58] sm:$0xff]
    %v562 = vld [vmem:[#allocation2 + $0xb60] sm:$0xff]
    %v563 = vld [vmem:[#allocation2 + $0xb68] sm:$0xff]
    %v564 = vld [vmem:[#allocation2 + $0xb70] sm:$0xff]
    %v565 = vld [vmem:[#allocation2 + $0xb78] sm:$0xff]
    %v566 = vld [vmem:[#allocation2 + $0xb80] sm:$0xff]
    %v567 = vld [vmem:[#allocation2 + $0xb88] sm:$0xff]
    %v568 = vld [vmem:[#allocation2 + $0xb90] sm:$0xff]
    %v569 = vld [vmem:[#allocation2 + $0xb98] sm:$0xff]
    %v570 = vld [vmem:[#allocation2 + $0xba0] sm:$0xff]
    %v571 = vld [vmem:[#allocation2 + $0xba8] sm:$0xff]
    %v572 = vld [vmem:[#allocation2 + $0xbb0] sm:$0xff]
    %v573 = vld [vmem:[#allocation2 + $0xbb8] sm:$0xff]
    %v574 = vld [vmem:[#allocation2 + $0xbc0] sm:$0xff]
    %v575 = vld [vmem:[#allocation2 + $0xbc8] sm:$0xff]
    %v576 = vld [vmem:[#allocation2 + $0xbd0] sm:$0xff]
    %v577 = vld [vmem:[#allocation2 + $0xbd8] sm:$0xff]
    %v578 = vld [vmem:[#allocation2 + $0xbe0] sm:$0xff]
    %v579 = vld [vmem:[#allocation2 + $0xbe8] sm:$0xff]
    %v580 = vld [vmem:[#allocation2 + $0xbf0] sm:$0xff]
    %v581 = vld [vmem:[#allocation2 + $0xbf8] sm:$0xff]
    %v582 = vld [vmem:[#allocation2 + $0xc00] sm:$0xff]
    %v583 = vld [vmem:[#allocation2 + $0xc08] sm:$0xff]
    %v584 = vld [vmem:[#allocation2 + $0xc10] sm:$0xff]
    %v585 = vld [vmem:[#allocation2 + $0xc18] sm:$0xff]
    %v586 = vld [vmem:[#allocation2 + $0xc20] sm:$0xff]
    %v587 = vld [vmem:[#allocation2 + $0xc28] sm:$0xff]
    %v588 = vld [vmem:[#allocation2 + $0xc30] sm:$0xff]
    %v589 = vld [vmem:[#allocation2 + $0xc38] sm:$0xff]
    %v590 = vld [vmem:[#allocation2 + $0xc40] sm:$0xff]
    %v591 = vld [vmem:[#allocation2 + $0xc48] sm:$0xff]
    %v592 = vld [vmem:[#allocation2 + $0xc50] sm:$0xff]
    %v593 = vld [vmem:[#allocation2 + $0xc58] sm:$0xff]
    %v594 = vld [vmem:[#allocation2 + $0xc60] sm:$0xff]
    %v595 = vld [vmem:[#allocation2 + $0xc68] sm:$0xff]
    %v596 = vld [vmem:[#allocation2 + $0xc70] sm:$0xff]
    %v597 = vld [vmem:[#allocation2 + $0xc78] sm:$0xff]
    %v598 = vld [vmem:[#allocation2 + $0xc80] sm:$0xff]
    %v599 = vld [vmem:[#allocation2 + $0xc88] sm:$0xff]
    %v600 = vld [vmem:[#allocation2 + $0xc90] sm:$0xff]
    %v601 = vld [vmem:[#allocation2 + $0xc98] sm:$0xff]
    %v602 = vld [vmem:[#allocation2 + $0xca0] sm:$0xff]
    %v603 = vld [vmem:[#allocation2 + $0xca8] sm:$0xff]
    %v604 = vld [vmem:[#allocation2 + $0xcb0] sm:$0xff]
    %v605 = vld [vmem:[#allocation2 + $0xcb8] sm:$0xff]
    %v606 = vld [vmem:[#allocation2 + $0xcc0] sm:$0xff]
    %v607 = vld [vmem:[#allocation2 + $0xcc8] sm:$0xff]
    %v608 = vld [vmem:[#allocation2 + $0xcd0] sm:$0xff]
    %v609 = vld [vmem:[#allocation2 + $0xcd8] sm:$0xff]
    %v610 = vld [vmem:[#allocation2 + $0xce0] sm:$0xff]
    %v611 = vld [vmem:[#allocation2 + $0xce8] sm:$0xff]
    %v612 = vld [vmem:[#allocation2 + $0xcf0] sm:$0xff]
    %v613 = vld [vmem:[#allocation2 + $0xcf8] sm:$0xff]
    %v614 = vld [vmem:[#allocation2 + $0xd00] sm:$0xff]
    %v615 = vld [vmem:[#allocation2 + $0xd08] sm:$0xff]
    %v616 = vld [vmem:[#allocation2 + $0xd10] sm:$0xff]
    %v617 = vld [vmem:[#allocation2 + $0xd18] sm:$0xff]
    %v618 = vld [vmem:[#allocation2 + $0xd20] sm:$0xff]
    %v619 = vld [vmem:[#allocation2 + $0xd28] sm:$0xff]
    %v620 = vld [vmem:[#allocation2 + $0xd30] sm:$0xff]
    %v621 = vld [vmem:[#allocation2 + $0xd38] sm:$0xff]
    %v622 = vld [vmem:[#allocation2 + $0xd40] sm:$0xff]
    %v623 = vld [vmem:[#allocation2 + $0xd48] sm:$0xff]
    %v624 = vld [vmem:[#allocation2 + $0xd50] sm:$0xff]
    %v625 = vld [vmem:[#allocation2 + $0xd58] sm:$0xff]
    %v626 = vld [vmem:[#allocation2 + $0xd60] sm:$0xff]
    %v627 = vld [vmem:[#allocation2 + $0xd68] sm:$0xff]
    %v628 = vld [vmem:[#allocation2 + $0xd70] sm:$0xff]
    %v629 = vld [vmem:[#allocation2 + $0xd78] sm:$0xff]
    %v630 = vld [vmem:[#allocation2 + $0xd80] sm:$0xff]
    %v631 = vld [vmem:[#allocation2 + $0xd88] sm:$0xff]
    %v632 = vld [vmem:[#allocation2 + $0xd90] sm:$0xff]
    %v633 = vld [vmem:[#allocation2 + $0xd98] sm:$0xff]
    %v634 = vld [vmem:[#allocation2 + $0xda0] sm:$0xff]
    %v635 = vld [vmem:[#allocation2 + $0xda8] sm:$0xff]
    %v636 = vld [vmem:[#allocation2 + $0xdb0] sm:$0xff]
    %v637 = vld [vmem:[#allocation2 + $0xdb8] sm:$0xff]
    %v638 = vld [vmem:[#allocation2 + $0xdc0] sm:$0xff]
    %v639 = vld [vmem:[#allocation2 + $0xdc8] sm:$0xff]
    %v640 = vld [vmem:[#allocation2 + $0xdd0] sm:$0xff]
    %v641 = vld [vmem:[#allocation2 + $0xdd8] sm:$0xff]
    %v642 = vld [vmem:[#allocation2 + $0xde0] sm:$0xff]
    %v643 = vld [vmem:[#allocation2 + $0xde8] sm:$0xff]
    %v644 = vld [vmem:[#allocation2 + $0xdf0] sm:$0xff]
    %v645 = vld [vmem:[#allocation2 + $0xdf8] sm:$0xff]
    %v646 = vld [vmem:[#allocation4] sm:$0xff]
    %v648 = vlaneseq
    %v649 = vshrl.u32 %v648, 7
    %v650 = vsub.s32 0, %v649
    %v651 = vrot.slane %v646, %v650
    %v652 = vlaneseq
    %v653 = vshrl.u32 %v652, 7
    %v654 = vsub.s32 1, %v653
    %v655 = vrot.slane %v646, %v654
    %v656 = vlaneseq
    %v657 = vshrl.u32 %v656, 7
    %v658 = vsub.s32 2, %v657
    %v659 = vrot.slane %v646, %v658
    %v660 = vlaneseq
    %v661 = vshrl.u32 %v660, 7
    %v662 = vsub.s32 3, %v661
    %v663 = vrot.slane %v646, %v662
    %v664 = vlaneseq
    %v665 = vshrl.u32 %v664, 7
    %v666 = vsub.s32 4, %v665
    %v667 = vrot.slane %v646, %v666
    %v668 = vlaneseq
    %v669 = vshrl.u32 %v668, 7
    %v670 = vsub.s32 5, %v669
    %v671 = vrot.slane %v646, %v670
    %v672 = vlaneseq
    %v673 = vshrl.u32 %v672, 7
    %v674 = vsub.s32 6, %v673
    %v675 = vrot.slane %v646, %v674
    %v676 = vlaneseq
    %v677 = vshrl.u32 %v676, 7
    %v678 = vsub.s32 7, %v677
    %v679 = vrot.slane %v646, %v678
    %v752 = vunpack.c.l.b16 %v134
    %v753 = vunpack.c.h.b16 %v134
    %v754 = vunpack.c.l.b16 %v135
    %v755 = vunpack.c.h.b16 %v135
    %v756 = vunpack.c.l.b16 %v136
    %v757 = vunpack.c.h.b16 %v136
    %v758 = vunpack.c.l.b16 %v137
    %v759 = vunpack.c.l.b16 %v138
    %v760 = vunpack.c.h.b16 %v138
    %v761 = vunpack.c.l.b16 %v139
    %v762 = vunpack.c.h.b16 %v139
    %v763 = vunpack.c.l.b16 %v140
    %v764 = vunpack.c.h.b16 %v140
    %v765 = vunpack.c.l.b16 %v141
    %v766 = vunpack.c.l.b16 %v142
    %v767 = vunpack.c.h.b16 %v142
    %v768 = vunpack.c.l.b16 %v143
    %v769 = vunpack.c.h.b16 %v143
    %v770 = vunpack.c.l.b16 %v144
    %v771 = vunpack.c.h.b16 %v144
    %v772 = vunpack.c.l.b16 %v145
    %v773 = vunpack.c.l.b16 %v146
    %v774 = vunpack.c.h.b16 %v146
    %v775 = vunpack.c.l.b16 %v147
    %v776 = vunpack.c.h.b16 %v147
    %v777 = vunpack.c.l.b16 %v148
    %v778 = vunpack.c.h.b16 %v148
    %v779 = vunpack.c.l.b16 %v149
    %v780 = vunpack.c.l.b16 %v150
    %v781 = vunpack.c.h.b16 %v150
    %v782 = vunpack.c.l.b16 %v151
    %v783 = vunpack.c.h.b16 %v151
    %v784 = vunpack.c.l.b16 %v152
    %v785 = vunpack.c.h.b16 %v152
    %v786 = vunpack.c.l.b16 %v153
    %v787 = vunpack.c.l.b16 %v154
    %v788 = vunpack.c.h.b16 %v154
    %v789 = vunpack.c.l.b16 %v155
    %v790 = vunpack.c.h.b16 %v155
    %v791 = vunpack.c.l.b16 %v156
    %v792 = vunpack.c.h.b16 %v156
    %v793 = vunpack.c.l.b16 %v157
    %v794 = vunpack.c.l.b16 %v158
    %v795 = vunpack.c.h.b16 %v158
    %v796 = vunpack.c.l.b16 %v159
    %v797 = vunpack.c.h.b16 %v159
    %v798 = vunpack.c.l.b16 %v160
    %v799 = vunpack.c.h.b16 %v160
    %v800 = vunpack.c.l.b16 %v161
    %v801 = vunpack.c.l.b16 %v162
    %v802 = vunpack.c.h.b16 %v162
    %v803 = vunpack.c.l.b16 %v163
    %v804 = vunpack.c.h.b16 %v163
    %v805 = vunpack.c.l.b16 %v164
    %v806 = vunpack.c.h.b16 %v164
    %v807 = vunpack.c.l.b16 %v165
    %v808 = vunpack.c.l.b16 %v166
    %v809 = vunpack.c.h.b16 %v166
    %v810 = vunpack.c.l.b16 %v167
    %v811 = vunpack.c.h.b16 %v167
    %v812 = vunpack.c.l.b16 %v168
    %v813 = vunpack.c.h.b16 %v168
    %v814 = vunpack.c.l.b16 %v169
    %v815 = vunpack.c.l.b16 %v170
    %v816 = vunpack.c.h.b16 %v170
    %v817 = vunpack.c.l.b16 %v171
    %v818 = vunpack.c.h.b16 %v171
    %v819 = vunpack.c.l.b16 %v172
    %v820 = vunpack.c.h.b16 %v172
    %v821 = vunpack.c.l.b16 %v173
    %v822 = vunpack.c.l.b16 %v174
    %v823 = vunpack.c.h.b16 %v174
    %v824 = vunpack.c.l.b16 %v175
    %v825 = vunpack.c.h.b16 %v175
    %v826 = vunpack.c.l.b16 %v176
    %v827 = vunpack.c.h.b16 %v176
    %v828 = vunpack.c.l.b16 %v177
    %v829 = vunpack.c.l.b16 %v178
    %v830 = vunpack.c.h.b16 %v178
    %v831 = vunpack.c.l.b16 %v179
    %v832 = vunpack.c.h.b16 %v179
    %v833 = vunpack.c.l.b16 %v180
    %v834 = vunpack.c.h.b16 %v180
    %v835 = vunpack.c.l.b16 %v181
    %v836 = vunpack.c.l.b16 %v182
    %v837 = vunpack.c.h.b16 %v182
    %v838 = vunpack.c.l.b16 %v183
    %v839 = vunpack.c.h.b16 %v183
    %v840 = vunpack.c.l.b16 %v184
    %v841 = vunpack.c.h.b16 %v184
    %v842 = vunpack.c.l.b16 %v185
    %v843 = vunpack.c.l.b16 %v186
    %v844 = vunpack.c.h.b16 %v186
    %v845 = vunpack.c.l.b16 %v187
    %v846 = vunpack.c.h.b16 %v187
    %v847 = vunpack.c.l.b16 %v188
    %v848 = vunpack.c.h.b16 %v188
    %v849 = vunpack.c.l.b16 %v189
    %v850 = vunpack.c.l.b16 %v190
    %v851 = vunpack.c.h.b16 %v190
    %v852 = vunpack.c.l.b16 %v191
    %v853 = vunpack.c.h.b16 %v191
    %v854 = vunpack.c.l.b16 %v192
    %v855 = vunpack.c.h.b16 %v192
    %v856 = vunpack.c.l.b16 %v193
    %v857 = vunpack.c.l.b16 %v194
    %v858 = vunpack.c.h.b16 %v194
    %v859 = vunpack.c.l.b16 %v195
    %v860 = vunpack.c.h.b16 %v195
    %v861 = vunpack.c.l.b16 %v196
    %v862 = vunpack.c.h.b16 %v196
    %v863 = vunpack.c.l.b16 %v197
    %v864 = vpack.c.b16 %v759, %v752
    %v865 = vpack.c.b16 %v760, %v753
    %v866 = vpack.c.b16 %v761, %v754
    %v867 = vpack.c.b16 %v762, %v755
    %v868 = vpack.c.b16 %v763, %v756
    %v869 = vpack.c.b16 %v764, %v757
    %v870 = vpack.c.b16 %v765, %v758
    %v871 = vpack.c.b16 %v773, %v766
    %v872 = vpack.c.b16 %v774, %v767
    %v873 = vpack.c.b16 %v775, %v768
    %v874 = vpack.c.b16 %v776, %v769
    %v875 = vpack.c.b16 %v777, %v770
    %v876 = vpack.c.b16 %v778, %v771
    %v877 = vpack.c.b16 %v779, %v772
    %v878 = vpack.c.b16 %v787, %v780
    %v879 = vpack.c.b16 %v788, %v781
    %v880 = vpack.c.b16 %v789, %v782
    %v881 = vpack.c.b16 %v790, %v783
    %v882 = vpack.c.b16 %v791, %v784
    %v883 = vpack.c.b16 %v792, %v785
    %v884 = vpack.c.b16 %v793, %v786
    %v885 = vpack.c.b16 %v801, %v794
    %v886 = vpack.c.b16 %v802, %v795
    %v887 = vpack.c.b16 %v803, %v796
    %v888 = vpack.c.b16 %v804, %v797
    %v889 = vpack.c.b16 %v805, %v798
    %v890 = vpack.c.b16 %v806, %v799
    %v891 = vpack.c.b16 %v807, %v800
    %v892 = vpack.c.b16 %v815, %v808
    %v893 = vpack.c.b16 %v816, %v809
    %v894 = vpack.c.b16 %v817, %v810
    %v895 = vpack.c.b16 %v818, %v811
    %v896 = vpack.c.b16 %v819, %v812
    %v897 = vpack.c.b16 %v820, %v813
    %v898 = vpack.c.b16 %v821, %v814
    %v899 = vpack.c.b16 %v829, %v822
    %v900 = vpack.c.b16 %v830, %v823
    %v901 = vpack.c.b16 %v831, %v824
    %v902 = vpack.c.b16 %v832, %v825
    %v903 = vpack.c.b16 %v833, %v826
    %v904 = vpack.c.b16 %v834, %v827
    %v905 = vpack.c.b16 %v835, %v828
    %v906 = vpack.c.b16 %v843, %v836
    %v907 = vpack.c.b16 %v844, %v837
    %v908 = vpack.c.b16 %v845, %v838
    %v909 = vpack.c.b16 %v846, %v839
    %v910 = vpack.c.b16 %v847, %v840
    %v911 = vpack.c.b16 %v848, %v841
    %v912 = vpack.c.b16 %v849, %v842
    %v913 = vpack.c.b16 %v857, %v850
    %v914 = vpack.c.b16 %v858, %v851
    %v915 = vpack.c.b16 %v859, %v852
    %v916 = vpack.c.b16 %v860, %v853
    %v917 = vpack.c.b16 %v861, %v854
    %v918 = vpack.c.b16 %v862, %v855
    %v919 = vpack.c.b16 %v863, %v856
    %v1424 = vunpack.c.l.b16 %v198
    %v1425 = vunpack.c.h.b16 %v198
    %v1426 = vunpack.c.l.b16 %v199
    %v1427 = vunpack.c.h.b16 %v199
    %v1428 = vunpack.c.l.b16 %v200
    %v1429 = vunpack.c.h.b16 %v200
    %v1430 = vunpack.c.l.b16 %v201
    %v1431 = vunpack.c.h.b16 %v201
    %v1432 = vunpack.c.l.b16 %v202
    %v1433 = vunpack.c.h.b16 %v202
    %v1434 = vunpack.c.l.b16 %v203
    %v1435 = vunpack.c.h.b16 %v203
    %v1436 = vunpack.c.l.b16 %v204
    %v1437 = vunpack.c.h.b16 %v204
    %v1438 = vunpack.c.l.b16 %v205
    %v1439 = vunpack.c.h.b16 %v205
    %v1440 = vunpack.c.l.b16 %v206
    %v1441 = vunpack.c.h.b16 %v206
    %v1442 = vunpack.c.l.b16 %v207
    %v1443 = vunpack.c.h.b16 %v207
    %v1444 = vunpack.c.l.b16 %v208
    %v1445 = vunpack.c.h.b16 %v208
    %v1446 = vunpack.c.l.b16 %v209
    %v1447 = vunpack.c.h.b16 %v209
    %v1448 = vunpack.c.l.b16 %v210
    %v1449 = vunpack.c.h.b16 %v210
    %v1450 = vunpack.c.l.b16 %v211
    %v1451 = vunpack.c.h.b16 %v211
    %v1452 = vunpack.c.l.b16 %v212
    %v1453 = vunpack.c.h.b16 %v212
    %v1454 = vunpack.c.l.b16 %v213
    %v1455 = vunpack.c.h.b16 %v213
    %v1456 = vunpack.c.l.b16 %v214
    %v1457 = vunpack.c.h.b16 %v214
    %v1458 = vunpack.c.l.b16 %v215
    %v1459 = vunpack.c.h.b16 %v215
    %v1460 = vunpack.c.l.b16 %v216
    %v1461 = vunpack.c.h.b16 %v216
    %v1462 = vunpack.c.l.b16 %v217
    %v1463 = vunpack.c.h.b16 %v217
    %v1464 = vunpack.c.l.b16 %v218
    %v1465 = vunpack.c.h.b16 %v218
    %v1466 = vunpack.c.l.b16 %v219
    %v1467 = vunpack.c.h.b16 %v219
    %v1468 = vunpack.c.l.b16 %v220
    %v1469 = vunpack.c.h.b16 %v220
    %v1470 = vunpack.c.l.b16 %v221
    %v1471 = vunpack.c.h.b16 %v221
    %v1472 = vunpack.c.l.b16 %v222
    %v1473 = vunpack.c.h.b16 %v222
    %v1474 = vunpack.c.l.b16 %v223
    %v1475 = vunpack.c.h.b16 %v223
    %v1476 = vunpack.c.l.b16 %v224
    %v1477 = vunpack.c.h.b16 %v224
    %v1478 = vunpack.c.l.b16 %v225
    %v1479 = vunpack.c.h.b16 %v225
    %v1480 = vunpack.c.l.b16 %v226
    %v1481 = vunpack.c.h.b16 %v226
    %v1482 = vunpack.c.l.b16 %v227
    %v1483 = vunpack.c.h.b16 %v227
    %v1484 = vunpack.c.l.b16 %v228
    %v1485 = vunpack.c.h.b16 %v228
    %v1486 = vunpack.c.l.b16 %v229
    %v1487 = vunpack.c.h.b16 %v229
    %v1488 = vunpack.c.l.b16 %v230
    %v1489 = vunpack.c.h.b16 %v230
    %v1490 = vunpack.c.l.b16 %v231
    %v1491 = vunpack.c.h.b16 %v231
    %v1492 = vunpack.c.l.b16 %v232
    %v1493 = vunpack.c.h.b16 %v232
    %v1494 = vunpack.c.l.b16 %v233
    %v1495 = vunpack.c.h.b16 %v233
    %v1496 = vunpack.c.l.b16 %v234
    %v1497 = vunpack.c.h.b16 %v234
    %v1498 = vunpack.c.l.b16 %v235
    %v1499 = vunpack.c.h.b16 %v235
    %v1500 = vunpack.c.l.b16 %v236
    %v1501 = vunpack.c.h.b16 %v236
    %v1502 = vunpack.c.l.b16 %v237
    %v1503 = vunpack.c.h.b16 %v237
    %v1504 = vunpack.c.l.b16 %v238
    %v1505 = vunpack.c.h.b16 %v238
    %v1506 = vunpack.c.l.b16 %v239
    %v1507 = vunpack.c.h.b16 %v239
    %v1508 = vunpack.c.l.b16 %v240
    %v1509 = vunpack.c.h.b16 %v240
    %v1510 = vunpack.c.l.b16 %v241
    %v1511 = vunpack.c.h.b16 %v241
    %v1512 = vunpack.c.l.b16 %v242
    %v1513 = vunpack.c.h.b16 %v242
    %v1514 = vunpack.c.l.b16 %v243
    %v1515 = vunpack.c.h.b16 %v243
    %v1516 = vunpack.c.l.b16 %v244
    %v1517 = vunpack.c.h.b16 %v244
    %v1518 = vunpack.c.l.b16 %v245
    %v1519 = vunpack.c.h.b16 %v245
    %v1520 = vunpack.c.l.b16 %v246
    %v1521 = vunpack.c.h.b16 %v246
    %v1522 = vunpack.c.l.b16 %v247
    %v1523 = vunpack.c.h.b16 %v247
    %v1524 = vunpack.c.l.b16 %v248
    %v1525 = vunpack.c.h.b16 %v248
    %v1526 = vunpack.c.l.b16 %v249
    %v1527 = vunpack.c.h.b16 %v249
    %v1528 = vunpack.c.l.b16 %v250
    %v1529 = vunpack.c.h.b16 %v250
    %v1530 = vunpack.c.l.b16 %v251
    %v1531 = vunpack.c.h.b16 %v251
    %v1532 = vunpack.c.l.b16 %v252
    %v1533 = vunpack.c.h.b16 %v252
    %v1534 = vunpack.c.l.b16 %v253
    %v1535 = vunpack.c.h.b16 %v253
    %v1536 = vunpack.c.l.b16 %v254
    %v1537 = vunpack.c.h.b16 %v254
    %v1538 = vunpack.c.l.b16 %v255
    %v1539 = vunpack.c.h.b16 %v255
    %v1540 = vunpack.c.l.b16 %v256
    %v1541 = vunpack.c.h.b16 %v256
    %v1542 = vunpack.c.l.b16 %v257
    %v1543 = vunpack.c.h.b16 %v257
    %v1544 = vunpack.c.l.b16 %v258
    %v1545 = vunpack.c.h.b16 %v258
    %v1546 = vunpack.c.l.b16 %v259
    %v1547 = vunpack.c.h.b16 %v259
    %v1548 = vunpack.c.l.b16 %v260
    %v1549 = vunpack.c.h.b16 %v260
    %v1550 = vunpack.c.l.b16 %v261
    %v1551 = vunpack.c.h.b16 %v261
    %v1552 = vunpack.c.l.b16 %v262
    %v1553 = vunpack.c.h.b16 %v262
    %v1554 = vunpack.c.l.b16 %v263
    %v1555 = vunpack.c.h.b16 %v263
    %v1556 = vunpack.c.l.b16 %v264
    %v1557 = vunpack.c.h.b16 %v264
    %v1558 = vunpack.c.l.b16 %v265
    %v1559 = vunpack.c.h.b16 %v265
    %v1560 = vunpack.c.l.b16 %v266
    %v1561 = vunpack.c.h.b16 %v266
    %v1562 = vunpack.c.l.b16 %v267
    %v1563 = vunpack.c.h.b16 %v267
    %v1564 = vunpack.c.l.b16 %v268
    %v1565 = vunpack.c.h.b16 %v268
    %v1566 = vunpack.c.l.b16 %v269
    %v1567 = vunpack.c.h.b16 %v269
    %v1568 = vunpack.c.l.b16 %v270
    %v1569 = vunpack.c.h.b16 %v270
    %v1570 = vunpack.c.l.b16 %v271
    %v1571 = vunpack.c.h.b16 %v271
    %v1572 = vunpack.c.l.b16 %v272
    %v1573 = vunpack.c.h.b16 %v272
    %v1574 = vunpack.c.l.b16 %v273
    %v1575 = vunpack.c.h.b16 %v273
    %v1576 = vunpack.c.l.b16 %v274
    %v1577 = vunpack.c.h.b16 %v274
    %v1578 = vunpack.c.l.b16 %v275
    %v1579 = vunpack.c.h.b16 %v275
    %v1580 = vunpack.c.l.b16 %v276
    %v1581 = vunpack.c.h.b16 %v276
    %v1582 = vunpack.c.l.b16 %v277
    %v1583 = vunpack.c.h.b16 %v277
    %v1584 = vunpack.c.l.b16 %v278
    %v1585 = vunpack.c.h.b16 %v278
    %v1586 = vunpack.c.l.b16 %v279
    %v1587 = vunpack.c.h.b16 %v279
    %v1588 = vunpack.c.l.b16 %v280
    %v1589 = vunpack.c.h.b16 %v280
    %v1590 = vunpack.c.l.b16 %v281
    %v1591 = vunpack.c.h.b16 %v281
    %v1592 = vunpack.c.l.b16 %v282
    %v1593 = vunpack.c.h.b16 %v282
    %v1594 = vunpack.c.l.b16 %v283
    %v1595 = vunpack.c.h.b16 %v283
    %v1596 = vunpack.c.l.b16 %v284
    %v1597 = vunpack.c.h.b16 %v284
    %v1598 = vunpack.c.l.b16 %v285
    %v1599 = vunpack.c.h.b16 %v285
    %v1600 = vunpack.c.l.b16 %v286
    %v1601 = vunpack.c.h.b16 %v286
    %v1602 = vunpack.c.l.b16 %v287
    %v1603 = vunpack.c.h.b16 %v287
    %v1604 = vunpack.c.l.b16 %v288
    %v1605 = vunpack.c.h.b16 %v288
    %v1606 = vunpack.c.l.b16 %v289
    %v1607 = vunpack.c.h.b16 %v289
    %v1608 = vunpack.c.l.b16 %v290
    %v1609 = vunpack.c.h.b16 %v290
    %v1610 = vunpack.c.l.b16 %v291
    %v1611 = vunpack.c.h.b16 %v291
    %v1612 = vunpack.c.l.b16 %v292
    %v1613 = vunpack.c.h.b16 %v292
    %v1614 = vunpack.c.l.b16 %v293
    %v1615 = vunpack.c.h.b16 %v293
    %v1616 = vunpack.c.l.b16 %v294
    %v1617 = vunpack.c.h.b16 %v294
    %v1618 = vunpack.c.l.b16 %v295
    %v1619 = vunpack.c.h.b16 %v295
    %v1620 = vunpack.c.l.b16 %v296
    %v1621 = vunpack.c.h.b16 %v296
    %v1622 = vunpack.c.l.b16 %v297
    %v1623 = vunpack.c.h.b16 %v297
    %v1624 = vunpack.c.l.b16 %v298
    %v1625 = vunpack.c.h.b16 %v298
    %v1626 = vunpack.c.l.b16 %v299
    %v1627 = vunpack.c.h.b16 %v299
    %v1628 = vunpack.c.l.b16 %v300
    %v1629 = vunpack.c.h.b16 %v300
    %v1630 = vunpack.c.l.b16 %v301
    %v1631 = vunpack.c.h.b16 %v301
    %v1632 = vunpack.c.l.b16 %v302
    %v1633 = vunpack.c.h.b16 %v302
    %v1634 = vunpack.c.l.b16 %v303
    %v1635 = vunpack.c.h.b16 %v303
    %v1636 = vunpack.c.l.b16 %v304
    %v1637 = vunpack.c.h.b16 %v304
    %v1638 = vunpack.c.l.b16 %v305
    %v1639 = vunpack.c.h.b16 %v305
    %v1640 = vunpack.c.l.b16 %v306
    %v1641 = vunpack.c.h.b16 %v306
    %v1642 = vunpack.c.l.b16 %v307
    %v1643 = vunpack.c.h.b16 %v307
    %v1644 = vunpack.c.l.b16 %v308
    %v1645 = vunpack.c.h.b16 %v308
    %v1646 = vunpack.c.l.b16 %v309
    %v1647 = vunpack.c.h.b16 %v309
    %v1648 = vunpack.c.l.b16 %v310
    %v1649 = vunpack.c.h.b16 %v310
    %v1650 = vunpack.c.l.b16 %v311
    %v1651 = vunpack.c.h.b16 %v311
    %v1652 = vunpack.c.l.b16 %v312
    %v1653 = vunpack.c.h.b16 %v312
    %v1654 = vunpack.c.l.b16 %v313
    %v1655 = vunpack.c.h.b16 %v313
    %v1656 = vunpack.c.l.b16 %v314
    %v1657 = vunpack.c.h.b16 %v314
    %v1658 = vunpack.c.l.b16 %v315
    %v1659 = vunpack.c.h.b16 %v315
    %v1660 = vunpack.c.l.b16 %v316
    %v1661 = vunpack.c.h.b16 %v316
    %v1662 = vunpack.c.l.b16 %v317
    %v1663 = vunpack.c.h.b16 %v317
    %v1664 = vunpack.c.l.b16 %v318
    %v1665 = vunpack.c.h.b16 %v318
    %v1666 = vunpack.c.l.b16 %v319
    %v1667 = vunpack.c.h.b16 %v319
    %v1668 = vunpack.c.l.b16 %v320
    %v1669 = vunpack.c.h.b16 %v320
    %v1670 = vunpack.c.l.b16 %v321
    %v1671 = vunpack.c.h.b16 %v321
    %v1672 = vunpack.c.l.b16 %v322
    %v1673 = vunpack.c.h.b16 %v322
    %v1674 = vunpack.c.l.b16 %v323
    %v1675 = vunpack.c.h.b16 %v323
    %v1676 = vunpack.c.l.b16 %v324
    %v1677 = vunpack.c.h.b16 %v324
    %v1678 = vunpack.c.l.b16 %v325
    %v1679 = vunpack.c.h.b16 %v325
    %v1680 = vunpack.c.l.b16 %v326
    %v1681 = vunpack.c.h.b16 %v326
    %v1682 = vunpack.c.l.b16 %v327
    %v1683 = vunpack.c.h.b16 %v327
    %v1684 = vunpack.c.l.b16 %v328
    %v1685 = vunpack.c.h.b16 %v328
    %v1686 = vunpack.c.l.b16 %v329
    %v1687 = vunpack.c.h.b16 %v329
    %v1688 = vunpack.c.l.b16 %v330
    %v1689 = vunpack.c.h.b16 %v330
    %v1690 = vunpack.c.l.b16 %v331
    %v1691 = vunpack.c.h.b16 %v331
    %v1692 = vunpack.c.l.b16 %v332
    %v1693 = vunpack.c.h.b16 %v332
    %v1694 = vunpack.c.l.b16 %v333
    %v1695 = vunpack.c.h.b16 %v333
    %v1696 = vunpack.c.l.b16 %v334
    %v1697 = vunpack.c.h.b16 %v334
    %v1698 = vunpack.c.l.b16 %v335
    %v1699 = vunpack.c.h.b16 %v335
    %v1700 = vunpack.c.l.b16 %v336
    %v1701 = vunpack.c.h.b16 %v336
    %v1702 = vunpack.c.l.b16 %v337
    %v1703 = vunpack.c.h.b16 %v337
    %v1704 = vunpack.c.l.b16 %v338
    %v1705 = vunpack.c.h.b16 %v338
    %v1706 = vunpack.c.l.b16 %v339
    %v1707 = vunpack.c.h.b16 %v339
    %v1708 = vunpack.c.l.b16 %v340
    %v1709 = vunpack.c.h.b16 %v340
    %v1710 = vunpack.c.l.b16 %v341
    %v1711 = vunpack.c.h.b16 %v341
    %v1712 = vunpack.c.l.b16 %v342
    %v1713 = vunpack.c.h.b16 %v342
    %v1714 = vunpack.c.l.b16 %v343
    %v1715 = vunpack.c.h.b16 %v343
    %v1716 = vunpack.c.l.b16 %v344
    %v1717 = vunpack.c.h.b16 %v344
    %v1718 = vunpack.c.l.b16 %v345
    %v1719 = vunpack.c.h.b16 %v345
    %v1720 = vunpack.c.l.b16 %v346
    %v1721 = vunpack.c.h.b16 %v346
    %v1722 = vunpack.c.l.b16 %v347
    %v1723 = vunpack.c.h.b16 %v347
    %v1724 = vunpack.c.l.b16 %v348
    %v1725 = vunpack.c.h.b16 %v348
    %v1726 = vunpack.c.l.b16 %v349
    %v1727 = vunpack.c.h.b16 %v349
    %v1728 = vunpack.c.l.b16 %v350
    %v1729 = vunpack.c.h.b16 %v350
    %v1730 = vunpack.c.l.b16 %v351
    %v1731 = vunpack.c.h.b16 %v351
    %v1732 = vunpack.c.l.b16 %v352
    %v1733 = vunpack.c.h.b16 %v352
    %v1734 = vunpack.c.l.b16 %v353
    %v1735 = vunpack.c.h.b16 %v353
    %v1736 = vunpack.c.l.b16 %v354
    %v1737 = vunpack.c.h.b16 %v354
    %v1738 = vunpack.c.l.b16 %v355
    %v1739 = vunpack.c.h.b16 %v355
    %v1740 = vunpack.c.l.b16 %v356
    %v1741 = vunpack.c.h.b16 %v356
    %v1742 = vunpack.c.l.b16 %v357
    %v1743 = vunpack.c.h.b16 %v357
    %v1744 = vunpack.c.l.b16 %v358
    %v1745 = vunpack.c.h.b16 %v358
    %v1746 = vunpack.c.l.b16 %v359
    %v1747 = vunpack.c.h.b16 %v359
    %v1748 = vunpack.c.l.b16 %v360
    %v1749 = vunpack.c.h.b16 %v360
    %v1750 = vunpack.c.l.b16 %v361
    %v1751 = vunpack.c.h.b16 %v361
    %v1752 = vunpack.c.l.b16 %v362
    %v1753 = vunpack.c.h.b16 %v362
    %v1754 = vunpack.c.l.b16 %v363
    %v1755 = vunpack.c.h.b16 %v363
    %v1756 = vunpack.c.l.b16 %v364
    %v1757 = vunpack.c.h.b16 %v364
    %v1758 = vunpack.c.l.b16 %v365
    %v1759 = vunpack.c.h.b16 %v365
    %v1760 = vunpack.c.l.b16 %v366
    %v1761 = vunpack.c.h.b16 %v366
    %v1762 = vunpack.c.l.b16 %v367
    %v1763 = vunpack.c.h.b16 %v367
    %v1764 = vunpack.c.l.b16 %v368
    %v1765 = vunpack.c.h.b16 %v368
    %v1766 = vunpack.c.l.b16 %v369
    %v1767 = vunpack.c.h.b16 %v369
    %v1768 = vunpack.c.l.b16 %v370
    %v1769 = vunpack.c.h.b16 %v370
    %v1770 = vunpack.c.l.b16 %v371
    %v1771 = vunpack.c.h.b16 %v371
    %v1772 = vunpack.c.l.b16 %v372
    %v1773 = vunpack.c.h.b16 %v372
    %v1774 = vunpack.c.l.b16 %v373
    %v1775 = vunpack.c.h.b16 %v373
    %v1776 = vunpack.c.l.b16 %v374
    %v1777 = vunpack.c.h.b16 %v374
    %v1778 = vunpack.c.l.b16 %v375
    %v1779 = vunpack.c.h.b16 %v375
    %v1780 = vunpack.c.l.b16 %v376
    %v1781 = vunpack.c.h.b16 %v376
    %v1782 = vunpack.c.l.b16 %v377
    %v1783 = vunpack.c.h.b16 %v377
    %v1784 = vunpack.c.l.b16 %v378
    %v1785 = vunpack.c.h.b16 %v378
    %v1786 = vunpack.c.l.b16 %v379
    %v1787 = vunpack.c.h.b16 %v379
    %v1788 = vunpack.c.l.b16 %v380
    %v1789 = vunpack.c.h.b16 %v380
    %v1790 = vunpack.c.l.b16 %v381
    %v1791 = vunpack.c.h.b16 %v381
    %v1792 = vunpack.c.l.b16 %v382
    %v1793 = vunpack.c.h.b16 %v382
    %v1794 = vunpack.c.l.b16 %v383
    %v1795 = vunpack.c.h.b16 %v383
    %v1796 = vunpack.c.l.b16 %v384
    %v1797 = vunpack.c.h.b16 %v384
    %v1798 = vunpack.c.l.b16 %v385
    %v1799 = vunpack.c.h.b16 %v385
    %v1800 = vunpack.c.l.b16 %v386
    %v1801 = vunpack.c.h.b16 %v386
    %v1802 = vunpack.c.l.b16 %v387
    %v1803 = vunpack.c.h.b16 %v387
    %v1804 = vunpack.c.l.b16 %v388
    %v1805 = vunpack.c.h.b16 %v388
    %v1806 = vunpack.c.l.b16 %v389
    %v1807 = vunpack.c.h.b16 %v389
    %v1808 = vunpack.c.l.b16 %v390
    %v1809 = vunpack.c.h.b16 %v390
    %v1810 = vunpack.c.l.b16 %v391
    %v1811 = vunpack.c.h.b16 %v391
    %v1812 = vunpack.c.l.b16 %v392
    %v1813 = vunpack.c.h.b16 %v392
    %v1814 = vunpack.c.l.b16 %v393
    %v1815 = vunpack.c.h.b16 %v393
    %v1816 = vunpack.c.l.b16 %v394
    %v1817 = vunpack.c.h.b16 %v394
    %v1818 = vunpack.c.l.b16 %v395
    %v1819 = vunpack.c.h.b16 %v395
    %v1820 = vunpack.c.l.b16 %v396
    %v1821 = vunpack.c.h.b16 %v396
    %v1822 = vunpack.c.l.b16 %v397
    %v1823 = vunpack.c.h.b16 %v397
    %v1824 = vunpack.c.l.b16 %v398
    %v1825 = vunpack.c.h.b16 %v398
    %v1826 = vunpack.c.l.b16 %v399
    %v1827 = vunpack.c.h.b16 %v399
    %v1828 = vunpack.c.l.b16 %v400
    %v1829 = vunpack.c.h.b16 %v400
    %v1830 = vunpack.c.l.b16 %v401
    %v1831 = vunpack.c.h.b16 %v401
    %v1832 = vunpack.c.l.b16 %v402
    %v1833 = vunpack.c.h.b16 %v402
    %v1834 = vunpack.c.l.b16 %v403
    %v1835 = vunpack.c.h.b16 %v403
    %v1836 = vunpack.c.l.b16 %v404
    %v1837 = vunpack.c.h.b16 %v404
    %v1838 = vunpack.c.l.b16 %v405
    %v1839 = vunpack.c.h.b16 %v405
    %v1840 = vunpack.c.l.b16 %v406
    %v1841 = vunpack.c.h.b16 %v406
    %v1842 = vunpack.c.l.b16 %v407
    %v1843 = vunpack.c.h.b16 %v407
    %v1844 = vunpack.c.l.b16 %v408
    %v1845 = vunpack.c.h.b16 %v408
    %v1846 = vunpack.c.l.b16 %v409
    %v1847 = vunpack.c.h.b16 %v409
    %v1848 = vunpack.c.l.b16 %v410
    %v1849 = vunpack.c.h.b16 %v410
    %v1850 = vunpack.c.l.b16 %v411
    %v1851 = vunpack.c.h.b16 %v411
    %v1852 = vunpack.c.l.b16 %v412
    %v1853 = vunpack.c.h.b16 %v412
    %v1854 = vunpack.c.l.b16 %v413
    %v1855 = vunpack.c.h.b16 %v413
    %v1856 = vunpack.c.l.b16 %v414
    %v1857 = vunpack.c.h.b16 %v414
    %v1858 = vunpack.c.l.b16 %v415
    %v1859 = vunpack.c.h.b16 %v415
    %v1860 = vunpack.c.l.b16 %v416
    %v1861 = vunpack.c.h.b16 %v416
    %v1862 = vunpack.c.l.b16 %v417
    %v1863 = vunpack.c.h.b16 %v417
    %v1864 = vunpack.c.l.b16 %v418
    %v1865 = vunpack.c.h.b16 %v418
    %v1866 = vunpack.c.l.b16 %v419
    %v1867 = vunpack.c.h.b16 %v419
    %v1868 = vunpack.c.l.b16 %v420
    %v1869 = vunpack.c.h.b16 %v420
    %v1870 = vunpack.c.l.b16 %v421
    %v1871 = vunpack.c.h.b16 %v421
    %v1872 = vunpack.c.l.b16 %v422
    %v1873 = vunpack.c.h.b16 %v422
    %v1874 = vunpack.c.l.b16 %v423
    %v1875 = vunpack.c.h.b16 %v423
    %v1876 = vunpack.c.l.b16 %v424
    %v1877 = vunpack.c.h.b16 %v424
    %v1878 = vunpack.c.l.b16 %v425
    %v1879 = vunpack.c.h.b16 %v425
    %v1880 = vunpack.c.l.b16 %v426
    %v1881 = vunpack.c.h.b16 %v426
    %v1882 = vunpack.c.l.b16 %v427
    %v1883 = vunpack.c.h.b16 %v427
    %v1884 = vunpack.c.l.b16 %v428
    %v1885 = vunpack.c.h.b16 %v428
    %v1886 = vunpack.c.l.b16 %v429
    %v1887 = vunpack.c.h.b16 %v429
    %v1888 = vunpack.c.l.b16 %v430
    %v1889 = vunpack.c.h.b16 %v430
    %v1890 = vunpack.c.l.b16 %v431
    %v1891 = vunpack.c.h.b16 %v431
    %v1892 = vunpack.c.l.b16 %v432
    %v1893 = vunpack.c.h.b16 %v432
    %v1894 = vunpack.c.l.b16 %v433
    %v1895 = vunpack.c.h.b16 %v433
    %v1896 = vunpack.c.l.b16 %v434
    %v1897 = vunpack.c.h.b16 %v434
    %v1898 = vunpack.c.l.b16 %v435
    %v1899 = vunpack.c.h.b16 %v435
    %v1900 = vunpack.c.l.b16 %v436
    %v1901 = vunpack.c.h.b16 %v436
    %v1902 = vunpack.c.l.b16 %v437
    %v1903 = vunpack.c.h.b16 %v437
    %v1904 = vunpack.c.l.b16 %v438
    %v1905 = vunpack.c.h.b16 %v438
    %v1906 = vunpack.c.l.b16 %v439
    %v1907 = vunpack.c.h.b16 %v439
    %v1908 = vunpack.c.l.b16 %v440
    %v1909 = vunpack.c.h.b16 %v440
    %v1910 = vunpack.c.l.b16 %v441
    %v1911 = vunpack.c.h.b16 %v441
    %v1912 = vunpack.c.l.b16 %v442
    %v1913 = vunpack.c.h.b16 %v442
    %v1914 = vunpack.c.l.b16 %v443
    %v1915 = vunpack.c.h.b16 %v443
    %v1916 = vunpack.c.l.b16 %v444
    %v1917 = vunpack.c.h.b16 %v444
    %v1918 = vunpack.c.l.b16 %v445
    %v1919 = vunpack.c.h.b16 %v445
    %v1920 = vunpack.c.l.b16 %v446
    %v1921 = vunpack.c.h.b16 %v446
    %v1922 = vunpack.c.l.b16 %v447
    %v1923 = vunpack.c.h.b16 %v447
    %v1924 = vunpack.c.l.b16 %v448
    %v1925 = vunpack.c.h.b16 %v448
    %v1926 = vunpack.c.l.b16 %v449
    %v1927 = vunpack.c.h.b16 %v449
    %v1928 = vunpack.c.l.b16 %v450
    %v1929 = vunpack.c.h.b16 %v450
    %v1930 = vunpack.c.l.b16 %v451
    %v1931 = vunpack.c.h.b16 %v451
    %v1932 = vunpack.c.l.b16 %v452
    %v1933 = vunpack.c.h.b16 %v452
    %v1934 = vunpack.c.l.b16 %v453
    %v1935 = vunpack.c.h.b16 %v453
    %v1936 = vunpack.c.l.b16 %v454
    %v1937 = vunpack.c.h.b16 %v454
    %v1938 = vunpack.c.l.b16 %v455
    %v1939 = vunpack.c.h.b16 %v455
    %v1940 = vunpack.c.l.b16 %v456
    %v1941 = vunpack.c.h.b16 %v456
    %v1942 = vunpack.c.l.b16 %v457
    %v1943 = vunpack.c.h.b16 %v457
    %v1944 = vunpack.c.l.b16 %v458
    %v1945 = vunpack.c.h.b16 %v458
    %v1946 = vunpack.c.l.b16 %v459
    %v1947 = vunpack.c.h.b16 %v459
    %v1948 = vunpack.c.l.b16 %v460
    %v1949 = vunpack.c.h.b16 %v460
    %v1950 = vunpack.c.l.b16 %v461
    %v1951 = vunpack.c.h.b16 %v461
    %v1952 = vunpack.c.l.b16 %v462
    %v1953 = vunpack.c.h.b16 %v462
    %v1954 = vunpack.c.l.b16 %v463
    %v1955 = vunpack.c.h.b16 %v463
    %v1956 = vunpack.c.l.b16 %v464
    %v1957 = vunpack.c.h.b16 %v464
    %v1958 = vunpack.c.l.b16 %v465
    %v1959 = vunpack.c.h.b16 %v465
    %v1960 = vunpack.c.l.b16 %v466
    %v1961 = vunpack.c.h.b16 %v466
    %v1962 = vunpack.c.l.b16 %v467
    %v1963 = vunpack.c.h.b16 %v467
    %v1964 = vunpack.c.l.b16 %v468
    %v1965 = vunpack.c.h.b16 %v468
    %v1966 = vunpack.c.l.b16 %v469
    %v1967 = vunpack.c.h.b16 %v469
    %v1968 = vunpack.c.l.b16 %v470
    %v1969 = vunpack.c.h.b16 %v470
    %v1970 = vunpack.c.l.b16 %v471
    %v1971 = vunpack.c.h.b16 %v471
    %v1972 = vunpack.c.l.b16 %v472
    %v1973 = vunpack.c.h.b16 %v472
    %v1974 = vunpack.c.l.b16 %v473
    %v1975 = vunpack.c.h.b16 %v473
    %v1976 = vunpack.c.l.b16 %v474
    %v1977 = vunpack.c.h.b16 %v474
    %v1978 = vunpack.c.l.b16 %v475
    %v1979 = vunpack.c.h.b16 %v475
    %v1980 = vunpack.c.l.b16 %v476
    %v1981 = vunpack.c.h.b16 %v476
    %v1982 = vunpack.c.l.b16 %v477
    %v1983 = vunpack.c.h.b16 %v477
    %v1984 = vunpack.c.l.b16 %v478
    %v1985 = vunpack.c.h.b16 %v478
    %v1986 = vunpack.c.l.b16 %v479
    %v1987 = vunpack.c.h.b16 %v479
    %v1988 = vunpack.c.l.b16 %v480
    %v1989 = vunpack.c.h.b16 %v480
    %v1990 = vunpack.c.l.b16 %v481
    %v1991 = vunpack.c.h.b16 %v481
    %v1992 = vunpack.c.l.b16 %v482
    %v1993 = vunpack.c.h.b16 %v482
    %v1994 = vunpack.c.l.b16 %v483
    %v1995 = vunpack.c.h.b16 %v483
    %v1996 = vunpack.c.l.b16 %v484
    %v1997 = vunpack.c.h.b16 %v484
    %v1998 = vunpack.c.l.b16 %v485
    %v1999 = vunpack.c.h.b16 %v485
    %v2000 = vunpack.c.l.b16 %v486
    %v2001 = vunpack.c.h.b16 %v486
    %v2002 = vunpack.c.l.b16 %v487
    %v2003 = vunpack.c.h.b16 %v487
    %v2004 = vunpack.c.l.b16 %v488
    %v2005 = vunpack.c.h.b16 %v488
    %v2006 = vunpack.c.l.b16 %v489
    %v2007 = vunpack.c.h.b16 %v489
    %v2008 = vunpack.c.l.b16 %v490
    %v2009 = vunpack.c.h.b16 %v490
    %v2010 = vunpack.c.l.b16 %v491
    %v2011 = vunpack.c.h.b16 %v491
    %v2012 = vunpack.c.l.b16 %v492
    %v2013 = vunpack.c.h.b16 %v492
    %v2014 = vunpack.c.l.b16 %v493
    %v2015 = vunpack.c.h.b16 %v493
    %v2016 = vunpack.c.l.b16 %v494
    %v2017 = vunpack.c.h.b16 %v494
    %v2018 = vunpack.c.l.b16 %v495
    %v2019 = vunpack.c.h.b16 %v495
    %v2020 = vunpack.c.l.b16 %v496
    %v2021 = vunpack.c.h.b16 %v496
    %v2022 = vunpack.c.l.b16 %v497
    %v2023 = vunpack.c.h.b16 %v497
    %v2024 = vunpack.c.l.b16 %v498
    %v2025 = vunpack.c.h.b16 %v498
    %v2026 = vunpack.c.l.b16 %v499
    %v2027 = vunpack.c.h.b16 %v499
    %v2028 = vunpack.c.l.b16 %v500
    %v2029 = vunpack.c.h.b16 %v500
    %v2030 = vunpack.c.l.b16 %v501
    %v2031 = vunpack.c.h.b16 %v501
    %v2032 = vunpack.c.l.b16 %v502
    %v2033 = vunpack.c.h.b16 %v502
    %v2034 = vunpack.c.l.b16 %v503
    %v2035 = vunpack.c.h.b16 %v503
    %v2036 = vunpack.c.l.b16 %v504
    %v2037 = vunpack.c.h.b16 %v504
    %v2038 = vunpack.c.l.b16 %v505
    %v2039 = vunpack.c.h.b16 %v505
    %v2040 = vunpack.c.l.b16 %v506
    %v2041 = vunpack.c.h.b16 %v506
    %v2042 = vunpack.c.l.b16 %v507
    %v2043 = vunpack.c.h.b16 %v507
    %v2044 = vunpack.c.l.b16 %v508
    %v2045 = vunpack.c.h.b16 %v508
    %v2046 = vunpack.c.l.b16 %v509
    %v2047 = vunpack.c.h.b16 %v509
    %v2048 = vunpack.c.l.b16 %v510
    %v2049 = vunpack.c.h.b16 %v510
    %v2050 = vunpack.c.l.b16 %v511
    %v2051 = vunpack.c.h.b16 %v511
    %v2052 = vunpack.c.l.b16 %v512
    %v2053 = vunpack.c.h.b16 %v512
    %v2054 = vunpack.c.l.b16 %v513
    %v2055 = vunpack.c.h.b16 %v513
    %v2056 = vunpack.c.l.b16 %v514
    %v2057 = vunpack.c.h.b16 %v514
    %v2058 = vunpack.c.l.b16 %v515
    %v2059 = vunpack.c.h.b16 %v515
    %v2060 = vunpack.c.l.b16 %v516
    %v2061 = vunpack.c.h.b16 %v516
    %v2062 = vunpack.c.l.b16 %v517
    %v2063 = vunpack.c.h.b16 %v517
    %v2064 = vunpack.c.l.b16 %v518
    %v2065 = vunpack.c.h.b16 %v518
    %v2066 = vunpack.c.l.b16 %v519
    %v2067 = vunpack.c.h.b16 %v519
    %v2068 = vunpack.c.l.b16 %v520
    %v2069 = vunpack.c.h.b16 %v520
    %v2070 = vunpack.c.l.b16 %v521
    %v2071 = vunpack.c.h.b16 %v521
    %v2072 = vunpack.c.l.b16 %v522
    %v2073 = vunpack.c.h.b16 %v522
    %v2074 = vunpack.c.l.b16 %v523
    %v2075 = vunpack.c.h.b16 %v523
    %v2076 = vunpack.c.l.b16 %v524
    %v2077 = vunpack.c.h.b16 %v524
    %v2078 = vunpack.c.l.b16 %v525
    %v2079 = vunpack.c.h.b16 %v525
    %v2080 = vunpack.c.l.b16 %v526
    %v2081 = vunpack.c.h.b16 %v526
    %v2082 = vunpack.c.l.b16 %v527
    %v2083 = vunpack.c.h.b16 %v527
    %v2084 = vunpack.c.l.b16 %v528
    %v2085 = vunpack.c.h.b16 %v528
    %v2086 = vunpack.c.l.b16 %v529
    %v2087 = vunpack.c.h.b16 %v529
    %v2088 = vunpack.c.l.b16 %v530
    %v2089 = vunpack.c.h.b16 %v530
    %v2090 = vunpack.c.l.b16 %v531
    %v2091 = vunpack.c.h.b16 %v531
    %v2092 = vunpack.c.l.b16 %v532
    %v2093 = vunpack.c.h.b16 %v532
    %v2094 = vunpack.c.l.b16 %v533
    %v2095 = vunpack.c.h.b16 %v533
    %v2096 = vunpack.c.l.b16 %v534
    %v2097 = vunpack.c.h.b16 %v534
    %v2098 = vunpack.c.l.b16 %v535
    %v2099 = vunpack.c.h.b16 %v535
    %v2100 = vunpack.c.l.b16 %v536
    %v2101 = vunpack.c.h.b16 %v536
    %v2102 = vunpack.c.l.b16 %v537
    %v2103 = vunpack.c.h.b16 %v537
    %v2104 = vunpack.c.l.b16 %v538
    %v2105 = vunpack.c.h.b16 %v538
    %v2106 = vunpack.c.l.b16 %v539
    %v2107 = vunpack.c.h.b16 %v539
    %v2108 = vunpack.c.l.b16 %v540
    %v2109 = vunpack.c.h.b16 %v540
    %v2110 = vunpack.c.l.b16 %v541
    %v2111 = vunpack.c.h.b16 %v541
    %v2112 = vunpack.c.l.b16 %v542
    %v2113 = vunpack.c.h.b16 %v542
    %v2114 = vunpack.c.l.b16 %v543
    %v2115 = vunpack.c.h.b16 %v543
    %v2116 = vunpack.c.l.b16 %v544
    %v2117 = vunpack.c.h.b16 %v544
    %v2118 = vunpack.c.l.b16 %v545
    %v2119 = vunpack.c.h.b16 %v545
    %v2120 = vunpack.c.l.b16 %v546
    %v2121 = vunpack.c.h.b16 %v546
    %v2122 = vunpack.c.l.b16 %v547
    %v2123 = vunpack.c.h.b16 %v547
    %v2124 = vunpack.c.l.b16 %v548
    %v2125 = vunpack.c.h.b16 %v548
    %v2126 = vunpack.c.l.b16 %v549
    %v2127 = vunpack.c.h.b16 %v549
    %v2128 = vunpack.c.l.b16 %v550
    %v2129 = vunpack.c.h.b16 %v550
    %v2130 = vunpack.c.l.b16 %v551
    %v2131 = vunpack.c.h.b16 %v551
    %v2132 = vunpack.c.l.b16 %v552
    %v2133 = vunpack.c.h.b16 %v552
    %v2134 = vunpack.c.l.b16 %v553
    %v2135 = vunpack.c.h.b16 %v553
    %v2136 = vunpack.c.l.b16 %v554
    %v2137 = vunpack.c.h.b16 %v554
    %v2138 = vunpack.c.l.b16 %v555
    %v2139 = vunpack.c.h.b16 %v555
    %v2140 = vunpack.c.l.b16 %v556
    %v2141 = vunpack.c.h.b16 %v556
    %v2142 = vunpack.c.l.b16 %v557
    %v2143 = vunpack.c.h.b16 %v557
    %v2144 = vunpack.c.l.b16 %v558
    %v2145 = vunpack.c.h.b16 %v558
    %v2146 = vunpack.c.l.b16 %v559
    %v2147 = vunpack.c.h.b16 %v559
    %v2148 = vunpack.c.l.b16 %v560
    %v2149 = vunpack.c.h.b16 %v560
    %v2150 = vunpack.c.l.b16 %v561
    %v2151 = vunpack.c.h.b16 %v561
    %v2152 = vunpack.c.l.b16 %v562
    %v2153 = vunpack.c.h.b16 %v562
    %v2154 = vunpack.c.l.b16 %v563
    %v2155 = vunpack.c.h.b16 %v563
    %v2156 = vunpack.c.l.b16 %v564
    %v2157 = vunpack.c.h.b16 %v564
    %v2158 = vunpack.c.l.b16 %v565
    %v2159 = vunpack.c.h.b16 %v565
    %v2160 = vunpack.c.l.b16 %v566
    %v2161 = vunpack.c.h.b16 %v566
    %v2162 = vunpack.c.l.b16 %v567
    %v2163 = vunpack.c.h.b16 %v567
    %v2164 = vunpack.c.l.b16 %v568
    %v2165 = vunpack.c.h.b16 %v568
    %v2166 = vunpack.c.l.b16 %v569
    %v2167 = vunpack.c.h.b16 %v569
    %v2168 = vunpack.c.l.b16 %v570
    %v2169 = vunpack.c.h.b16 %v570
    %v2170 = vunpack.c.l.b16 %v571
    %v2171 = vunpack.c.h.b16 %v571
    %v2172 = vunpack.c.l.b16 %v572
    %v2173 = vunpack.c.h.b16 %v572
    %v2174 = vunpack.c.l.b16 %v573
    %v2175 = vunpack.c.h.b16 %v573
    %v2176 = vunpack.c.l.b16 %v574
    %v2177 = vunpack.c.h.b16 %v574
    %v2178 = vunpack.c.l.b16 %v575
    %v2179 = vunpack.c.h.b16 %v575
    %v2180 = vunpack.c.l.b16 %v576
    %v2181 = vunpack.c.h.b16 %v576
    %v2182 = vunpack.c.l.b16 %v577
    %v2183 = vunpack.c.h.b16 %v577
    %v2184 = vunpack.c.l.b16 %v578
    %v2185 = vunpack.c.h.b16 %v578
    %v2186 = vunpack.c.l.b16 %v579
    %v2187 = vunpack.c.h.b16 %v579
    %v2188 = vunpack.c.l.b16 %v580
    %v2189 = vunpack.c.h.b16 %v580
    %v2190 = vunpack.c.l.b16 %v581
    %v2191 = vunpack.c.h.b16 %v581
    %v2192 = vunpack.c.l.b16 %v582
    %v2193 = vunpack.c.h.b16 %v582
    %v2194 = vunpack.c.l.b16 %v583
    %v2195 = vunpack.c.h.b16 %v583
    %v2196 = vunpack.c.l.b16 %v584
    %v2197 = vunpack.c.h.b16 %v584
    %v2198 = vunpack.c.l.b16 %v585
    %v2199 = vunpack.c.h.b16 %v585
    %v2200 = vunpack.c.l.b16 %v586
    %v2201 = vunpack.c.h.b16 %v586
    %v2202 = vunpack.c.l.b16 %v587
    %v2203 = vunpack.c.h.b16 %v587
    %v2204 = vunpack.c.l.b16 %v588
    %v2205 = vunpack.c.h.b16 %v588
    %v2206 = vunpack.c.l.b16 %v589
    %v2207 = vunpack.c.h.b16 %v589
    %v2208 = vunpack.c.l.b16 %v590
    %v2209 = vunpack.c.h.b16 %v590
    %v2210 = vunpack.c.l.b16 %v591
    %v2211 = vunpack.c.h.b16 %v591
    %v2212 = vunpack.c.l.b16 %v592
    %v2213 = vunpack.c.h.b16 %v592
    %v2214 = vunpack.c.l.b16 %v593
    %v2215 = vunpack.c.h.b16 %v593
    %v2216 = vunpack.c.l.b16 %v594
    %v2217 = vunpack.c.h.b16 %v594
    %v2218 = vunpack.c.l.b16 %v595
    %v2219 = vunpack.c.h.b16 %v595
    %v2220 = vunpack.c.l.b16 %v596
    %v2221 = vunpack.c.h.b16 %v596
    %v2222 = vunpack.c.l.b16 %v597
    %v2223 = vunpack.c.h.b16 %v597
    %v2224 = vunpack.c.l.b16 %v598
    %v2225 = vunpack.c.h.b16 %v598
    %v2226 = vunpack.c.l.b16 %v599
    %v2227 = vunpack.c.h.b16 %v599
    %v2228 = vunpack.c.l.b16 %v600
    %v2229 = vunpack.c.h.b16 %v600
    %v2230 = vunpack.c.l.b16 %v601
    %v2231 = vunpack.c.h.b16 %v601
    %v2232 = vunpack.c.l.b16 %v602
    %v2233 = vunpack.c.h.b16 %v602
    %v2234 = vunpack.c.l.b16 %v603
    %v2235 = vunpack.c.h.b16 %v603
    %v2236 = vunpack.c.l.b16 %v604
    %v2237 = vunpack.c.h.b16 %v604
    %v2238 = vunpack.c.l.b16 %v605
    %v2239 = vunpack.c.h.b16 %v605
    %v2240 = vunpack.c.l.b16 %v606
    %v2241 = vunpack.c.h.b16 %v606
    %v2242 = vunpack.c.l.b16 %v607
    %v2243 = vunpack.c.h.b16 %v607
    %v2244 = vunpack.c.l.b16 %v608
    %v2245 = vunpack.c.h.b16 %v608
    %v2246 = vunpack.c.l.b16 %v609
    %v2247 = vunpack.c.h.b16 %v609
    %v2248 = vunpack.c.l.b16 %v610
    %v2249 = vunpack.c.h.b16 %v610
    %v2250 = vunpack.c.l.b16 %v611
    %v2251 = vunpack.c.h.b16 %v611
    %v2252 = vunpack.c.l.b16 %v612
    %v2253 = vunpack.c.h.b16 %v612
    %v2254 = vunpack.c.l.b16 %v613
    %v2255 = vunpack.c.h.b16 %v613
    %v2256 = vunpack.c.l.b16 %v614
    %v2257 = vunpack.c.h.b16 %v614
    %v2258 = vunpack.c.l.b16 %v615
    %v2259 = vunpack.c.h.b16 %v615
    %v2260 = vunpack.c.l.b16 %v616
    %v2261 = vunpack.c.h.b16 %v616
    %v2262 = vunpack.c.l.b16 %v617
    %v2263 = vunpack.c.h.b16 %v617
    %v2264 = vunpack.c.l.b16 %v618
    %v2265 = vunpack.c.h.b16 %v618
    %v2266 = vunpack.c.l.b16 %v619
    %v2267 = vunpack.c.h.b16 %v619
    %v2268 = vunpack.c.l.b16 %v620
    %v2269 = vunpack.c.h.b16 %v620
    %v2270 = vunpack.c.l.b16 %v621
    %v2271 = vunpack.c.h.b16 %v621
    %v2272 = vunpack.c.l.b16 %v622
    %v2273 = vunpack.c.h.b16 %v622
    %v2274 = vunpack.c.l.b16 %v623
    %v2275 = vunpack.c.h.b16 %v623
    %v2276 = vunpack.c.l.b16 %v624
    %v2277 = vunpack.c.h.b16 %v624
    %v2278 = vunpack.c.l.b16 %v625
    %v2279 = vunpack.c.h.b16 %v625
    %v2280 = vunpack.c.l.b16 %v626
    %v2281 = vunpack.c.h.b16 %v626
    %v2282 = vunpack.c.l.b16 %v627
    %v2283 = vunpack.c.h.b16 %v627
    %v2284 = vunpack.c.l.b16 %v628
    %v2285 = vunpack.c.h.b16 %v628
    %v2286 = vunpack.c.l.b16 %v629
    %v2287 = vunpack.c.h.b16 %v629
    %v2288 = vunpack.c.l.b16 %v630
    %v2289 = vunpack.c.h.b16 %v630
    %v2290 = vunpack.c.l.b16 %v631
    %v2291 = vunpack.c.h.b16 %v631
    %v2292 = vunpack.c.l.b16 %v632
    %v2293 = vunpack.c.h.b16 %v632
    %v2294 = vunpack.c.l.b16 %v633
    %v2295 = vunpack.c.h.b16 %v633
    %v2296 = vunpack.c.l.b16 %v634
    %v2297 = vunpack.c.h.b16 %v634
    %v2298 = vunpack.c.l.b16 %v635
    %v2299 = vunpack.c.h.b16 %v635
    %v2300 = vunpack.c.l.b16 %v636
    %v2301 = vunpack.c.h.b16 %v636
    %v2302 = vunpack.c.l.b16 %v637
    %v2303 = vunpack.c.h.b16 %v637
    %v2304 = vunpack.c.l.b16 %v638
    %v2305 = vunpack.c.h.b16 %v638
    %v2306 = vunpack.c.l.b16 %v639
    %v2307 = vunpack.c.h.b16 %v639
    %v2308 = vunpack.c.l.b16 %v640
    %v2309 = vunpack.c.h.b16 %v640
    %v2310 = vunpack.c.l.b16 %v641
    %v2311 = vunpack.c.h.b16 %v641
    %v2312 = vunpack.c.l.b16 %v642
    %v2313 = vunpack.c.h.b16 %v642
    %v2314 = vunpack.c.l.b16 %v643
    %v2315 = vunpack.c.h.b16 %v643
    %v2316 = vunpack.c.l.b16 %v644
    %v2317 = vunpack.c.h.b16 %v644
    %v2318 = vunpack.c.l.b16 %v645
    %v2319 = vunpack.c.h.b16 %v645
    %v2320 = vpack.c.b16 %v1432, %v1424
    %v2321 = vpack.c.b16 %v1433, %v1425
    %v2322 = vpack.c.b16 %v1434, %v1426
    %v2323 = vpack.c.b16 %v1435, %v1427
    %v2324 = vpack.c.b16 %v1436, %v1428
    %v2325 = vpack.c.b16 %v1437, %v1429
    %v2326 = vpack.c.b16 %v1438, %v1430
    %v2327 = vpack.c.b16 %v1439, %v1431
    %v2328 = vpack.c.b16 %v1448, %v1440
    %v2329 = vpack.c.b16 %v1449, %v1441
    %v2330 = vpack.c.b16 %v1450, %v1442
    %v2331 = vpack.c.b16 %v1451, %v1443
    %v2332 = vpack.c.b16 %v1452, %v1444
    %v2333 = vpack.c.b16 %v1453, %v1445
    %v2334 = vpack.c.b16 %v1454, %v1446
    %v2335 = vpack.c.b16 %v1455, %v1447
    %v2336 = vpack.c.b16 %v1464, %v1456
    %v2337 = vpack.c.b16 %v1465, %v1457
    %v2338 = vpack.c.b16 %v1466, %v1458
    %v2339 = vpack.c.b16 %v1467, %v1459
    %v2340 = vpack.c.b16 %v1468, %v1460
    %v2341 = vpack.c.b16 %v1469, %v1461
    %v2342 = vpack.c.b16 %v1470, %v1462
    %v2343 = vpack.c.b16 %v1471, %v1463
    %v2344 = vpack.c.b16 %v1480, %v1472
    %v2345 = vpack.c.b16 %v1481, %v1473
    %v2346 = vpack.c.b16 %v1482, %v1474
    %v2347 = vpack.c.b16 %v1483, %v1475
    %v2348 = vpack.c.b16 %v1484, %v1476
    %v2349 = vpack.c.b16 %v1485, %v1477
    %v2350 = vpack.c.b16 %v1486, %v1478
    %v2351 = vpack.c.b16 %v1487, %v1479
    %v2352 = vpack.c.b16 %v1496, %v1488
    %v2353 = vpack.c.b16 %v1497, %v1489
    %v2354 = vpack.c.b16 %v1498, %v1490
    %v2355 = vpack.c.b16 %v1499, %v1491
    %v2356 = vpack.c.b16 %v1500, %v1492
    %v2357 = vpack.c.b16 %v1501, %v1493
    %v2358 = vpack.c.b16 %v1502, %v1494
    %v2359 = vpack.c.b16 %v1503, %v1495
    %v2360 = vpack.c.b16 %v1512, %v1504
    %v2361 = vpack.c.b16 %v1513, %v1505
    %v2362 = vpack.c.b16 %v1514, %v1506
    %v2363 = vpack.c.b16 %v1515, %v1507
    %v2364 = vpack.c.b16 %v1516, %v1508
    %v2365 = vpack.c.b16 %v1517, %v1509
    %v2366 = vpack.c.b16 %v1518, %v1510
    %v2367 = vpack.c.b16 %v1519, %v1511
    %v2368 = vpack.c.b16 %v1528, %v1520
    %v2369 = vpack.c.b16 %v1529, %v1521
    %v2370 = vpack.c.b16 %v1530, %v1522
    %v2371 = vpack.c.b16 %v1531, %v1523
    %v2372 = vpack.c.b16 %v1532, %v1524
    %v2373 = vpack.c.b16 %v1533, %v1525
    %v2374 = vpack.c.b16 %v1534, %v1526
    %v2375 = vpack.c.b16 %v1535, %v1527
    %v2376 = vpack.c.b16 %v1544, %v1536
    %v2377 = vpack.c.b16 %v1545, %v1537
    %v2378 = vpack.c.b16 %v1546, %v1538
    %v2379 = vpack.c.b16 %v1547, %v1539
    %v2380 = vpack.c.b16 %v1548, %v1540
    %v2381 = vpack.c.b16 %v1549, %v1541
    %v2382 = vpack.c.b16 %v1550, %v1542
    %v2383 = vpack.c.b16 %v1551, %v1543
    %v2384 = vpack.c.b16 %v1560, %v1552
    %v2385 = vpack.c.b16 %v1561, %v1553
    %v2386 = vpack.c.b16 %v1562, %v1554
    %v2387 = vpack.c.b16 %v1563, %v1555
    %v2388 = vpack.c.b16 %v1564, %v1556
    %v2389 = vpack.c.b16 %v1565, %v1557
    %v2390 = vpack.c.b16 %v1566, %v1558
    %v2391 = vpack.c.b16 %v1567, %v1559
    %v2392 = vpack.c.b16 %v1576, %v1568
    %v2393 = vpack.c.b16 %v1577, %v1569
    %v2394 = vpack.c.b16 %v1578, %v1570
    %v2395 = vpack.c.b16 %v1579, %v1571
    %v2396 = vpack.c.b16 %v1580, %v1572
    %v2397 = vpack.c.b16 %v1581, %v1573
    %v2398 = vpack.c.b16 %v1582, %v1574
    %v2399 = vpack.c.b16 %v1583, %v1575
    %v2400 = vpack.c.b16 %v1592, %v1584
    %v2401 = vpack.c.b16 %v1593, %v1585
    %v2402 = vpack.c.b16 %v1594, %v1586
    %v2403 = vpack.c.b16 %v1595, %v1587
    %v2404 = vpack.c.b16 %v1596, %v1588
    %v2405 = vpack.c.b16 %v1597, %v1589
    %v2406 = vpack.c.b16 %v1598, %v1590
    %v2407 = vpack.c.b16 %v1599, %v1591
    %v2408 = vpack.c.b16 %v1608, %v1600
    %v2409 = vpack.c.b16 %v1609, %v1601
    %v2410 = vpack.c.b16 %v1610, %v1602
    %v2411 = vpack.c.b16 %v1611, %v1603
    %v2412 = vpack.c.b16 %v1612, %v1604
    %v2413 = vpack.c.b16 %v1613, %v1605
    %v2414 = vpack.c.b16 %v1614, %v1606
    %v2415 = vpack.c.b16 %v1615, %v1607
    %v2416 = vpack.c.b16 %v1624, %v1616
    %v2417 = vpack.c.b16 %v1625, %v1617
    %v2418 = vpack.c.b16 %v1626, %v1618
    %v2419 = vpack.c.b16 %v1627, %v1619
    %v2420 = vpack.c.b16 %v1628, %v1620
    %v2421 = vpack.c.b16 %v1629, %v1621
    %v2422 = vpack.c.b16 %v1630, %v1622
    %v2423 = vpack.c.b16 %v1631, %v1623
    %v2424 = vpack.c.b16 %v1640, %v1632
    %v2425 = vpack.c.b16 %v1641, %v1633
    %v2426 = vpack.c.b16 %v1642, %v1634
    %v2427 = vpack.c.b16 %v1643, %v1635
    %v2428 = vpack.c.b16 %v1644, %v1636
    %v2429 = vpack.c.b16 %v1645, %v1637
    %v2430 = vpack.c.b16 %v1646, %v1638
    %v2431 = vpack.c.b16 %v1647, %v1639
    %v2432 = vpack.c.b16 %v1656, %v1648
    %v2433 = vpack.c.b16 %v1657, %v1649
    %v2434 = vpack.c.b16 %v1658, %v1650
    %v2435 = vpack.c.b16 %v1659, %v1651
    %v2436 = vpack.c.b16 %v1660, %v1652
    %v2437 = vpack.c.b16 %v1661, %v1653
    %v2438 = vpack.c.b16 %v1662, %v1654
    %v2439 = vpack.c.b16 %v1663, %v1655
    %v2440 = vpack.c.b16 %v1672, %v1664
    %v2441 = vpack.c.b16 %v1673, %v1665
    %v2442 = vpack.c.b16 %v1674, %v1666
    %v2443 = vpack.c.b16 %v1675, %v1667
    %v2444 = vpack.c.b16 %v1676, %v1668
    %v2445 = vpack.c.b16 %v1677, %v1669
    %v2446 = vpack.c.b16 %v1678, %v1670
    %v2447 = vpack.c.b16 %v1679, %v1671
    %v2448 = vpack.c.b16 %v1688, %v1680
    %v2449 = vpack.c.b16 %v1689, %v1681
    %v2450 = vpack.c.b16 %v1690, %v1682
    %v2451 = vpack.c.b16 %v1691, %v1683
    %v2452 = vpack.c.b16 %v1692, %v1684
    %v2453 = vpack.c.b16 %v1693, %v1685
    %v2454 = vpack.c.b16 %v1694, %v1686
    %v2455 = vpack.c.b16 %v1695, %v1687
    %v2456 = vpack.c.b16 %v1704, %v1696
    %v2457 = vpack.c.b16 %v1705, %v1697
    %v2458 = vpack.c.b16 %v1706, %v1698
    %v2459 = vpack.c.b16 %v1707, %v1699
    %v2460 = vpack.c.b16 %v1708, %v1700
    %v2461 = vpack.c.b16 %v1709, %v1701
    %v2462 = vpack.c.b16 %v1710, %v1702
    %v2463 = vpack.c.b16 %v1711, %v1703
    %v2464 = vpack.c.b16 %v1720, %v1712
    %v2465 = vpack.c.b16 %v1721, %v1713
    %v2466 = vpack.c.b16 %v1722, %v1714
    %v2467 = vpack.c.b16 %v1723, %v1715
    %v2468 = vpack.c.b16 %v1724, %v1716
    %v2469 = vpack.c.b16 %v1725, %v1717
    %v2470 = vpack.c.b16 %v1726, %v1718
    %v2471 = vpack.c.b16 %v1727, %v1719
    %v2472 = vpack.c.b16 %v1736, %v1728
    %v2473 = vpack.c.b16 %v1737, %v1729
    %v2474 = vpack.c.b16 %v1738, %v1730
    %v2475 = vpack.c.b16 %v1739, %v1731
    %v2476 = vpack.c.b16 %v1740, %v1732
    %v2477 = vpack.c.b16 %v1741, %v1733
    %v2478 = vpack.c.b16 %v1742, %v1734
    %v2479 = vpack.c.b16 %v1743, %v1735
    %v2480 = vpack.c.b16 %v1752, %v1744
    %v2481 = vpack.c.b16 %v1753, %v1745
    %v2482 = vpack.c.b16 %v1754, %v1746
    %v2483 = vpack.c.b16 %v1755, %v1747
    %v2484 = vpack.c.b16 %v1756, %v1748
    %v2485 = vpack.c.b16 %v1757, %v1749
    %v2486 = vpack.c.b16 %v1758, %v1750
    %v2487 = vpack.c.b16 %v1759, %v1751
    %v2488 = vpack.c.b16 %v1768, %v1760
    %v2489 = vpack.c.b16 %v1769, %v1761
    %v2490 = vpack.c.b16 %v1770, %v1762
    %v2491 = vpack.c.b16 %v1771, %v1763
    %v2492 = vpack.c.b16 %v1772, %v1764
    %v2493 = vpack.c.b16 %v1773, %v1765
    %v2494 = vpack.c.b16 %v1774, %v1766
    %v2495 = vpack.c.b16 %v1775, %v1767
    %v2496 = vpack.c.b16 %v1784, %v1776
    %v2497 = vpack.c.b16 %v1785, %v1777
    %v2498 = vpack.c.b16 %v1786, %v1778
    %v2499 = vpack.c.b16 %v1787, %v1779
    %v2500 = vpack.c.b16 %v1788, %v1780
    %v2501 = vpack.c.b16 %v1789, %v1781
    %v2502 = vpack.c.b16 %v1790, %v1782
    %v2503 = vpack.c.b16 %v1791, %v1783
    %v2504 = vpack.c.b16 %v1800, %v1792
    %v2505 = vpack.c.b16 %v1801, %v1793
    %v2506 = vpack.c.b16 %v1802, %v1794
    %v2507 = vpack.c.b16 %v1803, %v1795
    %v2508 = vpack.c.b16 %v1804, %v1796
    %v2509 = vpack.c.b16 %v1805, %v1797
    %v2510 = vpack.c.b16 %v1806, %v1798
    %v2511 = vpack.c.b16 %v1807, %v1799
    %v2512 = vpack.c.b16 %v1816, %v1808
    %v2513 = vpack.c.b16 %v1817, %v1809
    %v2514 = vpack.c.b16 %v1818, %v1810
    %v2515 = vpack.c.b16 %v1819, %v1811
    %v2516 = vpack.c.b16 %v1820, %v1812
    %v2517 = vpack.c.b16 %v1821, %v1813
    %v2518 = vpack.c.b16 %v1822, %v1814
    %v2519 = vpack.c.b16 %v1823, %v1815
    %v2520 = vpack.c.b16 %v1832, %v1824
    %v2521 = vpack.c.b16 %v1833, %v1825
    %v2522 = vpack.c.b16 %v1834, %v1826
    %v2523 = vpack.c.b16 %v1835, %v1827
    %v2524 = vpack.c.b16 %v1836, %v1828
    %v2525 = vpack.c.b16 %v1837, %v1829
    %v2526 = vpack.c.b16 %v1838, %v1830
    %v2527 = vpack.c.b16 %v1839, %v1831
    %v2528 = vpack.c.b16 %v1848, %v1840
    %v2529 = vpack.c.b16 %v1849, %v1841
    %v2530 = vpack.c.b16 %v1850, %v1842
    %v2531 = vpack.c.b16 %v1851, %v1843
    %v2532 = vpack.c.b16 %v1852, %v1844
    %v2533 = vpack.c.b16 %v1853, %v1845
    %v2534 = vpack.c.b16 %v1854, %v1846
    %v2535 = vpack.c.b16 %v1855, %v1847
    %v2536 = vpack.c.b16 %v1864, %v1856
    %v2537 = vpack.c.b16 %v1865, %v1857
    %v2538 = vpack.c.b16 %v1866, %v1858
    %v2539 = vpack.c.b16 %v1867, %v1859
    %v2540 = vpack.c.b16 %v1868, %v1860
    %v2541 = vpack.c.b16 %v1869, %v1861
    %v2542 = vpack.c.b16 %v1870, %v1862
    %v2543 = vpack.c.b16 %v1871, %v1863
    %v2544 = vpack.c.b16 %v1880, %v1872
    %v2545 = vpack.c.b16 %v1881, %v1873
    %v2546 = vpack.c.b16 %v1882, %v1874
    %v2547 = vpack.c.b16 %v1883, %v1875
    %v2548 = vpack.c.b16 %v1884, %v1876
    %v2549 = vpack.c.b16 %v1885, %v1877
    %v2550 = vpack.c.b16 %v1886, %v1878
    %v2551 = vpack.c.b16 %v1887, %v1879
    %v2552 = vpack.c.b16 %v1896, %v1888
    %v2553 = vpack.c.b16 %v1897, %v1889
    %v2554 = vpack.c.b16 %v1898, %v1890
    %v2555 = vpack.c.b16 %v1899, %v1891
    %v2556 = vpack.c.b16 %v1900, %v1892
    %v2557 = vpack.c.b16 %v1901, %v1893
    %v2558 = vpack.c.b16 %v1902, %v1894
    %v2559 = vpack.c.b16 %v1903, %v1895
    %v2560 = vpack.c.b16 %v1912, %v1904
    %v2561 = vpack.c.b16 %v1913, %v1905
    %v2562 = vpack.c.b16 %v1914, %v1906
    %v2563 = vpack.c.b16 %v1915, %v1907
    %v2564 = vpack.c.b16 %v1916, %v1908
    %v2565 = vpack.c.b16 %v1917, %v1909
    %v2566 = vpack.c.b16 %v1918, %v1910
    %v2567 = vpack.c.b16 %v1919, %v1911
    %v2568 = vpack.c.b16 %v1928, %v1920
    %v2569 = vpack.c.b16 %v1929, %v1921
    %v2570 = vpack.c.b16 %v1930, %v1922
    %v2571 = vpack.c.b16 %v1931, %v1923
    %v2572 = vpack.c.b16 %v1932, %v1924
    %v2573 = vpack.c.b16 %v1933, %v1925
    %v2574 = vpack.c.b16 %v1934, %v1926
    %v2575 = vpack.c.b16 %v1935, %v1927
    %v2576 = vpack.c.b16 %v1944, %v1936
    %v2577 = vpack.c.b16 %v1945, %v1937
    %v2578 = vpack.c.b16 %v1946, %v1938
    %v2579 = vpack.c.b16 %v1947, %v1939
    %v2580 = vpack.c.b16 %v1948, %v1940
    %v2581 = vpack.c.b16 %v1949, %v1941
    %v2582 = vpack.c.b16 %v1950, %v1942
    %v2583 = vpack.c.b16 %v1951, %v1943
    %v2584 = vpack.c.b16 %v1960, %v1952
    %v2585 = vpack.c.b16 %v1961, %v1953
    %v2586 = vpack.c.b16 %v1962, %v1954
    %v2587 = vpack.c.b16 %v1963, %v1955
    %v2588 = vpack.c.b16 %v1964, %v1956
    %v2589 = vpack.c.b16 %v1965, %v1957
    %v2590 = vpack.c.b16 %v1966, %v1958
    %v2591 = vpack.c.b16 %v1967, %v1959
    %v2592 = vpack.c.b16 %v1976, %v1968
    %v2593 = vpack.c.b16 %v1977, %v1969
    %v2594 = vpack.c.b16 %v1978, %v1970
    %v2595 = vpack.c.b16 %v1979, %v1971
    %v2596 = vpack.c.b16 %v1980, %v1972
    %v2597 = vpack.c.b16 %v1981, %v1973
    %v2598 = vpack.c.b16 %v1982, %v1974
    %v2599 = vpack.c.b16 %v1983, %v1975
    %v2600 = vpack.c.b16 %v1992, %v1984
    %v2601 = vpack.c.b16 %v1993, %v1985
    %v2602 = vpack.c.b16 %v1994, %v1986
    %v2603 = vpack.c.b16 %v1995, %v1987
    %v2604 = vpack.c.b16 %v1996, %v1988
    %v2605 = vpack.c.b16 %v1997, %v1989
    %v2606 = vpack.c.b16 %v1998, %v1990
    %v2607 = vpack.c.b16 %v1999, %v1991
    %v2608 = vpack.c.b16 %v2008, %v2000
    %v2609 = vpack.c.b16 %v2009, %v2001
    %v2610 = vpack.c.b16 %v2010, %v2002
    %v2611 = vpack.c.b16 %v2011, %v2003
    %v2612 = vpack.c.b16 %v2012, %v2004
    %v2613 = vpack.c.b16 %v2013, %v2005
    %v2614 = vpack.c.b16 %v2014, %v2006
    %v2615 = vpack.c.b16 %v2015, %v2007
    %v2616 = vpack.c.b16 %v2024, %v2016
    %v2617 = vpack.c.b16 %v2025, %v2017
    %v2618 = vpack.c.b16 %v2026, %v2018
    %v2619 = vpack.c.b16 %v2027, %v2019
    %v2620 = vpack.c.b16 %v2028, %v2020
    %v2621 = vpack.c.b16 %v2029, %v2021
    %v2622 = vpack.c.b16 %v2030, %v2022
    %v2623 = vpack.c.b16 %v2031, %v2023
    %v2624 = vpack.c.b16 %v2040, %v2032
    %v2625 = vpack.c.b16 %v2041, %v2033
    %v2626 = vpack.c.b16 %v2042, %v2034
    %v2627 = vpack.c.b16 %v2043, %v2035
    %v2628 = vpack.c.b16 %v2044, %v2036
    %v2629 = vpack.c.b16 %v2045, %v2037
    %v2630 = vpack.c.b16 %v2046, %v2038
    %v2631 = vpack.c.b16 %v2047, %v2039
    %v2632 = vpack.c.b16 %v2056, %v2048
    %v2633 = vpack.c.b16 %v2057, %v2049
    %v2634 = vpack.c.b16 %v2058, %v2050
    %v2635 = vpack.c.b16 %v2059, %v2051
    %v2636 = vpack.c.b16 %v2060, %v2052
    %v2637 = vpack.c.b16 %v2061, %v2053
    %v2638 = vpack.c.b16 %v2062, %v2054
    %v2639 = vpack.c.b16 %v2063, %v2055
    %v2640 = vpack.c.b16 %v2072, %v2064
    %v2641 = vpack.c.b16 %v2073, %v2065
    %v2642 = vpack.c.b16 %v2074, %v2066
    %v2643 = vpack.c.b16 %v2075, %v2067
    %v2644 = vpack.c.b16 %v2076, %v2068
    %v2645 = vpack.c.b16 %v2077, %v2069
    %v2646 = vpack.c.b16 %v2078, %v2070
    %v2647 = vpack.c.b16 %v2079, %v2071
    %v2648 = vpack.c.b16 %v2088, %v2080
    %v2649 = vpack.c.b16 %v2089, %v2081
    %v2650 = vpack.c.b16 %v2090, %v2082
    %v2651 = vpack.c.b16 %v2091, %v2083
    %v2652 = vpack.c.b16 %v2092, %v2084
    %v2653 = vpack.c.b16 %v2093, %v2085
    %v2654 = vpack.c.b16 %v2094, %v2086
    %v2655 = vpack.c.b16 %v2095, %v2087
    %v2656 = vpack.c.b16 %v2104, %v2096
    %v2657 = vpack.c.b16 %v2105, %v2097
    %v2658 = vpack.c.b16 %v2106, %v2098
    %v2659 = vpack.c.b16 %v2107, %v2099
    %v2660 = vpack.c.b16 %v2108, %v2100
    %v2661 = vpack.c.b16 %v2109, %v2101
    %v2662 = vpack.c.b16 %v2110, %v2102
    %v2663 = vpack.c.b16 %v2111, %v2103
    %v2664 = vpack.c.b16 %v2120, %v2112
    %v2665 = vpack.c.b16 %v2121, %v2113
    %v2666 = vpack.c.b16 %v2122, %v2114
    %v2667 = vpack.c.b16 %v2123, %v2115
    %v2668 = vpack.c.b16 %v2124, %v2116
    %v2669 = vpack.c.b16 %v2125, %v2117
    %v2670 = vpack.c.b16 %v2126, %v2118
    %v2671 = vpack.c.b16 %v2127, %v2119
    %v2672 = vpack.c.b16 %v2136, %v2128
    %v2673 = vpack.c.b16 %v2137, %v2129
    %v2674 = vpack.c.b16 %v2138, %v2130
    %v2675 = vpack.c.b16 %v2139, %v2131
    %v2676 = vpack.c.b16 %v2140, %v2132
    %v2677 = vpack.c.b16 %v2141, %v2133
    %v2678 = vpack.c.b16 %v2142, %v2134
    %v2679 = vpack.c.b16 %v2143, %v2135
    %v2680 = vpack.c.b16 %v2152, %v2144
    %v2681 = vpack.c.b16 %v2153, %v2145
    %v2682 = vpack.c.b16 %v2154, %v2146
    %v2683 = vpack.c.b16 %v2155, %v2147
    %v2684 = vpack.c.b16 %v2156, %v2148
    %v2685 = vpack.c.b16 %v2157, %v2149
    %v2686 = vpack.c.b16 %v2158, %v2150
    %v2687 = vpack.c.b16 %v2159, %v2151
    %v2688 = vpack.c.b16 %v2168, %v2160
    %v2689 = vpack.c.b16 %v2169, %v2161
    %v2690 = vpack.c.b16 %v2170, %v2162
    %v2691 = vpack.c.b16 %v2171, %v2163
    %v2692 = vpack.c.b16 %v2172, %v2164
    %v2693 = vpack.c.b16 %v2173, %v2165
    %v2694 = vpack.c.b16 %v2174, %v2166
    %v2695 = vpack.c.b16 %v2175, %v2167
    %v2696 = vpack.c.b16 %v2184, %v2176
    %v2697 = vpack.c.b16 %v2185, %v2177
    %v2698 = vpack.c.b16 %v2186, %v2178
    %v2699 = vpack.c.b16 %v2187, %v2179
    %v2700 = vpack.c.b16 %v2188, %v2180
    %v2701 = vpack.c.b16 %v2189, %v2181
    %v2702 = vpack.c.b16 %v2190, %v2182
    %v2703 = vpack.c.b16 %v2191, %v2183
    %v2704 = vpack.c.b16 %v2200, %v2192
    %v2705 = vpack.c.b16 %v2201, %v2193
    %v2706 = vpack.c.b16 %v2202, %v2194
    %v2707 = vpack.c.b16 %v2203, %v2195
    %v2708 = vpack.c.b16 %v2204, %v2196
    %v2709 = vpack.c.b16 %v2205, %v2197
    %v2710 = vpack.c.b16 %v2206, %v2198
    %v2711 = vpack.c.b16 %v2207, %v2199
    %v2712 = vpack.c.b16 %v2216, %v2208
    %v2713 = vpack.c.b16 %v2217, %v2209
    %v2714 = vpack.c.b16 %v2218, %v2210
    %v2715 = vpack.c.b16 %v2219, %v2211
    %v2716 = vpack.c.b16 %v2220, %v2212
    %v2717 = vpack.c.b16 %v2221, %v2213
    %v2718 = vpack.c.b16 %v2222, %v2214
    %v2719 = vpack.c.b16 %v2223, %v2215
    %v2720 = vpack.c.b16 %v2232, %v2224
    %v2721 = vpack.c.b16 %v2233, %v2225
    %v2722 = vpack.c.b16 %v2234, %v2226
    %v2723 = vpack.c.b16 %v2235, %v2227
    %v2724 = vpack.c.b16 %v2236, %v2228
    %v2725 = vpack.c.b16 %v2237, %v2229
    %v2726 = vpack.c.b16 %v2238, %v2230
    %v2727 = vpack.c.b16 %v2239, %v2231
    %v2728 = vpack.c.b16 %v2248, %v2240
    %v2729 = vpack.c.b16 %v2249, %v2241
    %v2730 = vpack.c.b16 %v2250, %v2242
    %v2731 = vpack.c.b16 %v2251, %v2243
    %v2732 = vpack.c.b16 %v2252, %v2244
    %v2733 = vpack.c.b16 %v2253, %v2245
    %v2734 = vpack.c.b16 %v2254, %v2246
    %v2735 = vpack.c.b16 %v2255, %v2247
    %v2736 = vpack.c.b16 %v2264, %v2256
    %v2737 = vpack.c.b16 %v2265, %v2257
    %v2738 = vpack.c.b16 %v2266, %v2258
    %v2739 = vpack.c.b16 %v2267, %v2259
    %v2740 = vpack.c.b16 %v2268, %v2260
    %v2741 = vpack.c.b16 %v2269, %v2261
    %v2742 = vpack.c.b16 %v2270, %v2262
    %v2743 = vpack.c.b16 %v2271, %v2263
    %v2744 = vpack.c.b16 %v2280, %v2272
    %v2745 = vpack.c.b16 %v2281, %v2273
    %v2746 = vpack.c.b16 %v2282, %v2274
    %v2747 = vpack.c.b16 %v2283, %v2275
    %v2748 = vpack.c.b16 %v2284, %v2276
    %v2749 = vpack.c.b16 %v2285, %v2277
    %v2750 = vpack.c.b16 %v2286, %v2278
    %v2751 = vpack.c.b16 %v2287, %v2279
    %v2752 = vpack.c.b16 %v2296, %v2288
    %v2753 = vpack.c.b16 %v2297, %v2289
    %v2754 = vpack.c.b16 %v2298, %v2290
    %v2755 = vpack.c.b16 %v2299, %v2291
    %v2756 = vpack.c.b16 %v2300, %v2292
    %v2757 = vpack.c.b16 %v2301, %v2293
    %v2758 = vpack.c.b16 %v2302, %v2294
    %v2759 = vpack.c.b16 %v2303, %v2295
    %v2760 = vpack.c.b16 %v2312, %v2304
    %v2761 = vpack.c.b16 %v2313, %v2305
    %v2762 = vpack.c.b16 %v2314, %v2306
    %v2763 = vpack.c.b16 %v2315, %v2307
    %v2764 = vpack.c.b16 %v2316, %v2308
    %v2765 = vpack.c.b16 %v2317, %v2309
    %v2766 = vpack.c.b16 %v2318, %v2310
    %v2767 = vpack.c.b16 %v2319, %v2311
    %3216 = vmatprep.subr.bf16.mxu0 %v2321
    %3217 = vmatpush1.bf16.msra.mxu0 %v2320
    %3218 = vmatprep.subr.bf16.mxu0 %v2329
    %3219 = vmatpush1.bf16.msra.mxu0 %v2328
    %3220 = vmatprep.subr.bf16.mxu0 %v2337
    %3221 = vmatpush1.bf16.msra.mxu0 %v2336
    %3222 = vmatprep.subr.bf16.mxu0 %v2345
    %3223 = vmatpush1.bf16.msra.mxu0 %v2344
    %3224 = vmatprep.subr.bf16.mxu0 %v2353
    %3225 = vmatpush1.bf16.msra.mxu0 %v2352
    %3226 = vmatprep.subr.bf16.mxu0 %v2361
    %3227 = vmatpush1.bf16.msra.mxu0 %v2360
    %3228 = vmatprep.subr.bf16.mxu0 %v2369
    %3229 = vmatpush1.bf16.msra.mxu0 %v2368
    %3230 = vmatprep.subr.bf16.mxu0 %v2377
    %3231 = vmatpush1.bf16.msra.mxu0 %v2376
    %3232 = vmatprep.subr.bf16.mxu0 %v2385
    %3233 = vmatpush1.bf16.msra.mxu0 %v2384
    %3234 = vmatprep.subr.bf16.mxu0 %v2393
    %3235 = vmatpush1.bf16.msra.mxu0 %v2392
    %3236 = vmatprep.subr.bf16.mxu0 %v2401
    %3237 = vmatpush1.bf16.msra.mxu0 %v2400
    %3238 = vmatprep.subr.bf16.mxu0 %v2409
    %3239 = vmatpush1.bf16.msra.mxu0 %v2408
    %3240 = vmatprep.subr.bf16.mxu0 %v2417
    %3241 = vmatpush1.bf16.msra.mxu0 %v2416
    %3242 = vmatprep.subr.bf16.mxu0 %v2425
    %3243 = vmatpush1.bf16.msra.mxu0 %v2424
    %3244 = vmatprep.subr.bf16.mxu0 %v2433
    %3245 = vmatpush1.bf16.msra.mxu0 %v2432
    %3246 = vmatprep.subr.bf16.mxu0 %v2441
    %3247 = vmatpush1.bf16.msra.mxu0 %v2440
    %3248 = vmatprep.mubr.bf16.mxu0 %v865
    %3249 = vmatmul.mubr.bf16.gmra.mrb[0].mxu0 %v864
    %v3250 = vpop.f32.mrb[0].mxu0
    %v3251 = vadd.f32 %v651, %v3250
    %v3252 = vpop.f32.mrb[0].mxu0
    %v3253 = vadd.f32 %v655, %v3252
    %v3254 = vpop.f32.mrb[0].mxu0
    %v3255 = vadd.f32 %v651, %v3254
    %v3256 = vpop.f32.mrb[0].mxu0
    %v3257 = vadd.f32 %v655, %v3256
    %3258 = vmatprep.mubr.bf16.mxu0 %v872
    %3259 = vmatmul.mubr.bf16.gmra.mrb[0].mxu0 %v871
    %v3260 = vpop.f32.mrb[0].mxu0
    %v3261 = vadd.f32 %v651, %v3260
    %v3262 = vpop.f32.mrb[0].mxu0
    %v3263 = vadd.f32 %v655, %v3262
    %v3264 = vpop.f32.mrb[0].mxu0
    %v3265 = vadd.f32 %v651, %v3264
    %v3266 = vpop.f32.mrb[0].mxu0
    %v3267 = vadd.f32 %v655, %v3266
    %3268 = vmatprep.mubr.bf16.mxu0 %v879
    %3269 = vmatmul.mubr.bf16.gmra.mrb[0].mxu0 %v878
    %v3270 = vpop.f32.mrb[0].mxu0
    %v3271 = vadd.f32 %v651, %v3270
    %v3272 = vpop.f32.mrb[0].mxu0
    %v3273 = vadd.f32 %v655, %v3272
    %v3274 = vpop.f32.mrb[0].mxu0
    %v3275 = vadd.f32 %v651, %v3274
    %v3276 = vpop.f32.mrb[0].mxu0
    %v3277 = vadd.f32 %v655, %v3276
    %3278 = vmatprep.mubr.bf16.mxu0 %v886
    %3279 = vmatmul.mubr.bf16.gmra.mrb[0].mxu0 %v885
    %v3280 = vpop.f32.mrb[0].mxu0
    %v3281 = vadd.f32 %v651, %v3280
    %v3282 = vpop.f32.mrb[0].mxu0
    %v3283 = vadd.f32 %v655, %v3282
    %v3284 = vpop.f32.mrb[0].mxu0
    %v3285 = vadd.f32 %v651, %v3284
    %v3286 = vpop.f32.mrb[0].mxu0
    %v3287 = vadd.f32 %v655, %v3286
    %3288 = vmatprep.mubr.bf16.mxu0 %v893
    %3289 = vmatmul.mubr.bf16.gmra.mrb[0].mxu0 %v892
    %v3290 = vpop.f32.mrb[0].mxu0
    %v3291 = vadd.f32 %v651, %v3290
    %v3292 = vpop.f32.mrb[0].mxu0
    %v3293 = vadd.f32 %v655, %v3292
    %v3294 = vpop.f32.mrb[0].mxu0
    %v3295 = vadd.f32 %v651, %v3294
    %v3296 = vpop.f32.mrb[0].mxu0
    %v3297 = vadd.f32 %v655, %v3296
    %3298 = vmatprep.mubr.bf16.mxu0 %v900
    %3299 = vmatmul.mubr.bf16.gmra.mrb[0].mxu0 %v899
    %v3300 = vpop.f32.mrb[0].mxu0
    %v3301 = vadd.f32 %v651, %v3300
    %v3302 = vpop.f32.mrb[0].mxu0
    %v3303 = vadd.f32 %v655, %v3302
    %v3304 = vpop.f32.mrb[0].mxu0
    %v3305 = vadd.f32 %v651, %v3304
    %v3306 = vpop.f32.mrb[0].mxu0
    %v3307 = vadd.f32 %v655, %v3306
    %3308 = vmatprep.mubr.bf16.mxu0 %v907
    %3309 = vmatmul.mubr.bf16.gmra.mrb[0].mxu0 %v906
    %v3310 = vpop.f32.mrb[0].mxu0
    %v3311 = vadd.f32 %v651, %v3310
    %v3312 = vpop.f32.mrb[0].mxu0
    %v3313 = vadd.f32 %v655, %v3312
    %v3314 = vpop.f32.mrb[0].mxu0
    %v3315 = vadd.f32 %v651, %v3314
    %v3316 = vpop.f32.mrb[0].mxu0
    %v3317 = vadd.f32 %v655, %v3316
    %3318 = vmatprep.mubr.bf16.mxu0 %v914
    %3319 = vmatmul.mubr.bf16.gmra.mrb[0].mxu0 %v913
    %v3320 = vpop.f32.mrb[0].mxu0
    %v3321 = vadd.f32 %v651, %v3320
    %v3322 = vpop.f32.mrb[0].mxu0
    %v3323 = vadd.f32 %v655, %v3322
    %v3324 = vpop.f32.mrb[0].mxu0
    %v3325 = vadd.f32 %v651, %v3324
    %v3326 = vpop.f32.mrb[0].mxu0
    %v3327 = vadd.f32 %v655, %v3326
    %3328 = vdwg.mxu0
    %3329 = vmatprep.subr.bf16.mxu0 %v2449
    %3330 = vmatpush1.bf16.msra.mxu0 %v2448
    %3331 = vmatprep.subr.bf16.mxu0 %v2457
    %3332 = vmatpush1.bf16.msra.mxu0 %v2456
    %3333 = vmatprep.subr.bf16.mxu0 %v2465
    %3334 = vmatpush1.bf16.msra.mxu0 %v2464
    %3335 = vmatprep.subr.bf16.mxu0 %v2473
    %3336 = vmatpush1.bf16.msra.mxu0 %v2472
    %3337 = vmatprep.subr.bf16.mxu0 %v2481
    %3338 = vmatpush1.bf16.msra.mxu0 %v2480
    %3339 = vmatprep.subr.bf16.mxu0 %v2489
    %3340 = vmatpush1.bf16.msra.mxu0 %v2488
    %3341 = vmatprep.subr.bf16.mxu0 %v2497
    %3342 = vmatpush1.bf16.msra.mxu0 %v2496
    %3343 = vmatprep.subr.bf16.mxu0 %v2505
    %3344 = vmatpush1.bf16.msra.mxu0 %v2504
    %3345 = vmatprep.subr.bf16.mxu0 %v2513
    %3346 = vmatpush1.bf16.msra.mxu0 %v2512
    %3347 = vmatprep.subr.bf16.mxu0 %v2521
    %3348 = vmatpush1.bf16.msra.mxu0 %v2520
    %3349 = vmatprep.subr.bf16.mxu0 %v2529
    %3350 = vmatpush1.bf16.msra.mxu0 %v2528
    %3351 = vmatprep.subr.bf16.mxu0 %v2537
    %3352 = vmatpush1.bf16.msra.mxu0 %v2536
    %3353 = vmatprep.subr.bf16.mxu0 %v2545
    %3354 = vmatpush1.bf16.msra.mxu0 %v2544
    %3355 = vmatprep.subr.bf16.mxu0 %v2553
    %3356 = vmatpush1.bf16.msra.mxu0 %v2552
    %3357 = vmatprep.subr.bf16.mxu0 %v2561
    %3358 = vmatpush1.bf16.msra.mxu0 %v2560
    %3359 = vmatprep.subr.bf16.mxu0 %v2569
    %3360 = vmatpush1.bf16.msra.mxu0 %v2568
    %3361 = vmatprep.mubr.bf16.mxu0 %v867
    %3362 = vmatmul.mubr.bf16.gmra.mrb[0].mxu0 %v866
    %v3363 = vpop.f32.mrb[0].mxu0
    %v3364 = vadd.f32 %v3251, %v3363
    %v3365 = vpop.f32.mrb[0].mxu0
    %v3366 = vadd.f32 %v3253, %v3365
    %v3367 = vpop.f32.mrb[0].mxu0
    %v3368 = vadd.f32 %v3255, %v3367
    %v3369 = vpop.f32.mrb[0].mxu0
    %v3370 = vadd.f32 %v3257, %v3369
    %3371 = vmatprep.mubr.bf16.mxu0 %v874
    %3372 = vmatmul.mubr.bf16.gmra.mrb[0].mxu0 %v873
    %v3373 = vpop.f32.mrb[0].mxu0
    %v3374 = vadd.f32 %v3261, %v3373
    %v3375 = vpop.f32.mrb[0].mxu0
    %v3376 = vadd.f32 %v3263, %v3375
    %v3377 = vpop.f32.mrb[0].mxu0
    %v3378 = vadd.f32 %v3265, %v3377
    %v3379 = vpop.f32.mrb[0].mxu0
    %v3380 = vadd.f32 %v3267, %v3379
    %3381 = vmatprep.mubr.bf16.mxu0 %v881
    %3382 = vmatmul.mubr.bf16.gmra.mrb[0].mxu0 %v880
    %v3383 = vpop.f32.mrb[0].mxu0
    %v3384 = vadd.f32 %v3271, %v3383
    %v3385 = vpop.f32.mrb[0].mxu0
    %v3386 = vadd.f32 %v3273, %v3385
    %v3387 = vpop.f32.mrb[0].mxu0
    %v3388 = vadd.f32 %v3275, %v3387
    %v3389 = vpop.f32.mrb[0].mxu0
    %v3390 = vadd.f32 %v3277, %v3389
    %3391 = vmatprep.mubr.bf16.mxu0 %v888
    %3392 = vmatmul.mubr.bf16.gmra.mrb[0].mxu0 %v887
    %v3393 = vpop.f32.mrb[0].mxu0
    %v3394 = vadd.f32 %v3281, %v3393
    %v3395 = vpop.f32.mrb[0].mxu0
    %v3396 = vadd.f32 %v3283, %v3395
    %v3397 = vpop.f32.mrb[0].mxu0
    %v3398 = vadd.f32 %v3285, %v3397
    %v3399 = vpop.f32.mrb[0].mxu0
    %v3400 = vadd.f32 %v3287, %v3399
    %3401 = vmatprep.mubr.bf16.mxu0 %v895
    %3402 = vmatmul.mubr.bf16.gmra.mrb[0].mxu0 %v894
    %v3403 = vpop.f32.mrb[0].mxu0
    %v3404 = vadd.f32 %v3291, %v3403
    %v3405 = vpop.f32.mrb[0].mxu0
    %v3406 = vadd.f32 %v3293, %v3405
    %v3407 = vpop.f32.mrb[0].mxu0
    %v3408 = vadd.f32 %v3295, %v3407
    %v3409 = vpop.f32.mrb[0].mxu0
    %v3410 = vadd.f32 %v3297, %v3409
    %3411 = vmatprep.mubr.bf16.mxu0 %v902
    %3412 = vmatmul.mubr.bf16.gmra.mrb[0].mxu0 %v901
    %v3413 = vpop.f32.mrb[0].mxu0
    %v3414 = vadd.f32 %v3301, %v3413
    %v3415 = vpop.f32.mrb[0].mxu0
    %v3416 = vadd.f32 %v3303, %v3415
    %v3417 = vpop.f32.mrb[0].mxu0
    %v3418 = vadd.f32 %v3305, %v3417
    %v3419 = vpop.f32.mrb[0].mxu0
    %v3420 = vadd.f32 %v3307, %v3419
    %3421 = vmatprep.mubr.bf16.mxu0 %v909
    %3422 = vmatmul.mubr.bf16.gmra.mrb[0].mxu0 %v908
    %v3423 = vpop.f32.mrb[0].mxu0
    %v3424 = vadd.f32 %v3311, %v3423
    %v3425 = vpop.f32.mrb[0].mxu0
    %v3426 = vadd.f32 %v3313, %v3425
    %v3427 = vpop.f32.mrb[0].mxu0
    %v3428 = vadd.f32 %v3315, %v3427
    %v3429 = vpop.f32.mrb[0].mxu0
    %v3430 = vadd.f32 %v3317, %v3429
    %3431 = vmatprep.mubr.bf16.mxu0 %v916
    %3432 = vmatmul.mubr.bf16.gmra.mrb[0].mxu0 %v915
    %v3433 = vpop.f32.mrb[0].mxu0
    %v3434 = vadd.f32 %v3321, %v3433
    %v3435 = vpop.f32.mrb[0].mxu0
    %v3436 = vadd.f32 %v3323, %v3435
    %v3437 = vpop.f32.mrb[0].mxu0
    %v3438 = vadd.f32 %v3325, %v3437
    %v3439 = vpop.f32.mrb[0].mxu0
    %v3440 = vadd.f32 %v3327, %v3439
    %3441 = vdwg.mxu0
    %3442 = vmatprep.subr.bf16.mxu0 %v2577
    %3443 = vmatpush1.bf16.msra.mxu0 %v2576
    %3444 = vmatprep.subr.bf16.mxu0 %v2585
    %3445 = vmatpush1.bf16.msra.mxu0 %v2584
    %3446 = vmatprep.subr.bf16.mxu0 %v2593
    %3447 = vmatpush1.bf16.msra.mxu0 %v2592
    %3448 = vmatprep.subr.bf16.mxu0 %v2601
    %3449 = vmatpush1.bf16.msra.mxu0 %v2600
    %3450 = vmatprep.subr.bf16.mxu0 %v2609
    %3451 = vmatpush1.bf16.msra.mxu0 %v2608
    %3452 = vmatprep.subr.bf16.mxu0 %v2617
    %3453 = vmatpush1.bf16.msra.mxu0 %v2616
    %3454 = vmatprep.subr.bf16.mxu0 %v2625
    %3455 = vmatpush1.bf16.msra.mxu0 %v2624
    %3456 = vmatprep.subr.bf16.mxu0 %v2633
    %3457 = vmatpush1.bf16.msra.mxu0 %v2632
    %3458 = vmatprep.subr.bf16.mxu0 %v2641
    %3459 = vmatpush1.bf16.msra.mxu0 %v2640
    %3460 = vmatprep.subr.bf16.mxu0 %v2649
    %3461 = vmatpush1.bf16.msra.mxu0 %v2648
    %3462 = vmatprep.subr.bf16.mxu0 %v2657
    %3463 = vmatpush1.bf16.msra.mxu0 %v2656
    %3464 = vmatprep.subr.bf16.mxu0 %v2665
    %3465 = vmatpush1.bf16.msra.mxu0 %v2664
    %3466 = vmatprep.subr.bf16.mxu0 %v2673
    %3467 = vmatpush1.bf16.msra.mxu0 %v2672
    %3468 = vmatprep.subr.bf16.mxu0 %v2681
    %3469 = vmatpush1.bf16.msra.mxu0 %v2680
    %3470 = vmatprep.subr.bf16.mxu0 %v2689
    %3471 = vmatpush1.bf16.msra.mxu0 %v2688
    %3472 = vmatprep.subr.bf16.mxu0 %v2697
    %3473 = vmatpush1.bf16.msra.mxu0 %v2696
    %3474 = vmatprep.mubr.bf16.mxu0 %v869
    %3475 = vmatmul.mubr.bf16.gmra.mrb[0].mxu0 %v868
    %v3476 = vpop.f32.mrb[0].mxu0
    %v3477 = vadd.f32 %v3364, %v3476
    %v3478 = vpop.f32.mrb[0].mxu0
    %v3479 = vadd.f32 %v3366, %v3478
    %v3480 = vpop.f32.mrb[0].mxu0
    %v3481 = vadd.f32 %v3368, %v3480
    %v3482 = vpop.f32.mrb[0].mxu0
    %v3483 = vadd.f32 %v3370, %v3482
    %3484 = vmatprep.mubr.bf16.mxu0 %v876
    %3485 = vmatmul.mubr.bf16.gmra.mrb[0].mxu0 %v875
    %v3486 = vpop.f32.mrb[0].mxu0
    %v3487 = vadd.f32 %v3374, %v3486
    %v3488 = vpop.f32.mrb[0].mxu0
    %v3489 = vadd.f32 %v3376, %v3488
    %v3490 = vpop.f32.mrb[0].mxu0
    %v3491 = vadd.f32 %v3378, %v3490
    %v3492 = vpop.f32.mrb[0].mxu0
    %v3493 = vadd.f32 %v3380, %v3492
    %3494 = vmatprep.mubr.bf16.mxu0 %v883
    %3495 = vmatmul.mubr.bf16.gmra.mrb[0].mxu0 %v882
    %v3496 = vpop.f32.mrb[0].mxu0
    %v3497 = vadd.f32 %v3384, %v3496
    %v3498 = vpop.f32.mrb[0].mxu0
    %v3499 = vadd.f32 %v3386, %v3498
    %v3500 = vpop.f32.mrb[0].mxu0
    %v3501 = vadd.f32 %v3388, %v3500
    %v3502 = vpop.f32.mrb[0].mxu0
    %v3503 = vadd.f32 %v3390, %v3502
    %3504 = vmatprep.mubr.bf16.mxu0 %v890
    %3505 = vmatmul.mubr.bf16.gmra.mrb[0].mxu0 %v889
    %v3506 = vpop.f32.mrb[0].mxu0
    %v3507 = vadd.f32 %v3394, %v3506
    %v3508 = vpop.f32.mrb[0].mxu0
    %v3509 = vadd.f32 %v3396, %v3508
    %v3510 = vpop.f32.mrb[0].mxu0
    %v3511 = vadd.f32 %v3398, %v3510
    %v3512 = vpop.f32.mrb[0].mxu0
    %v3513 = vadd.f32 %v3400, %v3512
    %3514 = vmatprep.mubr.bf16.mxu0 %v897
    %3515 = vmatmul.mubr.bf16.gmra.mrb[0].mxu0 %v896
    %v3516 = vpop.f32.mrb[0].mxu0
    %v3517 = vadd.f32 %v3404, %v3516
    %v3518 = vpop.f32.mrb[0].mxu0
    %v3519 = vadd.f32 %v3406, %v3518
    %v3520 = vpop.f32.mrb[0].mxu0
    %v3521 = vadd.f32 %v3408, %v3520
    %v3522 = vpop.f32.mrb[0].mxu0
    %v3523 = vadd.f32 %v3410, %v3522
    %3524 = vmatprep.mubr.bf16.mxu0 %v904
    %3525 = vmatmul.mubr.bf16.gmra.mrb[0].mxu0 %v903
    %v3526 = vpop.f32.mrb[0].mxu0
    %v3527 = vadd.f32 %v3414, %v3526
    %v3528 = vpop.f32.mrb[0].mxu0
    %v3529 = vadd.f32 %v3416, %v3528
    %v3530 = vpop.f32.mrb[0].mxu0
    %v3531 = vadd.f32 %v3418, %v3530
    %v3532 = vpop.f32.mrb[0].mxu0
    %v3533 = vadd.f32 %v3420, %v3532
    %3534 = vmatprep.mubr.bf16.mxu0 %v911
    %3535 = vmatmul.mubr.bf16.gmra.mrb[0].mxu0 %v910
    %v3536 = vpop.f32.mrb[0].mxu0
    %v3537 = vadd.f32 %v3424, %v3536
    %v3538 = vpop.f32.mrb[0].mxu0
    %v3539 = vadd.f32 %v3426, %v3538
    %v3540 = vpop.f32.mrb[0].mxu0
    %v3541 = vadd.f32 %v3428, %v3540
    %v3542 = vpop.f32.mrb[0].mxu0
    %v3543 = vadd.f32 %v3430, %v3542
    %3544 = vmatprep.mubr.bf16.mxu0 %v918
    %3545 = vmatmul.mubr.bf16.gmra.mrb[0].mxu0 %v917
    %v3546 = vpop.f32.mrb[0].mxu0
    %v3547 = vadd.f32 %v3434, %v3546
    %v3548 = vpop.f32.mrb[0].mxu0
    %v3549 = vadd.f32 %v3436, %v3548
    %v3550 = vpop.f32.mrb[0].mxu0
    %v3551 = vadd.f32 %v3438, %v3550
    %v3552 = vpop.f32.mrb[0].mxu0
    %v3553 = vadd.f32 %v3440, %v3552
    %3554 = vdwg.mxu0
    %3555 = vmatprep.subr.bf16.mxu0 %v2705
    %3556 = vmatpush1.bf16.msra.mxu0 %v2704
    %3557 = vmatprep.subr.bf16.mxu0 %v2713
    %3558 = vmatpush1.bf16.msra.mxu0 %v2712
    %3559 = vmatprep.subr.bf16.mxu0 %v2721
    %3560 = vmatpush1.bf16.msra.mxu0 %v2720
    %3561 = vmatprep.subr.bf16.mxu0 %v2729
    %3562 = vmatpush1.bf16.msra.mxu0 %v2728
    %3563 = vmatprep.subr.bf16.mxu0 %v2737
    %3564 = vmatpush1.bf16.msra.mxu0 %v2736
    %3565 = vmatprep.subr.bf16.mxu0 %v2745
    %3566 = vmatpush1.bf16.msra.mxu0 %v2744
    %3567 = vmatprep.subr.bf16.mxu0 %v2753
    %3568 = vmatpush1.bf16.msra.mxu0 %v2752
    %3569 = vmatprep.subr.bf16.mxu0 %v2761
    %3570 = vmatpush1.bf16.msra.mxu0 %v2760
    %3571 = vmatprep.subr.bf16.mxu0 0
    %3572 = vmatpush1.bf16.msra.mxu0 0
    %3573 = vmatprep.subr.bf16.mxu0 0
    %3574 = vmatpush1.bf16.msra.mxu0 0
    %3575 = vmatprep.subr.bf16.mxu0 0
    %3576 = vmatpush1.bf16.msra.mxu0 0
    %3577 = vmatprep.subr.bf16.mxu0 0
    %3578 = vmatpush1.bf16.msra.mxu0 0
    %3579 = vmatprep.subr.bf16.mxu0 0
    %3580 = vmatpush1.bf16.msra.mxu0 0
    %3581 = vmatprep.subr.bf16.mxu0 0
    %3582 = vmatpush1.bf16.msra.mxu0 0
    %3583 = vmatprep.subr.bf16.mxu0 0
    %3584 = vmatpush1.bf16.msra.mxu0 0
    %3585 = vmatprep.subr.bf16.mxu0 0
    %3586 = vmatpush1.bf16.msra.mxu0 0
    %3587 = vmatprep.mubr.bf16.mxu0 0
    %3588 = vmatmul.mubr.bf16.gmra.mrb[0].mxu0 %v870
    %v3589 = vpop.f32.mrb[0].mxu0
    %v3590 = vadd.f32 %v3477, %v3589
    %v3591 = vpop.f32.mrb[0].mxu0
    %v3592 = vadd.f32 %v3479, %v3591
    %v3593 = vpop.f32.mrb[0].mxu0
    %v3594 = vadd.f32 %v3481, %v3593
    %v3595 = vpop.f32.mrb[0].mxu0
    %v3596 = vadd.f32 %v3483, %v3595
    %3597 = vmatprep.mubr.bf16.mxu0 0
    %3598 = vmatmul.mubr.bf16.gmra.mrb[0].mxu0 %v877
    %v3599 = vpop.f32.mrb[0].mxu0
    %v3600 = vadd.f32 %v3487, %v3599
    %v3601 = vpop.f32.mrb[0].mxu0
    %v3602 = vadd.f32 %v3489, %v3601
    %v3603 = vpop.f32.mrb[0].mxu0
    %v3604 = vadd.f32 %v3491, %v3603
    %v3605 = vpop.f32.mrb[0].mxu0
    %v3606 = vadd.f32 %v3493, %v3605
    %3607 = vmatprep.mubr.bf16.mxu0 0
    %3608 = vmatmul.mubr.bf16.gmra.mrb[0].mxu0 %v884
    %v3609 = vpop.f32.mrb[0].mxu0
    %v3610 = vadd.f32 %v3497, %v3609
    %v3611 = vpop.f32.mrb[0].mxu0
    %v3612 = vadd.f32 %v3499, %v3611
    %v3613 = vpop.f32.mrb[0].mxu0
    %v3614 = vadd.f32 %v3501, %v3613
    %v3615 = vpop.f32.mrb[0].mxu0
    %v3616 = vadd.f32 %v3503, %v3615
    %3617 = vmatprep.mubr.bf16.mxu0 0
    %3618 = vmatmul.mubr.bf16.gmra.mrb[0].mxu0 %v891
    %v3619 = vpop.f32.mrb[0].mxu0
    %v3620 = vadd.f32 %v3507, %v3619
    %v3621 = vpop.f32.mrb[0].mxu0
    %v3622 = vadd.f32 %v3509, %v3621
    %v3623 = vpop.f32.mrb[0].mxu0
    %v3624 = vadd.f32 %v3511, %v3623
    %v3625 = vpop.f32.mrb[0].mxu0
    %v3626 = vadd.f32 %v3513, %v3625
    %3627 = vmatprep.mubr.bf16.mxu0 0
    %3628 = vmatmul.mubr.bf16.gmra.mrb[0].mxu0 %v898
    %v3629 = vpop.f32.mrb[0].mxu0
    %v3630 = vadd.f32 %v3517, %v3629
    %v3631 = vpop.f32.mrb[0].mxu0
    %v3632 = vadd.f32 %v3519, %v3631
    %v3633 = vpop.f32.mrb[0].mxu0
    %v3634 = vadd.f32 %v3521, %v3633
    %v3635 = vpop.f32.mrb[0].mxu0
    %v3636 = vadd.f32 %v3523, %v3635
    %3637 = vmatprep.mubr.bf16.mxu0 0
    %3638 = vmatmul.mubr.bf16.gmra.mrb[0].mxu0 %v905
    %v3639 = vpop.f32.mrb[0].mxu0
    %v3640 = vadd.f32 %v3527, %v3639
    %v3641 = vpop.f32.mrb[0].mxu0
    %v3642 = vadd.f32 %v3529, %v3641
    %v3643 = vpop.f32.mrb[0].mxu0
    %v3644 = vadd.f32 %v3531, %v3643
    %v3645 = vpop.f32.mrb[0].mxu0
    %v3646 = vadd.f32 %v3533, %v3645
    %3647 = vmatprep.mubr.bf16.mxu0 0
    %3648 = vmatmul.mubr.bf16.gmra.mrb[0].mxu0 %v912
    %v3649 = vpop.f32.mrb[0].mxu0
    %v3650 = vadd.f32 %v3537, %v3649
    %v3651 = vpop.f32.mrb[0].mxu0
    %v3652 = vadd.f32 %v3539, %v3651
    %v3653 = vpop.f32.mrb[0].mxu0
    %v3654 = vadd.f32 %v3541, %v3653
    %v3655 = vpop.f32.mrb[0].mxu0
    %v3656 = vadd.f32 %v3543, %v3655
    %3657 = vmatprep.mubr.bf16.mxu0 0
    %3658 = vmatmul.mubr.bf16.gmra.mrb[0].mxu0 %v919
    %v3659 = vpop.f32.mrb[0].mxu0
    %v3660 = vadd.f32 %v3547, %v3659
    %v3661 = vpop.f32.mrb[0].mxu0
    %v3662 = vadd.f32 %v3549, %v3661
    %v3663 = vpop.f32.mrb[0].mxu0
    %v3664 = vadd.f32 %v3551, %v3663
    %v3665 = vpop.f32.mrb[0].mxu0
    %v3666 = vadd.f32 %v3553, %v3665
    %3667 = vdwg.mxu0
    %3668 = vmatprep.subr.bf16.mxu0 %v2323
    %3669 = vmatpush1.bf16.msra.mxu0 %v2322
    %3670 = vmatprep.subr.bf16.mxu0 %v2331
    %3671 = vmatpush1.bf16.msra.mxu0 %v2330
    %3672 = vmatprep.subr.bf16.mxu0 %v2339
    %3673 = vmatpush1.bf16.msra.mxu0 %v2338
    %3674 = vmatprep.subr.bf16.mxu0 %v2347
    %3675 = vmatpush1.bf16.msra.mxu0 %v2346
    %3676 = vmatprep.subr.bf16.mxu0 %v2355
    %3677 = vmatpush1.bf16.msra.mxu0 %v2354
    %3678 = vmatprep.subr.bf16.mxu0 %v2363
    %3679 = vmatpush1.bf16.msra.mxu0 %v2362
    %3680 = vmatprep.subr.bf16.mxu0 %v2371
    %3681 = vmatpush1.bf16.msra.mxu0 %v2370
    %3682 = vmatprep.subr.bf16.mxu0 %v2379
    %3683 = vmatpush1.bf16.msra.mxu0 %v2378
    %3684 = vmatprep.subr.bf16.mxu0 %v2387
    %3685 = vmatpush1.bf16.msra.mxu0 %v2386
    %3686 = vmatprep.subr.bf16.mxu0 %v2395
    %3687 = vmatpush1.bf16.msra.mxu0 %v2394
    %3688 = vmatprep.subr.bf16.mxu0 %v2403
    %3689 = vmatpush1.bf16.msra.mxu0 %v2402
    %3690 = vmatprep.subr.bf16.mxu0 %v2411
    %3691 = vmatpush1.bf16.msra.mxu0 %v2410
    %3692 = vmatprep.subr.bf16.mxu0 %v2419
    %3693 = vmatpush1.bf16.msra.mxu0 %v2418
    %3694 = vmatprep.subr.bf16.mxu0 %v2427
    %3695 = vmatpush1.bf16.msra.mxu0 %v2426
    %3696 = vmatprep.subr.bf16.mxu0 %v2435
    %3697 = vmatpush1.bf16.msra.mxu0 %v2434
    %3698 = vmatprep.subr.bf16.mxu0 %v2443
    %3699 = vmatpush1.bf16.msra.mxu0 %v2442
    %3700 = vmatprep.mubr.bf16.mxu0 %v865
    %3701 = vmatmul.mubr.bf16.gmra.mrb[0].mxu0 %v864
    %v3702 = vpop.f32.mrb[0].mxu0
    %v3703 = vadd.f32 %v659, %v3702
    %v3704 = vpop.f32.mrb[0].mxu0
    %v3705 = vadd.f32 %v663, %v3704
    %v3706 = vpop.f32.mrb[0].mxu0
    %v3707 = vadd.f32 %v659, %v3706
    %v3708 = vpop.f32.mrb[0].mxu0
    %v3709 = vadd.f32 %v663, %v3708
    %3710 = vmatprep.mubr.bf16.mxu0 %v872
    %3711 = vmatmul.mubr.bf16.gmra.mrb[0].mxu0 %v871
    %v3712 = vpop.f32.mrb[0].mxu0
    %v3713 = vadd.f32 %v659, %v3712
    %v3714 = vpop.f32.mrb[0].mxu0
    %v3715 = vadd.f32 %v663, %v3714
    %v3716 = vpop.f32.mrb[0].mxu0
    %v3717 = vadd.f32 %v659, %v3716
    %v3718 = vpop.f32.mrb[0].mxu0
    %v3719 = vadd.f32 %v663, %v3718
    %3720 = vmatprep.mubr.bf16.mxu0 %v879
    %3721 = vmatmul.mubr.bf16.gmra.mrb[0].mxu0 %v878
    %v3722 = vpop.f32.mrb[0].mxu0
    %v3723 = vadd.f32 %v659, %v3722
    %v3724 = vpop.f32.mrb[0].mxu0
    %v3725 = vadd.f32 %v663, %v3724
    %v3726 = vpop.f32.mrb[0].mxu0
    %v3727 = vadd.f32 %v659, %v3726
    %v3728 = vpop.f32.mrb[0].mxu0
    %v3729 = vadd.f32 %v663, %v3728
    %3730 = vmatprep.mubr.bf16.mxu0 %v886
    %3731 = vmatmul.mubr.bf16.gmra.mrb[0].mxu0 %v885
    %v3732 = vpop.f32.mrb[0].mxu0
    %v3733 = vadd.f32 %v659, %v3732
    %v3734 = vpop.f32.mrb[0].mxu0
    %v3735 = vadd.f32 %v663, %v3734
    %v3736 = vpop.f32.mrb[0].mxu0
    %v3737 = vadd.f32 %v659, %v3736
    %v3738 = vpop.f32.mrb[0].mxu0
    %v3739 = vadd.f32 %v663, %v3738
    %3740 = vmatprep.mubr.bf16.mxu0 %v893
    %3741 = vmatmul.mubr.bf16.gmra.mrb[0].mxu0 %v892
    %v3742 = vpop.f32.mrb[0].mxu0
    %v3743 = vadd.f32 %v659, %v3742
    %v3744 = vpop.f32.mrb[0].mxu0
    %v3745 = vadd.f32 %v663, %v3744
    %v3746 = vpop.f32.mrb[0].mxu0
    %v3747 = vadd.f32 %v659, %v3746
    %v3748 = vpop.f32.mrb[0].mxu0
    %v3749 = vadd.f32 %v663, %v3748
    %3750 = vmatprep.mubr.bf16.mxu0 %v900
    %3751 = vmatmul.mubr.bf16.gmra.mrb[0].mxu0 %v899
    %v3752 = vpop.f32.mrb[0].mxu0
    %v3753 = vadd.f32 %v659, %v3752
    %v3754 = vpop.f32.mrb[0].mxu0
    %v3755 = vadd.f32 %v663, %v3754
    %v3756 = vpop.f32.mrb[0].mxu0
    %v3757 = vadd.f32 %v659, %v3756
    %v3758 = vpop.f32.mrb[0].mxu0
    %v3759 = vadd.f32 %v663, %v3758
    %3760 = vmatprep.mubr.bf16.mxu0 %v907
    %3761 = vmatmul.mubr.bf16.gmra.mrb[0].mxu0 %v906
    %v3762 = vpop.f32.mrb[0].mxu0
    %v3763 = vadd.f32 %v659, %v3762
    %v3764 = vpop.f32.mrb[0].mxu0
    %v3765 = vadd.f32 %v663, %v3764
    %v3766 = vpop.f32.mrb[0].mxu0
    %v3767 = vadd.f32 %v659, %v3766
    %v3768 = vpop.f32.mrb[0].mxu0
    %v3769 = vadd.f32 %v663, %v3768
    %3770 = vmatprep.mubr.bf16.mxu0 %v914
    %3771 = vmatmul.mubr.bf16.gmra.mrb[0].mxu0 %v913
    %v3772 = vpop.f32.mrb[0].mxu0
    %v3773 = vadd.f32 %v659, %v3772
    %v3774 = vpop.f32.mrb[0].mxu0
    %v3775 = vadd.f32 %v663, %v3774
    %v3776 = vpop.f32.mrb[0].mxu0
    %v3777 = vadd.f32 %v659, %v3776
    %v3778 = vpop.f32.mrb[0].mxu0
    %v3779 = vadd.f32 %v663, %v3778
    %3780 = vdwg.mxu0
    %3781 = vmatprep.subr.bf16.mxu0 %v2451
    %3782 = vmatpush1.bf16.msra.mxu0 %v2450
    %3783 = vmatprep.subr.bf16.mxu0 %v2459
    %3784 = vmatpush1.bf16.msra.mxu0 %v2458
    %3785 = vmatprep.subr.bf16.mxu0 %v2467
    %3786 = vmatpush1.bf16.msra.mxu0 %v2466
    %3787 = vmatprep.subr.bf16.mxu0 %v2475
    %3788 = vmatpush1.bf16.msra.mxu0 %v2474
    %3789 = vmatprep.subr.bf16.mxu0 %v2483
    %3790 = vmatpush1.bf16.msra.mxu0 %v2482
    %3791 = vmatprep.subr.bf16.mxu0 %v2491
    %3792 = vmatpush1.bf16.msra.mxu0 %v2490
    %3793 = vmatprep.subr.bf16.mxu0 %v2499
    %3794 = vmatpush1.bf16.msra.mxu0 %v2498
    %3795 = vmatprep.subr.bf16.mxu0 %v2507
    %3796 = vmatpush1.bf16.msra.mxu0 %v2506
    %3797 = vmatprep.subr.bf16.mxu0 %v2515
    %3798 = vmatpush1.bf16.msra.mxu0 %v2514
    %3799 = vmatprep.subr.bf16.mxu0 %v2523
    %3800 = vmatpush1.bf16.msra.mxu0 %v2522
    %3801 = vmatprep.subr.bf16.mxu0 %v2531
    %3802 = vmatpush1.bf16.msra.mxu0 %v2530
    %3803 = vmatprep.subr.bf16.mxu0 %v2539
    %3804 = vmatpush1.bf16.msra.mxu0 %v2538
    %3805 = vmatprep.subr.bf16.mxu0 %v2547
    %3806 = vmatpush1.bf16.msra.mxu0 %v2546
    %3807 = vmatprep.subr.bf16.mxu0 %v2555
    %3808 = vmatpush1.bf16.msra.mxu0 %v2554
    %3809 = vmatprep.subr.bf16.mxu0 %v2563
    %3810 = vmatpush1.bf16.msra.mxu0 %v2562
    %3811 = vmatprep.subr.bf16.mxu0 %v2571
    %3812 = vmatpush1.bf16.msra.mxu0 %v2570
    %3813 = vmatprep.mubr.bf16.mxu0 %v867
    %3814 = vmatmul.mubr.bf16.gmra.mrb[0].mxu0 %v866
    %v3815 = vpop.f32.mrb[0].mxu0
    %v3816 = vadd.f32 %v3703, %v3815
    %v3817 = vpop.f32.mrb[0].mxu0
    %v3818 = vadd.f32 %v3705, %v3817
    %v3819 = vpop.f32.mrb[0].mxu0
    %v3820 = vadd.f32 %v3707, %v3819
    %v3821 = vpop.f32.mrb[0].mxu0
    %v3822 = vadd.f32 %v3709, %v3821
    %3823 = vmatprep.mubr.bf16.mxu0 %v874
    %3824 = vmatmul.mubr.bf16.gmra.mrb[0].mxu0 %v873
    %v3825 = vpop.f32.mrb[0].mxu0
    %v3826 = vadd.f32 %v3713, %v3825
    %v3827 = vpop.f32.mrb[0].mxu0
    %v3828 = vadd.f32 %v3715, %v3827
    %v3829 = vpop.f32.mrb[0].mxu0
    %v3830 = vadd.f32 %v3717, %v3829
    %v3831 = vpop.f32.mrb[0].mxu0
    %v3832 = vadd.f32 %v3719, %v3831
    %3833 = vmatprep.mubr.bf16.mxu0 %v881
    %3834 = vmatmul.mubr.bf16.gmra.mrb[0].mxu0 %v880
    %v3835 = vpop.f32.mrb[0].mxu0
    %v3836 = vadd.f32 %v3723, %v3835
    %v3837 = vpop.f32.mrb[0].mxu0
    %v3838 = vadd.f32 %v3725, %v3837
    %v3839 = vpop.f32.mrb[0].mxu0
    %v3840 = vadd.f32 %v3727, %v3839
    %v3841 = vpop.f32.mrb[0].mxu0
    %v3842 = vadd.f32 %v3729, %v3841
    %3843 = vmatprep.mubr.bf16.mxu0 %v888
    %3844 = vmatmul.mubr.bf16.gmra.mrb[0].mxu0 %v887
    %v3845 = vpop.f32.mrb[0].mxu0
    %v3846 = vadd.f32 %v3733, %v3845
    %v3847 = vpop.f32.mrb[0].mxu0
    %v3848 = vadd.f32 %v3735, %v3847
    %v3849 = vpop.f32.mrb[0].mxu0
    %v3850 = vadd.f32 %v3737, %v3849
    %v3851 = vpop.f32.mrb[0].mxu0
    %v3852 = vadd.f32 %v3739, %v3851
    %3853 = vmatprep.mubr.bf16.mxu0 %v895
    %3854 = vmatmul.mubr.bf16.gmra.mrb[0].mxu0 %v894
    %v3855 = vpop.f32.mrb[0].mxu0
    %v3856 = vadd.f32 %v3743, %v3855
    %v3857 = vpop.f32.mrb[0].mxu0
    %v3858 = vadd.f32 %v3745, %v3857
    %v3859 = vpop.f32.mrb[0].mxu0
    %v3860 = vadd.f32 %v3747, %v3859
    %v3861 = vpop.f32.mrb[0].mxu0
    %v3862 = vadd.f32 %v3749, %v3861
    %3863 = vmatprep.mubr.bf16.mxu0 %v902
    %3864 = vmatmul.mubr.bf16.gmra.mrb[0].mxu0 %v901
    %v3865 = vpop.f32.mrb[0].mxu0
    %v3866 = vadd.f32 %v3753, %v3865
    %v3867 = vpop.f32.mrb[0].mxu0
    %v3868 = vadd.f32 %v3755, %v3867
    %v3869 = vpop.f32.mrb[0].mxu0
    %v3870 = vadd.f32 %v3757, %v3869
    %v3871 = vpop.f32.mrb[0].mxu0
    %v3872 = vadd.f32 %v3759, %v3871
    %3873 = vmatprep.mubr.bf16.mxu0 %v909
    %3874 = vmatmul.mubr.bf16.gmra.mrb[0].mxu0 %v908
    %v3875 = vpop.f32.mrb[0].mxu0
    %v3876 = vadd.f32 %v3763, %v3875
    %v3877 = vpop.f32.mrb[0].mxu0
    %v3878 = vadd.f32 %v3765, %v3877
    %v3879 = vpop.f32.mrb[0].mxu0
    %v3880 = vadd.f32 %v3767, %v3879
    %v3881 = vpop.f32.mrb[0].mxu0
    %v3882 = vadd.f32 %v3769, %v3881
    %3883 = vmatprep.mubr.bf16.mxu0 %v916
    %3884 = vmatmul.mubr.bf16.gmra.mrb[0].mxu0 %v915
    %v3885 = vpop.f32.mrb[0].mxu0
    %v3886 = vadd.f32 %v3773, %v3885
    %v3887 = vpop.f32.mrb[0].mxu0
    %v3888 = vadd.f32 %v3775, %v3887
    %v3889 = vpop.f32.mrb[0].mxu0
    %v3890 = vadd.f32 %v3777, %v3889
    %v3891 = vpop.f32.mrb[0].mxu0
    %v3892 = vadd.f32 %v3779, %v3891
    %3893 = vdwg.mxu0
    %3894 = vmatprep.subr.bf16.mxu0 %v2579
    %3895 = vmatpush1.bf16.msra.mxu0 %v2578
    %3896 = vmatprep.subr.bf16.mxu0 %v2587
    %3897 = vmatpush1.bf16.msra.mxu0 %v2586
    %3898 = vmatprep.subr.bf16.mxu0 %v2595
    %3899 = vmatpush1.bf16.msra.mxu0 %v2594
    %3900 = vmatprep.subr.bf16.mxu0 %v2603
    %3901 = vmatpush1.bf16.msra.mxu0 %v2602
    %3902 = vmatprep.subr.bf16.mxu0 %v2611
    %3903 = vmatpush1.bf16.msra.mxu0 %v2610
    %3904 = vmatprep.subr.bf16.mxu0 %v2619
    %3905 = vmatpush1.bf16.msra.mxu0 %v2618
    %3906 = vmatprep.subr.bf16.mxu0 %v2627
    %3907 = vmatpush1.bf16.msra.mxu0 %v2626
    %3908 = vmatprep.subr.bf16.mxu0 %v2635
    %3909 = vmatpush1.bf16.msra.mxu0 %v2634
    %3910 = vmatprep.subr.bf16.mxu0 %v2643
    %3911 = vmatpush1.bf16.msra.mxu0 %v2642
    %3912 = vmatprep.subr.bf16.mxu0 %v2651
    %3913 = vmatpush1.bf16.msra.mxu0 %v2650
    %3914 = vmatprep.subr.bf16.mxu0 %v2659
    %3915 = vmatpush1.bf16.msra.mxu0 %v2658
    %3916 = vmatprep.subr.bf16.mxu0 %v2667
    %3917 = vmatpush1.bf16.msra.mxu0 %v2666
    %3918 = vmatprep.subr.bf16.mxu0 %v2675
    %3919 = vmatpush1.bf16.msra.mxu0 %v2674
    %3920 = vmatprep.subr.bf16.mxu0 %v2683
    %3921 = vmatpush1.bf16.msra.mxu0 %v2682
    %3922 = vmatprep.subr.bf16.mxu0 %v2691
    %3923 = vmatpush1.bf16.msra.mxu0 %v2690
    %3924 = vmatprep.subr.bf16.mxu0 %v2699
    %3925 = vmatpush1.bf16.msra.mxu0 %v2698
    %3926 = vmatprep.mubr.bf16.mxu0 %v869
    %3927 = vmatmul.mubr.bf16.gmra.mrb[0].mxu0 %v868
    %v3928 = vpop.f32.mrb[0].mxu0
    %v3929 = vadd.f32 %v3816, %v3928
    %v3930 = vpop.f32.mrb[0].mxu0
    %v3931 = vadd.f32 %v3818, %v3930
    %v3932 = vpop.f32.mrb[0].mxu0
    %v3933 = vadd.f32 %v3820, %v3932
    %v3934 = vpop.f32.mrb[0].mxu0
    %v3935 = vadd.f32 %v3822, %v3934
    %3936 = vmatprep.mubr.bf16.mxu0 %v876
    %3937 = vmatmul.mubr.bf16.gmra.mrb[0].mxu0 %v875
    %v3938 = vpop.f32.mrb[0].mxu0
    %v3939 = vadd.f32 %v3826, %v3938
    %v3940 = vpop.f32.mrb[0].mxu0
    %v3941 = vadd.f32 %v3828, %v3940
    %v3942 = vpop.f32.mrb[0].mxu0
    %v3943 = vadd.f32 %v3830, %v3942
    %v3944 = vpop.f32.mrb[0].mxu0
    %v3945 = vadd.f32 %v3832, %v3944
    %3946 = vmatprep.mubr.bf16.mxu0 %v883
    %3947 = vmatmul.mubr.bf16.gmra.mrb[0].mxu0 %v882
    %v3948 = vpop.f32.mrb[0].mxu0
    %v3949 = vadd.f32 %v3836, %v3948
    %v3950 = vpop.f32.mrb[0].mxu0
    %v3951 = vadd.f32 %v3838, %v3950
    %v3952 = vpop.f32.mrb[0].mxu0
    %v3953 = vadd.f32 %v3840, %v3952
    %v3954 = vpop.f32.mrb[0].mxu0
    %v3955 = vadd.f32 %v3842, %v3954
    %3956 = vmatprep.mubr.bf16.mxu0 %v890
    %3957 = vmatmul.mubr.bf16.gmra.mrb[0].mxu0 %v889
    %v3958 = vpop.f32.mrb[0].mxu0
    %v3959 = vadd.f32 %v3846, %v3958
    %v3960 = vpop.f32.mrb[0].mxu0
    %v3961 = vadd.f32 %v3848, %v3960
    %v3962 = vpop.f32.mrb[0].mxu0
    %v3963 = vadd.f32 %v3850, %v3962
    %v3964 = vpop.f32.mrb[0].mxu0
    %v3965 = vadd.f32 %v3852, %v3964
    %3966 = vmatprep.mubr.bf16.mxu0 %v897
    %3967 = vmatmul.mubr.bf16.gmra.mrb[0].mxu0 %v896
    %v3968 = vpop.f32.mrb[0].mxu0
    %v3969 = vadd.f32 %v3856, %v3968
    %v3970 = vpop.f32.mrb[0].mxu0
    %v3971 = vadd.f32 %v3858, %v3970
    %v3972 = vpop.f32.mrb[0].mxu0
    %v3973 = vadd.f32 %v3860, %v3972
    %v3974 = vpop.f32.mrb[0].mxu0
    %v3975 = vadd.f32 %v3862, %v3974
    %3976 = vmatprep.mubr.bf16.mxu0 %v904
    %3977 = vmatmul.mubr.bf16.gmra.mrb[0].mxu0 %v903
    %v3978 = vpop.f32.mrb[0].mxu0
    %v3979 = vadd.f32 %v3866, %v3978
    %v3980 = vpop.f32.mrb[0].mxu0
    %v3981 = vadd.f32 %v3868, %v3980
    %v3982 = vpop.f32.mrb[0].mxu0
    %v3983 = vadd.f32 %v3870, %v3982
    %v3984 = vpop.f32.mrb[0].mxu0
    %v3985 = vadd.f32 %v3872, %v3984
    %3986 = vmatprep.mubr.bf16.mxu0 %v911
    %3987 = vmatmul.mubr.bf16.gmra.mrb[0].mxu0 %v910
    %v3988 = vpop.f32.mrb[0].mxu0
    %v3989 = vadd.f32 %v3876, %v3988
    %v3990 = vpop.f32.mrb[0].mxu0
    %v3991 = vadd.f32 %v3878, %v3990
    %v3992 = vpop.f32.mrb[0].mxu0
    %v3993 = vadd.f32 %v3880, %v3992
    %v3994 = vpop.f32.mrb[0].mxu0
    %v3995 = vadd.f32 %v3882, %v3994
    %3996 = vmatprep.mubr.bf16.mxu0 %v918
    %3997 = vmatmul.mubr.bf16.gmra.mrb[0].mxu0 %v917
    %v3998 = vpop.f32.mrb[0].mxu0
    %v3999 = vadd.f32 %v3886, %v3998
    %v4000 = vpop.f32.mrb[0].mxu0
    %v4001 = vadd.f32 %v3888, %v4000
    %v4002 = vpop.f32.mrb[0].mxu0
    %v4003 = vadd.f32 %v3890, %v4002
    %v4004 = vpop.f32.mrb[0].mxu0
    %v4005 = vadd.f32 %v3892, %v4004
    %4006 = vdwg.mxu0
    %4007 = vmatprep.subr.bf16.mxu0 %v2707
    %4008 = vmatpush1.bf16.msra.mxu0 %v2706
    %4009 = vmatprep.subr.bf16.mxu0 %v2715
    %4010 = vmatpush1.bf16.msra.mxu0 %v2714
    %4011 = vmatprep.subr.bf16.mxu0 %v2723
    %4012 = vmatpush1.bf16.msra.mxu0 %v2722
    %4013 = vmatprep.subr.bf16.mxu0 %v2731
    %4014 = vmatpush1.bf16.msra.mxu0 %v2730
    %4015 = vmatprep.subr.bf16.mxu0 %v2739
    %4016 = vmatpush1.bf16.msra.mxu0 %v2738
    %4017 = vmatprep.subr.bf16.mxu0 %v2747
    %4018 = vmatpush1.bf16.msra.mxu0 %v2746
    %4019 = vmatprep.subr.bf16.mxu0 %v2755
    %4020 = vmatpush1.bf16.msra.mxu0 %v2754
    %4021 = vmatprep.subr.bf16.mxu0 %v2763
    %4022 = vmatpush1.bf16.msra.mxu0 %v2762
    %4023 = vmatprep.subr.bf16.mxu0 0
    %4024 = vmatpush1.bf16.msra.mxu0 0
    %4025 = vmatprep.subr.bf16.mxu0 0
    %4026 = vmatpush1.bf16.msra.mxu0 0
    %4027 = vmatprep.subr.bf16.mxu0 0
    %4028 = vmatpush1.bf16.msra.mxu0 0
    %4029 = vmatprep.subr.bf16.mxu0 0
    %4030 = vmatpush1.bf16.msra.mxu0 0
    %4031 = vmatprep.subr.bf16.mxu0 0
    %4032 = vmatpush1.bf16.msra.mxu0 0
    %4033 = vmatprep.subr.bf16.mxu0 0
    %4034 = vmatpush1.bf16.msra.mxu0 0
    %4035 = vmatprep.subr.bf16.mxu0 0
    %4036 = vmatpush1.bf16.msra.mxu0 0
    %4037 = vmatprep.subr.bf16.mxu0 0
    %4038 = vmatpush1.bf16.msra.mxu0 0
    %4039 = vmatprep.mubr.bf16.mxu0 0
    %4040 = vmatmul.mubr.bf16.gmra.mrb[0].mxu0 %v870
    %v4041 = vpop.f32.mrb[0].mxu0
    %v4042 = vadd.f32 %v3929, %v4041
    %v4043 = vpop.f32.mrb[0].mxu0
    %v4044 = vadd.f32 %v3931, %v4043
    %v4045 = vpop.f32.mrb[0].mxu0
    %v4046 = vadd.f32 %v3933, %v4045
    %v4047 = vpop.f32.mrb[0].mxu0
    %v4048 = vadd.f32 %v3935, %v4047
    %4049 = vmatprep.mubr.bf16.mxu0 0
    %4050 = vmatmul.mubr.bf16.gmra.mrb[0].mxu0 %v877
    %v4051 = vpop.f32.mrb[0].mxu0
    %v4052 = vadd.f32 %v3939, %v4051
    %v4053 = vpop.f32.mrb[0].mxu0
    %v4054 = vadd.f32 %v3941, %v4053
    %v4055 = vpop.f32.mrb[0].mxu0
    %v4056 = vadd.f32 %v3943, %v4055
    %v4057 = vpop.f32.mrb[0].mxu0
    %v4058 = vadd.f32 %v3945, %v4057
    %4059 = vmatprep.mubr.bf16.mxu0 0
    %4060 = vmatmul.mubr.bf16.gmra.mrb[0].mxu0 %v884
    %v4061 = vpop.f32.mrb[0].mxu0
    %v4062 = vadd.f32 %v3949, %v4061
    %v4063 = vpop.f32.mrb[0].mxu0
    %v4064 = vadd.f32 %v3951, %v4063
    %v4065 = vpop.f32.mrb[0].mxu0
    %v4066 = vadd.f32 %v3953, %v4065
    %v4067 = vpop.f32.mrb[0].mxu0
    %v4068 = vadd.f32 %v3955, %v4067
    %4069 = vmatprep.mubr.bf16.mxu0 0
    %4070 = vmatmul.mubr.bf16.gmra.mrb[0].mxu0 %v891
    %v4071 = vpop.f32.mrb[0].mxu0
    %v4072 = vadd.f32 %v3959, %v4071
    %v4073 = vpop.f32.mrb[0].mxu0
    %v4074 = vadd.f32 %v3961, %v4073
    %v4075 = vpop.f32.mrb[0].mxu0
    %v4076 = vadd.f32 %v3963, %v4075
    %v4077 = vpop.f32.mrb[0].mxu0
    %v4078 = vadd.f32 %v3965, %v4077
    %4079 = vmatprep.mubr.bf16.mxu0 0
    %4080 = vmatmul.mubr.bf16.gmra.mrb[0].mxu0 %v898
    %v4081 = vpop.f32.mrb[0].mxu0
    %v4082 = vadd.f32 %v3969, %v4081
    %v4083 = vpop.f32.mrb[0].mxu0
    %v4084 = vadd.f32 %v3971, %v4083
    %v4085 = vpop.f32.mrb[0].mxu0
    %v4086 = vadd.f32 %v3973, %v4085
    %v4087 = vpop.f32.mrb[0].mxu0
    %v4088 = vadd.f32 %v3975, %v4087
    %4089 = vmatprep.mubr.bf16.mxu0 0
    %4090 = vmatmul.mubr.bf16.gmra.mrb[0].mxu0 %v905
    %v4091 = vpop.f32.mrb[0].mxu0
    %v4092 = vadd.f32 %v3979, %v4091
    %v4093 = vpop.f32.mrb[0].mxu0
    %v4094 = vadd.f32 %v3981, %v4093
    %v4095 = vpop.f32.mrb[0].mxu0
    %v4096 = vadd.f32 %v3983, %v4095
    %v4097 = vpop.f32.mrb[0].mxu0
    %v4098 = vadd.f32 %v3985, %v4097
    %4099 = vmatprep.mubr.bf16.mxu0 0
    %4100 = vmatmul.mubr.bf16.gmra.mrb[0].mxu0 %v912
    %v4101 = vpop.f32.mrb[0].mxu0
    %v4102 = vadd.f32 %v3989, %v4101
    %v4103 = vpop.f32.mrb[0].mxu0
    %v4104 = vadd.f32 %v3991, %v4103
    %v4105 = vpop.f32.mrb[0].mxu0
    %v4106 = vadd.f32 %v3993, %v4105
    %v4107 = vpop.f32.mrb[0].mxu0
    %v4108 = vadd.f32 %v3995, %v4107
    %4109 = vmatprep.mubr.bf16.mxu0 0
    %4110 = vmatmul.mubr.bf16.gmra.mrb[0].mxu0 %v919
    %v4111 = vpop.f32.mrb[0].mxu0
    %v4112 = vadd.f32 %v3999, %v4111
    %v4113 = vpop.f32.mrb[0].mxu0
    %v4114 = vadd.f32 %v4001, %v4113
    %v4115 = vpop.f32.mrb[0].mxu0
    %v4116 = vadd.f32 %v4003, %v4115
    %v4117 = vpop.f32.mrb[0].mxu0
    %v4118 = vadd.f32 %v4005, %v4117
    %4119 = vdwg.mxu0
    %4120 = vmatprep.subr.bf16.mxu0 %v2325
    %4121 = vmatpush1.bf16.msra.mxu0 %v2324
    %4122 = vmatprep.subr.bf16.mxu0 %v2333
    %4123 = vmatpush1.bf16.msra.mxu0 %v2332
    %4124 = vmatprep.subr.bf16.mxu0 %v2341
    %4125 = vmatpush1.bf16.msra.mxu0 %v2340
    %4126 = vmatprep.subr.bf16.mxu0 %v2349
    %4127 = vmatpush1.bf16.msra.mxu0 %v2348
    %4128 = vmatprep.subr.bf16.mxu0 %v2357
    %4129 = vmatpush1.bf16.msra.mxu0 %v2356
    %4130 = vmatprep.subr.bf16.mxu0 %v2365
    %4131 = vmatpush1.bf16.msra.mxu0 %v2364
    %4132 = vmatprep.subr.bf16.mxu0 %v2373
    %4133 = vmatpush1.bf16.msra.mxu0 %v2372
    %4134 = vmatprep.subr.bf16.mxu0 %v2381
    %4135 = vmatpush1.bf16.msra.mxu0 %v2380
    %4136 = vmatprep.subr.bf16.mxu0 %v2389
    %4137 = vmatpush1.bf16.msra.mxu0 %v2388
    %4138 = vmatprep.subr.bf16.mxu0 %v2397
    %4139 = vmatpush1.bf16.msra.mxu0 %v2396
    %4140 = vmatprep.subr.bf16.mxu0 %v2405
    %4141 = vmatpush1.bf16.msra.mxu0 %v2404
    %4142 = vmatprep.subr.bf16.mxu0 %v2413
    %4143 = vmatpush1.bf16.msra.mxu0 %v2412
    %4144 = vmatprep.subr.bf16.mxu0 %v2421
    %4145 = vmatpush1.bf16.msra.mxu0 %v2420
    %4146 = vmatprep.subr.bf16.mxu0 %v2429
    %4147 = vmatpush1.bf16.msra.mxu0 %v2428
    %4148 = vmatprep.subr.bf16.mxu0 %v2437
    %4149 = vmatpush1.bf16.msra.mxu0 %v2436
    %4150 = vmatprep.subr.bf16.mxu0 %v2445
    %4151 = vmatpush1.bf16.msra.mxu0 %v2444
    %4152 = vmatprep.mubr.bf16.mxu0 %v865
    %4153 = vmatmul.mubr.bf16.gmra.mrb[0].mxu0 %v864
    %v4154 = vpop.f32.mrb[0].mxu0
    %v4155 = vadd.f32 %v667, %v4154
    %v4156 = vpop.f32.mrb[0].mxu0
    %v4157 = vadd.f32 %v671, %v4156
    %v4158 = vpop.f32.mrb[0].mxu0
    %v4159 = vadd.f32 %v667, %v4158
    %v4160 = vpop.f32.mrb[0].mxu0
    %v4161 = vadd.f32 %v671, %v4160
    %4162 = vmatprep.mubr.bf16.mxu0 %v872
    %4163 = vmatmul.mubr.bf16.gmra.mrb[0].mxu0 %v871
    %v4164 = vpop.f32.mrb[0].mxu0
    %v4165 = vadd.f32 %v667, %v4164
    %v4166 = vpop.f32.mrb[0].mxu0
    %v4167 = vadd.f32 %v671, %v4166
    %v4168 = vpop.f32.mrb[0].mxu0
    %v4169 = vadd.f32 %v667, %v4168
    %v4170 = vpop.f32.mrb[0].mxu0
    %v4171 = vadd.f32 %v671, %v4170
    %4172 = vmatprep.mubr.bf16.mxu0 %v879
    %4173 = vmatmul.mubr.bf16.gmra.mrb[0].mxu0 %v878
    %v4174 = vpop.f32.mrb[0].mxu0
    %v4175 = vadd.f32 %v667, %v4174
    %v4176 = vpop.f32.mrb[0].mxu0
    %v4177 = vadd.f32 %v671, %v4176
    %v4178 = vpop.f32.mrb[0].mxu0
    %v4179 = vadd.f32 %v667, %v4178
    %v4180 = vpop.f32.mrb[0].mxu0
    %v4181 = vadd.f32 %v671, %v4180
    %4182 = vmatprep.mubr.bf16.mxu0 %v886
    %4183 = vmatmul.mubr.bf16.gmra.mrb[0].mxu0 %v885
    %v4184 = vpop.f32.mrb[0].mxu0
    %v4185 = vadd.f32 %v667, %v4184
    %v4186 = vpop.f32.mrb[0].mxu0
    %v4187 = vadd.f32 %v671, %v4186
    %v4188 = vpop.f32.mrb[0].mxu0
    %v4189 = vadd.f32 %v667, %v4188
    %v4190 = vpop.f32.mrb[0].mxu0
    %v4191 = vadd.f32 %v671, %v4190
    %4192 = vmatprep.mubr.bf16.mxu0 %v893
    %4193 = vmatmul.mubr.bf16.gmra.mrb[0].mxu0 %v892
    %v4194 = vpop.f32.mrb[0].mxu0
    %v4195 = vadd.f32 %v667, %v4194
    %v4196 = vpop.f32.mrb[0].mxu0
    %v4197 = vadd.f32 %v671, %v4196
    %v4198 = vpop.f32.mrb[0].mxu0
    %v4199 = vadd.f32 %v667, %v4198
    %v4200 = vpop.f32.mrb[0].mxu0
    %v4201 = vadd.f32 %v671, %v4200
    %4202 = vmatprep.mubr.bf16.mxu0 %v900
    %4203 = vmatmul.mubr.bf16.gmra.mrb[0].mxu0 %v899
    %v4204 = vpop.f32.mrb[0].mxu0
    %v4205 = vadd.f32 %v667, %v4204
    %v4206 = vpop.f32.mrb[0].mxu0
    %v4207 = vadd.f32 %v671, %v4206
    %v4208 = vpop.f32.mrb[0].mxu0
    %v4209 = vadd.f32 %v667, %v4208
    %v4210 = vpop.f32.mrb[0].mxu0
    %v4211 = vadd.f32 %v671, %v4210
    %4212 = vmatprep.mubr.bf16.mxu0 %v907
    %4213 = vmatmul.mubr.bf16.gmra.mrb[0].mxu0 %v906
    %v4214 = vpop.f32.mrb[0].mxu0
    %v4215 = vadd.f32 %v667, %v4214
    %v4216 = vpop.f32.mrb[0].mxu0
    %v4217 = vadd.f32 %v671, %v4216
    %v4218 = vpop.f32.mrb[0].mxu0
    %v4219 = vadd.f32 %v667, %v4218
    %v4220 = vpop.f32.mrb[0].mxu0
    %v4221 = vadd.f32 %v671, %v4220
    %4222 = vmatprep.mubr.bf16.mxu0 %v914
    %4223 = vmatmul.mubr.bf16.gmra.mrb[0].mxu0 %v913
    %v4224 = vpop.f32.mrb[0].mxu0
    %v4225 = vadd.f32 %v667, %v4224
    %v4226 = vpop.f32.mrb[0].mxu0
    %v4227 = vadd.f32 %v671, %v4226
    %v4228 = vpop.f32.mrb[0].mxu0
    %v4229 = vadd.f32 %v667, %v4228
    %v4230 = vpop.f32.mrb[0].mxu0
    %v4231 = vadd.f32 %v671, %v4230
    %4232 = vdwg.mxu0
    %4233 = vmatprep.subr.bf16.mxu0 %v2453
    %4234 = vmatpush1.bf16.msra.mxu0 %v2452
    %4235 = vmatprep.subr.bf16.mxu0 %v2461
    %4236 = vmatpush1.bf16.msra.mxu0 %v2460
    %4237 = vmatprep.subr.bf16.mxu0 %v2469
    %4238 = vmatpush1.bf16.msra.mxu0 %v2468
    %4239 = vmatprep.subr.bf16.mxu0 %v2477
    %4240 = vmatpush1.bf16.msra.mxu0 %v2476
    %4241 = vmatprep.subr.bf16.mxu0 %v2485
    %4242 = vmatpush1.bf16.msra.mxu0 %v2484
    %4243 = vmatprep.subr.bf16.mxu0 %v2493
    %4244 = vmatpush1.bf16.msra.mxu0 %v2492
    %4245 = vmatprep.subr.bf16.mxu0 %v2501
    %4246 = vmatpush1.bf16.msra.mxu0 %v2500
    %4247 = vmatprep.subr.bf16.mxu0 %v2509
    %4248 = vmatpush1.bf16.msra.mxu0 %v2508
    %4249 = vmatprep.subr.bf16.mxu0 %v2517
    %4250 = vmatpush1.bf16.msra.mxu0 %v2516
    %4251 = vmatprep.subr.bf16.mxu0 %v2525
    %4252 = vmatpush1.bf16.msra.mxu0 %v2524
    %4253 = vmatprep.subr.bf16.mxu0 %v2533
    %4254 = vmatpush1.bf16.msra.mxu0 %v2532
    %4255 = vmatprep.subr.bf16.mxu0 %v2541
    %4256 = vmatpush1.bf16.msra.mxu0 %v2540
    %4257 = vmatprep.subr.bf16.mxu0 %v2549
    %4258 = vmatpush1.bf16.msra.mxu0 %v2548
    %4259 = vmatprep.subr.bf16.mxu0 %v2557
    %4260 = vmatpush1.bf16.msra.mxu0 %v2556
    %4261 = vmatprep.subr.bf16.mxu0 %v2565
    %4262 = vmatpush1.bf16.msra.mxu0 %v2564
    %4263 = vmatprep.subr.bf16.mxu0 %v2573
    %4264 = vmatpush1.bf16.msra.mxu0 %v2572
    %4265 = vmatprep.mubr.bf16.mxu0 %v867
    %4266 = vmatmul.mubr.bf16.gmra.mrb[0].mxu0 %v866
    %v4267 = vpop.f32.mrb[0].mxu0
    %v4268 = vadd.f32 %v4155, %v4267
    %v4269 = vpop.f32.mrb[0].mxu0
    %v4270 = vadd.f32 %v4157, %v4269
    %v4271 = vpop.f32.mrb[0].mxu0
    %v4272 = vadd.f32 %v4159, %v4271
    %v4273 = vpop.f32.mrb[0].mxu0
    %v4274 = vadd.f32 %v4161, %v4273
    %4275 = vmatprep.mubr.bf16.mxu0 %v874
    %4276 = vmatmul.mubr.bf16.gmra.mrb[0].mxu0 %v873
    %v4277 = vpop.f32.mrb[0].mxu0
    %v4278 = vadd.f32 %v4165, %v4277
    %v4279 = vpop.f32.mrb[0].mxu0
    %v4280 = vadd.f32 %v4167, %v4279
    %v4281 = vpop.f32.mrb[0].mxu0
    %v4282 = vadd.f32 %v4169, %v4281
    %v4283 = vpop.f32.mrb[0].mxu0
    %v4284 = vadd.f32 %v4171, %v4283
    %4285 = vmatprep.mubr.bf16.mxu0 %v881
    %4286 = vmatmul.mubr.bf16.gmra.mrb[0].mxu0 %v880
    %v4287 = vpop.f32.mrb[0].mxu0
    %v4288 = vadd.f32 %v4175, %v4287
    %v4289 = vpop.f32.mrb[0].mxu0
    %v4290 = vadd.f32 %v4177, %v4289
    %v4291 = vpop.f32.mrb[0].mxu0
    %v4292 = vadd.f32 %v4179, %v4291
    %v4293 = vpop.f32.mrb[0].mxu0
    %v4294 = vadd.f32 %v4181, %v4293
    %4295 = vmatprep.mubr.bf16.mxu0 %v888
    %4296 = vmatmul.mubr.bf16.gmra.mrb[0].mxu0 %v887
    %v4297 = vpop.f32.mrb[0].mxu0
    %v4298 = vadd.f32 %v4185, %v4297
    %v4299 = vpop.f32.mrb[0].mxu0
    %v4300 = vadd.f32 %v4187, %v4299
    %v4301 = vpop.f32.mrb[0].mxu0
    %v4302 = vadd.f32 %v4189, %v4301
    %v4303 = vpop.f32.mrb[0].mxu0
    %v4304 = vadd.f32 %v4191, %v4303
    %4305 = vmatprep.mubr.bf16.mxu0 %v895
    %4306 = vmatmul.mubr.bf16.gmra.mrb[0].mxu0 %v894
    %v4307 = vpop.f32.mrb[0].mxu0
    %v4308 = vadd.f32 %v4195, %v4307
    %v4309 = vpop.f32.mrb[0].mxu0
    %v4310 = vadd.f32 %v4197, %v4309
    %v4311 = vpop.f32.mrb[0].mxu0
    %v4312 = vadd.f32 %v4199, %v4311
    %v4313 = vpop.f32.mrb[0].mxu0
    %v4314 = vadd.f32 %v4201, %v4313
    %4315 = vmatprep.mubr.bf16.mxu0 %v902
    %4316 = vmatmul.mubr.bf16.gmra.mrb[0].mxu0 %v901
    %v4317 = vpop.f32.mrb[0].mxu0
    %v4318 = vadd.f32 %v4205, %v4317
    %v4319 = vpop.f32.mrb[0].mxu0
    %v4320 = vadd.f32 %v4207, %v4319
    %v4321 = vpop.f32.mrb[0].mxu0
    %v4322 = vadd.f32 %v4209, %v4321
    %v4323 = vpop.f32.mrb[0].mxu0
    %v4324 = vadd.f32 %v4211, %v4323
    %4325 = vmatprep.mubr.bf16.mxu0 %v909
    %4326 = vmatmul.mubr.bf16.gmra.mrb[0].mxu0 %v908
    %v4327 = vpop.f32.mrb[0].mxu0
    %v4328 = vadd.f32 %v4215, %v4327
    %v4329 = vpop.f32.mrb[0].mxu0
    %v4330 = vadd.f32 %v4217, %v4329
    %v4331 = vpop.f32.mrb[0].mxu0
    %v4332 = vadd.f32 %v4219, %v4331
    %v4333 = vpop.f32.mrb[0].mxu0
    %v4334 = vadd.f32 %v4221, %v4333
    %4335 = vmatprep.mubr.bf16.mxu0 %v916
    %4336 = vmatmul.mubr.bf16.gmra.mrb[0].mxu0 %v915
    %v4337 = vpop.f32.mrb[0].mxu0
    %v4338 = vadd.f32 %v4225, %v4337
    %v4339 = vpop.f32.mrb[0].mxu0
    %v4340 = vadd.f32 %v4227, %v4339
    %v4341 = vpop.f32.mrb[0].mxu0
    %v4342 = vadd.f32 %v4229, %v4341
    %v4343 = vpop.f32.mrb[0].mxu0
    %v4344 = vadd.f32 %v4231, %v4343
    %4345 = vdwg.mxu0
    %4346 = vmatprep.subr.bf16.mxu0 %v2581
    %4347 = vmatpush1.bf16.msra.mxu0 %v2580
    %4348 = vmatprep.subr.bf16.mxu0 %v2589
    %4349 = vmatpush1.bf16.msra.mxu0 %v2588
    %4350 = vmatprep.subr.bf16.mxu0 %v2597
    %4351 = vmatpush1.bf16.msra.mxu0 %v2596
    %4352 = vmatprep.subr.bf16.mxu0 %v2605
    %4353 = vmatpush1.bf16.msra.mxu0 %v2604
    %4354 = vmatprep.subr.bf16.mxu0 %v2613
    %4355 = vmatpush1.bf16.msra.mxu0 %v2612
    %4356 = vmatprep.subr.bf16.mxu0 %v2621
    %4357 = vmatpush1.bf16.msra.mxu0 %v2620
    %4358 = vmatprep.subr.bf16.mxu0 %v2629
    %4359 = vmatpush1.bf16.msra.mxu0 %v2628
    %4360 = vmatprep.subr.bf16.mxu0 %v2637
    %4361 = vmatpush1.bf16.msra.mxu0 %v2636
    %4362 = vmatprep.subr.bf16.mxu0 %v2645
    %4363 = vmatpush1.bf16.msra.mxu0 %v2644
    %4364 = vmatprep.subr.bf16.mxu0 %v2653
    %4365 = vmatpush1.bf16.msra.mxu0 %v2652
    %4366 = vmatprep.subr.bf16.mxu0 %v2661
    %4367 = vmatpush1.bf16.msra.mxu0 %v2660
    %4368 = vmatprep.subr.bf16.mxu0 %v2669
    %4369 = vmatpush1.bf16.msra.mxu0 %v2668
    %4370 = vmatprep.subr.bf16.mxu0 %v2677
    %4371 = vmatpush1.bf16.msra.mxu0 %v2676
    %4372 = vmatprep.subr.bf16.mxu0 %v2685
    %4373 = vmatpush1.bf16.msra.mxu0 %v2684
    %4374 = vmatprep.subr.bf16.mxu0 %v2693
    %4375 = vmatpush1.bf16.msra.mxu0 %v2692
    %4376 = vmatprep.subr.bf16.mxu0 %v2701
    %4377 = vmatpush1.bf16.msra.mxu0 %v2700
    %4378 = vmatprep.mubr.bf16.mxu0 %v869
    %4379 = vmatmul.mubr.bf16.gmra.mrb[0].mxu0 %v868
    %v4380 = vpop.f32.mrb[0].mxu0
    %v4381 = vadd.f32 %v4268, %v4380
    %v4382 = vpop.f32.mrb[0].mxu0
    %v4383 = vadd.f32 %v4270, %v4382
    %v4384 = vpop.f32.mrb[0].mxu0
    %v4385 = vadd.f32 %v4272, %v4384
    %v4386 = vpop.f32.mrb[0].mxu0
    %v4387 = vadd.f32 %v4274, %v4386
    %4388 = vmatprep.mubr.bf16.mxu0 %v876
    %4389 = vmatmul.mubr.bf16.gmra.mrb[0].mxu0 %v875
    %v4390 = vpop.f32.mrb[0].mxu0
    %v4391 = vadd.f32 %v4278, %v4390
    %v4392 = vpop.f32.mrb[0].mxu0
    %v4393 = vadd.f32 %v4280, %v4392
    %v4394 = vpop.f32.mrb[0].mxu0
    %v4395 = vadd.f32 %v4282, %v4394
    %v4396 = vpop.f32.mrb[0].mxu0
    %v4397 = vadd.f32 %v4284, %v4396
    %4398 = vmatprep.mubr.bf16.mxu0 %v883
    %4399 = vmatmul.mubr.bf16.gmra.mrb[0].mxu0 %v882
    %v4400 = vpop.f32.mrb[0].mxu0
    %v4401 = vadd.f32 %v4288, %v4400
    %v4402 = vpop.f32.mrb[0].mxu0
    %v4403 = vadd.f32 %v4290, %v4402
    %v4404 = vpop.f32.mrb[0].mxu0
    %v4405 = vadd.f32 %v4292, %v4404
    %v4406 = vpop.f32.mrb[0].mxu0
    %v4407 = vadd.f32 %v4294, %v4406
    %4408 = vmatprep.mubr.bf16.mxu0 %v890
    %4409 = vmatmul.mubr.bf16.gmra.mrb[0].mxu0 %v889
    %v4410 = vpop.f32.mrb[0].mxu0
    %v4411 = vadd.f32 %v4298, %v4410
    %v4412 = vpop.f32.mrb[0].mxu0
    %v4413 = vadd.f32 %v4300, %v4412
    %v4414 = vpop.f32.mrb[0].mxu0
    %v4415 = vadd.f32 %v4302, %v4414
    %v4416 = vpop.f32.mrb[0].mxu0
    %v4417 = vadd.f32 %v4304, %v4416
    %4418 = vmatprep.mubr.bf16.mxu0 %v897
    %4419 = vmatmul.mubr.bf16.gmra.mrb[0].mxu0 %v896
    %v4420 = vpop.f32.mrb[0].mxu0
    %v4421 = vadd.f32 %v4308, %v4420
    %v4422 = vpop.f32.mrb[0].mxu0
    %v4423 = vadd.f32 %v4310, %v4422
    %v4424 = vpop.f32.mrb[0].mxu0
    %v4425 = vadd.f32 %v4312, %v4424
    %v4426 = vpop.f32.mrb[0].mxu0
    %v4427 = vadd.f32 %v4314, %v4426
    %4428 = vmatprep.mubr.bf16.mxu0 %v904
    %4429 = vmatmul.mubr.bf16.gmra.mrb[0].mxu0 %v903
    %v4430 = vpop.f32.mrb[0].mxu0
    %v4431 = vadd.f32 %v4318, %v4430
    %v4432 = vpop.f32.mrb[0].mxu0
    %v4433 = vadd.f32 %v4320, %v4432
    %v4434 = vpop.f32.mrb[0].mxu0
    %v4435 = vadd.f32 %v4322, %v4434
    %v4436 = vpop.f32.mrb[0].mxu0
    %v4437 = vadd.f32 %v4324, %v4436
    %4438 = vmatprep.mubr.bf16.mxu0 %v911
    %4439 = vmatmul.mubr.bf16.gmra.mrb[0].mxu0 %v910
    %v4440 = vpop.f32.mrb[0].mxu0
    %v4441 = vadd.f32 %v4328, %v4440
    %v4442 = vpop.f32.mrb[0].mxu0
    %v4443 = vadd.f32 %v4330, %v4442
    %v4444 = vpop.f32.mrb[0].mxu0
    %v4445 = vadd.f32 %v4332, %v4444
    %v4446 = vpop.f32.mrb[0].mxu0
    %v4447 = vadd.f32 %v4334, %v4446
    %4448 = vmatprep.mubr.bf16.mxu0 %v918
    %4449 = vmatmul.mubr.bf16.gmra.mrb[0].mxu0 %v917
    %v4450 = vpop.f32.mrb[0].mxu0
    %v4451 = vadd.f32 %v4338, %v4450
    %v4452 = vpop.f32.mrb[0].mxu0
    %v4453 = vadd.f32 %v4340, %v4452
    %v4454 = vpop.f32.mrb[0].mxu0
    %v4455 = vadd.f32 %v4342, %v4454
    %v4456 = vpop.f32.mrb[0].mxu0
    %v4457 = vadd.f32 %v4344, %v4456
    %4458 = vdwg.mxu0
    %4459 = vmatprep.subr.bf16.mxu0 %v2709
    %4460 = vmatpush1.bf16.msra.mxu0 %v2708
    %4461 = vmatprep.subr.bf16.mxu0 %v2717
    %4462 = vmatpush1.bf16.msra.mxu0 %v2716
    %4463 = vmatprep.subr.bf16.mxu0 %v2725
    %4464 = vmatpush1.bf16.msra.mxu0 %v2724
    %4465 = vmatprep.subr.bf16.mxu0 %v2733
    %4466 = vmatpush1.bf16.msra.mxu0 %v2732
    %4467 = vmatprep.subr.bf16.mxu0 %v2741
    %4468 = vmatpush1.bf16.msra.mxu0 %v2740
    %4469 = vmatprep.subr.bf16.mxu0 %v2749
    %4470 = vmatpush1.bf16.msra.mxu0 %v2748
    %4471 = vmatprep.subr.bf16.mxu0 %v2757
    %4472 = vmatpush1.bf16.msra.mxu0 %v2756
    %4473 = vmatprep.subr.bf16.mxu0 %v2765
    %4474 = vmatpush1.bf16.msra.mxu0 %v2764
    %4475 = vmatprep.subr.bf16.mxu0 0
    %4476 = vmatpush1.bf16.msra.mxu0 0
    %4477 = vmatprep.subr.bf16.mxu0 0
    %4478 = vmatpush1.bf16.msra.mxu0 0
    %4479 = vmatprep.subr.bf16.mxu0 0
    %4480 = vmatpush1.bf16.msra.mxu0 0
    %4481 = vmatprep.subr.bf16.mxu0 0
    %4482 = vmatpush1.bf16.msra.mxu0 0
    %4483 = vmatprep.subr.bf16.mxu0 0
    %4484 = vmatpush1.bf16.msra.mxu0 0
    %4485 = vmatprep.subr.bf16.mxu0 0
    %4486 = vmatpush1.bf16.msra.mxu0 0
    %4487 = vmatprep.subr.bf16.mxu0 0
    %4488 = vmatpush1.bf16.msra.mxu0 0
    %4489 = vmatprep.subr.bf16.mxu0 0
    %4490 = vmatpush1.bf16.msra.mxu0 0
    %4491 = vmatprep.mubr.bf16.mxu0 0
    %4492 = vmatmul.mubr.bf16.gmra.mrb[0].mxu0 %v870
    %v4493 = vpop.f32.mrb[0].mxu0
    %v4494 = vadd.f32 %v4381, %v4493
    %v4495 = vpop.f32.mrb[0].mxu0
    %v4496 = vadd.f32 %v4383, %v4495
    %v4497 = vpop.f32.mrb[0].mxu0
    %v4498 = vadd.f32 %v4385, %v4497
    %v4499 = vpop.f32.mrb[0].mxu0
    %v4500 = vadd.f32 %v4387, %v4499
    %4501 = vmatprep.mubr.bf16.mxu0 0
    %4502 = vmatmul.mubr.bf16.gmra.mrb[0].mxu0 %v877
    %v4503 = vpop.f32.mrb[0].mxu0
    %v4504 = vadd.f32 %v4391, %v4503
    %v4505 = vpop.f32.mrb[0].mxu0
    %v4506 = vadd.f32 %v4393, %v4505
    %v4507 = vpop.f32.mrb[0].mxu0
    %v4508 = vadd.f32 %v4395, %v4507
    %v4509 = vpop.f32.mrb[0].mxu0
    %v4510 = vadd.f32 %v4397, %v4509
    %4511 = vmatprep.mubr.bf16.mxu0 0
    %4512 = vmatmul.mubr.bf16.gmra.mrb[0].mxu0 %v884
    %v4513 = vpop.f32.mrb[0].mxu0
    %v4514 = vadd.f32 %v4401, %v4513
    %v4515 = vpop.f32.mrb[0].mxu0
    %v4516 = vadd.f32 %v4403, %v4515
    %v4517 = vpop.f32.mrb[0].mxu0
    %v4518 = vadd.f32 %v4405, %v4517
    %v4519 = vpop.f32.mrb[0].mxu0
    %v4520 = vadd.f32 %v4407, %v4519
    %4521 = vmatprep.mubr.bf16.mxu0 0
    %4522 = vmatmul.mubr.bf16.gmra.mrb[0].mxu0 %v891
    %v4523 = vpop.f32.mrb[0].mxu0
    %v4524 = vadd.f32 %v4411, %v4523
    %v4525 = vpop.f32.mrb[0].mxu0
    %v4526 = vadd.f32 %v4413, %v4525
    %v4527 = vpop.f32.mrb[0].mxu0
    %v4528 = vadd.f32 %v4415, %v4527
    %v4529 = vpop.f32.mrb[0].mxu0
    %v4530 = vadd.f32 %v4417, %v4529
    %4531 = vmatprep.mubr.bf16.mxu0 0
    %4532 = vmatmul.mubr.bf16.gmra.mrb[0].mxu0 %v898
    %v4533 = vpop.f32.mrb[0].mxu0
    %v4534 = vadd.f32 %v4421, %v4533
    %v4535 = vpop.f32.mrb[0].mxu0
    %v4536 = vadd.f32 %v4423, %v4535
    %v4537 = vpop.f32.mrb[0].mxu0
    %v4538 = vadd.f32 %v4425, %v4537
    %v4539 = vpop.f32.mrb[0].mxu0
    %v4540 = vadd.f32 %v4427, %v4539
    %4541 = vmatprep.mubr.bf16.mxu0 0
    %4542 = vmatmul.mubr.bf16.gmra.mrb[0].mxu0 %v905
    %v4543 = vpop.f32.mrb[0].mxu0
    %v4544 = vadd.f32 %v4431, %v4543
    %v4545 = vpop.f32.mrb[0].mxu0
    %v4546 = vadd.f32 %v4433, %v4545
    %v4547 = vpop.f32.mrb[0].mxu0
    %v4548 = vadd.f32 %v4435, %v4547
    %v4549 = vpop.f32.mrb[0].mxu0
    %v4550 = vadd.f32 %v4437, %v4549
    %4551 = vmatprep.mubr.bf16.mxu0 0
    %4552 = vmatmul.mubr.bf16.gmra.mrb[0].mxu0 %v912
    %v4553 = vpop.f32.mrb[0].mxu0
    %v4554 = vadd.f32 %v4441, %v4553
    %v4555 = vpop.f32.mrb[0].mxu0
    %v4556 = vadd.f32 %v4443, %v4555
    %v4557 = vpop.f32.mrb[0].mxu0
    %v4558 = vadd.f32 %v4445, %v4557
    %v4559 = vpop.f32.mrb[0].mxu0
    %v4560 = vadd.f32 %v4447, %v4559
    %4561 = vmatprep.mubr.bf16.mxu0 0
    %4562 = vmatmul.mubr.bf16.gmra.mrb[0].mxu0 %v919
    %v4563 = vpop.f32.mrb[0].mxu0
    %v4564 = vadd.f32 %v4451, %v4563
    %v4565 = vpop.f32.mrb[0].mxu0
    %v4566 = vadd.f32 %v4453, %v4565
    %v4567 = vpop.f32.mrb[0].mxu0
    %v4568 = vadd.f32 %v4455, %v4567
    %v4569 = vpop.f32.mrb[0].mxu0
    %v4570 = vadd.f32 %v4457, %v4569
    %4571 = vdwg.mxu0
    %4572 = vmatprep.subr.bf16.mxu0 %v2327
    %4573 = vmatpush1.bf16.msra.mxu0 %v2326
    %4574 = vmatprep.subr.bf16.mxu0 %v2335
    %4575 = vmatpush1.bf16.msra.mxu0 %v2334
    %4576 = vmatprep.subr.bf16.mxu0 %v2343
    %4577 = vmatpush1.bf16.msra.mxu0 %v2342
    %4578 = vmatprep.subr.bf16.mxu0 %v2351
    %4579 = vmatpush1.bf16.msra.mxu0 %v2350
    %4580 = vmatprep.subr.bf16.mxu0 %v2359
    %4581 = vmatpush1.bf16.msra.mxu0 %v2358
    %4582 = vmatprep.subr.bf16.mxu0 %v2367
    %4583 = vmatpush1.bf16.msra.mxu0 %v2366
    %4584 = vmatprep.subr.bf16.mxu0 %v2375
    %4585 = vmatpush1.bf16.msra.mxu0 %v2374
    %4586 = vmatprep.subr.bf16.mxu0 %v2383
    %4587 = vmatpush1.bf16.msra.mxu0 %v2382
    %4588 = vmatprep.subr.bf16.mxu0 %v2391
    %4589 = vmatpush1.bf16.msra.mxu0 %v2390
    %4590 = vmatprep.subr.bf16.mxu0 %v2399
    %4591 = vmatpush1.bf16.msra.mxu0 %v2398
    %4592 = vmatprep.subr.bf16.mxu0 %v2407
    %4593 = vmatpush1.bf16.msra.mxu0 %v2406
    %4594 = vmatprep.subr.bf16.mxu0 %v2415
    %4595 = vmatpush1.bf16.msra.mxu0 %v2414
    %4596 = vmatprep.subr.bf16.mxu0 %v2423
    %4597 = vmatpush1.bf16.msra.mxu0 %v2422
    %4598 = vmatprep.subr.bf16.mxu0 %v2431
    %4599 = vmatpush1.bf16.msra.mxu0 %v2430
    %4600 = vmatprep.subr.bf16.mxu0 %v2439
    %4601 = vmatpush1.bf16.msra.mxu0 %v2438
    %4602 = vmatprep.subr.bf16.mxu0 %v2447
    %4603 = vmatpush1.bf16.msra.mxu0 %v2446
    %4604 = vmatprep.mubr.bf16.mxu0 %v865
    %4605 = vmatmul.mubr.bf16.gmra.mrb[0].mxu0 %v864
    %v4606 = vpop.f32.mrb[0].mxu0
    %v4607 = vadd.f32 %v675, %v4606
    %v4608 = vpop.f32.mrb[0].mxu0
    %v4609 = vadd.f32 %v679, %v4608
    %v4610 = vpop.f32.mrb[0].mxu0
    %v4611 = vadd.f32 %v675, %v4610
    %v4612 = vpop.f32.mrb[0].mxu0
    %v4613 = vadd.f32 %v679, %v4612
    %4614 = vmatprep.mubr.bf16.mxu0 %v872
    %4615 = vmatmul.mubr.bf16.gmra.mrb[0].mxu0 %v871
    %v4616 = vpop.f32.mrb[0].mxu0
    %v4617 = vadd.f32 %v675, %v4616
    %v4618 = vpop.f32.mrb[0].mxu0
    %v4619 = vadd.f32 %v679, %v4618
    %v4620 = vpop.f32.mrb[0].mxu0
    %v4621 = vadd.f32 %v675, %v4620
    %v4622 = vpop.f32.mrb[0].mxu0
    %v4623 = vadd.f32 %v679, %v4622
    %4624 = vmatprep.mubr.bf16.mxu0 %v879
    %4625 = vmatmul.mubr.bf16.gmra.mrb[0].mxu0 %v878
    %v4626 = vpop.f32.mrb[0].mxu0
    %v4627 = vadd.f32 %v675, %v4626
    %v4628 = vpop.f32.mrb[0].mxu0
    %v4629 = vadd.f32 %v679, %v4628
    %v4630 = vpop.f32.mrb[0].mxu0
    %v4631 = vadd.f32 %v675, %v4630
    %v4632 = vpop.f32.mrb[0].mxu0
    %v4633 = vadd.f32 %v679, %v4632
    %4634 = vmatprep.mubr.bf16.mxu0 %v886
    %4635 = vmatmul.mubr.bf16.gmra.mrb[0].mxu0 %v885
    %v4636 = vpop.f32.mrb[0].mxu0
    %v4637 = vadd.f32 %v675, %v4636
    %v4638 = vpop.f32.mrb[0].mxu0
    %v4639 = vadd.f32 %v679, %v4638
    %v4640 = vpop.f32.mrb[0].mxu0
    %v4641 = vadd.f32 %v675, %v4640
    %v4642 = vpop.f32.mrb[0].mxu0
    %v4643 = vadd.f32 %v679, %v4642
    %4644 = vmatprep.mubr.bf16.mxu0 %v893
    %4645 = vmatmul.mubr.bf16.gmra.mrb[0].mxu0 %v892
    %v4646 = vpop.f32.mrb[0].mxu0
    %v4647 = vadd.f32 %v675, %v4646
    %v4648 = vpop.f32.mrb[0].mxu0
    %v4649 = vadd.f32 %v679, %v4648
    %v4650 = vpop.f32.mrb[0].mxu0
    %v4651 = vadd.f32 %v675, %v4650
    %v4652 = vpop.f32.mrb[0].mxu0
    %v4653 = vadd.f32 %v679, %v4652
    %4654 = vmatprep.mubr.bf16.mxu0 %v900
    %4655 = vmatmul.mubr.bf16.gmra.mrb[0].mxu0 %v899
    %v4656 = vpop.f32.mrb[0].mxu0
    %v4657 = vadd.f32 %v675, %v4656
    %v4658 = vpop.f32.mrb[0].mxu0
    %v4659 = vadd.f32 %v679, %v4658
    %v4660 = vpop.f32.mrb[0].mxu0
    %v4661 = vadd.f32 %v675, %v4660
    %v4662 = vpop.f32.mrb[0].mxu0
    %v4663 = vadd.f32 %v679, %v4662
    %4664 = vmatprep.mubr.bf16.mxu0 %v907
    %4665 = vmatmul.mubr.bf16.gmra.mrb[0].mxu0 %v906
    %v4666 = vpop.f32.mrb[0].mxu0
    %v4667 = vadd.f32 %v675, %v4666
    %v4668 = vpop.f32.mrb[0].mxu0
    %v4669 = vadd.f32 %v679, %v4668
    %v4670 = vpop.f32.mrb[0].mxu0
    %v4671 = vadd.f32 %v675, %v4670
    %v4672 = vpop.f32.mrb[0].mxu0
    %v4673 = vadd.f32 %v679, %v4672
    %4674 = vmatprep.mubr.bf16.mxu0 %v914
    %4675 = vmatmul.mubr.bf16.gmra.mrb[0].mxu0 %v913
    %v4676 = vpop.f32.mrb[0].mxu0
    %v4677 = vadd.f32 %v675, %v4676
    %v4678 = vpop.f32.mrb[0].mxu0
    %v4679 = vadd.f32 %v679, %v4678
    %v4680 = vpop.f32.mrb[0].mxu0
    %v4681 = vadd.f32 %v675, %v4680
    %v4682 = vpop.f32.mrb[0].mxu0
    %v4683 = vadd.f32 %v679, %v4682
    %4684 = vdwg.mxu0
    %4685 = vmatprep.subr.bf16.mxu0 %v2455
    %4686 = vmatpush1.bf16.msra.mxu0 %v2454
    %4687 = vmatprep.subr.bf16.mxu0 %v2463
    %4688 = vmatpush1.bf16.msra.mxu0 %v2462
    %4689 = vmatprep.subr.bf16.mxu0 %v2471
    %4690 = vmatpush1.bf16.msra.mxu0 %v2470
    %4691 = vmatprep.subr.bf16.mxu0 %v2479
    %4692 = vmatpush1.bf16.msra.mxu0 %v2478
    %4693 = vmatprep.subr.bf16.mxu0 %v2487
    %4694 = vmatpush1.bf16.msra.mxu0 %v2486
    %4695 = vmatprep.subr.bf16.mxu0 %v2495
    %4696 = vmatpush1.bf16.msra.mxu0 %v2494
    %4697 = vmatprep.subr.bf16.mxu0 %v2503
    %4698 = vmatpush1.bf16.msra.mxu0 %v2502
    %4699 = vmatprep.subr.bf16.mxu0 %v2511
    %4700 = vmatpush1.bf16.msra.mxu0 %v2510
    %4701 = vmatprep.subr.bf16.mxu0 %v2519
    %4702 = vmatpush1.bf16.msra.mxu0 %v2518
    %4703 = vmatprep.subr.bf16.mxu0 %v2527
    %4704 = vmatpush1.bf16.msra.mxu0 %v2526
    %4705 = vmatprep.subr.bf16.mxu0 %v2535
    %4706 = vmatpush1.bf16.msra.mxu0 %v2534
    %4707 = vmatprep.subr.bf16.mxu0 %v2543
    %4708 = vmatpush1.bf16.msra.mxu0 %v2542
    %4709 = vmatprep.subr.bf16.mxu0 %v2551
    %4710 = vmatpush1.bf16.msra.mxu0 %v2550
    %4711 = vmatprep.subr.bf16.mxu0 %v2559
    %4712 = vmatpush1.bf16.msra.mxu0 %v2558
    %4713 = vmatprep.subr.bf16.mxu0 %v2567
    %4714 = vmatpush1.bf16.msra.mxu0 %v2566
    %4715 = vmatprep.subr.bf16.mxu0 %v2575
    %4716 = vmatpush1.bf16.msra.mxu0 %v2574
    %4717 = vmatprep.mubr.bf16.mxu0 %v867
    %4718 = vmatmul.mubr.bf16.gmra.mrb[0].mxu0 %v866
    %v4719 = vpop.f32.mrb[0].mxu0
    %v4720 = vadd.f32 %v4607, %v4719
    %v4721 = vpop.f32.mrb[0].mxu0
    %v4722 = vadd.f32 %v4609, %v4721
    %v4723 = vpop.f32.mrb[0].mxu0
    %v4724 = vadd.f32 %v4611, %v4723
    %v4725 = vpop.f32.mrb[0].mxu0
    %v4726 = vadd.f32 %v4613, %v4725
    %4727 = vmatprep.mubr.bf16.mxu0 %v874
    %4728 = vmatmul.mubr.bf16.gmra.mrb[0].mxu0 %v873
    %v4729 = vpop.f32.mrb[0].mxu0
    %v4730 = vadd.f32 %v4617, %v4729
    %v4731 = vpop.f32.mrb[0].mxu0
    %v4732 = vadd.f32 %v4619, %v4731
    %v4733 = vpop.f32.mrb[0].mxu0
    %v4734 = vadd.f32 %v4621, %v4733
    %v4735 = vpop.f32.mrb[0].mxu0
    %v4736 = vadd.f32 %v4623, %v4735
    %4737 = vmatprep.mubr.bf16.mxu0 %v881
    %4738 = vmatmul.mubr.bf16.gmra.mrb[0].mxu0 %v880
    %v4739 = vpop.f32.mrb[0].mxu0
    %v4740 = vadd.f32 %v4627, %v4739
    %v4741 = vpop.f32.mrb[0].mxu0
    %v4742 = vadd.f32 %v4629, %v4741
    %v4743 = vpop.f32.mrb[0].mxu0
    %v4744 = vadd.f32 %v4631, %v4743
    %v4745 = vpop.f32.mrb[0].mxu0
    %v4746 = vadd.f32 %v4633, %v4745
    %4747 = vmatprep.mubr.bf16.mxu0 %v888
    %4748 = vmatmul.mubr.bf16.gmra.mrb[0].mxu0 %v887
    %v4749 = vpop.f32.mrb[0].mxu0
    %v4750 = vadd.f32 %v4637, %v4749
    %v4751 = vpop.f32.mrb[0].mxu0
    %v4752 = vadd.f32 %v4639, %v4751
    %v4753 = vpop.f32.mrb[0].mxu0
    %v4754 = vadd.f32 %v4641, %v4753
    %v4755 = vpop.f32.mrb[0].mxu0
    %v4756 = vadd.f32 %v4643, %v4755
    %4757 = vmatprep.mubr.bf16.mxu0 %v895
    %4758 = vmatmul.mubr.bf16.gmra.mrb[0].mxu0 %v894
    %v4759 = vpop.f32.mrb[0].mxu0
    %v4760 = vadd.f32 %v4647, %v4759
    %v4761 = vpop.f32.mrb[0].mxu0
    %v4762 = vadd.f32 %v4649, %v4761
    %v4763 = vpop.f32.mrb[0].mxu0
    %v4764 = vadd.f32 %v4651, %v4763
    %v4765 = vpop.f32.mrb[0].mxu0
    %v4766 = vadd.f32 %v4653, %v4765
    %4767 = vmatprep.mubr.bf16.mxu0 %v902
    %4768 = vmatmul.mubr.bf16.gmra.mrb[0].mxu0 %v901
    %v4769 = vpop.f32.mrb[0].mxu0
    %v4770 = vadd.f32 %v4657, %v4769
    %v4771 = vpop.f32.mrb[0].mxu0
    %v4772 = vadd.f32 %v4659, %v4771
    %v4773 = vpop.f32.mrb[0].mxu0
    %v4774 = vadd.f32 %v4661, %v4773
    %v4775 = vpop.f32.mrb[0].mxu0
    %v4776 = vadd.f32 %v4663, %v4775
    %4777 = vmatprep.mubr.bf16.mxu0 %v909
    %4778 = vmatmul.mubr.bf16.gmra.mrb[0].mxu0 %v908
    %v4779 = vpop.f32.mrb[0].mxu0
    %v4780 = vadd.f32 %v4667, %v4779
    %v4781 = vpop.f32.mrb[0].mxu0
    %v4782 = vadd.f32 %v4669, %v4781
    %v4783 = vpop.f32.mrb[0].mxu0
    %v4784 = vadd.f32 %v4671, %v4783
    %v4785 = vpop.f32.mrb[0].mxu0
    %v4786 = vadd.f32 %v4673, %v4785
    %4787 = vmatprep.mubr.bf16.mxu0 %v916
    %4788 = vmatmul.mubr.bf16.gmra.mrb[0].mxu0 %v915
    %v4789 = vpop.f32.mrb[0].mxu0
    %v4790 = vadd.f32 %v4677, %v4789
    %v4791 = vpop.f32.mrb[0].mxu0
    %v4792 = vadd.f32 %v4679, %v4791
    %v4793 = vpop.f32.mrb[0].mxu0
    %v4794 = vadd.f32 %v4681, %v4793
    %v4795 = vpop.f32.mrb[0].mxu0
    %v4796 = vadd.f32 %v4683, %v4795
    %4797 = vdwg.mxu0
    %4798 = vmatprep.subr.bf16.mxu0 %v2583
    %4799 = vmatpush1.bf16.msra.mxu0 %v2582
    %4800 = vmatprep.subr.bf16.mxu0 %v2591
    %4801 = vmatpush1.bf16.msra.mxu0 %v2590
    %4802 = vmatprep.subr.bf16.mxu0 %v2599
    %4803 = vmatpush1.bf16.msra.mxu0 %v2598
    %4804 = vmatprep.subr.bf16.mxu0 %v2607
    %4805 = vmatpush1.bf16.msra.mxu0 %v2606
    %4806 = vmatprep.subr.bf16.mxu0 %v2615
    %4807 = vmatpush1.bf16.msra.mxu0 %v2614
    %4808 = vmatprep.subr.bf16.mxu0 %v2623
    %4809 = vmatpush1.bf16.msra.mxu0 %v2622
    %4810 = vmatprep.subr.bf16.mxu0 %v2631
    %4811 = vmatpush1.bf16.msra.mxu0 %v2630
    %4812 = vmatprep.subr.bf16.mxu0 %v2639
    %4813 = vmatpush1.bf16.msra.mxu0 %v2638
    %4814 = vmatprep.subr.bf16.mxu0 %v2647
    %4815 = vmatpush1.bf16.msra.mxu0 %v2646
    %4816 = vmatprep.subr.bf16.mxu0 %v2655
    %4817 = vmatpush1.bf16.msra.mxu0 %v2654
    %4818 = vmatprep.subr.bf16.mxu0 %v2663
    %4819 = vmatpush1.bf16.msra.mxu0 %v2662
    %4820 = vmatprep.subr.bf16.mxu0 %v2671
    %4821 = vmatpush1.bf16.msra.mxu0 %v2670
    %4822 = vmatprep.subr.bf16.mxu0 %v2679
    %4823 = vmatpush1.bf16.msra.mxu0 %v2678
    %4824 = vmatprep.subr.bf16.mxu0 %v2687
    %4825 = vmatpush1.bf16.msra.mxu0 %v2686
    %4826 = vmatprep.subr.bf16.mxu0 %v2695
    %4827 = vmatpush1.bf16.msra.mxu0 %v2694
    %4828 = vmatprep.subr.bf16.mxu0 %v2703
    %4829 = vmatpush1.bf16.msra.mxu0 %v2702
    %4830 = vmatprep.mubr.bf16.mxu0 %v869
    %4831 = vmatmul.mubr.bf16.gmra.mrb[0].mxu0 %v868
    %v4832 = vpop.f32.mrb[0].mxu0
    %v4833 = vadd.f32 %v4720, %v4832
    %v4834 = vpop.f32.mrb[0].mxu0
    %v4835 = vadd.f32 %v4722, %v4834
    %v4836 = vpop.f32.mrb[0].mxu0
    %v4837 = vadd.f32 %v4724, %v4836
    %v4838 = vpop.f32.mrb[0].mxu0
    %v4839 = vadd.f32 %v4726, %v4838
    %4840 = vmatprep.mubr.bf16.mxu0 %v876
    %4841 = vmatmul.mubr.bf16.gmra.mrb[0].mxu0 %v875
    %v4842 = vpop.f32.mrb[0].mxu0
    %v4843 = vadd.f32 %v4730, %v4842
    %v4844 = vpop.f32.mrb[0].mxu0
    %v4845 = vadd.f32 %v4732, %v4844
    %v4846 = vpop.f32.mrb[0].mxu0
    %v4847 = vadd.f32 %v4734, %v4846
    %v4848 = vpop.f32.mrb[0].mxu0
    %v4849 = vadd.f32 %v4736, %v4848
    %4850 = vmatprep.mubr.bf16.mxu0 %v883
    %4851 = vmatmul.mubr.bf16.gmra.mrb[0].mxu0 %v882
    %v4852 = vpop.f32.mrb[0].mxu0
    %v4853 = vadd.f32 %v4740, %v4852
    %v4854 = vpop.f32.mrb[0].mxu0
    %v4855 = vadd.f32 %v4742, %v4854
    %v4856 = vpop.f32.mrb[0].mxu0
    %v4857 = vadd.f32 %v4744, %v4856
    %v4858 = vpop.f32.mrb[0].mxu0
    %v4859 = vadd.f32 %v4746, %v4858
    %4860 = vmatprep.mubr.bf16.mxu0 %v890
    %4861 = vmatmul.mubr.bf16.gmra.mrb[0].mxu0 %v889
    %v4862 = vpop.f32.mrb[0].mxu0
    %v4863 = vadd.f32 %v4750, %v4862
    %v4864 = vpop.f32.mrb[0].mxu0
    %v4865 = vadd.f32 %v4752, %v4864
    %v4866 = vpop.f32.mrb[0].mxu0
    %v4867 = vadd.f32 %v4754, %v4866
    %v4868 = vpop.f32.mrb[0].mxu0
    %v4869 = vadd.f32 %v4756, %v4868
    %4870 = vmatprep.mubr.bf16.mxu0 %v897
    %4871 = vmatmul.mubr.bf16.gmra.mrb[0].mxu0 %v896
    %v4872 = vpop.f32.mrb[0].mxu0
    %v4873 = vadd.f32 %v4760, %v4872
    %v4874 = vpop.f32.mrb[0].mxu0
    %v4875 = vadd.f32 %v4762, %v4874
    %v4876 = vpop.f32.mrb[0].mxu0
    %v4877 = vadd.f32 %v4764, %v4876
    %v4878 = vpop.f32.mrb[0].mxu0
    %v4879 = vadd.f32 %v4766, %v4878
    %4880 = vmatprep.mubr.bf16.mxu0 %v904
    %4881 = vmatmul.mubr.bf16.gmra.mrb[0].mxu0 %v903
    %v4882 = vpop.f32.mrb[0].mxu0
    %v4883 = vadd.f32 %v4770, %v4882
    %v4884 = vpop.f32.mrb[0].mxu0
    %v4885 = vadd.f32 %v4772, %v4884
    %v4886 = vpop.f32.mrb[0].mxu0
    %v4887 = vadd.f32 %v4774, %v4886
    %v4888 = vpop.f32.mrb[0].mxu0
    %v4889 = vadd.f32 %v4776, %v4888
    %4890 = vmatprep.mubr.bf16.mxu0 %v911
    %4891 = vmatmul.mubr.bf16.gmra.mrb[0].mxu0 %v910
    %v4892 = vpop.f32.mrb[0].mxu0
    %v4893 = vadd.f32 %v4780, %v4892
    %v4894 = vpop.f32.mrb[0].mxu0
    %v4895 = vadd.f32 %v4782, %v4894
    %v4896 = vpop.f32.mrb[0].mxu0
    %v4897 = vadd.f32 %v4784, %v4896
    %v4898 = vpop.f32.mrb[0].mxu0
    %v4899 = vadd.f32 %v4786, %v4898
    %4900 = vmatprep.mubr.bf16.mxu0 %v918
    %4901 = vmatmul.mubr.bf16.gmra.mrb[0].mxu0 %v917
    %v4902 = vpop.f32.mrb[0].mxu0
    %v4903 = vadd.f32 %v4790, %v4902
    %v4904 = vpop.f32.mrb[0].mxu0
    %v4905 = vadd.f32 %v4792, %v4904
    %v4906 = vpop.f32.mrb[0].mxu0
    %v4907 = vadd.f32 %v4794, %v4906
    %v4908 = vpop.f32.mrb[0].mxu0
    %v4909 = vadd.f32 %v4796, %v4908
    %4910 = vdwg.mxu0
    %4911 = vmatprep.subr.bf16.mxu0 %v2711
    %4912 = vmatpush1.bf16.msra.mxu0 %v2710
    %4913 = vmatprep.subr.bf16.mxu0 %v2719
    %4914 = vmatpush1.bf16.msra.mxu0 %v2718
    %4915 = vmatprep.subr.bf16.mxu0 %v2727
    %4916 = vmatpush1.bf16.msra.mxu0 %v2726
    %4917 = vmatprep.subr.bf16.mxu0 %v2735
    %4918 = vmatpush1.bf16.msra.mxu0 %v2734
    %4919 = vmatprep.subr.bf16.mxu0 %v2743
    %4920 = vmatpush1.bf16.msra.mxu0 %v2742
    %4921 = vmatprep.subr.bf16.mxu0 %v2751
    %4922 = vmatpush1.bf16.msra.mxu0 %v2750
    %4923 = vmatprep.subr.bf16.mxu0 %v2759
    %4924 = vmatpush1.bf16.msra.mxu0 %v2758
    %4925 = vmatprep.subr.bf16.mxu0 %v2767
    %4926 = vmatpush1.bf16.msra.mxu0 %v2766
    %4927 = vmatprep.subr.bf16.mxu0 0
    %4928 = vmatpush1.bf16.msra.mxu0 0
    %4929 = vmatprep.subr.bf16.mxu0 0
    %4930 = vmatpush1.bf16.msra.mxu0 0
    %4931 = vmatprep.subr.bf16.mxu0 0
    %4932 = vmatpush1.bf16.msra.mxu0 0
    %4933 = vmatprep.subr.bf16.mxu0 0
    %4934 = vmatpush1.bf16.msra.mxu0 0
    %4935 = vmatprep.subr.bf16.mxu0 0
    %4936 = vmatpush1.bf16.msra.mxu0 0
    %4937 = vmatprep.subr.bf16.mxu0 0
    %4938 = vmatpush1.bf16.msra.mxu0 0
    %4939 = vmatprep.subr.bf16.mxu0 0
    %4940 = vmatpush1.bf16.msra.mxu0 0
    %4941 = vmatprep.subr.bf16.mxu0 0
    %4942 = vmatpush1.bf16.msra.mxu0 0
    %4943 = vmatprep.mubr.bf16.mxu0 0
    %4944 = vmatmul.mubr.bf16.gmra.mrb[0].mxu0 %v870
    %v4945 = vpop.f32.mrb[0].mxu0
    %v4946 = vadd.f32 %v4833, %v4945
    %v4947 = vpop.f32.mrb[0].mxu0
    %v4948 = vadd.f32 %v4835, %v4947
    %v4949 = vpop.f32.mrb[0].mxu0
    %v4950 = vadd.f32 %v4837, %v4949
    %v4951 = vpop.f32.mrb[0].mxu0
    %v4952 = vadd.f32 %v4839, %v4951
    %4953 = vmatprep.mubr.bf16.mxu0 0
    %4954 = vmatmul.mubr.bf16.gmra.mrb[0].mxu0 %v877
    %v4955 = vpop.f32.mrb[0].mxu0
    %v4956 = vadd.f32 %v4843, %v4955
    %v4957 = vpop.f32.mrb[0].mxu0
    %v4958 = vadd.f32 %v4845, %v4957
    %v4959 = vpop.f32.mrb[0].mxu0
    %v4960 = vadd.f32 %v4847, %v4959
    %v4961 = vpop.f32.mrb[0].mxu0
    %v4962 = vadd.f32 %v4849, %v4961
    %4963 = vmatprep.mubr.bf16.mxu0 0
    %4964 = vmatmul.mubr.bf16.gmra.mrb[0].mxu0 %v884
    %v4965 = vpop.f32.mrb[0].mxu0
    %v4966 = vadd.f32 %v4853, %v4965
    %v4967 = vpop.f32.mrb[0].mxu0
    %v4968 = vadd.f32 %v4855, %v4967
    %v4969 = vpop.f32.mrb[0].mxu0
    %v4970 = vadd.f32 %v4857, %v4969
    %v4971 = vpop.f32.mrb[0].mxu0
    %v4972 = vadd.f32 %v4859, %v4971
    %4973 = vmatprep.mubr.bf16.mxu0 0
    %4974 = vmatmul.mubr.bf16.gmra.mrb[0].mxu0 %v891
    %v4975 = vpop.f32.mrb[0].mxu0
    %v4976 = vadd.f32 %v4863, %v4975
    %v4977 = vpop.f32.mrb[0].mxu0
    %v4978 = vadd.f32 %v4865, %v4977
    %v4979 = vpop.f32.mrb[0].mxu0
    %v4980 = vadd.f32 %v4867, %v4979
    %v4981 = vpop.f32.mrb[0].mxu0
    %v4982 = vadd.f32 %v4869, %v4981
    %4983 = vmatprep.mubr.bf16.mxu0 0
    %4984 = vmatmul.mubr.bf16.gmra.mrb[0].mxu0 %v898
    %v4985 = vpop.f32.mrb[0].mxu0
    %v4986 = vadd.f32 %v4873, %v4985
    %v4987 = vpop.f32.mrb[0].mxu0
    %v4988 = vadd.f32 %v4875, %v4987
    %v4989 = vpop.f32.mrb[0].mxu0
    %v4990 = vadd.f32 %v4877, %v4989
    %v4991 = vpop.f32.mrb[0].mxu0
    %v4992 = vadd.f32 %v4879, %v4991
    %4993 = vmatprep.mubr.bf16.mxu0 0
    %4994 = vmatmul.mubr.bf16.gmra.mrb[0].mxu0 %v905
    %v4995 = vpop.f32.mrb[0].mxu0
    %v4996 = vadd.f32 %v4883, %v4995
    %v4997 = vpop.f32.mrb[0].mxu0
    %v4998 = vadd.f32 %v4885, %v4997
    %v4999 = vpop.f32.mrb[0].mxu0
    %v5000 = vadd.f32 %v4887, %v4999
    %v5001 = vpop.f32.mrb[0].mxu0
    %v5002 = vadd.f32 %v4889, %v5001
    %5003 = vmatprep.mubr.bf16.mxu0 0
    %5004 = vmatmul.mubr.bf16.gmra.mrb[0].mxu0 %v912
    %v5005 = vpop.f32.mrb[0].mxu0
    %v5006 = vadd.f32 %v4893, %v5005
    %v5007 = vpop.f32.mrb[0].mxu0
    %v5008 = vadd.f32 %v4895, %v5007
    %v5009 = vpop.f32.mrb[0].mxu0
    %v5010 = vadd.f32 %v4897, %v5009
    %v5011 = vpop.f32.mrb[0].mxu0
    %v5012 = vadd.f32 %v4899, %v5011
    %5013 = vmatprep.mubr.bf16.mxu0 0
    %5014 = vmatmul.mubr.bf16.gmra.mrb[0].mxu0 %v919
    %v5015 = vpop.f32.mrb[0].mxu0
    %v5016 = vadd.f32 %v4903, %v5015
    %v5017 = vpop.f32.mrb[0].mxu0
    %v5018 = vadd.f32 %v4905, %v5017
    %v5019 = vpop.f32.mrb[0].mxu0
    %v5020 = vadd.f32 %v4907, %v5019
    %v5021 = vpop.f32.mrb[0].mxu0
    %v5022 = vadd.f32 %v4909, %v5021
    %5023 = vdwg.mxu0
    %v5024 = vmax.f32 %v3590, 0.0
    %v5025 = vmax.f32 %v3592, 0.0
    %v5026 = vmax.f32 %v4042, 0.0
    %v5027 = vmax.f32 %v4044, 0.0
    %v5028 = vmax.f32 %v4494, 0.0
    %v5029 = vmax.f32 %v4496, 0.0
    %v5030 = vmax.f32 %v4946, 0.0
    %v5031 = vmax.f32 %v4948, 0.0
    %v5032 = vmax.f32 %v3594, 0.0
    %v5033 = vmax.f32 %v3596, 0.0
    %v5034 = vmax.f32 %v4046, 0.0
    %v5035 = vmax.f32 %v4048, 0.0
    %v5036 = vmax.f32 %v4498, 0.0
    %v5037 = vmax.f32 %v4500, 0.0
    %v5038 = vmax.f32 %v4950, 0.0
    %v5039 = vmax.f32 %v4952, 0.0
    %v5040 = vmax.f32 %v3600, 0.0
    %v5041 = vmax.f32 %v3602, 0.0
    %v5042 = vmax.f32 %v4052, 0.0
    %v5043 = vmax.f32 %v4054, 0.0
    %v5044 = vmax.f32 %v4504, 0.0
    %v5045 = vmax.f32 %v4506, 0.0
    %v5046 = vmax.f32 %v4956, 0.0
    %v5047 = vmax.f32 %v4958, 0.0
    %v5048 = vmax.f32 %v3604, 0.0
    %v5049 = vmax.f32 %v3606, 0.0
    %v5050 = vmax.f32 %v4056, 0.0
    %v5051 = vmax.f32 %v4058, 0.0
    %v5052 = vmax.f32 %v4508, 0.0
    %v5053 = vmax.f32 %v4510, 0.0
    %v5054 = vmax.f32 %v4960, 0.0
    %v5055 = vmax.f32 %v4962, 0.0
    %v5056 = vmax.f32 %v3610, 0.0
    %v5057 = vmax.f32 %v3612, 0.0
    %v5058 = vmax.f32 %v4062, 0.0
    %v5059 = vmax.f32 %v4064, 0.0
    %v5060 = vmax.f32 %v4514, 0.0
    %v5061 = vmax.f32 %v4516, 0.0
    %v5062 = vmax.f32 %v4966, 0.0
    %v5063 = vmax.f32 %v4968, 0.0
    %v5064 = vmax.f32 %v3614, 0.0
    %v5065 = vmax.f32 %v3616, 0.0
    %v5066 = vmax.f32 %v4066, 0.0
    %v5067 = vmax.f32 %v4068, 0.0
    %v5068 = vmax.f32 %v4518, 0.0
    %v5069 = vmax.f32 %v4520, 0.0
    %v5070 = vmax.f32 %v4970, 0.0
    %v5071 = vmax.f32 %v4972, 0.0
    %v5072 = vmax.f32 %v3620, 0.0
    %v5073 = vmax.f32 %v3622, 0.0
    %v5074 = vmax.f32 %v4072, 0.0
    %v5075 = vmax.f32 %v4074, 0.0
    %v5076 = vmax.f32 %v4524, 0.0
    %v5077 = vmax.f32 %v4526, 0.0
    %v5078 = vmax.f32 %v4976, 0.0
    %v5079 = vmax.f32 %v4978, 0.0
    %v5080 = vmax.f32 %v3624, 0.0
    %v5081 = vmax.f32 %v3626, 0.0
    %v5082 = vmax.f32 %v4076, 0.0
    %v5083 = vmax.f32 %v4078, 0.0
    %v5084 = vmax.f32 %v4528, 0.0
    %v5085 = vmax.f32 %v4530, 0.0
    %v5086 = vmax.f32 %v4980, 0.0
    %v5087 = vmax.f32 %v4982, 0.0
    %v5088 = vmax.f32 %v3630, 0.0
    %v5089 = vmax.f32 %v3632, 0.0
    %v5090 = vmax.f32 %v4082, 0.0
    %v5091 = vmax.f32 %v4084, 0.0
    %v5092 = vmax.f32 %v4534, 0.0
    %v5093 = vmax.f32 %v4536, 0.0
    %v5094 = vmax.f32 %v4986, 0.0
    %v5095 = vmax.f32 %v4988, 0.0
    %v5096 = vmax.f32 %v3634, 0.0
    %v5097 = vmax.f32 %v3636, 0.0
    %v5098 = vmax.f32 %v4086, 0.0
    %v5099 = vmax.f32 %v4088, 0.0
    %v5100 = vmax.f32 %v4538, 0.0
    %v5101 = vmax.f32 %v4540, 0.0
    %v5102 = vmax.f32 %v4990, 0.0
    %v5103 = vmax.f32 %v4992, 0.0
    %v5104 = vmax.f32 %v3640, 0.0
    %v5105 = vmax.f32 %v3642, 0.0
    %v5106 = vmax.f32 %v4092, 0.0
    %v5107 = vmax.f32 %v4094, 0.0
    %v5108 = vmax.f32 %v4544, 0.0
    %v5109 = vmax.f32 %v4546, 0.0
    %v5110 = vmax.f32 %v4996, 0.0
    %v5111 = vmax.f32 %v4998, 0.0
    %v5112 = vmax.f32 %v3644, 0.0
    %v5113 = vmax.f32 %v3646, 0.0
    %v5114 = vmax.f32 %v4096, 0.0
    %v5115 = vmax.f32 %v4098, 0.0
    %v5116 = vmax.f32 %v4548, 0.0
    %v5117 = vmax.f32 %v4550, 0.0
    %v5118 = vmax.f32 %v5000, 0.0
    %v5119 = vmax.f32 %v5002, 0.0
    %v5120 = vmax.f32 %v3650, 0.0
    %v5121 = vmax.f32 %v3652, 0.0
    %v5122 = vmax.f32 %v4102, 0.0
    %v5123 = vmax.f32 %v4104, 0.0
    %v5124 = vmax.f32 %v4554, 0.0
    %v5125 = vmax.f32 %v4556, 0.0
    %v5126 = vmax.f32 %v5006, 0.0
    %v5127 = vmax.f32 %v5008, 0.0
    %v5128 = vmax.f32 %v3654, 0.0
    %v5129 = vmax.f32 %v3656, 0.0
    %v5130 = vmax.f32 %v4106, 0.0
    %v5131 = vmax.f32 %v4108, 0.0
    %v5132 = vmax.f32 %v4558, 0.0
    %v5133 = vmax.f32 %v4560, 0.0
    %v5134 = vmax.f32 %v5010, 0.0
    %v5135 = vmax.f32 %v5012, 0.0
    %v5136 = vmax.f32 %v3660, 0.0
    %v5137 = vmax.f32 %v3662, 0.0
    %v5138 = vmax.f32 %v4112, 0.0
    %v5139 = vmax.f32 %v4114, 0.0
    %v5140 = vmax.f32 %v4564, 0.0
    %v5141 = vmax.f32 %v4566, 0.0
    %v5142 = vmax.f32 %v5016, 0.0
    %v5143 = vmax.f32 %v5018, 0.0
    %v5144 = vmax.f32 %v3664, 0.0
    %v5145 = vmax.f32 %v3666, 0.0
    %v5146 = vmax.f32 %v4116, 0.0
    %v5147 = vmax.f32 %v4118, 0.0
    %v5148 = vmax.f32 %v4568, 0.0
    %v5149 = vmax.f32 %v4570, 0.0
    %v5150 = vmax.f32 %v5020, 0.0
    %v5151 = vmax.f32 %v5022, 0.0
    %v5152 = vpack.c.bf16 %v5032, %v5024
    %v5153 = vpack.c.bf16 %v5033, %v5025
    %v5154 = vpack.c.bf16 %v5034, %v5026
    %v5155 = vpack.c.bf16 %v5035, %v5027
    %v5156 = vpack.c.bf16 %v5036, %v5028
    %v5157 = vpack.c.bf16 %v5037, %v5029
    %v5158 = vpack.c.bf16 %v5038, %v5030
    %v5159 = vpack.c.bf16 %v5039, %v5031
    %v5160 = vpack.c.bf16 %v5048, %v5040
    %v5161 = vpack.c.bf16 %v5049, %v5041
    %v5162 = vpack.c.bf16 %v5050, %v5042
    %v5163 = vpack.c.bf16 %v5051, %v5043
    %v5164 = vpack.c.bf16 %v5052, %v5044
    %v5165 = vpack.c.bf16 %v5053, %v5045
    %v5166 = vpack.c.bf16 %v5054, %v5046
    %v5167 = vpack.c.bf16 %v5055, %v5047
    %v5168 = vpack.c.bf16 %v5064, %v5056
    %v5169 = vpack.c.bf16 %v5065, %v5057
    %v5170 = vpack.c.bf16 %v5066, %v5058
    %v5171 = vpack.c.bf16 %v5067, %v5059
    %v5172 = vpack.c.bf16 %v5068, %v5060
    %v5173 = vpack.c.bf16 %v5069, %v5061
    %v5174 = vpack.c.bf16 %v5070, %v5062
    %v5175 = vpack.c.bf16 %v5071, %v5063
    %v5176 = vpack.c.bf16 %v5080, %v5072
    %v5177 = vpack.c.bf16 %v5081, %v5073
    %v5178 = vpack.c.bf16 %v5082, %v5074
    %v5179 = vpack.c.bf16 %v5083, %v5075
    %v5180 = vpack.c.bf16 %v5084, %v5076
    %v5181 = vpack.c.bf16 %v5085, %v5077
    %v5182 = vpack.c.bf16 %v5086, %v5078
    %v5183 = vpack.c.bf16 %v5087, %v5079
    %v5184 = vpack.c.bf16 %v5096, %v5088
    %v5185 = vpack.c.bf16 %v5097, %v5089
    %v5186 = vpack.c.bf16 %v5098, %v5090
    %v5187 = vpack.c.bf16 %v5099, %v5091
    %v5188 = vpack.c.bf16 %v5100, %v5092
    %v5189 = vpack.c.bf16 %v5101, %v5093
    %v5190 = vpack.c.bf16 %v5102, %v5094
    %v5191 = vpack.c.bf16 %v5103, %v5095
    %v5192 = vpack.c.bf16 %v5112, %v5104
    %v5193 = vpack.c.bf16 %v5113, %v5105
    %v5194 = vpack.c.bf16 %v5114, %v5106
    %v5195 = vpack.c.bf16 %v5115, %v5107
    %v5196 = vpack.c.bf16 %v5116, %v5108
    %v5197 = vpack.c.bf16 %v5117, %v5109
    %v5198 = vpack.c.bf16 %v5118, %v5110
    %v5199 = vpack.c.bf16 %v5119, %v5111
    %v5200 = vpack.c.bf16 %v5128, %v5120
    %v5201 = vpack.c.bf16 %v5129, %v5121
    %v5202 = vpack.c.bf16 %v5130, %v5122
    %v5203 = vpack.c.bf16 %v5131, %v5123
    %v5204 = vpack.c.bf16 %v5132, %v5124
    %v5205 = vpack.c.bf16 %v5133, %v5125
    %v5206 = vpack.c.bf16 %v5134, %v5126
    %v5207 = vpack.c.bf16 %v5135, %v5127
    %v5208 = vpack.c.bf16 %v5144, %v5136
    %v5209 = vpack.c.bf16 %v5145, %v5137
    %v5210 = vpack.c.bf16 %v5146, %v5138
    %v5211 = vpack.c.bf16 %v5147, %v5139
    %v5212 = vpack.c.bf16 %v5148, %v5140
    %v5213 = vpack.c.bf16 %v5149, %v5141
    %v5214 = vpack.c.bf16 %v5150, %v5142
    %v5215 = vpack.c.bf16 %v5151, %v5143
    %v5216 = vld [vmem:[#allocation6] sm:$0xff]
    %v5217 = vld [vmem:[#allocation6 + $0x8] sm:$0xff]
    %v5218 = vld [vmem:[#allocation6 + $0x10] sm:$0xff]
    %v5219 = vld [vmem:[#allocation6 + $0x18] sm:$0xff]
    %v5220 = vld [vmem:[#allocation6 + $0x20] sm:$0xff]
    %v5221 = vld [vmem:[#allocation6 + $0x28] sm:$0xff]
    %v5222 = vld [vmem:[#allocation6 + $0x30] sm:$0xff]
    %v5223 = vld [vmem:[#allocation6 + $0x38] sm:$0xff]
    %v5224 = vld [vmem:[#allocation6 + $0x40] sm:$0xff]
    %v5225 = vld [vmem:[#allocation6 + $0x48] sm:$0xff]
    %v5226 = vld [vmem:[#allocation6 + $0x50] sm:$0xff]
    %v5227 = vld [vmem:[#allocation6 + $0x58] sm:$0xff]
    %v5228 = vld [vmem:[#allocation6 + $0x60] sm:$0xff]
    %v5229 = vld [vmem:[#allocation6 + $0x68] sm:$0xff]
    %v5230 = vld [vmem:[#allocation6 + $0x70] sm:$0xff]
    %v5231 = vld [vmem:[#allocation6 + $0x78] sm:$0xff]
    %v5232 = vld [vmem:[#allocation6 + $0x80] sm:$0xff]
    %v5233 = vld [vmem:[#allocation6 + $0x88] sm:$0xff]
    %v5234 = vld [vmem:[#allocation6 + $0x90] sm:$0xff]
    %v5235 = vld [vmem:[#allocation6 + $0x98] sm:$0xff]
    %v5236 = vld [vmem:[#allocation6 + $0xa0] sm:$0xff]
    %v5237 = vld [vmem:[#allocation6 + $0xa8] sm:$0xff]
    %v5238 = vld [vmem:[#allocation6 + $0xb0] sm:$0xff]
    %v5239 = vld [vmem:[#allocation6 + $0xb8] sm:$0xff]
    %v5240 = vld [vmem:[#allocation6 + $0xc0] sm:$0xff]
    %v5241 = vld [vmem:[#allocation6 + $0xc8] sm:$0xff]
    %v5242 = vld [vmem:[#allocation6 + $0xd0] sm:$0xff]
    %v5243 = vld [vmem:[#allocation6 + $0xd8] sm:$0xff]
    %v5244 = vld [vmem:[#allocation6 + $0xe0] sm:$0xff]
    %v5245 = vld [vmem:[#allocation6 + $0xe8] sm:$0xff]
    %v5246 = vld [vmem:[#allocation6 + $0xf0] sm:$0xff]
    %v5247 = vld [vmem:[#allocation6 + $0xf8] sm:$0xff]
    %v5248 = vld [vmem:[#allocation6 + $0x100] sm:$0xff]
    %v5249 = vld [vmem:[#allocation6 + $0x108] sm:$0xff]
    %v5250 = vld [vmem:[#allocation6 + $0x110] sm:$0xff]
    %v5251 = vld [vmem:[#allocation6 + $0x118] sm:$0xff]
    %v5252 = vld [vmem:[#allocation6 + $0x120] sm:$0xff]
    %v5253 = vld [vmem:[#allocation6 + $0x128] sm:$0xff]
    %v5254 = vld [vmem:[#allocation6 + $0x130] sm:$0xff]
    %v5255 = vld [vmem:[#allocation6 + $0x138] sm:$0xff]
    %v5256 = vld [vmem:[#allocation6 + $0x140] sm:$0xff]
    %v5257 = vld [vmem:[#allocation6 + $0x148] sm:$0xff]
    %v5258 = vld [vmem:[#allocation6 + $0x150] sm:$0xff]
    %v5259 = vld [vmem:[#allocation6 + $0x158] sm:$0xff]
    %v5260 = vld [vmem:[#allocation6 + $0x160] sm:$0xff]
    %v5261 = vld [vmem:[#allocation6 + $0x168] sm:$0xff]
    %v5262 = vld [vmem:[#allocation6 + $0x170] sm:$0xff]
    %v5263 = vld [vmem:[#allocation6 + $0x178] sm:$0xff]
    %v5264 = vld [vmem:[#allocation6 + $0x180] sm:$0xff]
    %v5265 = vld [vmem:[#allocation6 + $0x188] sm:$0xff]
    %v5266 = vld [vmem:[#allocation6 + $0x190] sm:$0xff]
    %v5267 = vld [vmem:[#allocation6 + $0x198] sm:$0xff]
    %v5268 = vld [vmem:[#allocation6 + $0x1a0] sm:$0xff]
    %v5269 = vld [vmem:[#allocation6 + $0x1a8] sm:$0xff]
    %v5270 = vld [vmem:[#allocation6 + $0x1b0] sm:$0xff]
    %v5271 = vld [vmem:[#allocation6 + $0x1b8] sm:$0xff]
    %v5272 = vld [vmem:[#allocation6 + $0x1c0] sm:$0xff]
    %v5273 = vld [vmem:[#allocation6 + $0x1c8] sm:$0xff]
    %v5274 = vld [vmem:[#allocation6 + $0x1d0] sm:$0xff]
    %v5275 = vld [vmem:[#allocation6 + $0x1d8] sm:$0xff]
    %v5276 = vld [vmem:[#allocation6 + $0x1e0] sm:$0xff]
    %v5277 = vld [vmem:[#allocation6 + $0x1e8] sm:$0xff]
    %v5278 = vld [vmem:[#allocation6 + $0x1f0] sm:$0xff]
    %v5279 = vld [vmem:[#allocation6 + $0x1f8] sm:$0xff]
    %v5280 = vld [vmem:[#allocation6 + $0x200] sm:$0xff]
    %v5281 = vld [vmem:[#allocation6 + $0x208] sm:$0xff]
    %v5282 = vld [vmem:[#allocation6 + $0x210] sm:$0xff]
    %v5283 = vld [vmem:[#allocation6 + $0x218] sm:$0xff]
    %v5284 = vld [vmem:[#allocation6 + $0x220] sm:$0xff]
    %v5285 = vld [vmem:[#allocation6 + $0x228] sm:$0xff]
    %v5286 = vld [vmem:[#allocation6 + $0x230] sm:$0xff]
    %v5287 = vld [vmem:[#allocation6 + $0x238] sm:$0xff]
    %v5288 = vld [vmem:[#allocation6 + $0x240] sm:$0xff]
    %v5289 = vld [vmem:[#allocation6 + $0x248] sm:$0xff]
    %v5290 = vld [vmem:[#allocation6 + $0x250] sm:$0xff]
    %v5291 = vld [vmem:[#allocation6 + $0x258] sm:$0xff]
    %v5292 = vld [vmem:[#allocation6 + $0x260] sm:$0xff]
    %v5293 = vld [vmem:[#allocation6 + $0x268] sm:$0xff]
    %v5294 = vld [vmem:[#allocation6 + $0x270] sm:$0xff]
    %v5295 = vld [vmem:[#allocation6 + $0x278] sm:$0xff]
    %v5296 = vld [vmem:[#allocation6 + $0x280] sm:$0xff]
    %v5297 = vld [vmem:[#allocation6 + $0x288] sm:$0xff]
    %v5298 = vld [vmem:[#allocation6 + $0x290] sm:$0xff]
    %v5299 = vld [vmem:[#allocation6 + $0x298] sm:$0xff]
    %v5300 = vld [vmem:[#allocation6 + $0x2a0] sm:$0xff]
    %v5301 = vld [vmem:[#allocation6 + $0x2a8] sm:$0xff]
    %v5302 = vld [vmem:[#allocation6 + $0x2b0] sm:$0xff]
    %v5303 = vld [vmem:[#allocation6 + $0x2b8] sm:$0xff]
    %v5304 = vld [vmem:[#allocation6 + $0x2c0] sm:$0xff]
    %v5305 = vld [vmem:[#allocation6 + $0x2c8] sm:$0xff]
    %v5306 = vld [vmem:[#allocation6 + $0x2d0] sm:$0xff]
    %v5307 = vld [vmem:[#allocation6 + $0x2d8] sm:$0xff]
    %v5308 = vld [vmem:[#allocation6 + $0x2e0] sm:$0xff]
    %v5309 = vld [vmem:[#allocation6 + $0x2e8] sm:$0xff]
    %v5310 = vld [vmem:[#allocation6 + $0x2f0] sm:$0xff]
    %v5311 = vld [vmem:[#allocation6 + $0x2f8] sm:$0xff]
    %v5312 = vld [vmem:[#allocation6 + $0x300] sm:$0xff]
    %v5313 = vld [vmem:[#allocation6 + $0x308] sm:$0xff]
    %v5314 = vld [vmem:[#allocation6 + $0x310] sm:$0xff]
    %v5315 = vld [vmem:[#allocation6 + $0x318] sm:$0xff]
    %v5316 = vld [vmem:[#allocation6 + $0x320] sm:$0xff]
    %v5317 = vld [vmem:[#allocation6 + $0x328] sm:$0xff]
    %v5318 = vld [vmem:[#allocation6 + $0x330] sm:$0xff]
    %v5319 = vld [vmem:[#allocation6 + $0x338] sm:$0xff]
    %v5320 = vld [vmem:[#allocation6 + $0x340] sm:$0xff]
    %v5321 = vld [vmem:[#allocation6 + $0x348] sm:$0xff]
    %v5322 = vld [vmem:[#allocation6 + $0x350] sm:$0xff]
    %v5323 = vld [vmem:[#allocation6 + $0x358] sm:$0xff]
    %v5324 = vld [vmem:[#allocation6 + $0x360] sm:$0xff]
    %v5325 = vld [vmem:[#allocation6 + $0x368] sm:$0xff]
    %v5326 = vld [vmem:[#allocation6 + $0x370] sm:$0xff]
    %v5327 = vld [vmem:[#allocation6 + $0x378] sm:$0xff]
    %v5328 = vld [vmem:[#allocation6 + $0x380] sm:$0xff]
    %v5329 = vld [vmem:[#allocation6 + $0x388] sm:$0xff]
    %v5330 = vld [vmem:[#allocation6 + $0x390] sm:$0xff]
    %v5331 = vld [vmem:[#allocation6 + $0x398] sm:$0xff]
    %v5332 = vld [vmem:[#allocation6 + $0x3a0] sm:$0xff]
    %v5333 = vld [vmem:[#allocation6 + $0x3a8] sm:$0xff]
    %v5334 = vld [vmem:[#allocation6 + $0x3b0] sm:$0xff]
    %v5335 = vld [vmem:[#allocation6 + $0x3b8] sm:$0xff]
    %v5336 = vld [vmem:[#allocation6 + $0x3c0] sm:$0xff]
    %v5337 = vld [vmem:[#allocation6 + $0x3c8] sm:$0xff]
    %v5338 = vld [vmem:[#allocation6 + $0x3d0] sm:$0xff]
    %v5339 = vld [vmem:[#allocation6 + $0x3d8] sm:$0xff]
    %v5340 = vld [vmem:[#allocation6 + $0x3e0] sm:$0xff]
    %v5341 = vld [vmem:[#allocation6 + $0x3e8] sm:$0xff]
    %v5342 = vld [vmem:[#allocation6 + $0x3f0] sm:$0xff]
    %v5343 = vld [vmem:[#allocation6 + $0x3f8] sm:$0xff]
    %v5344 = vld [vmem:[#allocation6 + $0x400] sm:$0xff]
    %v5345 = vld [vmem:[#allocation6 + $0x408] sm:$0xff]
    %v5346 = vld [vmem:[#allocation6 + $0x410] sm:$0xff]
    %v5347 = vld [vmem:[#allocation6 + $0x418] sm:$0xff]
    %v5348 = vld [vmem:[#allocation6 + $0x420] sm:$0xff]
    %v5349 = vld [vmem:[#allocation6 + $0x428] sm:$0xff]
    %v5350 = vld [vmem:[#allocation6 + $0x430] sm:$0xff]
    %v5351 = vld [vmem:[#allocation6 + $0x438] sm:$0xff]
    %v5352 = vld [vmem:[#allocation6 + $0x440] sm:$0xff]
    %v5353 = vld [vmem:[#allocation6 + $0x448] sm:$0xff]
    %v5354 = vld [vmem:[#allocation6 + $0x450] sm:$0xff]
    %v5355 = vld [vmem:[#allocation6 + $0x458] sm:$0xff]
    %v5356 = vld [vmem:[#allocation6 + $0x460] sm:$0xff]
    %v5357 = vld [vmem:[#allocation6 + $0x468] sm:$0xff]
    %v5358 = vld [vmem:[#allocation6 + $0x470] sm:$0xff]
    %v5359 = vld [vmem:[#allocation6 + $0x478] sm:$0xff]
    %v5360 = vld [vmem:[#allocation6 + $0x480] sm:$0xff]
    %v5361 = vld [vmem:[#allocation6 + $0x488] sm:$0xff]
    %v5362 = vld [vmem:[#allocation6 + $0x490] sm:$0xff]
    %v5363 = vld [vmem:[#allocation6 + $0x498] sm:$0xff]
    %v5364 = vld [vmem:[#allocation6 + $0x4a0] sm:$0xff]
    %v5365 = vld [vmem:[#allocation6 + $0x4a8] sm:$0xff]
    %v5366 = vld [vmem:[#allocation6 + $0x4b0] sm:$0xff]
    %v5367 = vld [vmem:[#allocation6 + $0x4b8] sm:$0xff]
    %v5368 = vld [vmem:[#allocation6 + $0x4c0] sm:$0xff]
    %v5369 = vld [vmem:[#allocation6 + $0x4c8] sm:$0xff]
    %v5370 = vld [vmem:[#allocation6 + $0x4d0] sm:$0xff]
    %v5371 = vld [vmem:[#allocation6 + $0x4d8] sm:$0xff]
    %v5372 = vld [vmem:[#allocation6 + $0x4e0] sm:$0xff]
    %v5373 = vld [vmem:[#allocation6 + $0x4e8] sm:$0xff]
    %v5374 = vld [vmem:[#allocation6 + $0x4f0] sm:$0xff]
    %v5375 = vld [vmem:[#allocation6 + $0x4f8] sm:$0xff]
    %v5376 = vld [vmem:[#allocation6 + $0x500] sm:$0xff]
    %v5377 = vld [vmem:[#allocation6 + $0x508] sm:$0xff]
    %v5378 = vld [vmem:[#allocation6 + $0x510] sm:$0xff]
    %v5379 = vld [vmem:[#allocation6 + $0x518] sm:$0xff]
    %v5380 = vld [vmem:[#allocation6 + $0x520] sm:$0xff]
    %v5381 = vld [vmem:[#allocation6 + $0x528] sm:$0xff]
    %v5382 = vld [vmem:[#allocation6 + $0x530] sm:$0xff]
    %v5383 = vld [vmem:[#allocation6 + $0x538] sm:$0xff]
    %v5384 = vld [vmem:[#allocation6 + $0x540] sm:$0xff]
    %v5385 = vld [vmem:[#allocation6 + $0x548] sm:$0xff]
    %v5386 = vld [vmem:[#allocation6 + $0x550] sm:$0xff]
    %v5387 = vld [vmem:[#allocation6 + $0x558] sm:$0xff]
    %v5388 = vld [vmem:[#allocation6 + $0x560] sm:$0xff]
    %v5389 = vld [vmem:[#allocation6 + $0x568] sm:$0xff]
    %v5390 = vld [vmem:[#allocation6 + $0x570] sm:$0xff]
    %v5391 = vld [vmem:[#allocation6 + $0x578] sm:$0xff]
    %v5392 = vld [vmem:[#allocation6 + $0x580] sm:$0xff]
    %v5393 = vld [vmem:[#allocation6 + $0x588] sm:$0xff]
    %v5394 = vld [vmem:[#allocation6 + $0x590] sm:$0xff]
    %v5395 = vld [vmem:[#allocation6 + $0x598] sm:$0xff]
    %v5396 = vld [vmem:[#allocation6 + $0x5a0] sm:$0xff]
    %v5397 = vld [vmem:[#allocation6 + $0x5a8] sm:$0xff]
    %v5398 = vld [vmem:[#allocation6 + $0x5b0] sm:$0xff]
    %v5399 = vld [vmem:[#allocation6 + $0x5b8] sm:$0xff]
    %v5400 = vld [vmem:[#allocation6 + $0x5c0] sm:$0xff]
    %v5401 = vld [vmem:[#allocation6 + $0x5c8] sm:$0xff]
    %v5402 = vld [vmem:[#allocation6 + $0x5d0] sm:$0xff]
    %v5403 = vld [vmem:[#allocation6 + $0x5d8] sm:$0xff]
    %v5404 = vld [vmem:[#allocation6 + $0x5e0] sm:$0xff]
    %v5405 = vld [vmem:[#allocation6 + $0x5e8] sm:$0xff]
    %v5406 = vld [vmem:[#allocation6 + $0x5f0] sm:$0xff]
    %v5407 = vld [vmem:[#allocation6 + $0x5f8] sm:$0xff]
    %v5408 = vld [vmem:[#allocation6 + $0x600] sm:$0xff]
    %v5409 = vld [vmem:[#allocation6 + $0x608] sm:$0xff]
    %v5410 = vld [vmem:[#allocation6 + $0x610] sm:$0xff]
    %v5411 = vld [vmem:[#allocation6 + $0x618] sm:$0xff]
    %v5412 = vld [vmem:[#allocation6 + $0x620] sm:$0xff]
    %v5413 = vld [vmem:[#allocation6 + $0x628] sm:$0xff]
    %v5414 = vld [vmem:[#allocation6 + $0x630] sm:$0xff]
    %v5415 = vld [vmem:[#allocation6 + $0x638] sm:$0xff]
    %v5416 = vld [vmem:[#allocation6 + $0x640] sm:$0xff]
    %v5417 = vld [vmem:[#allocation6 + $0x648] sm:$0xff]
    %v5418 = vld [vmem:[#allocation6 + $0x650] sm:$0xff]
    %v5419 = vld [vmem:[#allocation6 + $0x658] sm:$0xff]
    %v5420 = vld [vmem:[#allocation6 + $0x660] sm:$0xff]
    %v5421 = vld [vmem:[#allocation6 + $0x668] sm:$0xff]
    %v5422 = vld [vmem:[#allocation6 + $0x670] sm:$0xff]
    %v5423 = vld [vmem:[#allocation6 + $0x678] sm:$0xff]
    %v5424 = vld [vmem:[#allocation6 + $0x680] sm:$0xff]
    %v5425 = vld [vmem:[#allocation6 + $0x688] sm:$0xff]
    %v5426 = vld [vmem:[#allocation6 + $0x690] sm:$0xff]
    %v5427 = vld [vmem:[#allocation6 + $0x698] sm:$0xff]
    %v5428 = vld [vmem:[#allocation6 + $0x6a0] sm:$0xff]
    %v5429 = vld [vmem:[#allocation6 + $0x6a8] sm:$0xff]
    %v5430 = vld [vmem:[#allocation6 + $0x6b0] sm:$0xff]
    %v5431 = vld [vmem:[#allocation6 + $0x6b8] sm:$0xff]
    %v5432 = vld [vmem:[#allocation6 + $0x6c0] sm:$0xff]
    %v5433 = vld [vmem:[#allocation6 + $0x6c8] sm:$0xff]
    %v5434 = vld [vmem:[#allocation6 + $0x6d0] sm:$0xff]
    %v5435 = vld [vmem:[#allocation6 + $0x6d8] sm:$0xff]
    %v5436 = vld [vmem:[#allocation6 + $0x6e0] sm:$0xff]
    %v5437 = vld [vmem:[#allocation6 + $0x6e8] sm:$0xff]
    %v5438 = vld [vmem:[#allocation6 + $0x6f0] sm:$0xff]
    %v5439 = vld [vmem:[#allocation6 + $0x6f8] sm:$0xff]
    %v5440 = vld [vmem:[#allocation6 + $0x700] sm:$0xff]
    %v5441 = vld [vmem:[#allocation6 + $0x708] sm:$0xff]
    %v5442 = vld [vmem:[#allocation6 + $0x710] sm:$0xff]
    %v5443 = vld [vmem:[#allocation6 + $0x718] sm:$0xff]
    %v5444 = vld [vmem:[#allocation6 + $0x720] sm:$0xff]
    %v5445 = vld [vmem:[#allocation6 + $0x728] sm:$0xff]
    %v5446 = vld [vmem:[#allocation6 + $0x730] sm:$0xff]
    %v5447 = vld [vmem:[#allocation6 + $0x738] sm:$0xff]
    %v5448 = vld [vmem:[#allocation6 + $0x740] sm:$0xff]
    %v5449 = vld [vmem:[#allocation6 + $0x748] sm:$0xff]
    %v5450 = vld [vmem:[#allocation6 + $0x750] sm:$0xff]
    %v5451 = vld [vmem:[#allocation6 + $0x758] sm:$0xff]
    %v5452 = vld [vmem:[#allocation6 + $0x760] sm:$0xff]
    %v5453 = vld [vmem:[#allocation6 + $0x768] sm:$0xff]
    %v5454 = vld [vmem:[#allocation6 + $0x770] sm:$0xff]
    %v5455 = vld [vmem:[#allocation6 + $0x778] sm:$0xff]
    %v5456 = vld [vmem:[#allocation6 + $0x780] sm:$0xff]
    %v5457 = vld [vmem:[#allocation6 + $0x788] sm:$0xff]
    %v5458 = vld [vmem:[#allocation6 + $0x790] sm:$0xff]
    %v5459 = vld [vmem:[#allocation6 + $0x798] sm:$0xff]
    %v5460 = vld [vmem:[#allocation6 + $0x7a0] sm:$0xff]
    %v5461 = vld [vmem:[#allocation6 + $0x7a8] sm:$0xff]
    %v5462 = vld [vmem:[#allocation6 + $0x7b0] sm:$0xff]
    %v5463 = vld [vmem:[#allocation6 + $0x7b8] sm:$0xff]
    %v5464 = vld [vmem:[#allocation6 + $0x7c0] sm:$0xff]
    %v5465 = vld [vmem:[#allocation6 + $0x7c8] sm:$0xff]
    %v5466 = vld [vmem:[#allocation6 + $0x7d0] sm:$0xff]
    %v5467 = vld [vmem:[#allocation6 + $0x7d8] sm:$0xff]
    %v5468 = vld [vmem:[#allocation6 + $0x7e0] sm:$0xff]
    %v5469 = vld [vmem:[#allocation6 + $0x7e8] sm:$0xff]
    %v5470 = vld [vmem:[#allocation6 + $0x7f0] sm:$0xff]
    %v5471 = vld [vmem:[#allocation6 + $0x7f8] sm:$0xff]
    %v5472 = vld [vmem:[#allocation7] sm:$0xf]
    %v5474 = vlaneseq
    %v5475 = vshrl.u32 %v5474, 7
    %v5476 = vsub.s32 0, %v5475
    %v5477 = vrot.slane %v5472, %v5476
    %v5478 = vlaneseq
    %v5479 = vshrl.u32 %v5478, 7
    %v5480 = vsub.s32 1, %v5479
    %v5481 = vrot.slane %v5472, %v5480
    %v5482 = vlaneseq
    %v5483 = vshrl.u32 %v5482, 7
    %v5484 = vsub.s32 2, %v5483
    %v5485 = vrot.slane %v5472, %v5484
    %v5486 = vlaneseq
    %v5487 = vshrl.u32 %v5486, 7
    %v5488 = vsub.s32 3, %v5487
    %v5489 = vrot.slane %v5472, %v5488
    %v5750 = vunpack.c.l.b16 %v5216
    %v5751 = vunpack.c.h.b16 %v5216
    %v5752 = vunpack.c.l.b16 %v5217
    %v5753 = vunpack.c.h.b16 %v5217
    %v5754 = vunpack.c.l.b16 %v5218
    %v5755 = vunpack.c.h.b16 %v5218
    %v5756 = vunpack.c.l.b16 %v5219
    %v5757 = vunpack.c.h.b16 %v5219
    %v5758 = vunpack.c.l.b16 %v5220
    %v5759 = vunpack.c.h.b16 %v5220
    %v5760 = vunpack.c.l.b16 %v5221
    %v5761 = vunpack.c.h.b16 %v5221
    %v5762 = vunpack.c.l.b16 %v5222
    %v5763 = vunpack.c.h.b16 %v5222
    %v5764 = vunpack.c.l.b16 %v5223
    %v5765 = vunpack.c.h.b16 %v5223
    %v5766 = vunpack.c.l.b16 %v5224
    %v5767 = vunpack.c.h.b16 %v5224
    %v5768 = vunpack.c.l.b16 %v5225
    %v5769 = vunpack.c.h.b16 %v5225
    %v5770 = vunpack.c.l.b16 %v5226
    %v5771 = vunpack.c.h.b16 %v5226
    %v5772 = vunpack.c.l.b16 %v5227
    %v5773 = vunpack.c.h.b16 %v5227
    %v5774 = vunpack.c.l.b16 %v5228
    %v5775 = vunpack.c.h.b16 %v5228
    %v5776 = vunpack.c.l.b16 %v5229
    %v5777 = vunpack.c.h.b16 %v5229
    %v5778 = vunpack.c.l.b16 %v5230
    %v5779 = vunpack.c.h.b16 %v5230
    %v5780 = vunpack.c.l.b16 %v5231
    %v5781 = vunpack.c.h.b16 %v5231
    %v5782 = vunpack.c.l.b16 %v5232
    %v5783 = vunpack.c.h.b16 %v5232
    %v5784 = vunpack.c.l.b16 %v5233
    %v5785 = vunpack.c.h.b16 %v5233
    %v5786 = vunpack.c.l.b16 %v5234
    %v5787 = vunpack.c.h.b16 %v5234
    %v5788 = vunpack.c.l.b16 %v5235
    %v5789 = vunpack.c.h.b16 %v5235
    %v5790 = vunpack.c.l.b16 %v5236
    %v5791 = vunpack.c.h.b16 %v5236
    %v5792 = vunpack.c.l.b16 %v5237
    %v5793 = vunpack.c.h.b16 %v5237
    %v5794 = vunpack.c.l.b16 %v5238
    %v5795 = vunpack.c.h.b16 %v5238
    %v5796 = vunpack.c.l.b16 %v5239
    %v5797 = vunpack.c.h.b16 %v5239
    %v5798 = vunpack.c.l.b16 %v5240
    %v5799 = vunpack.c.h.b16 %v5240
    %v5800 = vunpack.c.l.b16 %v5241
    %v5801 = vunpack.c.h.b16 %v5241
    %v5802 = vunpack.c.l.b16 %v5242
    %v5803 = vunpack.c.h.b16 %v5242
    %v5804 = vunpack.c.l.b16 %v5243
    %v5805 = vunpack.c.h.b16 %v5243
    %v5806 = vunpack.c.l.b16 %v5244
    %v5807 = vunpack.c.h.b16 %v5244
    %v5808 = vunpack.c.l.b16 %v5245
    %v5809 = vunpack.c.h.b16 %v5245
    %v5810 = vunpack.c.l.b16 %v5246
    %v5811 = vunpack.c.h.b16 %v5246
    %v5812 = vunpack.c.l.b16 %v5247
    %v5813 = vunpack.c.h.b16 %v5247
    %v5814 = vunpack.c.l.b16 %v5248
    %v5815 = vunpack.c.h.b16 %v5248
    %v5816 = vunpack.c.l.b16 %v5249
    %v5817 = vunpack.c.h.b16 %v5249
    %v5818 = vunpack.c.l.b16 %v5250
    %v5819 = vunpack.c.h.b16 %v5250
    %v5820 = vunpack.c.l.b16 %v5251
    %v5821 = vunpack.c.h.b16 %v5251
    %v5822 = vunpack.c.l.b16 %v5252
    %v5823 = vunpack.c.h.b16 %v5252
    %v5824 = vunpack.c.l.b16 %v5253
    %v5825 = vunpack.c.h.b16 %v5253
    %v5826 = vunpack.c.l.b16 %v5254
    %v5827 = vunpack.c.h.b16 %v5254
    %v5828 = vunpack.c.l.b16 %v5255
    %v5829 = vunpack.c.h.b16 %v5255
    %v5830 = vunpack.c.l.b16 %v5256
    %v5831 = vunpack.c.h.b16 %v5256
    %v5832 = vunpack.c.l.b16 %v5257
    %v5833 = vunpack.c.h.b16 %v5257
    %v5834 = vunpack.c.l.b16 %v5258
    %v5835 = vunpack.c.h.b16 %v5258
    %v5836 = vunpack.c.l.b16 %v5259
    %v5837 = vunpack.c.h.b16 %v5259
    %v5838 = vunpack.c.l.b16 %v5260
    %v5839 = vunpack.c.h.b16 %v5260
    %v5840 = vunpack.c.l.b16 %v5261
    %v5841 = vunpack.c.h.b16 %v5261
    %v5842 = vunpack.c.l.b16 %v5262
    %v5843 = vunpack.c.h.b16 %v5262
    %v5844 = vunpack.c.l.b16 %v5263
    %v5845 = vunpack.c.h.b16 %v5263
    %v5846 = vunpack.c.l.b16 %v5264
    %v5847 = vunpack.c.h.b16 %v5264
    %v5848 = vunpack.c.l.b16 %v5265
    %v5849 = vunpack.c.h.b16 %v5265
    %v5850 = vunpack.c.l.b16 %v5266
    %v5851 = vunpack.c.h.b16 %v5266
    %v5852 = vunpack.c.l.b16 %v5267
    %v5853 = vunpack.c.h.b16 %v5267
    %v5854 = vunpack.c.l.b16 %v5268
    %v5855 = vunpack.c.h.b16 %v5268
    %v5856 = vunpack.c.l.b16 %v5269
    %v5857 = vunpack.c.h.b16 %v5269
    %v5858 = vunpack.c.l.b16 %v5270
    %v5859 = vunpack.c.h.b16 %v5270
    %v5860 = vunpack.c.l.b16 %v5271
    %v5861 = vunpack.c.h.b16 %v5271
    %v5862 = vunpack.c.l.b16 %v5272
    %v5863 = vunpack.c.h.b16 %v5272
    %v5864 = vunpack.c.l.b16 %v5273
    %v5865 = vunpack.c.h.b16 %v5273
    %v5866 = vunpack.c.l.b16 %v5274
    %v5867 = vunpack.c.h.b16 %v5274
    %v5868 = vunpack.c.l.b16 %v5275
    %v5869 = vunpack.c.h.b16 %v5275
    %v5870 = vunpack.c.l.b16 %v5276
    %v5871 = vunpack.c.h.b16 %v5276
    %v5872 = vunpack.c.l.b16 %v5277
    %v5873 = vunpack.c.h.b16 %v5277
    %v5874 = vunpack.c.l.b16 %v5278
    %v5875 = vunpack.c.h.b16 %v5278
    %v5876 = vunpack.c.l.b16 %v5279
    %v5877 = vunpack.c.h.b16 %v5279
    %v5878 = vunpack.c.l.b16 %v5280
    %v5879 = vunpack.c.h.b16 %v5280
    %v5880 = vunpack.c.l.b16 %v5281
    %v5881 = vunpack.c.h.b16 %v5281
    %v5882 = vunpack.c.l.b16 %v5282
    %v5883 = vunpack.c.h.b16 %v5282
    %v5884 = vunpack.c.l.b16 %v5283
    %v5885 = vunpack.c.h.b16 %v5283
    %v5886 = vunpack.c.l.b16 %v5284
    %v5887 = vunpack.c.h.b16 %v5284
    %v5888 = vunpack.c.l.b16 %v5285
    %v5889 = vunpack.c.h.b16 %v5285
    %v5890 = vunpack.c.l.b16 %v5286
    %v5891 = vunpack.c.h.b16 %v5286
    %v5892 = vunpack.c.l.b16 %v5287
    %v5893 = vunpack.c.h.b16 %v5287
    %v5894 = vunpack.c.l.b16 %v5288
    %v5895 = vunpack.c.h.b16 %v5288
    %v5896 = vunpack.c.l.b16 %v5289
    %v5897 = vunpack.c.h.b16 %v5289
    %v5898 = vunpack.c.l.b16 %v5290
    %v5899 = vunpack.c.h.b16 %v5290
    %v5900 = vunpack.c.l.b16 %v5291
    %v5901 = vunpack.c.h.b16 %v5291
    %v5902 = vunpack.c.l.b16 %v5292
    %v5903 = vunpack.c.h.b16 %v5292
    %v5904 = vunpack.c.l.b16 %v5293
    %v5905 = vunpack.c.h.b16 %v5293
    %v5906 = vunpack.c.l.b16 %v5294
    %v5907 = vunpack.c.h.b16 %v5294
    %v5908 = vunpack.c.l.b16 %v5295
    %v5909 = vunpack.c.h.b16 %v5295
    %v5910 = vunpack.c.l.b16 %v5296
    %v5911 = vunpack.c.h.b16 %v5296
    %v5912 = vunpack.c.l.b16 %v5297
    %v5913 = vunpack.c.h.b16 %v5297
    %v5914 = vunpack.c.l.b16 %v5298
    %v5915 = vunpack.c.h.b16 %v5298
    %v5916 = vunpack.c.l.b16 %v5299
    %v5917 = vunpack.c.h.b16 %v5299
    %v5918 = vunpack.c.l.b16 %v5300
    %v5919 = vunpack.c.h.b16 %v5300
    %v5920 = vunpack.c.l.b16 %v5301
    %v5921 = vunpack.c.h.b16 %v5301
    %v5922 = vunpack.c.l.b16 %v5302
    %v5923 = vunpack.c.h.b16 %v5302
    %v5924 = vunpack.c.l.b16 %v5303
    %v5925 = vunpack.c.h.b16 %v5303
    %v5926 = vunpack.c.l.b16 %v5304
    %v5927 = vunpack.c.h.b16 %v5304
    %v5928 = vunpack.c.l.b16 %v5305
    %v5929 = vunpack.c.h.b16 %v5305
    %v5930 = vunpack.c.l.b16 %v5306
    %v5931 = vunpack.c.h.b16 %v5306
    %v5932 = vunpack.c.l.b16 %v5307
    %v5933 = vunpack.c.h.b16 %v5307
    %v5934 = vunpack.c.l.b16 %v5308
    %v5935 = vunpack.c.h.b16 %v5308
    %v5936 = vunpack.c.l.b16 %v5309
    %v5937 = vunpack.c.h.b16 %v5309
    %v5938 = vunpack.c.l.b16 %v5310
    %v5939 = vunpack.c.h.b16 %v5310
    %v5940 = vunpack.c.l.b16 %v5311
    %v5941 = vunpack.c.h.b16 %v5311
    %v5942 = vunpack.c.l.b16 %v5312
    %v5943 = vunpack.c.h.b16 %v5312
    %v5944 = vunpack.c.l.b16 %v5313
    %v5945 = vunpack.c.h.b16 %v5313
    %v5946 = vunpack.c.l.b16 %v5314
    %v5947 = vunpack.c.h.b16 %v5314
    %v5948 = vunpack.c.l.b16 %v5315
    %v5949 = vunpack.c.h.b16 %v5315
    %v5950 = vunpack.c.l.b16 %v5316
    %v5951 = vunpack.c.h.b16 %v5316
    %v5952 = vunpack.c.l.b16 %v5317
    %v5953 = vunpack.c.h.b16 %v5317
    %v5954 = vunpack.c.l.b16 %v5318
    %v5955 = vunpack.c.h.b16 %v5318
    %v5956 = vunpack.c.l.b16 %v5319
    %v5957 = vunpack.c.h.b16 %v5319
    %v5958 = vunpack.c.l.b16 %v5320
    %v5959 = vunpack.c.h.b16 %v5320
    %v5960 = vunpack.c.l.b16 %v5321
    %v5961 = vunpack.c.h.b16 %v5321
    %v5962 = vunpack.c.l.b16 %v5322
    %v5963 = vunpack.c.h.b16 %v5322
    %v5964 = vunpack.c.l.b16 %v5323
    %v5965 = vunpack.c.h.b16 %v5323
    %v5966 = vunpack.c.l.b16 %v5324
    %v5967 = vunpack.c.h.b16 %v5324
    %v5968 = vunpack.c.l.b16 %v5325
    %v5969 = vunpack.c.h.b16 %v5325
    %v5970 = vunpack.c.l.b16 %v5326
    %v5971 = vunpack.c.h.b16 %v5326
    %v5972 = vunpack.c.l.b16 %v5327
    %v5973 = vunpack.c.h.b16 %v5327
    %v5974 = vunpack.c.l.b16 %v5328
    %v5975 = vunpack.c.h.b16 %v5328
    %v5976 = vunpack.c.l.b16 %v5329
    %v5977 = vunpack.c.h.b16 %v5329
    %v5978 = vunpack.c.l.b16 %v5330
    %v5979 = vunpack.c.h.b16 %v5330
    %v5980 = vunpack.c.l.b16 %v5331
    %v5981 = vunpack.c.h.b16 %v5331
    %v5982 = vunpack.c.l.b16 %v5332
    %v5983 = vunpack.c.h.b16 %v5332
    %v5984 = vunpack.c.l.b16 %v5333
    %v5985 = vunpack.c.h.b16 %v5333
    %v5986 = vunpack.c.l.b16 %v5334
    %v5987 = vunpack.c.h.b16 %v5334
    %v5988 = vunpack.c.l.b16 %v5335
    %v5989 = vunpack.c.h.b16 %v5335
    %v5990 = vunpack.c.l.b16 %v5336
    %v5991 = vunpack.c.h.b16 %v5336
    %v5992 = vunpack.c.l.b16 %v5337
    %v5993 = vunpack.c.h.b16 %v5337
    %v5994 = vunpack.c.l.b16 %v5338
    %v5995 = vunpack.c.h.b16 %v5338
    %v5996 = vunpack.c.l.b16 %v5339
    %v5997 = vunpack.c.h.b16 %v5339
    %v5998 = vunpack.c.l.b16 %v5340
    %v5999 = vunpack.c.h.b16 %v5340
    %v6000 = vunpack.c.l.b16 %v5341
    %v6001 = vunpack.c.h.b16 %v5341
    %v6002 = vunpack.c.l.b16 %v5342
    %v6003 = vunpack.c.h.b16 %v5342
    %v6004 = vunpack.c.l.b16 %v5343
    %v6005 = vunpack.c.h.b16 %v5343
    %v6006 = vunpack.c.l.b16 %v5344
    %v6007 = vunpack.c.h.b16 %v5344
    %v6008 = vunpack.c.l.b16 %v5345
    %v6009 = vunpack.c.h.b16 %v5345
    %v6010 = vunpack.c.l.b16 %v5346
    %v6011 = vunpack.c.h.b16 %v5346
    %v6012 = vunpack.c.l.b16 %v5347
    %v6013 = vunpack.c.h.b16 %v5347
    %v6014 = vunpack.c.l.b16 %v5348
    %v6015 = vunpack.c.h.b16 %v5348
    %v6016 = vunpack.c.l.b16 %v5349
    %v6017 = vunpack.c.h.b16 %v5349
    %v6018 = vunpack.c.l.b16 %v5350
    %v6019 = vunpack.c.h.b16 %v5350
    %v6020 = vunpack.c.l.b16 %v5351
    %v6021 = vunpack.c.h.b16 %v5351
    %v6022 = vunpack.c.l.b16 %v5352
    %v6023 = vunpack.c.h.b16 %v5352
    %v6024 = vunpack.c.l.b16 %v5353
    %v6025 = vunpack.c.h.b16 %v5353
    %v6026 = vunpack.c.l.b16 %v5354
    %v6027 = vunpack.c.h.b16 %v5354
    %v6028 = vunpack.c.l.b16 %v5355
    %v6029 = vunpack.c.h.b16 %v5355
    %v6030 = vunpack.c.l.b16 %v5356
    %v6031 = vunpack.c.h.b16 %v5356
    %v6032 = vunpack.c.l.b16 %v5357
    %v6033 = vunpack.c.h.b16 %v5357
    %v6034 = vunpack.c.l.b16 %v5358
    %v6035 = vunpack.c.h.b16 %v5358
    %v6036 = vunpack.c.l.b16 %v5359
    %v6037 = vunpack.c.h.b16 %v5359
    %v6038 = vunpack.c.l.b16 %v5360
    %v6039 = vunpack.c.h.b16 %v5360
    %v6040 = vunpack.c.l.b16 %v5361
    %v6041 = vunpack.c.h.b16 %v5361
    %v6042 = vunpack.c.l.b16 %v5362
    %v6043 = vunpack.c.h.b16 %v5362
    %v6044 = vunpack.c.l.b16 %v5363
    %v6045 = vunpack.c.h.b16 %v5363
    %v6046 = vunpack.c.l.b16 %v5364
    %v6047 = vunpack.c.h.b16 %v5364
    %v6048 = vunpack.c.l.b16 %v5365
    %v6049 = vunpack.c.h.b16 %v5365
    %v6050 = vunpack.c.l.b16 %v5366
    %v6051 = vunpack.c.h.b16 %v5366
    %v6052 = vunpack.c.l.b16 %v5367
    %v6053 = vunpack.c.h.b16 %v5367
    %v6054 = vunpack.c.l.b16 %v5368
    %v6055 = vunpack.c.h.b16 %v5368
    %v6056 = vunpack.c.l.b16 %v5369
    %v6057 = vunpack.c.h.b16 %v5369
    %v6058 = vunpack.c.l.b16 %v5370
    %v6059 = vunpack.c.h.b16 %v5370
    %v6060 = vunpack.c.l.b16 %v5371
    %v6061 = vunpack.c.h.b16 %v5371
    %v6062 = vunpack.c.l.b16 %v5372
    %v6063 = vunpack.c.h.b16 %v5372
    %v6064 = vunpack.c.l.b16 %v5373
    %v6065 = vunpack.c.h.b16 %v5373
    %v6066 = vunpack.c.l.b16 %v5374
    %v6067 = vunpack.c.h.b16 %v5374
    %v6068 = vunpack.c.l.b16 %v5375
    %v6069 = vunpack.c.h.b16 %v5375
    %v6070 = vunpack.c.l.b16 %v5376
    %v6071 = vunpack.c.h.b16 %v5376
    %v6072 = vunpack.c.l.b16 %v5377
    %v6073 = vunpack.c.h.b16 %v5377
    %v6074 = vunpack.c.l.b16 %v5378
    %v6075 = vunpack.c.h.b16 %v5378
    %v6076 = vunpack.c.l.b16 %v5379
    %v6077 = vunpack.c.h.b16 %v5379
    %v6078 = vunpack.c.l.b16 %v5380
    %v6079 = vunpack.c.h.b16 %v5380
    %v6080 = vunpack.c.l.b16 %v5381
    %v6081 = vunpack.c.h.b16 %v5381
    %v6082 = vunpack.c.l.b16 %v5382
    %v6083 = vunpack.c.h.b16 %v5382
    %v6084 = vunpack.c.l.b16 %v5383
    %v6085 = vunpack.c.h.b16 %v5383
    %v6086 = vunpack.c.l.b16 %v5384
    %v6087 = vunpack.c.h.b16 %v5384
    %v6088 = vunpack.c.l.b16 %v5385
    %v6089 = vunpack.c.h.b16 %v5385
    %v6090 = vunpack.c.l.b16 %v5386
    %v6091 = vunpack.c.h.b16 %v5386
    %v6092 = vunpack.c.l.b16 %v5387
    %v6093 = vunpack.c.h.b16 %v5387
    %v6094 = vunpack.c.l.b16 %v5388
    %v6095 = vunpack.c.h.b16 %v5388
    %v6096 = vunpack.c.l.b16 %v5389
    %v6097 = vunpack.c.h.b16 %v5389
    %v6098 = vunpack.c.l.b16 %v5390
    %v6099 = vunpack.c.h.b16 %v5390
    %v6100 = vunpack.c.l.b16 %v5391
    %v6101 = vunpack.c.h.b16 %v5391
    %v6102 = vunpack.c.l.b16 %v5392
    %v6103 = vunpack.c.h.b16 %v5392
    %v6104 = vunpack.c.l.b16 %v5393
    %v6105 = vunpack.c.h.b16 %v5393
    %v6106 = vunpack.c.l.b16 %v5394
    %v6107 = vunpack.c.h.b16 %v5394
    %v6108 = vunpack.c.l.b16 %v5395
    %v6109 = vunpack.c.h.b16 %v5395
    %v6110 = vunpack.c.l.b16 %v5396
    %v6111 = vunpack.c.h.b16 %v5396
    %v6112 = vunpack.c.l.b16 %v5397
    %v6113 = vunpack.c.h.b16 %v5397
    %v6114 = vunpack.c.l.b16 %v5398
    %v6115 = vunpack.c.h.b16 %v5398
    %v6116 = vunpack.c.l.b16 %v5399
    %v6117 = vunpack.c.h.b16 %v5399
    %v6118 = vunpack.c.l.b16 %v5400
    %v6119 = vunpack.c.h.b16 %v5400
    %v6120 = vunpack.c.l.b16 %v5401
    %v6121 = vunpack.c.h.b16 %v5401
    %v6122 = vunpack.c.l.b16 %v5402
    %v6123 = vunpack.c.h.b16 %v5402
    %v6124 = vunpack.c.l.b16 %v5403
    %v6125 = vunpack.c.h.b16 %v5403
    %v6126 = vunpack.c.l.b16 %v5404
    %v6127 = vunpack.c.h.b16 %v5404
    %v6128 = vunpack.c.l.b16 %v5405
    %v6129 = vunpack.c.h.b16 %v5405
    %v6130 = vunpack.c.l.b16 %v5406
    %v6131 = vunpack.c.h.b16 %v5406
    %v6132 = vunpack.c.l.b16 %v5407
    %v6133 = vunpack.c.h.b16 %v5407
    %v6134 = vunpack.c.l.b16 %v5408
    %v6135 = vunpack.c.h.b16 %v5408
    %v6136 = vunpack.c.l.b16 %v5409
    %v6137 = vunpack.c.h.b16 %v5409
    %v6138 = vunpack.c.l.b16 %v5410
    %v6139 = vunpack.c.h.b16 %v5410
    %v6140 = vunpack.c.l.b16 %v5411
    %v6141 = vunpack.c.h.b16 %v5411
    %v6142 = vunpack.c.l.b16 %v5412
    %v6143 = vunpack.c.h.b16 %v5412
    %v6144 = vunpack.c.l.b16 %v5413
    %v6145 = vunpack.c.h.b16 %v5413
    %v6146 = vunpack.c.l.b16 %v5414
    %v6147 = vunpack.c.h.b16 %v5414
    %v6148 = vunpack.c.l.b16 %v5415
    %v6149 = vunpack.c.h.b16 %v5415
    %v6150 = vunpack.c.l.b16 %v5416
    %v6151 = vunpack.c.h.b16 %v5416
    %v6152 = vunpack.c.l.b16 %v5417
    %v6153 = vunpack.c.h.b16 %v5417
    %v6154 = vunpack.c.l.b16 %v5418
    %v6155 = vunpack.c.h.b16 %v5418
    %v6156 = vunpack.c.l.b16 %v5419
    %v6157 = vunpack.c.h.b16 %v5419
    %v6158 = vunpack.c.l.b16 %v5420
    %v6159 = vunpack.c.h.b16 %v5420
    %v6160 = vunpack.c.l.b16 %v5421
    %v6161 = vunpack.c.h.b16 %v5421
    %v6162 = vunpack.c.l.b16 %v5422
    %v6163 = vunpack.c.h.b16 %v5422
    %v6164 = vunpack.c.l.b16 %v5423
    %v6165 = vunpack.c.h.b16 %v5423
    %v6166 = vunpack.c.l.b16 %v5424
    %v6167 = vunpack.c.h.b16 %v5424
    %v6168 = vunpack.c.l.b16 %v5425
    %v6169 = vunpack.c.h.b16 %v5425
    %v6170 = vunpack.c.l.b16 %v5426
    %v6171 = vunpack.c.h.b16 %v5426
    %v6172 = vunpack.c.l.b16 %v5427
    %v6173 = vunpack.c.h.b16 %v5427
    %v6174 = vunpack.c.l.b16 %v5428
    %v6175 = vunpack.c.h.b16 %v5428
    %v6176 = vunpack.c.l.b16 %v5429
    %v6177 = vunpack.c.h.b16 %v5429
    %v6178 = vunpack.c.l.b16 %v5430
    %v6179 = vunpack.c.h.b16 %v5430
    %v6180 = vunpack.c.l.b16 %v5431
    %v6181 = vunpack.c.h.b16 %v5431
    %v6182 = vunpack.c.l.b16 %v5432
    %v6183 = vunpack.c.h.b16 %v5432
    %v6184 = vunpack.c.l.b16 %v5433
    %v6185 = vunpack.c.h.b16 %v5433
    %v6186 = vunpack.c.l.b16 %v5434
    %v6187 = vunpack.c.h.b16 %v5434
    %v6188 = vunpack.c.l.b16 %v5435
    %v6189 = vunpack.c.h.b16 %v5435
    %v6190 = vunpack.c.l.b16 %v5436
    %v6191 = vunpack.c.h.b16 %v5436
    %v6192 = vunpack.c.l.b16 %v5437
    %v6193 = vunpack.c.h.b16 %v5437
    %v6194 = vunpack.c.l.b16 %v5438
    %v6195 = vunpack.c.h.b16 %v5438
    %v6196 = vunpack.c.l.b16 %v5439
    %v6197 = vunpack.c.h.b16 %v5439
    %v6198 = vunpack.c.l.b16 %v5440
    %v6199 = vunpack.c.h.b16 %v5440
    %v6200 = vunpack.c.l.b16 %v5441
    %v6201 = vunpack.c.h.b16 %v5441
    %v6202 = vunpack.c.l.b16 %v5442
    %v6203 = vunpack.c.h.b16 %v5442
    %v6204 = vunpack.c.l.b16 %v5443
    %v6205 = vunpack.c.h.b16 %v5443
    %v6206 = vunpack.c.l.b16 %v5444
    %v6207 = vunpack.c.h.b16 %v5444
    %v6208 = vunpack.c.l.b16 %v5445
    %v6209 = vunpack.c.h.b16 %v5445
    %v6210 = vunpack.c.l.b16 %v5446
    %v6211 = vunpack.c.h.b16 %v5446
    %v6212 = vunpack.c.l.b16 %v5447
    %v6213 = vunpack.c.h.b16 %v5447
    %v6214 = vunpack.c.l.b16 %v5448
    %v6215 = vunpack.c.h.b16 %v5448
    %v6216 = vunpack.c.l.b16 %v5449
    %v6217 = vunpack.c.h.b16 %v5449
    %v6218 = vunpack.c.l.b16 %v5450
    %v6219 = vunpack.c.h.b16 %v5450
    %v6220 = vunpack.c.l.b16 %v5451
    %v6221 = vunpack.c.h.b16 %v5451
    %v6222 = vunpack.c.l.b16 %v5452
    %v6223 = vunpack.c.h.b16 %v5452
    %v6224 = vunpack.c.l.b16 %v5453
    %v6225 = vunpack.c.h.b16 %v5453
    %v6226 = vunpack.c.l.b16 %v5454
    %v6227 = vunpack.c.h.b16 %v5454
    %v6228 = vunpack.c.l.b16 %v5455
    %v6229 = vunpack.c.h.b16 %v5455
    %v6230 = vunpack.c.l.b16 %v5456
    %v6231 = vunpack.c.h.b16 %v5456
    %v6232 = vunpack.c.l.b16 %v5457
    %v6233 = vunpack.c.h.b16 %v5457
    %v6234 = vunpack.c.l.b16 %v5458
    %v6235 = vunpack.c.h.b16 %v5458
    %v6236 = vunpack.c.l.b16 %v5459
    %v6237 = vunpack.c.h.b16 %v5459
    %v6238 = vunpack.c.l.b16 %v5460
    %v6239 = vunpack.c.h.b16 %v5460
    %v6240 = vunpack.c.l.b16 %v5461
    %v6241 = vunpack.c.h.b16 %v5461
    %v6242 = vunpack.c.l.b16 %v5462
    %v6243 = vunpack.c.h.b16 %v5462
    %v6244 = vunpack.c.l.b16 %v5463
    %v6245 = vunpack.c.h.b16 %v5463
    %v6246 = vunpack.c.l.b16 %v5464
    %v6247 = vunpack.c.h.b16 %v5464
    %v6248 = vunpack.c.l.b16 %v5465
    %v6249 = vunpack.c.h.b16 %v5465
    %v6250 = vunpack.c.l.b16 %v5466
    %v6251 = vunpack.c.h.b16 %v5466
    %v6252 = vunpack.c.l.b16 %v5467
    %v6253 = vunpack.c.h.b16 %v5467
    %v6254 = vunpack.c.l.b16 %v5468
    %v6255 = vunpack.c.h.b16 %v5468
    %v6256 = vunpack.c.l.b16 %v5469
    %v6257 = vunpack.c.h.b16 %v5469
    %v6258 = vunpack.c.l.b16 %v5470
    %v6259 = vunpack.c.h.b16 %v5470
    %v6260 = vunpack.c.l.b16 %v5471
    %v6261 = vunpack.c.h.b16 %v5471
    %v6262 = vpack.c.b16 %v5754, %v5750
    %v6263 = vpack.c.b16 %v5755, %v5751
    %v6264 = vpack.c.b16 %v5756, %v5752
    %v6265 = vpack.c.b16 %v5757, %v5753
    %v6266 = vpack.c.b16 %v5762, %v5758
    %v6267 = vpack.c.b16 %v5763, %v5759
    %v6268 = vpack.c.b16 %v5764, %v5760
    %v6269 = vpack.c.b16 %v5765, %v5761
    %v6270 = vpack.c.b16 %v5770, %v5766
    %v6271 = vpack.c.b16 %v5771, %v5767
    %v6272 = vpack.c.b16 %v5772, %v5768
    %v6273 = vpack.c.b16 %v5773, %v5769
    %v6274 = vpack.c.b16 %v5778, %v5774
    %v6275 = vpack.c.b16 %v5779, %v5775
    %v6276 = vpack.c.b16 %v5780, %v5776
    %v6277 = vpack.c.b16 %v5781, %v5777
    %v6278 = vpack.c.b16 %v5786, %v5782
    %v6279 = vpack.c.b16 %v5787, %v5783
    %v6280 = vpack.c.b16 %v5788, %v5784
    %v6281 = vpack.c.b16 %v5789, %v5785
    %v6282 = vpack.c.b16 %v5794, %v5790
    %v6283 = vpack.c.b16 %v5795, %v5791
    %v6284 = vpack.c.b16 %v5796, %v5792
    %v6285 = vpack.c.b16 %v5797, %v5793
    %v6286 = vpack.c.b16 %v5802, %v5798
    %v6287 = vpack.c.b16 %v5803, %v5799
    %v6288 = vpack.c.b16 %v5804, %v5800
    %v6289 = vpack.c.b16 %v5805, %v5801
    %v6290 = vpack.c.b16 %v5810, %v5806
    %v6291 = vpack.c.b16 %v5811, %v5807
    %v6292 = vpack.c.b16 %v5812, %v5808
    %v6293 = vpack.c.b16 %v5813, %v5809
    %v6294 = vpack.c.b16 %v5818, %v5814
    %v6295 = vpack.c.b16 %v5819, %v5815
    %v6296 = vpack.c.b16 %v5820, %v5816
    %v6297 = vpack.c.b16 %v5821, %v5817
    %v6298 = vpack.c.b16 %v5826, %v5822
    %v6299 = vpack.c.b16 %v5827, %v5823
    %v6300 = vpack.c.b16 %v5828, %v5824
    %v6301 = vpack.c.b16 %v5829, %v5825
    %v6302 = vpack.c.b16 %v5834, %v5830
    %v6303 = vpack.c.b16 %v5835, %v5831
    %v6304 = vpack.c.b16 %v5836, %v5832
    %v6305 = vpack.c.b16 %v5837, %v5833
    %v6306 = vpack.c.b16 %v5842, %v5838
    %v6307 = vpack.c.b16 %v5843, %v5839
    %v6308 = vpack.c.b16 %v5844, %v5840
    %v6309 = vpack.c.b16 %v5845, %v5841
    %v6310 = vpack.c.b16 %v5850, %v5846
    %v6311 = vpack.c.b16 %v5851, %v5847
    %v6312 = vpack.c.b16 %v5852, %v5848
    %v6313 = vpack.c.b16 %v5853, %v5849
    %v6314 = vpack.c.b16 %v5858, %v5854
    %v6315 = vpack.c.b16 %v5859, %v5855
    %v6316 = vpack.c.b16 %v5860, %v5856
    %v6317 = vpack.c.b16 %v5861, %v5857
    %v6318 = vpack.c.b16 %v5866, %v5862
    %v6319 = vpack.c.b16 %v5867, %v5863
    %v6320 = vpack.c.b16 %v5868, %v5864
    %v6321 = vpack.c.b16 %v5869, %v5865
    %v6322 = vpack.c.b16 %v5874, %v5870
    %v6323 = vpack.c.b16 %v5875, %v5871
    %v6324 = vpack.c.b16 %v5876, %v5872
    %v6325 = vpack.c.b16 %v5877, %v5873
    %v6326 = vpack.c.b16 %v5882, %v5878
    %v6327 = vpack.c.b16 %v5883, %v5879
    %v6328 = vpack.c.b16 %v5884, %v5880
    %v6329 = vpack.c.b16 %v5885, %v5881
    %v6330 = vpack.c.b16 %v5890, %v5886
    %v6331 = vpack.c.b16 %v5891, %v5887
    %v6332 = vpack.c.b16 %v5892, %v5888
    %v6333 = vpack.c.b16 %v5893, %v5889
    %v6334 = vpack.c.b16 %v5898, %v5894
    %v6335 = vpack.c.b16 %v5899, %v5895
    %v6336 = vpack.c.b16 %v5900, %v5896
    %v6337 = vpack.c.b16 %v5901, %v5897
    %v6338 = vpack.c.b16 %v5906, %v5902
    %v6339 = vpack.c.b16 %v5907, %v5903
    %v6340 = vpack.c.b16 %v5908, %v5904
    %v6341 = vpack.c.b16 %v5909, %v5905
    %v6342 = vpack.c.b16 %v5914, %v5910
    %v6343 = vpack.c.b16 %v5915, %v5911
    %v6344 = vpack.c.b16 %v5916, %v5912
    %v6345 = vpack.c.b16 %v5917, %v5913
    %v6346 = vpack.c.b16 %v5922, %v5918
    %v6347 = vpack.c.b16 %v5923, %v5919
    %v6348 = vpack.c.b16 %v5924, %v5920
    %v6349 = vpack.c.b16 %v5925, %v5921
    %v6350 = vpack.c.b16 %v5930, %v5926
    %v6351 = vpack.c.b16 %v5931, %v5927
    %v6352 = vpack.c.b16 %v5932, %v5928
    %v6353 = vpack.c.b16 %v5933, %v5929
    %v6354 = vpack.c.b16 %v5938, %v5934
    %v6355 = vpack.c.b16 %v5939, %v5935
    %v6356 = vpack.c.b16 %v5940, %v5936
    %v6357 = vpack.c.b16 %v5941, %v5937
    %v6358 = vpack.c.b16 %v5946, %v5942
    %v6359 = vpack.c.b16 %v5947, %v5943
    %v6360 = vpack.c.b16 %v5948, %v5944
    %v6361 = vpack.c.b16 %v5949, %v5945
    %v6362 = vpack.c.b16 %v5954, %v5950
    %v6363 = vpack.c.b16 %v5955, %v5951
    %v6364 = vpack.c.b16 %v5956, %v5952
    %v6365 = vpack.c.b16 %v5957, %v5953
    %v6366 = vpack.c.b16 %v5962, %v5958
    %v6367 = vpack.c.b16 %v5963, %v5959
    %v6368 = vpack.c.b16 %v5964, %v5960
    %v6369 = vpack.c.b16 %v5965, %v5961
    %v6370 = vpack.c.b16 %v5970, %v5966
    %v6371 = vpack.c.b16 %v5971, %v5967
    %v6372 = vpack.c.b16 %v5972, %v5968
    %v6373 = vpack.c.b16 %v5973, %v5969
    %v6374 = vpack.c.b16 %v5978, %v5974
    %v6375 = vpack.c.b16 %v5979, %v5975
    %v6376 = vpack.c.b16 %v5980, %v5976
    %v6377 = vpack.c.b16 %v5981, %v5977
    %v6378 = vpack.c.b16 %v5986, %v5982
    %v6379 = vpack.c.b16 %v5987, %v5983
    %v6380 = vpack.c.b16 %v5988, %v5984
    %v6381 = vpack.c.b16 %v5989, %v5985
    %v6382 = vpack.c.b16 %v5994, %v5990
    %v6383 = vpack.c.b16 %v5995, %v5991
    %v6384 = vpack.c.b16 %v5996, %v5992
    %v6385 = vpack.c.b16 %v5997, %v5993
    %v6386 = vpack.c.b16 %v6002, %v5998
    %v6387 = vpack.c.b16 %v6003, %v5999
    %v6388 = vpack.c.b16 %v6004, %v6000
    %v6389 = vpack.c.b16 %v6005, %v6001
    %v6390 = vpack.c.b16 %v6010, %v6006
    %v6391 = vpack.c.b16 %v6011, %v6007
    %v6392 = vpack.c.b16 %v6012, %v6008
    %v6393 = vpack.c.b16 %v6013, %v6009
    %v6394 = vpack.c.b16 %v6018, %v6014
    %v6395 = vpack.c.b16 %v6019, %v6015
    %v6396 = vpack.c.b16 %v6020, %v6016
    %v6397 = vpack.c.b16 %v6021, %v6017
    %v6398 = vpack.c.b16 %v6026, %v6022
    %v6399 = vpack.c.b16 %v6027, %v6023
    %v6400 = vpack.c.b16 %v6028, %v6024
    %v6401 = vpack.c.b16 %v6029, %v6025
    %v6402 = vpack.c.b16 %v6034, %v6030
    %v6403 = vpack.c.b16 %v6035, %v6031
    %v6404 = vpack.c.b16 %v6036, %v6032
    %v6405 = vpack.c.b16 %v6037, %v6033
    %v6406 = vpack.c.b16 %v6042, %v6038
    %v6407 = vpack.c.b16 %v6043, %v6039
    %v6408 = vpack.c.b16 %v6044, %v6040
    %v6409 = vpack.c.b16 %v6045, %v6041
    %v6410 = vpack.c.b16 %v6050, %v6046
    %v6411 = vpack.c.b16 %v6051, %v6047
    %v6412 = vpack.c.b16 %v6052, %v6048
    %v6413 = vpack.c.b16 %v6053, %v6049
    %v6414 = vpack.c.b16 %v6058, %v6054
    %v6415 = vpack.c.b16 %v6059, %v6055
    %v6416 = vpack.c.b16 %v6060, %v6056
    %v6417 = vpack.c.b16 %v6061, %v6057
    %v6418 = vpack.c.b16 %v6066, %v6062
    %v6419 = vpack.c.b16 %v6067, %v6063
    %v6420 = vpack.c.b16 %v6068, %v6064
    %v6421 = vpack.c.b16 %v6069, %v6065
    %v6422 = vpack.c.b16 %v6074, %v6070
    %v6423 = vpack.c.b16 %v6075, %v6071
    %v6424 = vpack.c.b16 %v6076, %v6072
    %v6425 = vpack.c.b16 %v6077, %v6073
    %v6426 = vpack.c.b16 %v6082, %v6078
    %v6427 = vpack.c.b16 %v6083, %v6079
    %v6428 = vpack.c.b16 %v6084, %v6080
    %v6429 = vpack.c.b16 %v6085, %v6081
    %v6430 = vpack.c.b16 %v6090, %v6086
    %v6431 = vpack.c.b16 %v6091, %v6087
    %v6432 = vpack.c.b16 %v6092, %v6088
    %v6433 = vpack.c.b16 %v6093, %v6089
    %v6434 = vpack.c.b16 %v6098, %v6094
    %v6435 = vpack.c.b16 %v6099, %v6095
    %v6436 = vpack.c.b16 %v6100, %v6096
    %v6437 = vpack.c.b16 %v6101, %v6097
    %v6438 = vpack.c.b16 %v6106, %v6102
    %v6439 = vpack.c.b16 %v6107, %v6103
    %v6440 = vpack.c.b16 %v6108, %v6104
    %v6441 = vpack.c.b16 %v6109, %v6105
    %v6442 = vpack.c.b16 %v6114, %v6110
    %v6443 = vpack.c.b16 %v6115, %v6111
    %v6444 = vpack.c.b16 %v6116, %v6112
    %v6445 = vpack.c.b16 %v6117, %v6113
    %v6446 = vpack.c.b16 %v6122, %v6118
    %v6447 = vpack.c.b16 %v6123, %v6119
    %v6448 = vpack.c.b16 %v6124, %v6120
    %v6449 = vpack.c.b16 %v6125, %v6121
    %v6450 = vpack.c.b16 %v6130, %v6126
    %v6451 = vpack.c.b16 %v6131, %v6127
    %v6452 = vpack.c.b16 %v6132, %v6128
    %v6453 = vpack.c.b16 %v6133, %v6129
    %v6454 = vpack.c.b16 %v6138, %v6134
    %v6455 = vpack.c.b16 %v6139, %v6135
    %v6456 = vpack.c.b16 %v6140, %v6136
    %v6457 = vpack.c.b16 %v6141, %v6137
    %v6458 = vpack.c.b16 %v6146, %v6142
    %v6459 = vpack.c.b16 %v6147, %v6143
    %v6460 = vpack.c.b16 %v6148, %v6144
    %v6461 = vpack.c.b16 %v6149, %v6145
    %v6462 = vpack.c.b16 %v6154, %v6150
    %v6463 = vpack.c.b16 %v6155, %v6151
    %v6464 = vpack.c.b16 %v6156, %v6152
    %v6465 = vpack.c.b16 %v6157, %v6153
    %v6466 = vpack.c.b16 %v6162, %v6158
    %v6467 = vpack.c.b16 %v6163, %v6159
    %v6468 = vpack.c.b16 %v6164, %v6160
    %v6469 = vpack.c.b16 %v6165, %v6161
    %v6470 = vpack.c.b16 %v6170, %v6166
    %v6471 = vpack.c.b16 %v6171, %v6167
    %v6472 = vpack.c.b16 %v6172, %v6168
    %v6473 = vpack.c.b16 %v6173, %v6169
    %v6474 = vpack.c.b16 %v6178, %v6174
    %v6475 = vpack.c.b16 %v6179, %v6175
    %v6476 = vpack.c.b16 %v6180, %v6176
    %v6477 = vpack.c.b16 %v6181, %v6177
    %v6478 = vpack.c.b16 %v6186, %v6182
    %v6479 = vpack.c.b16 %v6187, %v6183
    %v6480 = vpack.c.b16 %v6188, %v6184
    %v6481 = vpack.c.b16 %v6189, %v6185
    %v6482 = vpack.c.b16 %v6194, %v6190
    %v6483 = vpack.c.b16 %v6195, %v6191
    %v6484 = vpack.c.b16 %v6196, %v6192
    %v6485 = vpack.c.b16 %v6197, %v6193
    %v6486 = vpack.c.b16 %v6202, %v6198
    %v6487 = vpack.c.b16 %v6203, %v6199
    %v6488 = vpack.c.b16 %v6204, %v6200
    %v6489 = vpack.c.b16 %v6205, %v6201
    %v6490 = vpack.c.b16 %v6210, %v6206
    %v6491 = vpack.c.b16 %v6211, %v6207
    %v6492 = vpack.c.b16 %v6212, %v6208
    %v6493 = vpack.c.b16 %v6213, %v6209
    %v6494 = vpack.c.b16 %v6218, %v6214
    %v6495 = vpack.c.b16 %v6219, %v6215
    %v6496 = vpack.c.b16 %v6220, %v6216
    %v6497 = vpack.c.b16 %v6221, %v6217
    %v6498 = vpack.c.b16 %v6226, %v6222
    %v6499 = vpack.c.b16 %v6227, %v6223
    %v6500 = vpack.c.b16 %v6228, %v6224
    %v6501 = vpack.c.b16 %v6229, %v6225
    %v6502 = vpack.c.b16 %v6234, %v6230
    %v6503 = vpack.c.b16 %v6235, %v6231
    %v6504 = vpack.c.b16 %v6236, %v6232
    %v6505 = vpack.c.b16 %v6237, %v6233
    %v6506 = vpack.c.b16 %v6242, %v6238
    %v6507 = vpack.c.b16 %v6243, %v6239
    %v6508 = vpack.c.b16 %v6244, %v6240
    %v6509 = vpack.c.b16 %v6245, %v6241
    %v6510 = vpack.c.b16 %v6250, %v6246
    %v6511 = vpack.c.b16 %v6251, %v6247
    %v6512 = vpack.c.b16 %v6252, %v6248
    %v6513 = vpack.c.b16 %v6253, %v6249
    %v6514 = vpack.c.b16 %v6258, %v6254
    %v6515 = vpack.c.b16 %v6259, %v6255
    %v6516 = vpack.c.b16 %v6260, %v6256
    %v6517 = vpack.c.b16 %v6261, %v6257
    %6774 = vmatprep.subr.bf16.mxu0 %v6263
    %6775 = vmatpush1.bf16.msra.mxu0 %v6262
    %6776 = vmatprep.subr.bf16.mxu0 %v6267
    %6777 = vmatpush1.bf16.msra.mxu0 %v6266
    %6778 = vmatprep.subr.bf16.mxu0 %v6271
    %6779 = vmatpush1.bf16.msra.mxu0 %v6270
    %6780 = vmatprep.subr.bf16.mxu0 %v6275
    %6781 = vmatpush1.bf16.msra.mxu0 %v6274
    %6782 = vmatprep.subr.bf16.mxu0 %v6279
    %6783 = vmatpush1.bf16.msra.mxu0 %v6278
    %6784 = vmatprep.subr.bf16.mxu0 %v6283
    %6785 = vmatpush1.bf16.msra.mxu0 %v6282
    %6786 = vmatprep.subr.bf16.mxu0 %v6287
    %6787 = vmatpush1.bf16.msra.mxu0 %v6286
    %6788 = vmatprep.subr.bf16.mxu0 %v6291
    %6789 = vmatpush1.bf16.msra.mxu0 %v6290
    %6790 = vmatprep.subr.bf16.mxu0 %v6295
    %6791 = vmatpush1.bf16.msra.mxu0 %v6294
    %6792 = vmatprep.subr.bf16.mxu0 %v6299
    %6793 = vmatpush1.bf16.msra.mxu0 %v6298
    %6794 = vmatprep.subr.bf16.mxu0 %v6303
    %6795 = vmatpush1.bf16.msra.mxu0 %v6302
    %6796 = vmatprep.subr.bf16.mxu0 %v6307
    %6797 = vmatpush1.bf16.msra.mxu0 %v6306
    %6798 = vmatprep.subr.bf16.mxu0 %v6311
    %6799 = vmatpush1.bf16.msra.mxu0 %v6310
    %6800 = vmatprep.subr.bf16.mxu0 %v6315
    %6801 = vmatpush1.bf16.msra.mxu0 %v6314
    %6802 = vmatprep.subr.bf16.mxu0 %v6319
    %6803 = vmatpush1.bf16.msra.mxu0 %v6318
    %6804 = vmatprep.subr.bf16.mxu0 %v6323
    %6805 = vmatpush1.bf16.msra.mxu0 %v6322
    %6806 = vmatprep.mubr.bf16.mxu0 %v5153
    %6807 = vmatmul.mubr.bf16.gmra.mrb[0].mxu0 %v5152
    %v6808 = vpop.f32.mrb[0].mxu0
    %v6809 = vadd.f32 %v5477, %v6808
    %v6810 = vpop.f32.mrb[0].mxu0
    %v6811 = vadd.f32 %v5481, %v6810
    %v6812 = vpop.f32.mrb[0].mxu0
    %v6813 = vadd.f32 %v5477, %v6812
    %v6814 = vpop.f32.mrb[0].mxu0
    %v6815 = vadd.f32 %v5481, %v6814
    %6816 = vmatprep.mubr.bf16.mxu0 %v5161
    %6817 = vmatmul.mubr.bf16.gmra.mrb[0].mxu0 %v5160
    %v6818 = vpop.f32.mrb[0].mxu0
    %v6819 = vadd.f32 %v5477, %v6818
    %v6820 = vpop.f32.mrb[0].mxu0
    %v6821 = vadd.f32 %v5481, %v6820
    %v6822 = vpop.f32.mrb[0].mxu0
    %v6823 = vadd.f32 %v5477, %v6822
    %v6824 = vpop.f32.mrb[0].mxu0
    %v6825 = vadd.f32 %v5481, %v6824
    %6826 = vmatprep.mubr.bf16.mxu0 %v5169
    %6827 = vmatmul.mubr.bf16.gmra.mrb[0].mxu0 %v5168
    %v6828 = vpop.f32.mrb[0].mxu0
    %v6829 = vadd.f32 %v5477, %v6828
    %v6830 = vpop.f32.mrb[0].mxu0
    %v6831 = vadd.f32 %v5481, %v6830
    %v6832 = vpop.f32.mrb[0].mxu0
    %v6833 = vadd.f32 %v5477, %v6832
    %v6834 = vpop.f32.mrb[0].mxu0
    %v6835 = vadd.f32 %v5481, %v6834
    %6836 = vmatprep.mubr.bf16.mxu0 %v5177
    %6837 = vmatmul.mubr.bf16.gmra.mrb[0].mxu0 %v5176
    %v6838 = vpop.f32.mrb[0].mxu0
    %v6839 = vadd.f32 %v5477, %v6838
    %v6840 = vpop.f32.mrb[0].mxu0
    %v6841 = vadd.f32 %v5481, %v6840
    %v6842 = vpop.f32.mrb[0].mxu0
    %v6843 = vadd.f32 %v5477, %v6842
    %v6844 = vpop.f32.mrb[0].mxu0
    %v6845 = vadd.f32 %v5481, %v6844
    %6846 = vmatprep.mubr.bf16.mxu0 %v5185
    %6847 = vmatmul.mubr.bf16.gmra.mrb[0].mxu0 %v5184
    %v6848 = vpop.f32.mrb[0].mxu0
    %v6849 = vadd.f32 %v5477, %v6848
    %v6850 = vpop.f32.mrb[0].mxu0
    %v6851 = vadd.f32 %v5481, %v6850
    %v6852 = vpop.f32.mrb[0].mxu0
    %v6853 = vadd.f32 %v5477, %v6852
    %v6854 = vpop.f32.mrb[0].mxu0
    %v6855 = vadd.f32 %v5481, %v6854
    %6856 = vmatprep.mubr.bf16.mxu0 %v5193
    %6857 = vmatmul.mubr.bf16.gmra.mrb[0].mxu0 %v5192
    %v6858 = vpop.f32.mrb[0].mxu0
    %v6859 = vadd.f32 %v5477, %v6858
    %v6860 = vpop.f32.mrb[0].mxu0
    %v6861 = vadd.f32 %v5481, %v6860
    %v6862 = vpop.f32.mrb[0].mxu0
    %v6863 = vadd.f32 %v5477, %v6862
    %v6864 = vpop.f32.mrb[0].mxu0
    %v6865 = vadd.f32 %v5481, %v6864
    %6866 = vmatprep.mubr.bf16.mxu0 %v5201
    %6867 = vmatmul.mubr.bf16.gmra.mrb[0].mxu0 %v5200
    %v6868 = vpop.f32.mrb[0].mxu0
    %v6869 = vadd.f32 %v5477, %v6868
    %v6870 = vpop.f32.mrb[0].mxu0
    %v6871 = vadd.f32 %v5481, %v6870
    %v6872 = vpop.f32.mrb[0].mxu0
    %v6873 = vadd.f32 %v5477, %v6872
    %v6874 = vpop.f32.mrb[0].mxu0
    %v6875 = vadd.f32 %v5481, %v6874
    %6876 = vmatprep.mubr.bf16.mxu0 %v5209
    %6877 = vmatmul.mubr.bf16.gmra.mrb[0].mxu0 %v5208
    %v6878 = vpop.f32.mrb[0].mxu0
    %v6879 = vadd.f32 %v5477, %v6878
    %v6880 = vpop.f32.mrb[0].mxu0
    %v6881 = vadd.f32 %v5481, %v6880
    %v6882 = vpop.f32.mrb[0].mxu0
    %v6883 = vadd.f32 %v5477, %v6882
    %v6884 = vpop.f32.mrb[0].mxu0
    %v6885 = vadd.f32 %v5481, %v6884
    %6886 = vdwg.mxu0
    %6887 = vmatprep.subr.bf16.mxu0 %v6327
    %6888 = vmatpush1.bf16.msra.mxu0 %v6326
    %6889 = vmatprep.subr.bf16.mxu0 %v6331
    %6890 = vmatpush1.bf16.msra.mxu0 %v6330
    %6891 = vmatprep.subr.bf16.mxu0 %v6335
    %6892 = vmatpush1.bf16.msra.mxu0 %v6334
    %6893 = vmatprep.subr.bf16.mxu0 %v6339
    %6894 = vmatpush1.bf16.msra.mxu0 %v6338
    %6895 = vmatprep.subr.bf16.mxu0 %v6343
    %6896 = vmatpush1.bf16.msra.mxu0 %v6342
    %6897 = vmatprep.subr.bf16.mxu0 %v6347
    %6898 = vmatpush1.bf16.msra.mxu0 %v6346
    %6899 = vmatprep.subr.bf16.mxu0 %v6351
    %6900 = vmatpush1.bf16.msra.mxu0 %v6350
    %6901 = vmatprep.subr.bf16.mxu0 %v6355
    %6902 = vmatpush1.bf16.msra.mxu0 %v6354
    %6903 = vmatprep.subr.bf16.mxu0 %v6359
    %6904 = vmatpush1.bf16.msra.mxu0 %v6358
    %6905 = vmatprep.subr.bf16.mxu0 %v6363
    %6906 = vmatpush1.bf16.msra.mxu0 %v6362
    %6907 = vmatprep.subr.bf16.mxu0 %v6367
    %6908 = vmatpush1.bf16.msra.mxu0 %v6366
    %6909 = vmatprep.subr.bf16.mxu0 %v6371
    %6910 = vmatpush1.bf16.msra.mxu0 %v6370
    %6911 = vmatprep.subr.bf16.mxu0 %v6375
    %6912 = vmatpush1.bf16.msra.mxu0 %v6374
    %6913 = vmatprep.subr.bf16.mxu0 %v6379
    %6914 = vmatpush1.bf16.msra.mxu0 %v6378
    %6915 = vmatprep.subr.bf16.mxu0 %v6383
    %6916 = vmatpush1.bf16.msra.mxu0 %v6382
    %6917 = vmatprep.subr.bf16.mxu0 %v6387
    %6918 = vmatpush1.bf16.msra.mxu0 %v6386
    %6919 = vmatprep.mubr.bf16.mxu0 %v5155
    %6920 = vmatmul.mubr.bf16.gmra.mrb[0].mxu0 %v5154
    %v6921 = vpop.f32.mrb[0].mxu0
    %v6922 = vadd.f32 %v6809, %v6921
    %v6923 = vpop.f32.mrb[0].mxu0
    %v6924 = vadd.f32 %v6811, %v6923
    %v6925 = vpop.f32.mrb[0].mxu0
    %v6926 = vadd.f32 %v6813, %v6925
    %v6927 = vpop.f32.mrb[0].mxu0
    %v6928 = vadd.f32 %v6815, %v6927
    %6929 = vmatprep.mubr.bf16.mxu0 %v5163
    %6930 = vmatmul.mubr.bf16.gmra.mrb[0].mxu0 %v5162
    %v6931 = vpop.f32.mrb[0].mxu0
    %v6932 = vadd.f32 %v6819, %v6931
    %v6933 = vpop.f32.mrb[0].mxu0
    %v6934 = vadd.f32 %v6821, %v6933
    %v6935 = vpop.f32.mrb[0].mxu0
    %v6936 = vadd.f32 %v6823, %v6935
    %v6937 = vpop.f32.mrb[0].mxu0
    %v6938 = vadd.f32 %v6825, %v6937
    %6939 = vmatprep.mubr.bf16.mxu0 %v5171
    %6940 = vmatmul.mubr.bf16.gmra.mrb[0].mxu0 %v5170
    %v6941 = vpop.f32.mrb[0].mxu0
    %v6942 = vadd.f32 %v6829, %v6941
    %v6943 = vpop.f32.mrb[0].mxu0
    %v6944 = vadd.f32 %v6831, %v6943
    %v6945 = vpop.f32.mrb[0].mxu0
    %v6946 = vadd.f32 %v6833, %v6945
    %v6947 = vpop.f32.mrb[0].mxu0
    %v6948 = vadd.f32 %v6835, %v6947
    %6949 = vmatprep.mubr.bf16.mxu0 %v5179
    %6950 = vmatmul.mubr.bf16.gmra.mrb[0].mxu0 %v5178
    %v6951 = vpop.f32.mrb[0].mxu0
    %v6952 = vadd.f32 %v6839, %v6951
    %v6953 = vpop.f32.mrb[0].mxu0
    %v6954 = vadd.f32 %v6841, %v6953
    %v6955 = vpop.f32.mrb[0].mxu0
    %v6956 = vadd.f32 %v6843, %v6955
    %v6957 = vpop.f32.mrb[0].mxu0
    %v6958 = vadd.f32 %v6845, %v6957
    %6959 = vmatprep.mubr.bf16.mxu0 %v5187
    %6960 = vmatmul.mubr.bf16.gmra.mrb[0].mxu0 %v5186
    %v6961 = vpop.f32.mrb[0].mxu0
    %v6962 = vadd.f32 %v6849, %v6961
    %v6963 = vpop.f32.mrb[0].mxu0
    %v6964 = vadd.f32 %v6851, %v6963
    %v6965 = vpop.f32.mrb[0].mxu0
    %v6966 = vadd.f32 %v6853, %v6965
    %v6967 = vpop.f32.mrb[0].mxu0
    %v6968 = vadd.f32 %v6855, %v6967
    %6969 = vmatprep.mubr.bf16.mxu0 %v5195
    %6970 = vmatmul.mubr.bf16.gmra.mrb[0].mxu0 %v5194
    %v6971 = vpop.f32.mrb[0].mxu0
    %v6972 = vadd.f32 %v6859, %v6971
    %v6973 = vpop.f32.mrb[0].mxu0
    %v6974 = vadd.f32 %v6861, %v6973
    %v6975 = vpop.f32.mrb[0].mxu0
    %v6976 = vadd.f32 %v6863, %v6975
    %v6977 = vpop.f32.mrb[0].mxu0
    %v6978 = vadd.f32 %v6865, %v6977
    %6979 = vmatprep.mubr.bf16.mxu0 %v5203
    %6980 = vmatmul.mubr.bf16.gmra.mrb[0].mxu0 %v5202
    %v6981 = vpop.f32.mrb[0].mxu0
    %v6982 = vadd.f32 %v6869, %v6981
    %v6983 = vpop.f32.mrb[0].mxu0
    %v6984 = vadd.f32 %v6871, %v6983
    %v6985 = vpop.f32.mrb[0].mxu0
    %v6986 = vadd.f32 %v6873, %v6985
    %v6987 = vpop.f32.mrb[0].mxu0
    %v6988 = vadd.f32 %v6875, %v6987
    %6989 = vmatprep.mubr.bf16.mxu0 %v5211
    %6990 = vmatmul.mubr.bf16.gmra.mrb[0].mxu0 %v5210
    %v6991 = vpop.f32.mrb[0].mxu0
    %v6992 = vadd.f32 %v6879, %v6991
    %v6993 = vpop.f32.mrb[0].mxu0
    %v6994 = vadd.f32 %v6881, %v6993
    %v6995 = vpop.f32.mrb[0].mxu0
    %v6996 = vadd.f32 %v6883, %v6995
    %v6997 = vpop.f32.mrb[0].mxu0
    %v6998 = vadd.f32 %v6885, %v6997
    %6999 = vdwg.mxu0
    %7000 = vmatprep.subr.bf16.mxu0 %v6391
    %7001 = vmatpush1.bf16.msra.mxu0 %v6390
    %7002 = vmatprep.subr.bf16.mxu0 %v6395
    %7003 = vmatpush1.bf16.msra.mxu0 %v6394
    %7004 = vmatprep.subr.bf16.mxu0 %v6399
    %7005 = vmatpush1.bf16.msra.mxu0 %v6398
    %7006 = vmatprep.subr.bf16.mxu0 %v6403
    %7007 = vmatpush1.bf16.msra.mxu0 %v6402
    %7008 = vmatprep.subr.bf16.mxu0 %v6407
    %7009 = vmatpush1.bf16.msra.mxu0 %v6406
    %7010 = vmatprep.subr.bf16.mxu0 %v6411
    %7011 = vmatpush1.bf16.msra.mxu0 %v6410
    %7012 = vmatprep.subr.bf16.mxu0 %v6415
    %7013 = vmatpush1.bf16.msra.mxu0 %v6414
    %7014 = vmatprep.subr.bf16.mxu0 %v6419
    %7015 = vmatpush1.bf16.msra.mxu0 %v6418
    %7016 = vmatprep.subr.bf16.mxu0 %v6423
    %7017 = vmatpush1.bf16.msra.mxu0 %v6422
    %7018 = vmatprep.subr.bf16.mxu0 %v6427
    %7019 = vmatpush1.bf16.msra.mxu0 %v6426
    %7020 = vmatprep.subr.bf16.mxu0 %v6431
    %7021 = vmatpush1.bf16.msra.mxu0 %v6430
    %7022 = vmatprep.subr.bf16.mxu0 %v6435
    %7023 = vmatpush1.bf16.msra.mxu0 %v6434
    %7024 = vmatprep.subr.bf16.mxu0 %v6439
    %7025 = vmatpush1.bf16.msra.mxu0 %v6438
    %7026 = vmatprep.subr.bf16.mxu0 %v6443
    %7027 = vmatpush1.bf16.msra.mxu0 %v6442
    %7028 = vmatprep.subr.bf16.mxu0 %v6447
    %7029 = vmatpush1.bf16.msra.mxu0 %v6446
    %7030 = vmatprep.subr.bf16.mxu0 %v6451
    %7031 = vmatpush1.bf16.msra.mxu0 %v6450
    %7032 = vmatprep.mubr.bf16.mxu0 %v5157
    %7033 = vmatmul.mubr.bf16.gmra.mrb[0].mxu0 %v5156
    %v7034 = vpop.f32.mrb[0].mxu0
    %v7035 = vadd.f32 %v6922, %v7034
    %v7036 = vpop.f32.mrb[0].mxu0
    %v7037 = vadd.f32 %v6924, %v7036
    %v7038 = vpop.f32.mrb[0].mxu0
    %v7039 = vadd.f32 %v6926, %v7038
    %v7040 = vpop.f32.mrb[0].mxu0
    %v7041 = vadd.f32 %v6928, %v7040
    %7042 = vmatprep.mubr.bf16.mxu0 %v5165
    %7043 = vmatmul.mubr.bf16.gmra.mrb[0].mxu0 %v5164
    %v7044 = vpop.f32.mrb[0].mxu0
    %v7045 = vadd.f32 %v6932, %v7044
    %v7046 = vpop.f32.mrb[0].mxu0
    %v7047 = vadd.f32 %v6934, %v7046
    %v7048 = vpop.f32.mrb[0].mxu0
    %v7049 = vadd.f32 %v6936, %v7048
    %v7050 = vpop.f32.mrb[0].mxu0
    %v7051 = vadd.f32 %v6938, %v7050
    %7052 = vmatprep.mubr.bf16.mxu0 %v5173
    %7053 = vmatmul.mubr.bf16.gmra.mrb[0].mxu0 %v5172
    %v7054 = vpop.f32.mrb[0].mxu0
    %v7055 = vadd.f32 %v6942, %v7054
    %v7056 = vpop.f32.mrb[0].mxu0
    %v7057 = vadd.f32 %v6944, %v7056
    %v7058 = vpop.f32.mrb[0].mxu0
    %v7059 = vadd.f32 %v6946, %v7058
    %v7060 = vpop.f32.mrb[0].mxu0
    %v7061 = vadd.f32 %v6948, %v7060
    %7062 = vmatprep.mubr.bf16.mxu0 %v5181
    %7063 = vmatmul.mubr.bf16.gmra.mrb[0].mxu0 %v5180
    %v7064 = vpop.f32.mrb[0].mxu0
    %v7065 = vadd.f32 %v6952, %v7064
    %v7066 = vpop.f32.mrb[0].mxu0
    %v7067 = vadd.f32 %v6954, %v7066
    %v7068 = vpop.f32.mrb[0].mxu0
    %v7069 = vadd.f32 %v6956, %v7068
    %v7070 = vpop.f32.mrb[0].mxu0
    %v7071 = vadd.f32 %v6958, %v7070
    %7072 = vmatprep.mubr.bf16.mxu0 %v5189
    %7073 = vmatmul.mubr.bf16.gmra.mrb[0].mxu0 %v5188
    %v7074 = vpop.f32.mrb[0].mxu0
    %v7075 = vadd.f32 %v6962, %v7074
    %v7076 = vpop.f32.mrb[0].mxu0
    %v7077 = vadd.f32 %v6964, %v7076
    %v7078 = vpop.f32.mrb[0].mxu0
    %v7079 = vadd.f32 %v6966, %v7078
    %v7080 = vpop.f32.mrb[0].mxu0
    %v7081 = vadd.f32 %v6968, %v7080
    %7082 = vmatprep.mubr.bf16.mxu0 %v5197
    %7083 = vmatmul.mubr.bf16.gmra.mrb[0].mxu0 %v5196
    %v7084 = vpop.f32.mrb[0].mxu0
    %v7085 = vadd.f32 %v6972, %v7084
    %v7086 = vpop.f32.mrb[0].mxu0
    %v7087 = vadd.f32 %v6974, %v7086
    %v7088 = vpop.f32.mrb[0].mxu0
    %v7089 = vadd.f32 %v6976, %v7088
    %v7090 = vpop.f32.mrb[0].mxu0
    %v7091 = vadd.f32 %v6978, %v7090
    %7092 = vmatprep.mubr.bf16.mxu0 %v5205
    %7093 = vmatmul.mubr.bf16.gmra.mrb[0].mxu0 %v5204
    %v7094 = vpop.f32.mrb[0].mxu0
    %v7095 = vadd.f32 %v6982, %v7094
    %v7096 = vpop.f32.mrb[0].mxu0
    %v7097 = vadd.f32 %v6984, %v7096
    %v7098 = vpop.f32.mrb[0].mxu0
    %v7099 = vadd.f32 %v6986, %v7098
    %v7100 = vpop.f32.mrb[0].mxu0
    %v7101 = vadd.f32 %v6988, %v7100
    %7102 = vmatprep.mubr.bf16.mxu0 %v5213
    %7103 = vmatmul.mubr.bf16.gmra.mrb[0].mxu0 %v5212
    %v7104 = vpop.f32.mrb[0].mxu0
    %v7105 = vadd.f32 %v6992, %v7104
    %v7106 = vpop.f32.mrb[0].mxu0
    %v7107 = vadd.f32 %v6994, %v7106
    %v7108 = vpop.f32.mrb[0].mxu0
    %v7109 = vadd.f32 %v6996, %v7108
    %v7110 = vpop.f32.mrb[0].mxu0
    %v7111 = vadd.f32 %v6998, %v7110
    %7112 = vdwg.mxu0
    %7113 = vmatprep.subr.bf16.mxu0 %v6455
    %7114 = vmatpush1.bf16.msra.mxu0 %v6454
    %7115 = vmatprep.subr.bf16.mxu0 %v6459
    %7116 = vmatpush1.bf16.msra.mxu0 %v6458
    %7117 = vmatprep.subr.bf16.mxu0 %v6463
    %7118 = vmatpush1.bf16.msra.mxu0 %v6462
    %7119 = vmatprep.subr.bf16.mxu0 %v6467
    %7120 = vmatpush1.bf16.msra.mxu0 %v6466
    %7121 = vmatprep.subr.bf16.mxu0 %v6471
    %7122 = vmatpush1.bf16.msra.mxu0 %v6470
    %7123 = vmatprep.subr.bf16.mxu0 %v6475
    %7124 = vmatpush1.bf16.msra.mxu0 %v6474
    %7125 = vmatprep.subr.bf16.mxu0 %v6479
    %7126 = vmatpush1.bf16.msra.mxu0 %v6478
    %7127 = vmatprep.subr.bf16.mxu0 %v6483
    %7128 = vmatpush1.bf16.msra.mxu0 %v6482
    %7129 = vmatprep.subr.bf16.mxu0 %v6487
    %7130 = vmatpush1.bf16.msra.mxu0 %v6486
    %7131 = vmatprep.subr.bf16.mxu0 %v6491
    %7132 = vmatpush1.bf16.msra.mxu0 %v6490
    %7133 = vmatprep.subr.bf16.mxu0 %v6495
    %7134 = vmatpush1.bf16.msra.mxu0 %v6494
    %7135 = vmatprep.subr.bf16.mxu0 %v6499
    %7136 = vmatpush1.bf16.msra.mxu0 %v6498
    %7137 = vmatprep.subr.bf16.mxu0 %v6503
    %7138 = vmatpush1.bf16.msra.mxu0 %v6502
    %7139 = vmatprep.subr.bf16.mxu0 %v6507
    %7140 = vmatpush1.bf16.msra.mxu0 %v6506
    %7141 = vmatprep.subr.bf16.mxu0 %v6511
    %7142 = vmatpush1.bf16.msra.mxu0 %v6510
    %7143 = vmatprep.subr.bf16.mxu0 %v6515
    %7144 = vmatpush1.bf16.msra.mxu0 %v6514
    %7145 = vmatprep.mubr.bf16.mxu0 %v5159
    %7146 = vmatmul.mubr.bf16.gmra.mrb[0].mxu0 %v5158
    %v7147 = vpop.f32.mrb[0].mxu0
    %v7148 = vadd.f32 %v7035, %v7147
    %v7149 = vpop.f32.mrb[0].mxu0
    %v7150 = vadd.f32 %v7037, %v7149
    %v7151 = vpop.f32.mrb[0].mxu0
    %v7152 = vadd.f32 %v7039, %v7151
    %v7153 = vpop.f32.mrb[0].mxu0
    %v7154 = vadd.f32 %v7041, %v7153
    %7155 = vmatprep.mubr.bf16.mxu0 %v5167
    %7156 = vmatmul.mubr.bf16.gmra.mrb[0].mxu0 %v5166
    %v7157 = vpop.f32.mrb[0].mxu0
    %v7158 = vadd.f32 %v7045, %v7157
    %v7159 = vpop.f32.mrb[0].mxu0
    %v7160 = vadd.f32 %v7047, %v7159
    %v7161 = vpop.f32.mrb[0].mxu0
    %v7162 = vadd.f32 %v7049, %v7161
    %v7163 = vpop.f32.mrb[0].mxu0
    %v7164 = vadd.f32 %v7051, %v7163
    %7165 = vmatprep.mubr.bf16.mxu0 %v5175
    %7166 = vmatmul.mubr.bf16.gmra.mrb[0].mxu0 %v5174
    %v7167 = vpop.f32.mrb[0].mxu0
    %v7168 = vadd.f32 %v7055, %v7167
    %v7169 = vpop.f32.mrb[0].mxu0
    %v7170 = vadd.f32 %v7057, %v7169
    %v7171 = vpop.f32.mrb[0].mxu0
    %v7172 = vadd.f32 %v7059, %v7171
    %v7173 = vpop.f32.mrb[0].mxu0
    %v7174 = vadd.f32 %v7061, %v7173
    %7175 = vmatprep.mubr.bf16.mxu0 %v5183
    %7176 = vmatmul.mubr.bf16.gmra.mrb[0].mxu0 %v5182
    %v7177 = vpop.f32.mrb[0].mxu0
    %v7178 = vadd.f32 %v7065, %v7177
    %v7179 = vpop.f32.mrb[0].mxu0
    %v7180 = vadd.f32 %v7067, %v7179
    %v7181 = vpop.f32.mrb[0].mxu0
    %v7182 = vadd.f32 %v7069, %v7181
    %v7183 = vpop.f32.mrb[0].mxu0
    %v7184 = vadd.f32 %v7071, %v7183
    %7185 = vmatprep.mubr.bf16.mxu0 %v5191
    %7186 = vmatmul.mubr.bf16.gmra.mrb[0].mxu0 %v5190
    %v7187 = vpop.f32.mrb[0].mxu0
    %v7188 = vadd.f32 %v7075, %v7187
    %v7189 = vpop.f32.mrb[0].mxu0
    %v7190 = vadd.f32 %v7077, %v7189
    %v7191 = vpop.f32.mrb[0].mxu0
    %v7192 = vadd.f32 %v7079, %v7191
    %v7193 = vpop.f32.mrb[0].mxu0
    %v7194 = vadd.f32 %v7081, %v7193
    %7195 = vmatprep.mubr.bf16.mxu0 %v5199
    %7196 = vmatmul.mubr.bf16.gmra.mrb[0].mxu0 %v5198
    %v7197 = vpop.f32.mrb[0].mxu0
    %v7198 = vadd.f32 %v7085, %v7197
    %v7199 = vpop.f32.mrb[0].mxu0
    %v7200 = vadd.f32 %v7087, %v7199
    %v7201 = vpop.f32.mrb[0].mxu0
    %v7202 = vadd.f32 %v7089, %v7201
    %v7203 = vpop.f32.mrb[0].mxu0
    %v7204 = vadd.f32 %v7091, %v7203
    %7205 = vmatprep.mubr.bf16.mxu0 %v5207
    %7206 = vmatmul.mubr.bf16.gmra.mrb[0].mxu0 %v5206
    %v7207 = vpop.f32.mrb[0].mxu0
    %v7208 = vadd.f32 %v7095, %v7207
    %v7209 = vpop.f32.mrb[0].mxu0
    %v7210 = vadd.f32 %v7097, %v7209
    %v7211 = vpop.f32.mrb[0].mxu0
    %v7212 = vadd.f32 %v7099, %v7211
    %v7213 = vpop.f32.mrb[0].mxu0
    %v7214 = vadd.f32 %v7101, %v7213
    %7215 = vmatprep.mubr.bf16.mxu0 %v5215
    %7216 = vmatmul.mubr.bf16.gmra.mrb[0].mxu0 %v5214
    %v7217 = vpop.f32.mrb[0].mxu0
    %v7218 = vadd.f32 %v7105, %v7217
    %v7219 = vpop.f32.mrb[0].mxu0
    %v7220 = vadd.f32 %v7107, %v7219
    %v7221 = vpop.f32.mrb[0].mxu0
    %v7222 = vadd.f32 %v7109, %v7221
    %v7223 = vpop.f32.mrb[0].mxu0
    %v7224 = vadd.f32 %v7111, %v7223
    %7225 = vdwg.mxu0
    %7226 = vmatprep.subr.bf16.mxu0 %v6265
    %7227 = vmatpush1.bf16.msra.mxu0 %v6264
    %7228 = vmatprep.subr.bf16.mxu0 %v6269
    %7229 = vmatpush1.bf16.msra.mxu0 %v6268
    %7230 = vmatprep.subr.bf16.mxu0 %v6273
    %7231 = vmatpush1.bf16.msra.mxu0 %v6272
    %7232 = vmatprep.subr.bf16.mxu0 %v6277
    %7233 = vmatpush1.bf16.msra.mxu0 %v6276
    %7234 = vmatprep.subr.bf16.mxu0 %v6281
    %7235 = vmatpush1.bf16.msra.mxu0 %v6280
    %7236 = vmatprep.subr.bf16.mxu0 %v6285
    %7237 = vmatpush1.bf16.msra.mxu0 %v6284
    %7238 = vmatprep.subr.bf16.mxu0 %v6289
    %7239 = vmatpush1.bf16.msra.mxu0 %v6288
    %7240 = vmatprep.subr.bf16.mxu0 %v6293
    %7241 = vmatpush1.bf16.msra.mxu0 %v6292
    %7242 = vmatprep.subr.bf16.mxu0 %v6297
    %7243 = vmatpush1.bf16.msra.mxu0 %v6296
    %7244 = vmatprep.subr.bf16.mxu0 %v6301
    %7245 = vmatpush1.bf16.msra.mxu0 %v6300
    %7246 = vmatprep.subr.bf16.mxu0 %v6305
    %7247 = vmatpush1.bf16.msra.mxu0 %v6304
    %7248 = vmatprep.subr.bf16.mxu0 %v6309
    %7249 = vmatpush1.bf16.msra.mxu0 %v6308
    %7250 = vmatprep.subr.bf16.mxu0 %v6313
    %7251 = vmatpush1.bf16.msra.mxu0 %v6312
    %7252 = vmatprep.subr.bf16.mxu0 %v6317
    %7253 = vmatpush1.bf16.msra.mxu0 %v6316
    %7254 = vmatprep.subr.bf16.mxu0 %v6321
    %7255 = vmatpush1.bf16.msra.mxu0 %v6320
    %7256 = vmatprep.subr.bf16.mxu0 %v6325
    %7257 = vmatpush1.bf16.msra.mxu0 %v6324
    %7258 = vmatprep.mubr.bf16.mxu0 %v5153
    %7259 = vmatmul.mubr.bf16.gmra.mrb[0].mxu0 %v5152
    %v7260 = vpop.f32.mrb[0].mxu0
    %v7261 = vadd.f32 %v5485, %v7260
    %v7262 = vpop.f32.mrb[0].mxu0
    %v7263 = vadd.f32 %v5489, %v7262
    %v7264 = vpop.f32.mrb[0].mxu0
    %v7265 = vadd.f32 %v5485, %v7264
    %v7266 = vpop.f32.mrb[0].mxu0
    %v7267 = vadd.f32 %v5489, %v7266
    %7268 = vmatprep.mubr.bf16.mxu0 %v5161
    %7269 = vmatmul.mubr.bf16.gmra.mrb[0].mxu0 %v5160
    %v7270 = vpop.f32.mrb[0].mxu0
    %v7271 = vadd.f32 %v5485, %v7270
    %v7272 = vpop.f32.mrb[0].mxu0
    %v7273 = vadd.f32 %v5489, %v7272
    %v7274 = vpop.f32.mrb[0].mxu0
    %v7275 = vadd.f32 %v5485, %v7274
    %v7276 = vpop.f32.mrb[0].mxu0
    %v7277 = vadd.f32 %v5489, %v7276
    %7278 = vmatprep.mubr.bf16.mxu0 %v5169
    %7279 = vmatmul.mubr.bf16.gmra.mrb[0].mxu0 %v5168
    %v7280 = vpop.f32.mrb[0].mxu0
    %v7281 = vadd.f32 %v5485, %v7280
    %v7282 = vpop.f32.mrb[0].mxu0
    %v7283 = vadd.f32 %v5489, %v7282
    %v7284 = vpop.f32.mrb[0].mxu0
    %v7285 = vadd.f32 %v5485, %v7284
    %v7286 = vpop.f32.mrb[0].mxu0
    %v7287 = vadd.f32 %v5489, %v7286
    %7288 = vmatprep.mubr.bf16.mxu0 %v5177
    %7289 = vmatmul.mubr.bf16.gmra.mrb[0].mxu0 %v5176
    %v7290 = vpop.f32.mrb[0].mxu0
    %v7291 = vadd.f32 %v5485, %v7290
    %v7292 = vpop.f32.mrb[0].mxu0
    %v7293 = vadd.f32 %v5489, %v7292
    %v7294 = vpop.f32.mrb[0].mxu0
    %v7295 = vadd.f32 %v5485, %v7294
    %v7296 = vpop.f32.mrb[0].mxu0
    %v7297 = vadd.f32 %v5489, %v7296
    %7298 = vmatprep.mubr.bf16.mxu0 %v5185
    %7299 = vmatmul.mubr.bf16.gmra.mrb[0].mxu0 %v5184
    %v7300 = vpop.f32.mrb[0].mxu0
    %v7301 = vadd.f32 %v5485, %v7300
    %v7302 = vpop.f32.mrb[0].mxu0
    %v7303 = vadd.f32 %v5489, %v7302
    %v7304 = vpop.f32.mrb[0].mxu0
    %v7305 = vadd.f32 %v5485, %v7304
    %v7306 = vpop.f32.mrb[0].mxu0
    %v7307 = vadd.f32 %v5489, %v7306
    %7308 = vmatprep.mubr.bf16.mxu0 %v5193
    %7309 = vmatmul.mubr.bf16.gmra.mrb[0].mxu0 %v5192
    %v7310 = vpop.f32.mrb[0].mxu0
    %v7311 = vadd.f32 %v5485, %v7310
    %v7312 = vpop.f32.mrb[0].mxu0
    %v7313 = vadd.f32 %v5489, %v7312
    %v7314 = vpop.f32.mrb[0].mxu0
    %v7315 = vadd.f32 %v5485, %v7314
    %v7316 = vpop.f32.mrb[0].mxu0
    %v7317 = vadd.f32 %v5489, %v7316
    %7318 = vmatprep.mubr.bf16.mxu0 %v5201
    %7319 = vmatmul.mubr.bf16.gmra.mrb[0].mxu0 %v5200
    %v7320 = vpop.f32.mrb[0].mxu0
    %v7321 = vadd.f32 %v5485, %v7320
    %v7322 = vpop.f32.mrb[0].mxu0
    %v7323 = vadd.f32 %v5489, %v7322
    %v7324 = vpop.f32.mrb[0].mxu0
    %v7325 = vadd.f32 %v5485, %v7324
    %v7326 = vpop.f32.mrb[0].mxu0
    %v7327 = vadd.f32 %v5489, %v7326
    %7328 = vmatprep.mubr.bf16.mxu0 %v5209
    %7329 = vmatmul.mubr.bf16.gmra.mrb[0].mxu0 %v5208
    %v7330 = vpop.f32.mrb[0].mxu0
    %v7331 = vadd.f32 %v5485, %v7330
    %v7332 = vpop.f32.mrb[0].mxu0
    %v7333 = vadd.f32 %v5489, %v7332
    %v7334 = vpop.f32.mrb[0].mxu0
    %v7335 = vadd.f32 %v5485, %v7334
    %v7336 = vpop.f32.mrb[0].mxu0
    %v7337 = vadd.f32 %v5489, %v7336
    %7338 = vdwg.mxu0
    %7339 = vmatprep.subr.bf16.mxu0 %v6329
    %7340 = vmatpush1.bf16.msra.mxu0 %v6328
    %7341 = vmatprep.subr.bf16.mxu0 %v6333
    %7342 = vmatpush1.bf16.msra.mxu0 %v6332
    %7343 = vmatprep.subr.bf16.mxu0 %v6337
    %7344 = vmatpush1.bf16.msra.mxu0 %v6336
    %7345 = vmatprep.subr.bf16.mxu0 %v6341
    %7346 = vmatpush1.bf16.msra.mxu0 %v6340
    %7347 = vmatprep.subr.bf16.mxu0 %v6345
    %7348 = vmatpush1.bf16.msra.mxu0 %v6344
    %7349 = vmatprep.subr.bf16.mxu0 %v6349
    %7350 = vmatpush1.bf16.msra.mxu0 %v6348
    %7351 = vmatprep.subr.bf16.mxu0 %v6353
    %7352 = vmatpush1.bf16.msra.mxu0 %v6352
    %7353 = vmatprep.subr.bf16.mxu0 %v6357
    %7354 = vmatpush1.bf16.msra.mxu0 %v6356
    %7355 = vmatprep.subr.bf16.mxu0 %v6361
    %7356 = vmatpush1.bf16.msra.mxu0 %v6360
    %7357 = vmatprep.subr.bf16.mxu0 %v6365
    %7358 = vmatpush1.bf16.msra.mxu0 %v6364
    %7359 = vmatprep.subr.bf16.mxu0 %v6369
    %7360 = vmatpush1.bf16.msra.mxu0 %v6368
    %7361 = vmatprep.subr.bf16.mxu0 %v6373
    %7362 = vmatpush1.bf16.msra.mxu0 %v6372
    %7363 = vmatprep.subr.bf16.mxu0 %v6377
    %7364 = vmatpush1.bf16.msra.mxu0 %v6376
    %7365 = vmatprep.subr.bf16.mxu0 %v6381
    %7366 = vmatpush1.bf16.msra.mxu0 %v6380
    %7367 = vmatprep.subr.bf16.mxu0 %v6385
    %7368 = vmatpush1.bf16.msra.mxu0 %v6384
    %7369 = vmatprep.subr.bf16.mxu0 %v6389
    %7370 = vmatpush1.bf16.msra.mxu0 %v6388
    %7371 = vmatprep.mubr.bf16.mxu0 %v5155
    %7372 = vmatmul.mubr.bf16.gmra.mrb[0].mxu0 %v5154
    %v7373 = vpop.f32.mrb[0].mxu0
    %v7374 = vadd.f32 %v7261, %v7373
    %v7375 = vpop.f32.mrb[0].mxu0
    %v7376 = vadd.f32 %v7263, %v7375
    %v7377 = vpop.f32.mrb[0].mxu0
    %v7378 = vadd.f32 %v7265, %v7377
    %v7379 = vpop.f32.mrb[0].mxu0
    %v7380 = vadd.f32 %v7267, %v7379
    %7381 = vmatprep.mubr.bf16.mxu0 %v5163
    %7382 = vmatmul.mubr.bf16.gmra.mrb[0].mxu0 %v5162
    %v7383 = vpop.f32.mrb[0].mxu0
    %v7384 = vadd.f32 %v7271, %v7383
    %v7385 = vpop.f32.mrb[0].mxu0
    %v7386 = vadd.f32 %v7273, %v7385
    %v7387 = vpop.f32.mrb[0].mxu0
    %v7388 = vadd.f32 %v7275, %v7387
    %v7389 = vpop.f32.mrb[0].mxu0
    %v7390 = vadd.f32 %v7277, %v7389
    %7391 = vmatprep.mubr.bf16.mxu0 %v5171
    %7392 = vmatmul.mubr.bf16.gmra.mrb[0].mxu0 %v5170
    %v7393 = vpop.f32.mrb[0].mxu0
    %v7394 = vadd.f32 %v7281, %v7393
    %v7395 = vpop.f32.mrb[0].mxu0
    %v7396 = vadd.f32 %v7283, %v7395
    %v7397 = vpop.f32.mrb[0].mxu0
    %v7398 = vadd.f32 %v7285, %v7397
    %v7399 = vpop.f32.mrb[0].mxu0
    %v7400 = vadd.f32 %v7287, %v7399
    %7401 = vmatprep.mubr.bf16.mxu0 %v5179
    %7402 = vmatmul.mubr.bf16.gmra.mrb[0].mxu0 %v5178
    %v7403 = vpop.f32.mrb[0].mxu0
    %v7404 = vadd.f32 %v7291, %v7403
    %v7405 = vpop.f32.mrb[0].mxu0
    %v7406 = vadd.f32 %v7293, %v7405
    %v7407 = vpop.f32.mrb[0].mxu0
    %v7408 = vadd.f32 %v7295, %v7407
    %v7409 = vpop.f32.mrb[0].mxu0
    %v7410 = vadd.f32 %v7297, %v7409
    %7411 = vmatprep.mubr.bf16.mxu0 %v5187
    %7412 = vmatmul.mubr.bf16.gmra.mrb[0].mxu0 %v5186
    %v7413 = vpop.f32.mrb[0].mxu0
    %v7414 = vadd.f32 %v7301, %v7413
    %v7415 = vpop.f32.mrb[0].mxu0
    %v7416 = vadd.f32 %v7303, %v7415
    %v7417 = vpop.f32.mrb[0].mxu0
    %v7418 = vadd.f32 %v7305, %v7417
    %v7419 = vpop.f32.mrb[0].mxu0
    %v7420 = vadd.f32 %v7307, %v7419
    %7421 = vmatprep.mubr.bf16.mxu0 %v5195
    %7422 = vmatmul.mubr.bf16.gmra.mrb[0].mxu0 %v5194
    %v7423 = vpop.f32.mrb[0].mxu0
    %v7424 = vadd.f32 %v7311, %v7423
    %v7425 = vpop.f32.mrb[0].mxu0
    %v7426 = vadd.f32 %v7313, %v7425
    %v7427 = vpop.f32.mrb[0].mxu0
    %v7428 = vadd.f32 %v7315, %v7427
    %v7429 = vpop.f32.mrb[0].mxu0
    %v7430 = vadd.f32 %v7317, %v7429
    %7431 = vmatprep.mubr.bf16.mxu0 %v5203
    %7432 = vmatmul.mubr.bf16.gmra.mrb[0].mxu0 %v5202
    %v7433 = vpop.f32.mrb[0].mxu0
    %v7434 = vadd.f32 %v7321, %v7433
    %v7435 = vpop.f32.mrb[0].mxu0
    %v7436 = vadd.f32 %v7323, %v7435
    %v7437 = vpop.f32.mrb[0].mxu0
    %v7438 = vadd.f32 %v7325, %v7437
    %v7439 = vpop.f32.mrb[0].mxu0
    %v7440 = vadd.f32 %v7327, %v7439
    %7441 = vmatprep.mubr.bf16.mxu0 %v5211
    %7442 = vmatmul.mubr.bf16.gmra.mrb[0].mxu0 %v5210
    %v7443 = vpop.f32.mrb[0].mxu0
    %v7444 = vadd.f32 %v7331, %v7443
    %v7445 = vpop.f32.mrb[0].mxu0
    %v7446 = vadd.f32 %v7333, %v7445
    %v7447 = vpop.f32.mrb[0].mxu0
    %v7448 = vadd.f32 %v7335, %v7447
    %v7449 = vpop.f32.mrb[0].mxu0
    %v7450 = vadd.f32 %v7337, %v7449
    %7451 = vdwg.mxu0
    %7452 = vmatprep.subr.bf16.mxu0 %v6393
    %7453 = vmatpush1.bf16.msra.mxu0 %v6392
    %7454 = vmatprep.subr.bf16.mxu0 %v6397
    %7455 = vmatpush1.bf16.msra.mxu0 %v6396
    %7456 = vmatprep.subr.bf16.mxu0 %v6401
    %7457 = vmatpush1.bf16.msra.mxu0 %v6400
    %7458 = vmatprep.subr.bf16.mxu0 %v6405
    %7459 = vmatpush1.bf16.msra.mxu0 %v6404
    %7460 = vmatprep.subr.bf16.mxu0 %v6409
    %7461 = vmatpush1.bf16.msra.mxu0 %v6408
    %7462 = vmatprep.subr.bf16.mxu0 %v6413
    %7463 = vmatpush1.bf16.msra.mxu0 %v6412
    %7464 = vmatprep.subr.bf16.mxu0 %v6417
    %7465 = vmatpush1.bf16.msra.mxu0 %v6416
    %7466 = vmatprep.subr.bf16.mxu0 %v6421
    %7467 = vmatpush1.bf16.msra.mxu0 %v6420
    %7468 = vmatprep.subr.bf16.mxu0 %v6425
    %7469 = vmatpush1.bf16.msra.mxu0 %v6424
    %7470 = vmatprep.subr.bf16.mxu0 %v6429
    %7471 = vmatpush1.bf16.msra.mxu0 %v6428
    %7472 = vmatprep.subr.bf16.mxu0 %v6433
    %7473 = vmatpush1.bf16.msra.mxu0 %v6432
    %7474 = vmatprep.subr.bf16.mxu0 %v6437
    %7475 = vmatpush1.bf16.msra.mxu0 %v6436
    %7476 = vmatprep.subr.bf16.mxu0 %v6441
    %7477 = vmatpush1.bf16.msra.mxu0 %v6440
    %7478 = vmatprep.subr.bf16.mxu0 %v6445
    %7479 = vmatpush1.bf16.msra.mxu0 %v6444
    %7480 = vmatprep.subr.bf16.mxu0 %v6449
    %7481 = vmatpush1.bf16.msra.mxu0 %v6448
    %7482 = vmatprep.subr.bf16.mxu0 %v6453
    %7483 = vmatpush1.bf16.msra.mxu0 %v6452
    %7484 = vmatprep.mubr.bf16.mxu0 %v5157
    %7485 = vmatmul.mubr.bf16.gmra.mrb[0].mxu0 %v5156
    %v7486 = vpop.f32.mrb[0].mxu0
    %v7487 = vadd.f32 %v7374, %v7486
    %v7488 = vpop.f32.mrb[0].mxu0
    %v7489 = vadd.f32 %v7376, %v7488
    %v7490 = vpop.f32.mrb[0].mxu0
    %v7491 = vadd.f32 %v7378, %v7490
    %v7492 = vpop.f32.mrb[0].mxu0
    %v7493 = vadd.f32 %v7380, %v7492
    %7494 = vmatprep.mubr.bf16.mxu0 %v5165
    %7495 = vmatmul.mubr.bf16.gmra.mrb[0].mxu0 %v5164
    %v7496 = vpop.f32.mrb[0].mxu0
    %v7497 = vadd.f32 %v7384, %v7496
    %v7498 = vpop.f32.mrb[0].mxu0
    %v7499 = vadd.f32 %v7386, %v7498
    %v7500 = vpop.f32.mrb[0].mxu0
    %v7501 = vadd.f32 %v7388, %v7500
    %v7502 = vpop.f32.mrb[0].mxu0
    %v7503 = vadd.f32 %v7390, %v7502
    %7504 = vmatprep.mubr.bf16.mxu0 %v5173
    %7505 = vmatmul.mubr.bf16.gmra.mrb[0].mxu0 %v5172
    %v7506 = vpop.f32.mrb[0].mxu0
    %v7507 = vadd.f32 %v7394, %v7506
    %v7508 = vpop.f32.mrb[0].mxu0
    %v7509 = vadd.f32 %v7396, %v7508
    %v7510 = vpop.f32.mrb[0].mxu0
    %v7511 = vadd.f32 %v7398, %v7510
    %v7512 = vpop.f32.mrb[0].mxu0
    %v7513 = vadd.f32 %v7400, %v7512
    %7514 = vmatprep.mubr.bf16.mxu0 %v5181
    %7515 = vmatmul.mubr.bf16.gmra.mrb[0].mxu0 %v5180
    %v7516 = vpop.f32.mrb[0].mxu0
    %v7517 = vadd.f32 %v7404, %v7516
    %v7518 = vpop.f32.mrb[0].mxu0
    %v7519 = vadd.f32 %v7406, %v7518
    %v7520 = vpop.f32.mrb[0].mxu0
    %v7521 = vadd.f32 %v7408, %v7520
    %v7522 = vpop.f32.mrb[0].mxu0
    %v7523 = vadd.f32 %v7410, %v7522
    %7524 = vmatprep.mubr.bf16.mxu0 %v5189
    %7525 = vmatmul.mubr.bf16.gmra.mrb[0].mxu0 %v5188
    %v7526 = vpop.f32.mrb[0].mxu0
    %v7527 = vadd.f32 %v7414, %v7526
    %v7528 = vpop.f32.mrb[0].mxu0
    %v7529 = vadd.f32 %v7416, %v7528
    %v7530 = vpop.f32.mrb[0].mxu0
    %v7531 = vadd.f32 %v7418, %v7530
    %v7532 = vpop.f32.mrb[0].mxu0
    %v7533 = vadd.f32 %v7420, %v7532
    %7534 = vmatprep.mubr.bf16.mxu0 %v5197
    %7535 = vmatmul.mubr.bf16.gmra.mrb[0].mxu0 %v5196
    %v7536 = vpop.f32.mrb[0].mxu0
    %v7537 = vadd.f32 %v7424, %v7536
    %v7538 = vpop.f32.mrb[0].mxu0
    %v7539 = vadd.f32 %v7426, %v7538
    %v7540 = vpop.f32.mrb[0].mxu0
    %v7541 = vadd.f32 %v7428, %v7540
    %v7542 = vpop.f32.mrb[0].mxu0
    %v7543 = vadd.f32 %v7430, %v7542
    %7544 = vmatprep.mubr.bf16.mxu0 %v5205
    %7545 = vmatmul.mubr.bf16.gmra.mrb[0].mxu0 %v5204
    %v7546 = vpop.f32.mrb[0].mxu0
    %v7547 = vadd.f32 %v7434, %v7546
    %v7548 = vpop.f32.mrb[0].mxu0
    %v7549 = vadd.f32 %v7436, %v7548
    %v7550 = vpop.f32.mrb[0].mxu0
    %v7551 = vadd.f32 %v7438, %v7550
    %v7552 = vpop.f32.mrb[0].mxu0
    %v7553 = vadd.f32 %v7440, %v7552
    %7554 = vmatprep.mubr.bf16.mxu0 %v5213
    %7555 = vmatmul.mubr.bf16.gmra.mrb[0].mxu0 %v5212
    %v7556 = vpop.f32.mrb[0].mxu0
    %v7557 = vadd.f32 %v7444, %v7556
    %v7558 = vpop.f32.mrb[0].mxu0
    %v7559 = vadd.f32 %v7446, %v7558
    %v7560 = vpop.f32.mrb[0].mxu0
    %v7561 = vadd.f32 %v7448, %v7560
    %v7562 = vpop.f32.mrb[0].mxu0
    %v7563 = vadd.f32 %v7450, %v7562
    %7564 = vdwg.mxu0
    %7565 = vmatprep.subr.bf16.mxu0 %v6457
    %7566 = vmatpush1.bf16.msra.mxu0 %v6456
    %7567 = vmatprep.subr.bf16.mxu0 %v6461
    %7568 = vmatpush1.bf16.msra.mxu0 %v6460
    %7569 = vmatprep.subr.bf16.mxu0 %v6465
    %7570 = vmatpush1.bf16.msra.mxu0 %v6464
    %7571 = vmatprep.subr.bf16.mxu0 %v6469
    %7572 = vmatpush1.bf16.msra.mxu0 %v6468
    %7573 = vmatprep.subr.bf16.mxu0 %v6473
    %7574 = vmatpush1.bf16.msra.mxu0 %v6472
    %7575 = vmatprep.subr.bf16.mxu0 %v6477
    %7576 = vmatpush1.bf16.msra.mxu0 %v6476
    %7577 = vmatprep.subr.bf16.mxu0 %v6481
    %7578 = vmatpush1.bf16.msra.mxu0 %v6480
    %7579 = vmatprep.subr.bf16.mxu0 %v6485
    %7580 = vmatpush1.bf16.msra.mxu0 %v6484
    %7581 = vmatprep.subr.bf16.mxu0 %v6489
    %7582 = vmatpush1.bf16.msra.mxu0 %v6488
    %7583 = vmatprep.subr.bf16.mxu0 %v6493
    %7584 = vmatpush1.bf16.msra.mxu0 %v6492
    %7585 = vmatprep.subr.bf16.mxu0 %v6497
    %7586 = vmatpush1.bf16.msra.mxu0 %v6496
    %7587 = vmatprep.subr.bf16.mxu0 %v6501
    %7588 = vmatpush1.bf16.msra.mxu0 %v6500
    %7589 = vmatprep.subr.bf16.mxu0 %v6505
    %7590 = vmatpush1.bf16.msra.mxu0 %v6504
    %7591 = vmatprep.subr.bf16.mxu0 %v6509
    %7592 = vmatpush1.bf16.msra.mxu0 %v6508
    %7593 = vmatprep.subr.bf16.mxu0 %v6513
    %7594 = vmatpush1.bf16.msra.mxu0 %v6512
    %7595 = vmatprep.subr.bf16.mxu0 %v6517
    %7596 = vmatpush1.bf16.msra.mxu0 %v6516
    %7597 = vmatprep.mubr.bf16.mxu0 %v5159
    %7598 = vmatmul.mubr.bf16.gmra.mrb[0].mxu0 %v5158
    %v7599 = vpop.f32.mrb[0].mxu0
    %v7600 = vadd.f32 %v7487, %v7599
    %v7601 = vpop.f32.mrb[0].mxu0
    %v7602 = vadd.f32 %v7489, %v7601
    %v7603 = vpop.f32.mrb[0].mxu0
    %v7604 = vadd.f32 %v7491, %v7603
    %v7605 = vpop.f32.mrb[0].mxu0
    %v7606 = vadd.f32 %v7493, %v7605
    %7607 = vmatprep.mubr.bf16.mxu0 %v5167
    %7608 = vmatmul.mubr.bf16.gmra.mrb[0].mxu0 %v5166
    %v7609 = vpop.f32.mrb[0].mxu0
    %v7610 = vadd.f32 %v7497, %v7609
    %v7611 = vpop.f32.mrb[0].mxu0
    %v7612 = vadd.f32 %v7499, %v7611
    %v7613 = vpop.f32.mrb[0].mxu0
    %v7614 = vadd.f32 %v7501, %v7613
    %v7615 = vpop.f32.mrb[0].mxu0
    %v7616 = vadd.f32 %v7503, %v7615
    %7617 = vmatprep.mubr.bf16.mxu0 %v5175
    %7618 = vmatmul.mubr.bf16.gmra.mrb[0].mxu0 %v5174
    %v7619 = vpop.f32.mrb[0].mxu0
    %v7620 = vadd.f32 %v7507, %v7619
    %v7621 = vpop.f32.mrb[0].mxu0
    %v7622 = vadd.f32 %v7509, %v7621
    %v7623 = vpop.f32.mrb[0].mxu0
    %v7624 = vadd.f32 %v7511, %v7623
    %v7625 = vpop.f32.mrb[0].mxu0
    %v7626 = vadd.f32 %v7513, %v7625
    %7627 = vmatprep.mubr.bf16.mxu0 %v5183
    %7628 = vmatmul.mubr.bf16.gmra.mrb[0].mxu0 %v5182
    %v7629 = vpop.f32.mrb[0].mxu0
    %v7630 = vadd.f32 %v7517, %v7629
    %v7631 = vpop.f32.mrb[0].mxu0
    %v7632 = vadd.f32 %v7519, %v7631
    %v7633 = vpop.f32.mrb[0].mxu0
    %v7634 = vadd.f32 %v7521, %v7633
    %v7635 = vpop.f32.mrb[0].mxu0
    %v7636 = vadd.f32 %v7523, %v7635
    %7637 = vmatprep.mubr.bf16.mxu0 %v5191
    %7638 = vmatmul.mubr.bf16.gmra.mrb[0].mxu0 %v5190
    %v7639 = vpop.f32.mrb[0].mxu0
    %v7640 = vadd.f32 %v7527, %v7639
    %v7641 = vpop.f32.mrb[0].mxu0
    %v7642 = vadd.f32 %v7529, %v7641
    %v7643 = vpop.f32.mrb[0].mxu0
    %v7644 = vadd.f32 %v7531, %v7643
    %v7645 = vpop.f32.mrb[0].mxu0
    %v7646 = vadd.f32 %v7533, %v7645
    %7647 = vmatprep.mubr.bf16.mxu0 %v5199
    %7648 = vmatmul.mubr.bf16.gmra.mrb[0].mxu0 %v5198
    %v7649 = vpop.f32.mrb[0].mxu0
    %v7650 = vadd.f32 %v7537, %v7649
    %v7651 = vpop.f32.mrb[0].mxu0
    %v7652 = vadd.f32 %v7539, %v7651
    %v7653 = vpop.f32.mrb[0].mxu0
    %v7654 = vadd.f32 %v7541, %v7653
    %v7655 = vpop.f32.mrb[0].mxu0
    %v7656 = vadd.f32 %v7543, %v7655
    %7657 = vmatprep.mubr.bf16.mxu0 %v5207
    %7658 = vmatmul.mubr.bf16.gmra.mrb[0].mxu0 %v5206
    %v7659 = vpop.f32.mrb[0].mxu0
    %v7660 = vadd.f32 %v7547, %v7659
    %v7661 = vpop.f32.mrb[0].mxu0
    %v7662 = vadd.f32 %v7549, %v7661
    %v7663 = vpop.f32.mrb[0].mxu0
    %v7664 = vadd.f32 %v7551, %v7663
    %v7665 = vpop.f32.mrb[0].mxu0
    %v7666 = vadd.f32 %v7553, %v7665
    %7667 = vmatprep.mubr.bf16.mxu0 %v5215
    %7668 = vmatmul.mubr.bf16.gmra.mrb[0].mxu0 %v5214
    %v7669 = vpop.f32.mrb[0].mxu0
    %v7670 = vadd.f32 %v7557, %v7669
    %v7671 = vpop.f32.mrb[0].mxu0
    %v7672 = vadd.f32 %v7559, %v7671
    %v7673 = vpop.f32.mrb[0].mxu0
    %v7674 = vadd.f32 %v7561, %v7673
    %v7675 = vpop.f32.mrb[0].mxu0
    %v7676 = vadd.f32 %v7563, %v7675
    %7677 = vdwg.mxu0
    %v7678 = vmax.f32 %v7148, 0.0
    %v7679 = vmax.f32 %v7150, 0.0
    %v7680 = vmax.f32 %v7600, 0.0
    %v7681 = vmax.f32 %v7602, 0.0
    %v7682 = vmax.f32 %v7152, 0.0
    %v7683 = vmax.f32 %v7154, 0.0
    %v7684 = vmax.f32 %v7604, 0.0
    %v7685 = vmax.f32 %v7606, 0.0
    %v7686 = vmax.f32 %v7158, 0.0
    %v7687 = vmax.f32 %v7160, 0.0
    %v7688 = vmax.f32 %v7610, 0.0
    %v7689 = vmax.f32 %v7612, 0.0
    %v7690 = vmax.f32 %v7162, 0.0
    %v7691 = vmax.f32 %v7164, 0.0
    %v7692 = vmax.f32 %v7614, 0.0
    %v7693 = vmax.f32 %v7616, 0.0
    %v7694 = vmax.f32 %v7168, 0.0
    %v7695 = vmax.f32 %v7170, 0.0
    %v7696 = vmax.f32 %v7620, 0.0
    %v7697 = vmax.f32 %v7622, 0.0
    %v7698 = vmax.f32 %v7172, 0.0
    %v7699 = vmax.f32 %v7174, 0.0
    %v7700 = vmax.f32 %v7624, 0.0
    %v7701 = vmax.f32 %v7626, 0.0
    %v7702 = vmax.f32 %v7178, 0.0
    %v7703 = vmax.f32 %v7180, 0.0
    %v7704 = vmax.f32 %v7630, 0.0
    %v7705 = vmax.f32 %v7632, 0.0
    %v7706 = vmax.f32 %v7182, 0.0
    %v7707 = vmax.f32 %v7184, 0.0
    %v7708 = vmax.f32 %v7634, 0.0
    %v7709 = vmax.f32 %v7636, 0.0
    %v7710 = vmax.f32 %v7188, 0.0
    %v7711 = vmax.f32 %v7190, 0.0
    %v7712 = vmax.f32 %v7640, 0.0
    %v7713 = vmax.f32 %v7642, 0.0
    %v7714 = vmax.f32 %v7192, 0.0
    %v7715 = vmax.f32 %v7194, 0.0
    %v7716 = vmax.f32 %v7644, 0.0
    %v7717 = vmax.f32 %v7646, 0.0
    %v7718 = vmax.f32 %v7198, 0.0
    %v7719 = vmax.f32 %v7200, 0.0
    %v7720 = vmax.f32 %v7650, 0.0
    %v7721 = vmax.f32 %v7652, 0.0
    %v7722 = vmax.f32 %v7202, 0.0
    %v7723 = vmax.f32 %v7204, 0.0
    %v7724 = vmax.f32 %v7654, 0.0
    %v7725 = vmax.f32 %v7656, 0.0
    %v7726 = vmax.f32 %v7208, 0.0
    %v7727 = vmax.f32 %v7210, 0.0
    %v7728 = vmax.f32 %v7660, 0.0
    %v7729 = vmax.f32 %v7662, 0.0
    %v7730 = vmax.f32 %v7212, 0.0
    %v7731 = vmax.f32 %v7214, 0.0
    %v7732 = vmax.f32 %v7664, 0.0
    %v7733 = vmax.f32 %v7666, 0.0
    %v7734 = vmax.f32 %v7218, 0.0
    %v7735 = vmax.f32 %v7220, 0.0
    %v7736 = vmax.f32 %v7670, 0.0
    %v7737 = vmax.f32 %v7672, 0.0
    %v7738 = vmax.f32 %v7222, 0.0
    %v7739 = vmax.f32 %v7224, 0.0
    %v7740 = vmax.f32 %v7674, 0.0
    %v7741 = vmax.f32 %v7676, 0.0
    %v7742 = vpack.c.bf16 %v7682, %v7678
    %v7743 = vpack.c.bf16 %v7683, %v7679
    %v7744 = vpack.c.bf16 %v7684, %v7680
    %v7745 = vpack.c.bf16 %v7685, %v7681
    %v7746 = vpack.c.bf16 %v7690, %v7686
    %v7747 = vpack.c.bf16 %v7691, %v7687
    %v7748 = vpack.c.bf16 %v7692, %v7688
    %v7749 = vpack.c.bf16 %v7693, %v7689
    %v7750 = vpack.c.bf16 %v7698, %v7694
    %v7751 = vpack.c.bf16 %v7699, %v7695
    %v7752 = vpack.c.bf16 %v7700, %v7696
    %v7753 = vpack.c.bf16 %v7701, %v7697
    %v7754 = vpack.c.bf16 %v7706, %v7702
    %v7755 = vpack.c.bf16 %v7707, %v7703
    %v7756 = vpack.c.bf16 %v7708, %v7704
    %v7757 = vpack.c.bf16 %v7709, %v7705
    %v7758 = vpack.c.bf16 %v7714, %v7710
    %v7759 = vpack.c.bf16 %v7715, %v7711
    %v7760 = vpack.c.bf16 %v7716, %v7712
    %v7761 = vpack.c.bf16 %v7717, %v7713
    %v7762 = vpack.c.bf16 %v7722, %v7718
    %v7763 = vpack.c.bf16 %v7723, %v7719
    %v7764 = vpack.c.bf16 %v7724, %v7720
    %v7765 = vpack.c.bf16 %v7725, %v7721
    %v7766 = vpack.c.bf16 %v7730, %v7726
    %v7767 = vpack.c.bf16 %v7731, %v7727
    %v7768 = vpack.c.bf16 %v7732, %v7728
    %v7769 = vpack.c.bf16 %v7733, %v7729
    %v7770 = vpack.c.bf16 %v7738, %v7734
    %v7771 = vpack.c.bf16 %v7739, %v7735
    %v7772 = vpack.c.bf16 %v7740, %v7736
    %v7773 = vpack.c.bf16 %v7741, %v7737
    %v7774 = vld [vmem:[#allocation9] sm:$0xf]
    %v7775 = vld [vmem:[#allocation9 + $0x4] sm:$0xf]
    %v7776 = vld [vmem:[#allocation9 + $0x8] sm:$0xf]
    %v7777 = vld [vmem:[#allocation9 + $0xc] sm:$0xf]
    %v7778 = vld [vmem:[#allocation9 + $0x10] sm:$0xf]
    %v7779 = vld [vmem:[#allocation9 + $0x14] sm:$0xf]
    %v7780 = vld [vmem:[#allocation9 + $0x18] sm:$0xf]
    %v7781 = vld [vmem:[#allocation9 + $0x1c] sm:$0xf]
    %v7782 = vld [vmem:[#allocation9 + $0x20] sm:$0xf]
    %v7783 = vld [vmem:[#allocation9 + $0x24] sm:$0xf]
    %v7784 = vld [vmem:[#allocation9 + $0x28] sm:$0xf]
    %v7785 = vld [vmem:[#allocation9 + $0x2c] sm:$0xf]
    %v7786 = vld [vmem:[#allocation9 + $0x30] sm:$0xf]
    %v7787 = vld [vmem:[#allocation9 + $0x34] sm:$0xf]
    %v7788 = vld [vmem:[#allocation9 + $0x38] sm:$0xf]
    %v7789 = vld [vmem:[#allocation9 + $0x3c] sm:$0xf]
    %v7790 = vld [vmem:[#allocation9 + $0x40] sm:$0xf]
    %v7791 = vld [vmem:[#allocation9 + $0x44] sm:$0xf]
    %v7792 = vld [vmem:[#allocation9 + $0x48] sm:$0xf]
    %v7793 = vld [vmem:[#allocation9 + $0x4c] sm:$0xf]
    %v7794 = vld [vmem:[#allocation9 + $0x50] sm:$0xf]
    %v7795 = vld [vmem:[#allocation9 + $0x54] sm:$0xf]
    %v7796 = vld [vmem:[#allocation9 + $0x58] sm:$0xf]
    %v7797 = vld [vmem:[#allocation9 + $0x5c] sm:$0xf]
    %v7798 = vld [vmem:[#allocation9 + $0x60] sm:$0xf]
    %v7799 = vld [vmem:[#allocation9 + $0x64] sm:$0xf]
    %v7800 = vld [vmem:[#allocation9 + $0x68] sm:$0xf]
    %v7801 = vld [vmem:[#allocation9 + $0x6c] sm:$0xf]
    %v7802 = vld [vmem:[#allocation9 + $0x70] sm:$0xf]
    %v7803 = vld [vmem:[#allocation9 + $0x74] sm:$0xf]
    %v7804 = vld [vmem:[#allocation9 + $0x78] sm:$0xf]
    %v7805 = vld [vmem:[#allocation9 + $0x7c] sm:$0xf]
    %v7806 = vld [vmem:[#allocation9 + $0x80] sm:$0xf]
    %v7807 = vld [vmem:[#allocation9 + $0x84] sm:$0xf]
    %v7808 = vld [vmem:[#allocation9 + $0x88] sm:$0xf]
    %v7809 = vld [vmem:[#allocation9 + $0x8c] sm:$0xf]
    %v7810 = vld [vmem:[#allocation9 + $0x90] sm:$0xf]
    %v7811 = vld [vmem:[#allocation9 + $0x94] sm:$0xf]
    %v7812 = vld [vmem:[#allocation9 + $0x98] sm:$0xf]
    %v7813 = vld [vmem:[#allocation9 + $0x9c] sm:$0xf]
    %v7814 = vld [vmem:[#allocation9 + $0xa0] sm:$0xf]
    %v7815 = vld [vmem:[#allocation9 + $0xa4] sm:$0xf]
    %v7816 = vld [vmem:[#allocation9 + $0xa8] sm:$0xf]
    %v7817 = vld [vmem:[#allocation9 + $0xac] sm:$0xf]
    %v7818 = vld [vmem:[#allocation9 + $0xb0] sm:$0xf]
    %v7819 = vld [vmem:[#allocation9 + $0xb4] sm:$0xf]
    %v7820 = vld [vmem:[#allocation9 + $0xb8] sm:$0xf]
    %v7821 = vld [vmem:[#allocation9 + $0xbc] sm:$0xf]
    %v7822 = vld [vmem:[#allocation9 + $0xc0] sm:$0xf]
    %v7823 = vld [vmem:[#allocation9 + $0xc4] sm:$0xf]
    %v7824 = vld [vmem:[#allocation9 + $0xc8] sm:$0xf]
    %v7825 = vld [vmem:[#allocation9 + $0xcc] sm:$0xf]
    %v7826 = vld [vmem:[#allocation9 + $0xd0] sm:$0xf]
    %v7827 = vld [vmem:[#allocation9 + $0xd4] sm:$0xf]
    %v7828 = vld [vmem:[#allocation9 + $0xd8] sm:$0xf]
    %v7829 = vld [vmem:[#allocation9 + $0xdc] sm:$0xf]
    %v7830 = vld [vmem:[#allocation9 + $0xe0] sm:$0xf]
    %v7831 = vld [vmem:[#allocation9 + $0xe4] sm:$0xf]
    %v7832 = vld [vmem:[#allocation9 + $0xe8] sm:$0xf]
    %v7833 = vld [vmem:[#allocation9 + $0xec] sm:$0xf]
    %v7834 = vld [vmem:[#allocation9 + $0xf0] sm:$0xf]
    %v7835 = vld [vmem:[#allocation9 + $0xf4] sm:$0xf]
    %v7836 = vld [vmem:[#allocation9 + $0xf8] sm:$0xf]
    %v7837 = vld [vmem:[#allocation9 + $0xfc] sm:$0xf]
    %v7838 = vld [vmem:[#allocation10] sm:$0x1]
    %v7840 = vlaneseq
    %v7841 = vshrl.u32 %v7840, 7
    %v7842 = vsub.s32 0, %v7841
    %v7843 = vrot.slane %v7838, %v7842
    %v7909 = vunpack.c.l.b16 %v7774
    %v7910 = vunpack.c.l.b16 %v7775
    %v7911 = vunpack.c.l.b16 %v7776
    %v7912 = vunpack.c.l.b16 %v7777
    %v7913 = vunpack.c.l.b16 %v7778
    %v7914 = vunpack.c.l.b16 %v7779
    %v7915 = vunpack.c.l.b16 %v7780
    %v7916 = vunpack.c.l.b16 %v7781
    %v7917 = vunpack.c.l.b16 %v7782
    %v7918 = vunpack.c.l.b16 %v7783
    %v7919 = vunpack.c.l.b16 %v7784
    %v7920 = vunpack.c.l.b16 %v7785
    %v7921 = vunpack.c.l.b16 %v7786
    %v7922 = vunpack.c.l.b16 %v7787
    %v7923 = vunpack.c.l.b16 %v7788
    %v7924 = vunpack.c.l.b16 %v7789
    %v7925 = vunpack.c.l.b16 %v7790
    %v7926 = vunpack.c.l.b16 %v7791
    %v7927 = vunpack.c.l.b16 %v7792
    %v7928 = vunpack.c.l.b16 %v7793
    %v7929 = vunpack.c.l.b16 %v7794
    %v7930 = vunpack.c.l.b16 %v7795
    %v7931 = vunpack.c.l.b16 %v7796
    %v7932 = vunpack.c.l.b16 %v7797
    %v7933 = vunpack.c.l.b16 %v7798
    %v7934 = vunpack.c.l.b16 %v7799
    %v7935 = vunpack.c.l.b16 %v7800
    %v7936 = vunpack.c.l.b16 %v7801
    %v7937 = vunpack.c.l.b16 %v7802
    %v7938 = vunpack.c.l.b16 %v7803
    %v7939 = vunpack.c.l.b16 %v7804
    %v7940 = vunpack.c.l.b16 %v7805
    %v7941 = vunpack.c.l.b16 %v7806
    %v7942 = vunpack.c.l.b16 %v7807
    %v7943 = vunpack.c.l.b16 %v7808
    %v7944 = vunpack.c.l.b16 %v7809
    %v7945 = vunpack.c.l.b16 %v7810
    %v7946 = vunpack.c.l.b16 %v7811
    %v7947 = vunpack.c.l.b16 %v7812
    %v7948 = vunpack.c.l.b16 %v7813
    %v7949 = vunpack.c.l.b16 %v7814
    %v7950 = vunpack.c.l.b16 %v7815
    %v7951 = vunpack.c.l.b16 %v7816
    %v7952 = vunpack.c.l.b16 %v7817
    %v7953 = vunpack.c.l.b16 %v7818
    %v7954 = vunpack.c.l.b16 %v7819
    %v7955 = vunpack.c.l.b16 %v7820
    %v7956 = vunpack.c.l.b16 %v7821
    %v7957 = vunpack.c.l.b16 %v7822
    %v7958 = vunpack.c.l.b16 %v7823
    %v7959 = vunpack.c.l.b16 %v7824
    %v7960 = vunpack.c.l.b16 %v7825
    %v7961 = vunpack.c.l.b16 %v7826
    %v7962 = vunpack.c.l.b16 %v7827
    %v7963 = vunpack.c.l.b16 %v7828
    %v7964 = vunpack.c.l.b16 %v7829
    %v7965 = vunpack.c.l.b16 %v7830
    %v7966 = vunpack.c.l.b16 %v7831
    %v7967 = vunpack.c.l.b16 %v7832
    %v7968 = vunpack.c.l.b16 %v7833
    %v7969 = vunpack.c.l.b16 %v7834
    %v7970 = vunpack.c.l.b16 %v7835
    %v7971 = vunpack.c.l.b16 %v7836
    %v7972 = vunpack.c.l.b16 %v7837
    %v7973 = vpack.c.b16 %v7910, %v7909
    %v7974 = vpack.c.b16 %v7912, %v7911
    %v7975 = vpack.c.b16 %v7914, %v7913
    %v7976 = vpack.c.b16 %v7916, %v7915
    %v7977 = vpack.c.b16 %v7918, %v7917
    %v7978 = vpack.c.b16 %v7920, %v7919
    %v7979 = vpack.c.b16 %v7922, %v7921
    %v7980 = vpack.c.b16 %v7924, %v7923
    %v7981 = vpack.c.b16 %v7926, %v7925
    %v7982 = vpack.c.b16 %v7928, %v7927
    %v7983 = vpack.c.b16 %v7930, %v7929
    %v7984 = vpack.c.b16 %v7932, %v7931
    %v7985 = vpack.c.b16 %v7934, %v7933
    %v7986 = vpack.c.b16 %v7936, %v7935
    %v7987 = vpack.c.b16 %v7938, %v7937
    %v7988 = vpack.c.b16 %v7940, %v7939
    %v7989 = vpack.c.b16 %v7942, %v7941
    %v7990 = vpack.c.b16 %v7944, %v7943
    %v7991 = vpack.c.b16 %v7946, %v7945
    %v7992 = vpack.c.b16 %v7948, %v7947
    %v7993 = vpack.c.b16 %v7950, %v7949
    %v7994 = vpack.c.b16 %v7952, %v7951
    %v7995 = vpack.c.b16 %v7954, %v7953
    %v7996 = vpack.c.b16 %v7956, %v7955
    %v7997 = vpack.c.b16 %v7958, %v7957
    %v7998 = vpack.c.b16 %v7960, %v7959
    %v7999 = vpack.c.b16 %v7962, %v7961
    %v8000 = vpack.c.b16 %v7964, %v7963
    %v8001 = vpack.c.b16 %v7966, %v7965
    %v8002 = vpack.c.b16 %v7968, %v7967
    %v8003 = vpack.c.b16 %v7970, %v7969
    %v8004 = vpack.c.b16 %v7972, %v7971
    %8037 = vmatprep.subr.bf16.mxu0 0
    %8038 = vmatpush1.bf16.msra.mxu0 %v7973
    %8039 = vmatprep.subr.bf16.mxu0 0
    %8040 = vmatpush1.bf16.msra.mxu0 %v7974
    %8041 = vmatprep.subr.bf16.mxu0 0
    %8042 = vmatpush1.bf16.msra.mxu0 %v7975
    %8043 = vmatprep.subr.bf16.mxu0 0
    %8044 = vmatpush1.bf16.msra.mxu0 %v7976
    %8045 = vmatprep.subr.bf16.mxu0 0
    %8046 = vmatpush1.bf16.msra.mxu0 %v7977
    %8047 = vmatprep.subr.bf16.mxu0 0
    %8048 = vmatpush1.bf16.msra.mxu0 %v7978
    %8049 = vmatprep.subr.bf16.mxu0 0
    %8050 = vmatpush1.bf16.msra.mxu0 %v7979
    %8051 = vmatprep.subr.bf16.mxu0 0
    %8052 = vmatpush1.bf16.msra.mxu0 %v7980
    %8053 = vmatprep.subr.bf16.mxu0 0
    %8054 = vmatpush1.bf16.msra.mxu0 %v7981
    %8055 = vmatprep.subr.bf16.mxu0 0
    %8056 = vmatpush1.bf16.msra.mxu0 %v7982
    %8057 = vmatprep.subr.bf16.mxu0 0
    %8058 = vmatpush1.bf16.msra.mxu0 %v7983
    %8059 = vmatprep.subr.bf16.mxu0 0
    %8060 = vmatpush1.bf16.msra.mxu0 %v7984
    %8061 = vmatprep.subr.bf16.mxu0 0
    %8062 = vmatpush1.bf16.msra.mxu0 %v7985
    %8063 = vmatprep.subr.bf16.mxu0 0
    %8064 = vmatpush1.bf16.msra.mxu0 %v7986
    %8065 = vmatprep.subr.bf16.mxu0 0
    %8066 = vmatpush1.bf16.msra.mxu0 %v7987
    %8067 = vmatprep.subr.bf16.mxu0 0
    %8068 = vmatpush1.bf16.msra.mxu0 %v7988
    %8069 = vmatprep.mubr.bf16.mxu0 %v7743
    %8070 = vmatmul.mubr.bf16.gmra.mrb[0].mxu0 %v7742
    %v8071 = vpop.f32.mrb[0].mxu0
    %v8072 = vadd.f32 %v7843, %v8071
    %v8073 = vpop.f32.mrb[0].mxu0
    %v8074 = vpop.f32.mrb[0].mxu0
    %v8075 = vadd.f32 %v7843, %v8074
    %v8076 = vpop.f32.mrb[0].mxu0
    %8077 = vmatprep.mubr.bf16.mxu0 %v7747
    %8078 = vmatmul.mubr.bf16.gmra.mrb[0].mxu0 %v7746
    %v8079 = vpop.f32.mrb[0].mxu0
    %v8080 = vadd.f32 %v7843, %v8079
    %v8081 = vpop.f32.mrb[0].mxu0
    %v8082 = vpop.f32.mrb[0].mxu0
    %v8083 = vadd.f32 %v7843, %v8082
    %v8084 = vpop.f32.mrb[0].mxu0
    %8085 = vmatprep.mubr.bf16.mxu0 %v7751
    %8086 = vmatmul.mubr.bf16.gmra.mrb[0].mxu0 %v7750
    %v8087 = vpop.f32.mrb[0].mxu0
    %v8088 = vadd.f32 %v7843, %v8087
    %v8089 = vpop.f32.mrb[0].mxu0
    %v8090 = vpop.f32.mrb[0].mxu0
    %v8091 = vadd.f32 %v7843, %v8090
    %v8092 = vpop.f32.mrb[0].mxu0
    %8093 = vmatprep.mubr.bf16.mxu0 %v7755
    %8094 = vmatmul.mubr.bf16.gmra.mrb[0].mxu0 %v7754
    %v8095 = vpop.f32.mrb[0].mxu0
    %v8096 = vadd.f32 %v7843, %v8095
    %v8097 = vpop.f32.mrb[0].mxu0
    %v8098 = vpop.f32.mrb[0].mxu0
    %v8099 = vadd.f32 %v7843, %v8098
    %v8100 = vpop.f32.mrb[0].mxu0
    %8101 = vmatprep.mubr.bf16.mxu0 %v7759
    %8102 = vmatmul.mubr.bf16.gmra.mrb[0].mxu0 %v7758
    %v8103 = vpop.f32.mrb[0].mxu0
    %v8104 = vadd.f32 %v7843, %v8103
    %v8105 = vpop.f32.mrb[0].mxu0
    %v8106 = vpop.f32.mrb[0].mxu0
    %v8107 = vadd.f32 %v7843, %v8106
    %v8108 = vpop.f32.mrb[0].mxu0
    %8109 = vmatprep.mubr.bf16.mxu0 %v7763
    %8110 = vmatmul.mubr.bf16.gmra.mrb[0].mxu0 %v7762
    %v8111 = vpop.f32.mrb[0].mxu0
    %v8112 = vadd.f32 %v7843, %v8111
    %v8113 = vpop.f32.mrb[0].mxu0
    %v8114 = vpop.f32.mrb[0].mxu0
    %v8115 = vadd.f32 %v7843, %v8114
    %v8116 = vpop.f32.mrb[0].mxu0
    %8117 = vmatprep.mubr.bf16.mxu0 %v7767
    %8118 = vmatmul.mubr.bf16.gmra.mrb[0].mxu0 %v7766
    %v8119 = vpop.f32.mrb[0].mxu0
    %v8120 = vadd.f32 %v7843, %v8119
    %v8121 = vpop.f32.mrb[0].mxu0
    %v8122 = vpop.f32.mrb[0].mxu0
    %v8123 = vadd.f32 %v7843, %v8122
    %v8124 = vpop.f32.mrb[0].mxu0
    %8125 = vmatprep.mubr.bf16.mxu0 %v7771
    %8126 = vmatmul.mubr.bf16.gmra.mrb[0].mxu0 %v7770
    %v8127 = vpop.f32.mrb[0].mxu0
    %v8128 = vadd.f32 %v7843, %v8127
    %v8129 = vpop.f32.mrb[0].mxu0
    %v8130 = vpop.f32.mrb[0].mxu0
    %v8131 = vadd.f32 %v7843, %v8130
    %v8132 = vpop.f32.mrb[0].mxu0
    %8133 = vdwg.mxu0
    %8134 = vmatprep.subr.bf16.mxu0 0
    %8135 = vmatpush1.bf16.msra.mxu0 %v7989
    %8136 = vmatprep.subr.bf16.mxu0 0
    %8137 = vmatpush1.bf16.msra.mxu0 %v7990
    %8138 = vmatprep.subr.bf16.mxu0 0
    %8139 = vmatpush1.bf16.msra.mxu0 %v7991
    %8140 = vmatprep.subr.bf16.mxu0 0
    %8141 = vmatpush1.bf16.msra.mxu0 %v7992
    %8142 = vmatprep.subr.bf16.mxu0 0
    %8143 = vmatpush1.bf16.msra.mxu0 %v7993
    %8144 = vmatprep.subr.bf16.mxu0 0
    %8145 = vmatpush1.bf16.msra.mxu0 %v7994
    %8146 = vmatprep.subr.bf16.mxu0 0
    %8147 = vmatpush1.bf16.msra.mxu0 %v7995
    %8148 = vmatprep.subr.bf16.mxu0 0
    %8149 = vmatpush1.bf16.msra.mxu0 %v7996
    %8150 = vmatprep.subr.bf16.mxu0 0
    %8151 = vmatpush1.bf16.msra.mxu0 %v7997
    %8152 = vmatprep.subr.bf16.mxu0 0
    %8153 = vmatpush1.bf16.msra.mxu0 %v7998
    %8154 = vmatprep.subr.bf16.mxu0 0
    %8155 = vmatpush1.bf16.msra.mxu0 %v7999
    %8156 = vmatprep.subr.bf16.mxu0 0
    %8157 = vmatpush1.bf16.msra.mxu0 %v8000
    %8158 = vmatprep.subr.bf16.mxu0 0
    %8159 = vmatpush1.bf16.msra.mxu0 %v8001
    %8160 = vmatprep.subr.bf16.mxu0 0
    %8161 = vmatpush1.bf16.msra.mxu0 %v8002
    %8162 = vmatprep.subr.bf16.mxu0 0
    %8163 = vmatpush1.bf16.msra.mxu0 %v8003
    %8164 = vmatprep.subr.bf16.mxu0 0
    %8165 = vmatpush1.bf16.msra.mxu0 %v8004
    %8166 = vmatprep.mubr.bf16.mxu0 %v7745
    %8167 = vmatmul.mubr.bf16.gmra.mrb[0].mxu0 %v7744
    %v8168 = vpop.f32.mrb[0].mxu0
    %v8169 = vadd.f32 %v8072, %v8168
    %v8170 = vpop.f32.mrb[0].mxu0
    %v8171 = vpop.f32.mrb[0].mxu0
    %v8172 = vadd.f32 %v8075, %v8171
    %v8173 = vpop.f32.mrb[0].mxu0
    %8174 = vmatprep.mubr.bf16.mxu0 %v7749
    %8175 = vmatmul.mubr.bf16.gmra.mrb[0].mxu0 %v7748
    %v8176 = vpop.f32.mrb[0].mxu0
    %v8177 = vadd.f32 %v8080, %v8176
    %v8178 = vpop.f32.mrb[0].mxu0
    %v8179 = vpop.f32.mrb[0].mxu0
    %v8180 = vadd.f32 %v8083, %v8179
    %v8181 = vpop.f32.mrb[0].mxu0
    %8182 = vmatprep.mubr.bf16.mxu0 %v7753
    %8183 = vmatmul.mubr.bf16.gmra.mrb[0].mxu0 %v7752
    %v8184 = vpop.f32.mrb[0].mxu0
    %v8185 = vadd.f32 %v8088, %v8184
    %v8186 = vpop.f32.mrb[0].mxu0
    %v8187 = vpop.f32.mrb[0].mxu0
    %v8188 = vadd.f32 %v8091, %v8187
    %v8189 = vpop.f32.mrb[0].mxu0
    %8190 = vmatprep.mubr.bf16.mxu0 %v7757
    %8191 = vmatmul.mubr.bf16.gmra.mrb[0].mxu0 %v7756
    %v8192 = vpop.f32.mrb[0].mxu0
    %v8193 = vadd.f32 %v8096, %v8192
    %v8194 = vpop.f32.mrb[0].mxu0
    %v8195 = vpop.f32.mrb[0].mxu0
    %v8196 = vadd.f32 %v8099, %v8195
    %v8197 = vpop.f32.mrb[0].mxu0
    %8198 = vmatprep.mubr.bf16.mxu0 %v7761
    %8199 = vmatmul.mubr.bf16.gmra.mrb[0].mxu0 %v7760
    %v8200 = vpop.f32.mrb[0].mxu0
    %v8201 = vadd.f32 %v8104, %v8200
    %v8202 = vpop.f32.mrb[0].mxu0
    %v8203 = vpop.f32.mrb[0].mxu0
    %v8204 = vadd.f32 %v8107, %v8203
    %v8205 = vpop.f32.mrb[0].mxu0
    %8206 = vmatprep.mubr.bf16.mxu0 %v7765
    %8207 = vmatmul.mubr.bf16.gmra.mrb[0].mxu0 %v7764
    %v8208 = vpop.f32.mrb[0].mxu0
    %v8209 = vadd.f32 %v8112, %v8208
    %v8210 = vpop.f32.mrb[0].mxu0
    %v8211 = vpop.f32.mrb[0].mxu0
    %v8212 = vadd.f32 %v8115, %v8211
    %v8213 = vpop.f32.mrb[0].mxu0
    %8214 = vmatprep.mubr.bf16.mxu0 %v7769
    %8215 = vmatmul.mubr.bf16.gmra.mrb[0].mxu0 %v7768
    %v8216 = vpop.f32.mrb[0].mxu0
    %v8217 = vadd.f32 %v8120, %v8216
    %v8218 = vpop.f32.mrb[0].mxu0
    %v8219 = vpop.f32.mrb[0].mxu0
    %v8220 = vadd.f32 %v8123, %v8219
    %v8221 = vpop.f32.mrb[0].mxu0
    %8222 = vmatprep.mubr.bf16.mxu0 %v7773
    %8223 = vmatmul.mubr.bf16.gmra.mrb[0].mxu0 %v7772
    %v8224 = vpop.f32.mrb[0].mxu0
    %v8225 = vadd.f32 %v8128, %v8224
    %v8226 = vpop.f32.mrb[0].mxu0
    %v8227 = vpop.f32.mrb[0].mxu0
    %v8228 = vadd.f32 %v8131, %v8227
    %v8229 = vpop.f32.mrb[0].mxu0
    %8230 = vdwg.mxu0
    %v8231 = vmax.f32 %v8169, 0.0
    %v8232 = vmax.f32 %v8172, 0.0
    %v8233 = vmax.f32 %v8177, 0.0
    %v8234 = vmax.f32 %v8180, 0.0
    %v8235 = vmax.f32 %v8185, 0.0
    %v8236 = vmax.f32 %v8188, 0.0
    %v8237 = vmax.f32 %v8193, 0.0
    %v8238 = vmax.f32 %v8196, 0.0
    %v8239 = vmax.f32 %v8201, 0.0
    %v8240 = vmax.f32 %v8204, 0.0
    %v8241 = vmax.f32 %v8209, 0.0
    %v8242 = vmax.f32 %v8212, 0.0
    %v8243 = vmax.f32 %v8217, 0.0
    %v8244 = vmax.f32 %v8220, 0.0
    %v8245 = vmax.f32 %v8225, 0.0
    %v8246 = vmax.f32 %v8228, 0.0
    %v8247 = vpack.c.bf16 %v8232, %v8231
    %v8248 = vpack.c.bf16 %v8234, %v8233
    %v8249 = vpack.c.bf16 %v8236, %v8235
    %v8250 = vpack.c.bf16 %v8238, %v8237
    %v8251 = vpack.c.bf16 %v8240, %v8239
    %v8252 = vpack.c.bf16 %v8242, %v8241
    %v8253 = vpack.c.bf16 %v8244, %v8243
    %v8254 = vpack.c.bf16 %v8246, %v8245
    %v8255 = vld [vmem:[#allocation12] sm:$0xf]
    %v8256 = vld [vmem:[#allocation12 + $0x4] sm:$0xf]
    %v8257 = vld [vmem:[#allocation12 + $0x8] sm:$0xf]
    %v8258 = vld [vmem:[#allocation12 + $0xc] sm:$0xf]
    %v8259 = vld [vmem:[#allocation12 + $0x10] sm:$0xf]
    %v8260 = vld [vmem:[#allocation12 + $0x14] sm:$0xf]
    %v8261 = vld [vmem:[#allocation12 + $0x18] sm:$0xf]
    %v8262 = vld [vmem:[#allocation12 + $0x1c] sm:$0xf]
    %v8263 = vld [vmem:[#allocation12 + $0x20] sm:$0xf]
    %v8264 = vld [vmem:[#allocation12 + $0x24] sm:$0xf]
    %v8265 = vld [vmem:[#allocation12 + $0x28] sm:$0xf]
    %v8266 = vld [vmem:[#allocation12 + $0x2c] sm:$0xf]
    %v8267 = vld [vmem:[#allocation12 + $0x30] sm:$0xf]
    %v8268 = vld [vmem:[#allocation12 + $0x34] sm:$0xf]
    %v8269 = vld [vmem:[#allocation12 + $0x38] sm:$0xf]
    %v8270 = vld [vmem:[#allocation12 + $0x3c] sm:$0xf]
    %v8271 = vld [vmem:[#allocation13] sm:$0x1]
    %v8273 = vlaneseq
    %v8274 = vshrl.u32 %v8273, 7
    %v8275 = vsub.s32 0, %v8274
    %v8276 = vrot.slane %v8271, %v8275
    %v8294 = vunpack.c.l.b16 %v8255
    %v8295 = vunpack.c.l.b16 %v8256
    %v8296 = vunpack.c.l.b16 %v8257
    %v8297 = vunpack.c.l.b16 %v8258
    %v8298 = vunpack.c.l.b16 %v8259
    %v8299 = vunpack.c.l.b16 %v8260
    %v8300 = vunpack.c.l.b16 %v8261
    %v8301 = vunpack.c.l.b16 %v8262
    %v8302 = vunpack.c.l.b16 %v8263
    %v8303 = vunpack.c.l.b16 %v8264
    %v8304 = vunpack.c.l.b16 %v8265
    %v8305 = vunpack.c.l.b16 %v8266
    %v8306 = vunpack.c.l.b16 %v8267
    %v8307 = vunpack.c.l.b16 %v8268
    %v8308 = vunpack.c.l.b16 %v8269
    %v8309 = vunpack.c.l.b16 %v8270
    %v8310 = vpack.c.b16 %v8295, %v8294
    %v8311 = vpack.c.b16 %v8297, %v8296
    %v8312 = vpack.c.b16 %v8299, %v8298
    %v8313 = vpack.c.b16 %v8301, %v8300
    %v8314 = vpack.c.b16 %v8303, %v8302
    %v8315 = vpack.c.b16 %v8305, %v8304
    %v8316 = vpack.c.b16 %v8307, %v8306
    %v8317 = vpack.c.b16 %v8309, %v8308
    %8326 = vmatprep.subr.bf16.mxu0 0
    %8327 = vmatpush1.bf16.msra.mxu0 %v8310
    %8328 = vmatprep.subr.bf16.mxu0 0
    %8329 = vmatpush1.bf16.msra.mxu0 %v8311
    %8330 = vmatprep.subr.bf16.mxu0 0
    %8331 = vmatpush1.bf16.msra.mxu0 %v8312
    %8332 = vmatprep.subr.bf16.mxu0 0
    %8333 = vmatpush1.bf16.msra.mxu0 %v8313
    %8334 = vmatprep.subr.bf16.mxu0 0
    %8335 = vmatpush1.bf16.msra.mxu0 %v8314
    %8336 = vmatprep.subr.bf16.mxu0 0
    %8337 = vmatpush1.bf16.msra.mxu0 %v8315
    %8338 = vmatprep.subr.bf16.mxu0 0
    %8339 = vmatpush1.bf16.msra.mxu0 %v8316
    %8340 = vmatprep.subr.bf16.mxu0 0
    %8341 = vmatpush1.bf16.msra.mxu0 %v8317
    %8342 = vmatprep.subr.bf16.mxu0 0
    %8343 = vmatpush1.bf16.msra.mxu0 0
    %8344 = vmatprep.subr.bf16.mxu0 0
    %8345 = vmatpush1.bf16.msra.mxu0 0
    %8346 = vmatprep.subr.bf16.mxu0 0
    %8347 = vmatpush1.bf16.msra.mxu0 0
    %8348 = vmatprep.subr.bf16.mxu0 0
    %8349 = vmatpush1.bf16.msra.mxu0 0
    %8350 = vmatprep.subr.bf16.mxu0 0
    %8351 = vmatpush1.bf16.msra.mxu0 0
    %8352 = vmatprep.subr.bf16.mxu0 0
    %8353 = vmatpush1.bf16.msra.mxu0 0
    %8354 = vmatprep.subr.bf16.mxu0 0
    %8355 = vmatpush1.bf16.msra.mxu0 0
    %8356 = vmatprep.subr.bf16.mxu0 0
    %8357 = vmatpush1.bf16.msra.mxu0 0
    %8358 = vmatprep.mubr.bf16.mxu0 0
    %8359 = vmatmul.mubr.bf16.gmra.mrb[0].mxu0 %v8247
    %v8360 = vpop.f32.mrb[0].mxu0
    %v8361 = vadd.f32 %v8276, %v8360
    %v8362 = vpop.f32.mrb[0].mxu0
    %v8363 = vpop.f32.mrb[0].mxu0
    %v8364 = vadd.f32 %v8276, %v8363
    %v8365 = vpop.f32.mrb[0].mxu0
    %8366 = vmatprep.mubr.bf16.mxu0 0
    %8367 = vmatmul.mubr.bf16.gmra.mrb[0].mxu0 %v8248
    %v8368 = vpop.f32.mrb[0].mxu0
    %v8369 = vadd.f32 %v8276, %v8368
    %v8370 = vpop.f32.mrb[0].mxu0
    %v8371 = vpop.f32.mrb[0].mxu0
    %v8372 = vadd.f32 %v8276, %v8371
    %v8373 = vpop.f32.mrb[0].mxu0
    %8374 = vmatprep.mubr.bf16.mxu0 0
    %8375 = vmatmul.mubr.bf16.gmra.mrb[0].mxu0 %v8249
    %v8376 = vpop.f32.mrb[0].mxu0
    %v8377 = vadd.f32 %v8276, %v8376
    %v8378 = vpop.f32.mrb[0].mxu0
    %v8379 = vpop.f32.mrb[0].mxu0
    %v8380 = vadd.f32 %v8276, %v8379
    %v8381 = vpop.f32.mrb[0].mxu0
    %8382 = vmatprep.mubr.bf16.mxu0 0
    %8383 = vmatmul.mubr.bf16.gmra.mrb[0].mxu0 %v8250
    %v8384 = vpop.f32.mrb[0].mxu0
    %v8385 = vadd.f32 %v8276, %v8384
    %v8386 = vpop.f32.mrb[0].mxu0
    %v8387 = vpop.f32.mrb[0].mxu0
    %v8388 = vadd.f32 %v8276, %v8387
    %v8389 = vpop.f32.mrb[0].mxu0
    %8390 = vmatprep.mubr.bf16.mxu0 0
    %8391 = vmatmul.mubr.bf16.gmra.mrb[0].mxu0 %v8251
    %v8392 = vpop.f32.mrb[0].mxu0
    %v8393 = vadd.f32 %v8276, %v8392
    %v8394 = vpop.f32.mrb[0].mxu0
    %v8395 = vpop.f32.mrb[0].mxu0
    %v8396 = vadd.f32 %v8276, %v8395
    %v8397 = vpop.f32.mrb[0].mxu0
    %8398 = vmatprep.mubr.bf16.mxu0 0
    %8399 = vmatmul.mubr.bf16.gmra.mrb[0].mxu0 %v8252
    %v8400 = vpop.f32.mrb[0].mxu0
    %v8401 = vadd.f32 %v8276, %v8400
    %v8402 = vpop.f32.mrb[0].mxu0
    %v8403 = vpop.f32.mrb[0].mxu0
    %v8404 = vadd.f32 %v8276, %v8403
    %v8405 = vpop.f32.mrb[0].mxu0
    %8406 = vmatprep.mubr.bf16.mxu0 0
    %8407 = vmatmul.mubr.bf16.gmra.mrb[0].mxu0 %v8253
    %v8408 = vpop.f32.mrb[0].mxu0
    %v8409 = vadd.f32 %v8276, %v8408
    %v8410 = vpop.f32.mrb[0].mxu0
    %v8411 = vpop.f32.mrb[0].mxu0
    %v8412 = vadd.f32 %v8276, %v8411
    %v8413 = vpop.f32.mrb[0].mxu0
    %8414 = vmatprep.mubr.bf16.mxu0 0
    %8415 = vmatmul.mubr.bf16.gmra.mrb[0].mxu0 %v8254
    %v8416 = vpop.f32.mrb[0].mxu0
    %v8417 = vadd.f32 %v8276, %v8416
    %v8418 = vpop.f32.mrb[0].mxu0
    %v8419 = vpop.f32.mrb[0].mxu0
    %v8420 = vadd.f32 %v8276, %v8419
    %v8421 = vpop.f32.mrb[0].mxu0
    %8422 = vdwg.mxu0
    %v8423 = vmax.f32 %v8361, 0.0
    %v8424 = vmax.f32 %v8364, 0.0
    %v8425 = vmax.f32 %v8369, 0.0
    %v8426 = vmax.f32 %v8372, 0.0
    %v8427 = vmax.f32 %v8377, 0.0
    %v8428 = vmax.f32 %v8380, 0.0
    %v8429 = vmax.f32 %v8385, 0.0
    %v8430 = vmax.f32 %v8388, 0.0
    %v8431 = vmax.f32 %v8393, 0.0
    %v8432 = vmax.f32 %v8396, 0.0
    %v8433 = vmax.f32 %v8401, 0.0
    %v8434 = vmax.f32 %v8404, 0.0
    %v8435 = vmax.f32 %v8409, 0.0
    %v8436 = vmax.f32 %v8412, 0.0
    %v8437 = vmax.f32 %v8417, 0.0
    %v8438 = vmax.f32 %v8420, 0.0
    %v8439 = vpack.c.bf16 %v8424, %v8423
    %v8440 = vpack.c.bf16 %v8426, %v8425
    %v8441 = vpack.c.bf16 %v8428, %v8427
    %v8442 = vpack.c.bf16 %v8430, %v8429
    %v8443 = vpack.c.bf16 %v8432, %v8431
    %v8444 = vpack.c.bf16 %v8434, %v8433
    %v8445 = vpack.c.bf16 %v8436, %v8435
    %v8446 = vpack.c.bf16 %v8438, %v8437
    %v8455 = vunpack.c.l.b16 %v8439
    %v8456 = vunpack.c.h.b16 %v8439
    %v8457 = vunpack.c.l.b16 %v8440
    %v8458 = vunpack.c.h.b16 %v8440
    %v8459 = vunpack.c.l.b16 %v8441
    %v8460 = vunpack.c.h.b16 %v8441
    %v8461 = vunpack.c.l.b16 %v8442
    %v8462 = vunpack.c.h.b16 %v8442
    %v8463 = vunpack.c.l.b16 %v8443
    %v8464 = vunpack.c.h.b16 %v8443
    %v8465 = vunpack.c.l.b16 %v8444
    %v8466 = vunpack.c.h.b16 %v8444
    %v8467 = vunpack.c.l.b16 %v8445
    %v8468 = vunpack.c.h.b16 %v8445
    %v8469 = vunpack.c.l.b16 %v8446
    %v8470 = vunpack.c.h.b16 %v8446
    %v8471 = vpack.c.b16 %v8455, %v8455
    %v8472 = vpack.c.b16 %v8456, %v8456
    %v8473 = vpack.c.b16 %v8457, %v8457
    %v8474 = vpack.c.b16 %v8458, %v8458
    %v8475 = vpack.c.b16 %v8459, %v8459
    %v8476 = vpack.c.b16 %v8460, %v8460
    %v8477 = vpack.c.b16 %v8461, %v8461
    %v8478 = vpack.c.b16 %v8462, %v8462
    %v8479 = vpack.c.b16 %v8463, %v8463
    %v8480 = vpack.c.b16 %v8464, %v8464
    %v8481 = vpack.c.b16 %v8465, %v8465
    %v8482 = vpack.c.b16 %v8466, %v8466
    %v8483 = vpack.c.b16 %v8467, %v8467
    %v8484 = vpack.c.b16 %v8468, %v8468
    %v8485 = vpack.c.b16 %v8469, %v8469
    %v8486 = vpack.c.b16 %v8470, %v8470
    %8503 = vst [vmem:[%s9] sm:$0xf] %v8471
    %8504 = vst [vmem:[%s9 + $0x4] sm:$0xf] %v8472
    %8505 = vst [vmem:[%s9 + $0x8] sm:$0xf] %v8473
    %8506 = vst [vmem:[%s9 + $0xc] sm:$0xf] %v8474
    %8507 = vst [vmem:[%s9 + $0x10] sm:$0xf] %v8475
    %8508 = vst [vmem:[%s9 + $0x14] sm:$0xf] %v8476
    %8509 = vst [vmem:[%s9 + $0x18] sm:$0xf] %v8477
    %8510 = vst [vmem:[%s9 + $0x1c] sm:$0xf] %v8478
    %8511 = vst [vmem:[%s9 + $0x20] sm:$0xf] %v8479
    %8512 = vst [vmem:[%s9 + $0x24] sm:$0xf] %v8480
    %8513 = vst [vmem:[%s9 + $0x28] sm:$0xf] %v8481
    %8514 = vst [vmem:[%s9 + $0x2c] sm:$0xf] %v8482
    %8515 = vst [vmem:[%s9 + $0x30] sm:$0xf] %v8483
    %8516 = vst [vmem:[%s9 + $0x34] sm:$0xf] %v8484
    %8517 = vst [vmem:[%s9 + $0x38] sm:$0xf] %v8485
    %8518 = vst [vmem:[%s9 + $0x3c] sm:$0xf] %v8486
    // Predicated region
    $region70: #{nn_encoder_forward.1} parent=1 // pred_check
      _
    $region71: #{nn_encoder_forward.1} parent=1 // pred_check_branch
      %8520 = sbr.rel (0) target = $region73
    $region72: #{nn_encoder_forward.1} parent=1 // pred_region
      _
    $region73: #{nn_encoder_forward.1} parent=1 // pred_fallthru
      _
    // Predicated region
    $region74: #{nn_encoder_forward.1} parent=1 // pred_check
      _
    $region75: #{nn_encoder_forward.1} parent=1 // pred_check_branch
      %8522 = sbr.rel (0) target = $region77
    $region76: #{nn_encoder_forward.1} parent=1 // pred_region
      _
    $region77: #{nn_encoder_forward.1} parent=1 // pred_fallthru
      _
    %8523 = vsyncpa [#allocation3], 1
    %8524 = vsyncpa [#allocation5], 1
    %8525 = vsyncpa [#allocation8], 1
    %8526 = vsyncpa [#allocation11], 1
    %8527 = vsyncpa [#allocation14], 1

</llo_original>
